<compile_context>
chip_gen: v7x
topology: tpu7x:2x2x1
jax: 0.10.0
libtpu: 0.0.40
codegen_flags: <defaults>
</compile_context>

<pallas_src>
import functools

import jax
import jax.numpy as jnp
from jax.experimental import pallas as pl
from jax.experimental.pallas import tpu as pltpu


_VMEM_LIMIT = 32 * 1024 * 1024
_LANE = 128
_TAP_ALIGN = 16   # bf16 sublane tile: in-kernel tap row offsets (a*Wo) must be
                  # multiples of this for the static slices to stay tile-aligned.


def _roundup(x, m):
    return ((x + m - 1) // m) * m


def _apply_act(y, act, slope):
    if act == "leaky_relu":
        return jnp.where(y > 0.0, y, slope * y)
    if act == "sigmoid":
        return 1.0 / (1.0 + jnp.exp(-y))
    return y


# ----------------------------------------------------------------------------
# Kernel 1: single-shot matmul + per-column affine (folded BN) + activation.
#           Single K block (no accumulator scratch, no K grid axis).
# ----------------------------------------------------------------------------
def _mm_epilogue_kernel(a_ref, b_ref, s_ref, c_ref, o_ref, *, act, slope):
    y = jnp.dot(a_ref[...], b_ref[...], preferred_element_type=jnp.float32)
    y = y * s_ref[...] + c_ref[...]
    o_ref[...] = _apply_act(y, act, slope).astype(o_ref.dtype)


def matmul_affine_act(a, b, scale, bias, act="none", slope=0.2,
                      out_dtype=jnp.bfloat16):
    """y = act((a @ b) * scale + bias);  a:(M,K), b:(K,N), scale/bias:(N,)."""
    M, K = a.shape
    K2, N = b.shape
    assert K == K2
    npad = _roundup(max(N, _LANE), _LANE)     # lane-dense (>=128) output stores
    mp = _roundup(M, 8)
    tm = min(mp, 512)                         # single M block up to 512 rows;
    mp = _roundup(mp, tm)                     # >512 rows -> multiple parallel blocks

    a_p = jnp.pad(a.astype(jnp.bfloat16), ((0, mp - M), (0, 0)))
    b_p = jnp.pad(b.astype(jnp.bfloat16), ((0, 0), (0, npad - N)))
    s_p = jnp.pad(scale.astype(jnp.float32), (0, npad - N),
                  constant_values=1.0).reshape(1, npad)
    c_p = jnp.pad(bias.astype(jnp.float32), (0, npad - N)).reshape(1, npad)

    cost = pl.CostEstimate(
        flops=2 * mp * K * npad,
        transcendentals=mp * npad if act == "sigmoid" else 0,
        bytes_accessed=(a_p.size + b_p.size) * 2 + (s_p.size + c_p.size) * 4
        + mp * npad * jnp.dtype(out_dtype).itemsize)

    out = pl.pallas_call(
        functools.partial(_mm_epilogue_kernel, act=act, slope=slope),
        out_shape=jax.ShapeDtypeStruct((mp, npad), out_dtype),
        grid_spec=pltpu.PrefetchScalarGridSpec(
            num_scalar_prefetch=0,
            grid=(mp // tm,),
            in_specs=[
                pl.BlockSpec((tm, K), lambda i: (i, 0)),
                pl.BlockSpec((K, npad), lambda i: (0, 0)),
                pl.BlockSpec((1, npad), lambda i: (0, 0)),
                pl.BlockSpec((1, npad), lambda i: (0, 0)),
            ],
            out_specs=pl.BlockSpec((tm, npad), lambda i: (i, 0)),
        ),
        compiler_params=pltpu.CompilerParams(
            dimension_semantics=("parallel",),
            vmem_limit_bytes=_VMEM_LIMIT),
        cost_estimate=cost,
    )(a_p, b_p, s_p, c_p)
    return out[:M, :N]


# ----------------------------------------------------------------------------
# Kernel 2: 4x4/stride-2/pad-1 conv + folded BN + activation with the tap
#           gather done INSIDE the kernel (no HBM im2col slab).
# ----------------------------------------------------------------------------
def _conv_tap_kernel(x0_ref, x1_ref, w_ref, s_ref, c_ref, o_ref, *,
                     ho, wo, act, slope):
    # After space-to-depth, the conv is a 2x2/stride-1 conv: its 4 taps are
    # contiguous, statically aligned row windows of the VMEM-resident inputs.
    rows = ho * wo
    acc = jnp.zeros(o_ref.shape, jnp.float32)
    for a in range(2):            # row tap of the 2x2 window
        lo = a * wo
        for b in range(2):        # column tap (pre-shifted copies x0 / x1)
            src = x0_ref if b == 0 else x1_ref
            acc += jnp.dot(src[lo:lo + rows, :], w_ref[2 * a + b],
                           preferred_element_type=jnp.float32)
    y = acc * s_ref[...] + c_ref[...]
    o_ref[...] = _apply_act(y, act, slope).astype(o_ref.dtype)


def conv4x4_s2_tap(x, w, scale, bias, act, slope=0.2, out_dtype=jnp.bfloat16):
    """Conv2d(4,2,1,bias=False) + per-channel affine + act on NHWC activations."""
    N, H, W, C = x.shape
    O = w.shape[0]
    Ho, Wo = H // 2, W // 2
    Hs = Ho + 1
    opad = _roundup(max(O, _LANE), _LANE)
    k4 = 4 * C

    # Space-to-depth of the spatially padded input (pure layout ops, ~1x size).
    xp = jnp.pad(x.astype(jnp.bfloat16), ((0, 0), (1, 1), (1, 1), (0, 0)))
    xs = xp.reshape(N, Hs, 2, Wo + 1, 2, C).transpose(0, 1, 3, 2, 4, 5)
    xs = xs.reshape(N, Hs, Wo + 1, k4)
    xs0 = xs[:, :, :Wo, :].reshape(N, Hs * Wo, k4)   # column tap b = 0
    xs1 = xs[:, :, 1:, :].reshape(N, Hs * Wo, k4)    # column tap b = 1

    # Tap weights: w[o, c, 2a+di, 2b+dj] -> wt[2a+b, (di,dj,c), o].
    wt = w.transpose(2, 3, 1, 0).reshape(2, 2, 2, 2, C, O)   # [a, di, b, dj, c, o]
    wt = wt.transpose(0, 2, 1, 3, 4, 5).reshape(4, k4, O)
    wt = jnp.pad(wt, ((0, 0), (0, 0), (0, opad - O))).astype(jnp.bfloat16)

    s_p = jnp.pad(scale.astype(jnp.float32), (0, opad - O),
                  constant_values=1.0).reshape(1, opad)
    c_p = jnp.pad(bias.astype(jnp.float32), (0, opad - O)).reshape(1, opad)

    m_n = Ho * Wo
    rows = Hs * Wo
    cost = pl.CostEstimate(
        flops=2 * N * m_n * (4 * k4) * opad,
        transcendentals=N * m_n * opad if act == "sigmoid" else 0,
        bytes_accessed=(xs0.size + xs1.size + wt.size) * 2
        + (s_p.size + c_p.size) * 4
        + N * m_n * opad * jnp.dtype(out_dtype).itemsize)

    out = pl.pallas_call(
        functools.partial(_conv_tap_kernel, ho=Ho, wo=Wo, act=act, slope=slope),
        out_shape=jax.ShapeDtypeStruct((N, m_n, opad), out_dtype),
        grid_spec=pltpu.PrefetchScalarGridSpec(
            num_scalar_prefetch=0,
            grid=(N,),                       # batch axis "parallel" (2 TCs on v7x)
            in_specs=[
                pl.BlockSpec((None, rows, k4), lambda n: (n, 0, 0)),
                pl.BlockSpec((None, rows, k4), lambda n: (n, 0, 0)),
                pl.BlockSpec((4, k4, opad), lambda n: (0, 0, 0)),
                pl.BlockSpec((1, opad), lambda n: (0, 0)),
                pl.BlockSpec((1, opad), lambda n: (0, 0)),
            ],
            out_specs=pl.BlockSpec((None, m_n, opad), lambda n: (n, 0, 0)),
        ),
        compiler_params=pltpu.CompilerParams(
            dimension_semantics=("parallel",),
            vmem_limit_bytes=_VMEM_LIMIT),
        cost_estimate=cost,
    )(xs0, xs1, wt, s_p, c_p)
    return out[:, :, :O].reshape(N, Ho, Wo, O)


# ----------------------------------------------------------------------------
# Conv dispatcher: big stride-2 layers -> in-kernel tap gather; tiny layers
# (negligible slabs, unaligned tap offsets) -> XLA im2col + fused matmul.
# ----------------------------------------------------------------------------
def conv2d_nhwc(x, w, scale, bias, stride, pad, act, slope=0.2,
                out_dtype=jnp.bfloat16):
    N, H, W, C = x.shape
    O, Cin, kh, kw = w.shape
    assert Cin == C
    if (stride == 2 and pad == 1 and kh == 4 and kw == 4
            and H % 2 == 0 and W % 2 == 0
            and (W // 2) % _TAP_ALIGN == 0
            and (H // 2) * (W // 2) <= 2048):
        return conv4x4_s2_tap(x, w, scale, bias, act, slope, out_dtype)

    xp = jnp.pad(x, ((0, 0), (pad, pad), (pad, pad), (0, 0)))
    Ho = (H + 2 * pad - kh) // stride + 1
    Wo = (W + 2 * pad - kw) // stride + 1
    taps = [xp[:, i:i + stride * Ho:stride, j:j + stride * Wo:stride, :]
            for i in range(kh) for j in range(kw)]
    patches = jnp.stack(taps, axis=3)                      # (N, Ho, Wo, kh*kw, C)
    a = patches.reshape(N * Ho * Wo, kh * kw * C)
    bmat = w.transpose(2, 3, 1, 0).reshape(kh * kw * C, O)
    y = matmul_affine_act(a, bmat, scale, bias, act, slope, out_dtype)
    return y.reshape(N, Ho, Wo, O)


# ----------------------------------------------------------------------------
# Parameters (deterministic, following weights_init from the PyTorch module)
# ----------------------------------------------------------------------------
class KeyGen:
    def __init__(self, seed=0):
        self._key = jax.random.PRNGKey(seed)

    def __call__(self):
        self._key, sub = jax.random.split(self._key)
        return sub


def bn_params(kg, c):
    # weights_init: gamma ~ N(1, 0.02), beta = 0; eval-mode running stats.
    return dict(
        gamma=1.0 + 0.02 * jax.random.normal(kg(), (c,), jnp.float32),
        beta=jnp.zeros((c,), jnp.float32),
        mean=0.1 * jax.random.normal(kg(), (c,), jnp.float32),
        var=1.0 + 0.1 * jnp.abs(jax.random.normal(kg(), (c,), jnp.float32)),
    )


def bn_fold(bn, eps=1e-5):
    scale = bn["gamma"] / jnp.sqrt(bn["var"] + eps)
    bias = bn["beta"] - bn["mean"] * scale
    return scale, bias


def make_netD_params(kg, nc, ndf, image_size):
    def conv_w(o, c, k):                      # weights_init: N(0, 0.02)
        return 0.02 * jax.random.normal(kg(), (o, c, k, k), jnp.float32)

    p = {
        "conv1_w": conv_w(ndf, nc, 4),
        "conv2_w": conv_w(ndf * 2, ndf, 4), "bn2": bn_params(kg, ndf * 2),
        "conv3_w": conv_w(ndf * 4, ndf * 2, 4), "bn3": bn_params(kg, ndf * 4),
        "conv4_w": conv_w(ndf * 8, ndf * 4, 4), "bn4": bn_params(kg, ndf * 8),
        "conv5_w": conv_w(1, ndf * 8, 4),
    }
    head_in = 1 if image_size == 128 else 169
    p["head_w"] = 0.02 * jax.random.normal(kg(), (1, head_in), jnp.float32)
    p["head_b"] = jnp.zeros((1,), jnp.float32)
    return p


# ----------------------------------------------------------------------------
# Forward pass (matches _netD_resnet.forward, single-device path)
# ----------------------------------------------------------------------------
def netD_forward(params, x_nchw):
    """x:(N, nc, H, W) NCHW (PyTorch layout).  Returns (N, 1) probabilities."""
    x = jnp.transpose(x_nchw, (0, 2, 3, 1)).astype(jnp.bfloat16)   # NHWC bf16
    nc = x.shape[-1]
    w1 = params["conv1_w"]
    ndf = w1.shape[0]
    # Zero-pad input channels once (3 -> 8); conv1 weights padded to match.
    cpad = _roundup(max(nc, 8), 8)
    x = jnp.pad(x, ((0, 0), (0, 0), (0, 0), (0, cpad - nc)))
    w1 = jnp.pad(w1, ((0, 0), (0, cpad - nc), (0, 0), (0, 0)))

    ones = lambda c: jnp.ones((c,), jnp.float32)
    zeros = lambda c: jnp.zeros((c,), jnp.float32)

    h = conv2d_nhwc(x, w1, ones(ndf), zeros(ndf),
                    stride=2, pad=1, act="leaky_relu")
    for idx in (2, 3, 4):
        s, b = bn_fold(params[f"bn{idx}"])
        h = conv2d_nhwc(h, params[f"conv{idx}_w"], s, b,
                        stride=2, pad=1, act="leaky_relu")

    # conv5 (4x4/s1/p0, one output channel) + Linear(1,1) + Sigmoid head fused
    # into ONE kernel: feat.view(B,-1) is (B,1), so head(feat) = sigmoid(feat*w+b)
    # and the head scalar folds into the f32 matmul epilogue (no bf16 roundtrip).
    B, Hf, Wf, Cf = h.shape
    a = h.reshape(B, Hf * Wf * Cf)                           # NHWC (i, j, c) order
    w5 = params["conv5_w"]                                   # (1, 8*ndf, 4, 4)
    bmat = w5.transpose(2, 3, 1, 0).reshape(-1, 1)           # same (i, j, c) order
    head_w, head_b = params["head_w"], params["head_b"]
    if head_w.shape != (1, 1):
        # TODO(synk): imageSize==512 branch (Linear(169,1) head) is not implemented.
        raise NotImplementedError("only the imageSize==128 (Linear(1,1)) head is fused")
    out = matmul_affine_act(a, bmat, head_w.reshape(1), head_b,
                            act="sigmoid", out_dtype=jnp.float32)
    return out.reshape(-1, 1)                                # output.view(-1, 1)


if __name__ == "__main__":
    kg = KeyGen(0)
    nc, ndf, image_size = 3, 8, 128          # imageSize==128 -> Linear(1,1) head
    params = make_netD_params(kg, nc, ndf, image_size)
    # The discriminator consumes the 64x64 inpainting patch; that is what makes
    # the final 4x4/1/0 conv output 1x1 and the Linear(1,1) head well-formed.
    x = jax.random.normal(jax.random.PRNGKey(0), (2, nc, 64, 64), jnp.float32)

    fwd = jax.jit(netD_forward)
    out = fwd(params, x)
    jax.block_until_ready(out)

    assert out.shape == (2, 1), out.shape
    assert bool(jnp.all(jnp.isfinite(out)))
    assert bool(jnp.all((out >= 0.0) & (out <= 1.0)))
    print("KERNEL_OK")
</pallas_src>

<mosaic_0001>
module attributes {stable_mosaic.version = 11 : i64} {
  func.func @_conv_tap_kernel(%arg0: i32, %arg1: memref<1x1056x32xbf16, #tpu.memory_space<vmem>>, %arg2: memref<1x1056x32xbf16, #tpu.memory_space<vmem>>, %arg3: memref<4x32x128xbf16, #tpu.memory_space<vmem>>, %arg4: memref<1x128xf32, #tpu.memory_space<vmem>>, %arg5: memref<1x128xf32, #tpu.memory_space<vmem>>, %arg6: memref<1x1024x128xbf16, #tpu.memory_space<vmem>>) attributes {dimension_semantics = [#tpu.dimension_semantics<parallel>], iteration_bounds = array<i64: 2>, scalar_prefetch = 0 : i64, scratch_operands = 0 : i64, tpu.core_type = #tpu.core_type<tc>, window_params = [{transform_indices = @transform_0, window_bounds = array<i64: 1, 1056, 32>}, {transform_indices = @transform_1, window_bounds = array<i64: 1, 1056, 32>}, {pipeline_mode = #tpu.pipeline_mode<synchronous>, transform_indices = @transform_2, window_bounds = array<i64: 4, 32, 128>}, {pipeline_mode = #tpu.pipeline_mode<synchronous>, transform_indices = @transform_3, window_bounds = array<i64: 1, 128>}, {pipeline_mode = #tpu.pipeline_mode<synchronous>, transform_indices = @transform_4, window_bounds = array<i64: 1, 128>}, {transform_indices = @transform_5, window_bounds = array<i64: 1, 1024, 128>}]} {
    %cst = arith.constant 0.000000e+00 : f32
    %0 = vector.broadcast %cst : f32 to vector<1024x128xf32>
    %c0 = arith.constant 0 : index
    %c0_0 = arith.constant 0 : index
    %c0_1 = arith.constant 0 : index
    %1 = vector.load %arg1[%c0, %c0_0, %c0_1] : memref<1x1056x32xbf16, #tpu.memory_space<vmem>>, vector<1x1024x32xbf16>
    %2 = vector.shape_cast %1 : vector<1x1024x32xbf16> to vector<1024x32xbf16>
    %c0_2 = arith.constant 0 : index
    %c0_3 = arith.constant 0 : index
    %c0_4 = arith.constant 0 : index
    %3 = vector.load %arg3[%c0_2, %c0_3, %c0_4] : memref<4x32x128xbf16, #tpu.memory_space<vmem>>, vector<1x32x128xbf16>
    %4 = vector.shape_cast %3 : vector<1x32x128xbf16> to vector<32x128xbf16>
    %cst_5 = arith.constant dense<0.000000e+00> : vector<1024x128xf32>
    %5 = tpu.matmul %2, %4, %cst_5 {dimension_numbers = #tpu.dot_dimension_numbers<[1], [0], [0], [1], [0, 0, 1, 1], [], []>} : vector<1024x32xbf16>, vector<32x128xbf16>, vector<1024x128xf32> -> vector<1024x128xf32>
    %6 = arith.addf %0, %5 : vector<1024x128xf32>
    %c0_6 = arith.constant 0 : index
    %c0_7 = arith.constant 0 : index
    %c0_8 = arith.constant 0 : index
    %7 = vector.load %arg2[%c0_6, %c0_7, %c0_8] : memref<1x1056x32xbf16, #tpu.memory_space<vmem>>, vector<1x1024x32xbf16>
    %8 = vector.shape_cast %7 : vector<1x1024x32xbf16> to vector<1024x32xbf16>
    %c1 = arith.constant 1 : index
    %c0_9 = arith.constant 0 : index
    %c0_10 = arith.constant 0 : index
    %9 = vector.load %arg3[%c1, %c0_9, %c0_10] : memref<4x32x128xbf16, #tpu.memory_space<vmem>>, vector<1x32x128xbf16>
    %10 = vector.shape_cast %9 : vector<1x32x128xbf16> to vector<32x128xbf16>
    %cst_11 = arith.constant dense<0.000000e+00> : vector<1024x128xf32>
    %11 = tpu.matmul %8, %10, %cst_11 {dimension_numbers = #tpu.dot_dimension_numbers<[1], [0], [0], [1], [0, 0, 1, 1], [], []>} : vector<1024x32xbf16>, vector<32x128xbf16>, vector<1024x128xf32> -> vector<1024x128xf32>
    %12 = arith.addf %6, %11 : vector<1024x128xf32>
    %c0_12 = arith.constant 0 : index
    %c32 = arith.constant 32 : index
    %c0_13 = arith.constant 0 : index
    %13 = vector.load %arg1[%c0_12, %c32, %c0_13] : memref<1x1056x32xbf16, #tpu.memory_space<vmem>>, vector<1x1024x32xbf16>
    %14 = vector.shape_cast %13 : vector<1x1024x32xbf16> to vector<1024x32xbf16>
    %c2 = arith.constant 2 : index
    %c0_14 = arith.constant 0 : index
    %c0_15 = arith.constant 0 : index
    %15 = vector.load %arg3[%c2, %c0_14, %c0_15] : memref<4x32x128xbf16, #tpu.memory_space<vmem>>, vector<1x32x128xbf16>
    %16 = vector.shape_cast %15 : vector<1x32x128xbf16> to vector<32x128xbf16>
    %cst_16 = arith.constant dense<0.000000e+00> : vector<1024x128xf32>
    %17 = tpu.matmul %14, %16, %cst_16 {dimension_numbers = #tpu.dot_dimension_numbers<[1], [0], [0], [1], [0, 0, 1, 1], [], []>} : vector<1024x32xbf16>, vector<32x128xbf16>, vector<1024x128xf32> -> vector<1024x128xf32>
    %18 = arith.addf %12, %17 : vector<1024x128xf32>
    %c0_17 = arith.constant 0 : index
    %c32_18 = arith.constant 32 : index
    %c0_19 = arith.constant 0 : index
    %19 = vector.load %arg2[%c0_17, %c32_18, %c0_19] : memref<1x1056x32xbf16, #tpu.memory_space<vmem>>, vector<1x1024x32xbf16>
    %20 = vector.shape_cast %19 : vector<1x1024x32xbf16> to vector<1024x32xbf16>
    %c3 = arith.constant 3 : index
    %c0_20 = arith.constant 0 : index
    %c0_21 = arith.constant 0 : index
    %21 = vector.load %arg3[%c3, %c0_20, %c0_21] : memref<4x32x128xbf16, #tpu.memory_space<vmem>>, vector<1x32x128xbf16>
    %22 = vector.shape_cast %21 : vector<1x32x128xbf16> to vector<32x128xbf16>
    %cst_22 = arith.constant dense<0.000000e+00> : vector<1024x128xf32>
    %23 = tpu.matmul %20, %22, %cst_22 {dimension_numbers = #tpu.dot_dimension_numbers<[1], [0], [0], [1], [0, 0, 1, 1], [], []>} : vector<1024x32xbf16>, vector<32x128xbf16>, vector<1024x128xf32> -> vector<1024x128xf32>
    %24 = arith.addf %18, %23 : vector<1024x128xf32>
    %c0_23 = arith.constant 0 : index
    %c0_24 = arith.constant 0 : index
    %25 = vector.load %arg4[%c0_23, %c0_24] : memref<1x128xf32, #tpu.memory_space<vmem>>, vector<1x128xf32>
    %26 = vector.broadcast %25 : vector<1x128xf32> to vector<1024x128xf32>
    %27 = arith.mulf %24, %26 : vector<1024x128xf32>
    %c0_25 = arith.constant 0 : index
    %c0_26 = arith.constant 0 : index
    %28 = vector.load %arg5[%c0_25, %c0_26] : memref<1x128xf32, #tpu.memory_space<vmem>>, vector<1x128xf32>
    %29 = vector.broadcast %28 : vector<1x128xf32> to vector<1024x128xf32>
    %30 = arith.addf %27, %29 : vector<1024x128xf32>
    %cst_27 = arith.constant 0.000000e+00 : f32
    %31 = vector.broadcast %cst_27 : f32 to vector<1024x128xf32>
    %32 = arith.cmpf ogt, %30, %31 : vector<1024x128xf32>
    %cst_28 = arith.constant 2.000000e-01 : f32
    %33 = vector.broadcast %cst_28 : f32 to vector<1024x128xf32>
    %34 = arith.mulf %33, %30 : vector<1024x128xf32>
    %35 = arith.select %32, %30, %34 : vector<1024x128xi1>, vector<1024x128xf32>
    %36 = arith.truncf %35 : vector<1024x128xf32> to vector<1024x128xbf16>
    %c0_29 = arith.constant 0 : index
    %c0_30 = arith.constant 0 : index
    %c0_31 = arith.constant 0 : index
    %37 = vector.load %arg6[%c0_29, %c0_30, %c0_31] : memref<1x1024x128xbf16, #tpu.memory_space<vmem>>, vector<1x1024x128xbf16>
    %38 = vector.shape_cast %37 : vector<1x1024x128xbf16> to vector<1024x128xbf16>
    %39 = vector.shape_cast %36 : vector<1024x128xbf16> to vector<1x1024x128xbf16>
    tpu.vector_store %arg6[%c0_29, %c0_30, %c0_31], %39 {strides = array<i32>} : memref<1x1024x128xbf16, #tpu.memory_space<vmem>>, vector<1x1024x128xbf16>,
    return
  }
  func.func @transform_0(%arg0: i32) -> (i32, i32, i32) {
    %c0_i32 = arith.constant 0 : i32
    %c0_i32_0 = arith.constant 0 : i32
    %c0_i32_1 = arith.constant 0 : i32
    return %arg0, %c0_i32, %c0_i32_0 : i32, i32, i32
  }
  func.func @transform_1(%arg0: i32) -> (i32, i32, i32) {
    %c0_i32 = arith.constant 0 : i32
    %c0_i32_0 = arith.constant 0 : i32
    %c0_i32_1 = arith.constant 0 : i32
    return %arg0, %c0_i32, %c0_i32_0 : i32, i32, i32
  }
  func.func @transform_2(%arg0: i32) -> (i32, i32, i32) {
    %c0_i32 = arith.constant 0 : i32
    %c0_i32_0 = arith.constant 0 : i32
    %c0_i32_1 = arith.constant 0 : i32
    %c0_i32_2 = arith.constant 0 : i32
    return %c0_i32, %c0_i32_0, %c0_i32_1 : i32, i32, i32
  }
  func.func @transform_3(%arg0: i32) -> (i32, i32) {
    %c0_i32 = arith.constant 0 : i32
    %c0_i32_0 = arith.constant 0 : i32
    %c0_i32_1 = arith.constant 0 : i32
    return %c0_i32, %c0_i32_0 : i32, i32
  }
  func.func @transform_4(%arg0: i32) -> (i32, i32) {
    %c0_i32 = arith.constant 0 : i32
    %c0_i32_0 = arith.constant 0 : i32
    %c0_i32_1 = arith.constant 0 : i32
    return %c0_i32, %c0_i32_0 : i32, i32
  }
  func.func @transform_5(%arg0: i32) -> (i32, i32, i32) {
    %c0_i32 = arith.constant 0 : i32
    %c0_i32_0 = arith.constant 0 : i32
    %c0_i32_1 = arith.constant 0 : i32
    return %arg0, %c0_i32, %c0_i32_0 : i32, i32, i32
  }
}

module attributes {stable_mosaic.version = 11 : i64} {
  func.func @_conv_tap_kernel(%arg0: i32, %arg1: memref<1x272x32xbf16, #tpu.memory_space<vmem>>, %arg2: memref<1x272x32xbf16, #tpu.memory_space<vmem>>, %arg3: memref<4x32x128xbf16, #tpu.memory_space<vmem>>, %arg4: memref<1x128xf32, #tpu.memory_space<vmem>>, %arg5: memref<1x128xf32, #tpu.memory_space<vmem>>, %arg6: memref<1x256x128xbf16, #tpu.memory_space<vmem>>) attributes {dimension_semantics = [#tpu.dimension_semantics<parallel>], iteration_bounds = array<i64: 2>, scalar_prefetch = 0 : i64, scratch_operands = 0 : i64, tpu.core_type = #tpu.core_type<tc>, window_params = [{transform_indices = @transform_0, window_bounds = array<i64: 1, 272, 32>}, {transform_indices = @transform_1, window_bounds = array<i64: 1, 272, 32>}, {pipeline_mode = #tpu.pipeline_mode<synchronous>, transform_indices = @transform_2, window_bounds = array<i64: 4, 32, 128>}, {pipeline_mode = #tpu.pipeline_mode<synchronous>, transform_indices = @transform_3, window_bounds = array<i64: 1, 128>}, {pipeline_mode = #tpu.pipeline_mode<synchronous>, transform_indices = @transform_4, window_bounds = array<i64: 1, 128>}, {transform_indices = @transform_5, window_bounds = array<i64: 1, 256, 128>}]} {
    %cst = arith.constant 0.000000e+00 : f32
    %0 = vector.broadcast %cst : f32 to vector<256x128xf32>
    %c0 = arith.constant 0 : index
    %c0_0 = arith.constant 0 : index
    %c0_1 = arith.constant 0 : index
    %1 = vector.load %arg1[%c0, %c0_0, %c0_1] : memref<1x272x32xbf16, #tpu.memory_space<vmem>>, vector<1x256x32xbf16>
    %2 = vector.shape_cast %1 : vector<1x256x32xbf16> to vector<256x32xbf16>
    %c0_2 = arith.constant 0 : index
    %c0_3 = arith.constant 0 : index
    %c0_4 = arith.constant 0 : index
    %3 = vector.load %arg3[%c0_2, %c0_3, %c0_4] : memref<4x32x128xbf16, #tpu.memory_space<vmem>>, vector<1x32x128xbf16>
    %4 = vector.shape_cast %3 : vector<1x32x128xbf16> to vector<32x128xbf16>
    %cst_5 = arith.constant dense<0.000000e+00> : vector<256x128xf32>
    %5 = tpu.matmul %2, %4, %cst_5 {dimension_numbers = #tpu.dot_dimension_numbers<[1], [0], [0], [1], [0, 0, 1, 1], [], []>} : vector<256x32xbf16>, vector<32x128xbf16>, vector<256x128xf32> -> vector<256x128xf32>
    %6 = arith.addf %0, %5 : vector<256x128xf32>
    %c0_6 = arith.constant 0 : index
    %c0_7 = arith.constant 0 : index
    %c0_8 = arith.constant 0 : index
    %7 = vector.load %arg2[%c0_6, %c0_7, %c0_8] : memref<1x272x32xbf16, #tpu.memory_space<vmem>>, vector<1x256x32xbf16>
    %8 = vector.shape_cast %7 : vector<1x256x32xbf16> to vector<256x32xbf16>
    %c1 = arith.constant 1 : index
    %c0_9 = arith.constant 0 : index
    %c0_10 = arith.constant 0 : index
    %9 = vector.load %arg3[%c1, %c0_9, %c0_10] : memref<4x32x128xbf16, #tpu.memory_space<vmem>>, vector<1x32x128xbf16>
    %10 = vector.shape_cast %9 : vector<1x32x128xbf16> to vector<32x128xbf16>
    %cst_11 = arith.constant dense<0.000000e+00> : vector<256x128xf32>
    %11 = tpu.matmul %8, %10, %cst_11 {dimension_numbers = #tpu.dot_dimension_numbers<[1], [0], [0], [1], [0, 0, 1, 1], [], []>} : vector<256x32xbf16>, vector<32x128xbf16>, vector<256x128xf32> -> vector<256x128xf32>
    %12 = arith.addf %6, %11 : vector<256x128xf32>
    %c0_12 = arith.constant 0 : index
    %c16 = arith.constant 16 : index
    %c0_13 = arith.constant 0 : index
    %13 = vector.load %arg1[%c0_12, %c16, %c0_13] : memref<1x272x32xbf16, #tpu.memory_space<vmem>>, vector<1x256x32xbf16>
    %14 = vector.shape_cast %13 : vector<1x256x32xbf16> to vector<256x32xbf16>
    %c2 = arith.constant 2 : index
    %c0_14 = arith.constant 0 : index
    %c0_15 = arith.constant 0 : index
    %15 = vector.load %arg3[%c2, %c0_14, %c0_15] : memref<4x32x128xbf16, #tpu.memory_space<vmem>>, vector<1x32x128xbf16>
    %16 = vector.shape_cast %15 : vector<1x32x128xbf16> to vector<32x128xbf16>
    %cst_16 = arith.constant dense<0.000000e+00> : vector<256x128xf32>
    %17 = tpu.matmul %14, %16, %cst_16 {dimension_numbers = #tpu.dot_dimension_numbers<[1], [0], [0], [1], [0, 0, 1, 1], [], []>} : vector<256x32xbf16>, vector<32x128xbf16>, vector<256x128xf32> -> vector<256x128xf32>
    %18 = arith.addf %12, %17 : vector<256x128xf32>
    %c0_17 = arith.constant 0 : index
    %c16_18 = arith.constant 16 : index
    %c0_19 = arith.constant 0 : index
    %19 = vector.load %arg2[%c0_17, %c16_18, %c0_19] : memref<1x272x32xbf16, #tpu.memory_space<vmem>>, vector<1x256x32xbf16>
    %20 = vector.shape_cast %19 : vector<1x256x32xbf16> to vector<256x32xbf16>
    %c3 = arith.constant 3 : index
    %c0_20 = arith.constant 0 : index
    %c0_21 = arith.constant 0 : index
    %21 = vector.load %arg3[%c3, %c0_20, %c0_21] : memref<4x32x128xbf16, #tpu.memory_space<vmem>>, vector<1x32x128xbf16>
    %22 = vector.shape_cast %21 : vector<1x32x128xbf16> to vector<32x128xbf16>
    %cst_22 = arith.constant dense<0.000000e+00> : vector<256x128xf32>
    %23 = tpu.matmul %20, %22, %cst_22 {dimension_numbers = #tpu.dot_dimension_numbers<[1], [0], [0], [1], [0, 0, 1, 1], [], []>} : vector<256x32xbf16>, vector<32x128xbf16>, vector<256x128xf32> -> vector<256x128xf32>
    %24 = arith.addf %18, %23 : vector<256x128xf32>
    %c0_23 = arith.constant 0 : index
    %c0_24 = arith.constant 0 : index
    %25 = vector.load %arg4[%c0_23, %c0_24] : memref<1x128xf32, #tpu.memory_space<vmem>>, vector<1x128xf32>
    %26 = vector.broadcast %25 : vector<1x128xf32> to vector<256x128xf32>
    %27 = arith.mulf %24, %26 : vector<256x128xf32>
    %c0_25 = arith.constant 0 : index
    %c0_26 = arith.constant 0 : index
    %28 = vector.load %arg5[%c0_25, %c0_26] : memref<1x128xf32, #tpu.memory_space<vmem>>, vector<1x128xf32>
    %29 = vector.broadcast %28 : vector<1x128xf32> to vector<256x128xf32>
    %30 = arith.addf %27, %29 : vector<256x128xf32>
    %cst_27 = arith.constant 0.000000e+00 : f32
    %31 = vector.broadcast %cst_27 : f32 to vector<256x128xf32>
    %32 = arith.cmpf ogt, %30, %31 : vector<256x128xf32>
    %cst_28 = arith.constant 2.000000e-01 : f32
    %33 = vector.broadcast %cst_28 : f32 to vector<256x128xf32>
    %34 = arith.mulf %33, %30 : vector<256x128xf32>
    %35 = arith.select %32, %30, %34 : vector<256x128xi1>, vector<256x128xf32>
    %36 = arith.truncf %35 : vector<256x128xf32> to vector<256x128xbf16>
    %c0_29 = arith.constant 0 : index
    %c0_30 = arith.constant 0 : index
    %c0_31 = arith.constant 0 : index
    %37 = vector.load %arg6[%c0_29, %c0_30, %c0_31] : memref<1x256x128xbf16, #tpu.memory_space<vmem>>, vector<1x256x128xbf16>
    %38 = vector.shape_cast %37 : vector<1x256x128xbf16> to vector<256x128xbf16>
    %39 = vector.shape_cast %36 : vector<256x128xbf16> to vector<1x256x128xbf16>
    tpu.vector_store %arg6[%c0_29, %c0_30, %c0_31], %39 {strides = array<i32>} : memref<1x256x128xbf16, #tpu.memory_space<vmem>>, vector<1x256x128xbf16>,
    return
  }
  func.func @transform_0(%arg0: i32) -> (i32, i32, i32) {
    %c0_i32 = arith.constant 0 : i32
    %c0_i32_0 = arith.constant 0 : i32
    %c0_i32_1 = arith.constant 0 : i32
    return %arg0, %c0_i32, %c0_i32_0 : i32, i32, i32
  }
  func.func @transform_1(%arg0: i32) -> (i32, i32, i32) {
    %c0_i32 = arith.constant 0 : i32
    %c0_i32_0 = arith.constant 0 : i32
    %c0_i32_1 = arith.constant 0 : i32
    return %arg0, %c0_i32, %c0_i32_0 : i32, i32, i32
  }
  func.func @transform_2(%arg0: i32) -> (i32, i32, i32) {
    %c0_i32 = arith.constant 0 : i32
    %c0_i32_0 = arith.constant 0 : i32
    %c0_i32_1 = arith.constant 0 : i32
    %c0_i32_2 = arith.constant 0 : i32
    return %c0_i32, %c0_i32_0, %c0_i32_1 : i32, i32, i32
  }
  func.func @transform_3(%arg0: i32) -> (i32, i32) {
    %c0_i32 = arith.constant 0 : i32
    %c0_i32_0 = arith.constant 0 : i32
    %c0_i32_1 = arith.constant 0 : i32
    return %c0_i32, %c0_i32_0 : i32, i32
  }
  func.func @transform_4(%arg0: i32) -> (i32, i32) {
    %c0_i32 = arith.constant 0 : i32
    %c0_i32_0 = arith.constant 0 : i32
    %c0_i32_1 = arith.constant 0 : i32
    return %c0_i32, %c0_i32_0 : i32, i32
  }
  func.func @transform_5(%arg0: i32) -> (i32, i32, i32) {
    %c0_i32 = arith.constant 0 : i32
    %c0_i32_0 = arith.constant 0 : i32
    %c0_i32_1 = arith.constant 0 : i32
    return %arg0, %c0_i32, %c0_i32_0 : i32, i32, i32
  }
}

module attributes {stable_mosaic.version = 11 : i64} {
  func.func @_mm_epilogue_kernel(%arg0: i32, %arg1: memref<128x256xbf16, #tpu.memory_space<vmem>>, %arg2: memref<256x128xbf16, #tpu.memory_space<vmem>>, %arg3: memref<1x128xf32, #tpu.memory_space<vmem>>, %arg4: memref<1x128xf32, #tpu.memory_space<vmem>>, %arg5: memref<128x128xbf16, #tpu.memory_space<vmem>>) attributes {dimension_semantics = [#tpu.dimension_semantics<parallel>], iteration_bounds = array<i64: 1>, scalar_prefetch = 0 : i64, scratch_operands = 0 : i64, tpu.core_type = #tpu.core_type<tc>, window_params = [{transform_indices = @transform_0, window_bounds = array<i64: 128, 256>}, {pipeline_mode = #tpu.pipeline_mode<synchronous>, transform_indices = @transform_1, window_bounds = array<i64: 256, 128>}, {pipeline_mode = #tpu.pipeline_mode<synchronous>, transform_indices = @transform_2, window_bounds = array<i64: 1, 128>}, {pipeline_mode = #tpu.pipeline_mode<synchronous>, transform_indices = @transform_3, window_bounds = array<i64: 1, 128>}, {transform_indices = @transform_4, window_bounds = array<i64: 128, 128>}]} {
    %c0 = arith.constant 0 : index
    %c0_0 = arith.constant 0 : index
    %0 = vector.load %arg1[%c0, %c0_0] : memref<128x256xbf16, #tpu.memory_space<vmem>>, vector<128x256xbf16>
    %c0_1 = arith.constant 0 : index
    %c0_2 = arith.constant 0 : index
    %1 = vector.load %arg2[%c0_1, %c0_2] : memref<256x128xbf16, #tpu.memory_space<vmem>>, vector<256x128xbf16>
    %cst = arith.constant dense<0.000000e+00> : vector<128x128xf32>
    %2 = tpu.matmul %0, %1, %cst {dimension_numbers = #tpu.dot_dimension_numbers<[1], [0], [0], [1], [0, 0, 1, 1], [], []>} : vector<128x256xbf16>, vector<256x128xbf16>, vector<128x128xf32> -> vector<128x128xf32>
    %c0_3 = arith.constant 0 : index
    %c0_4 = arith.constant 0 : index
    %3 = vector.load %arg3[%c0_3, %c0_4] : memref<1x128xf32, #tpu.memory_space<vmem>>, vector<1x128xf32>
    %4 = vector.broadcast %3 : vector<1x128xf32> to vector<128x128xf32>
    %5 = arith.mulf %2, %4 : vector<128x128xf32>
    %c0_5 = arith.constant 0 : index
    %c0_6 = arith.constant 0 : index
    %6 = vector.load %arg4[%c0_5, %c0_6] : memref<1x128xf32, #tpu.memory_space<vmem>>, vector<1x128xf32>
    %7 = vector.broadcast %6 : vector<1x128xf32> to vector<128x128xf32>
    %8 = arith.addf %5, %7 : vector<128x128xf32>
    %cst_7 = arith.constant 0.000000e+00 : f32
    %9 = vector.broadcast %cst_7 : f32 to vector<128x128xf32>
    %10 = arith.cmpf ogt, %8, %9 : vector<128x128xf32>
    %cst_8 = arith.constant 2.000000e-01 : f32
    %11 = vector.broadcast %cst_8 : f32 to vector<128x128xf32>
    %12 = arith.mulf %11, %8 : vector<128x128xf32>
    %13 = arith.select %10, %8, %12 : vector<128x128xi1>, vector<128x128xf32>
    %14 = arith.truncf %13 : vector<128x128xf32> to vector<128x128xbf16>
    %c0_9 = arith.constant 0 : index
    %c0_10 = arith.constant 0 : index
    %15 = vector.load %arg5[%c0_9, %c0_10] : memref<128x128xbf16, #tpu.memory_space<vmem>>, vector<128x128xbf16>
    tpu.vector_store %arg5[%c0_9, %c0_10], %14 {strides = array<i32>} : memref<128x128xbf16, #tpu.memory_space<vmem>>, vector<128x128xbf16>,
    return
  }
  func.func @transform_0(%arg0: i32) -> (i32, i32) {
    %c0_i32 = arith.constant 0 : i32
    %c0_i32_0 = arith.constant 0 : i32
    return %arg0, %c0_i32 : i32, i32
  }
  func.func @transform_1(%arg0: i32) -> (i32, i32) {
    %c0_i32 = arith.constant 0 : i32
    %c0_i32_0 = arith.constant 0 : i32
    %c0_i32_1 = arith.constant 0 : i32
    return %c0_i32, %c0_i32_0 : i32, i32
  }
  func.func @transform_2(%arg0: i32) -> (i32, i32) {
    %c0_i32 = arith.constant 0 : i32
    %c0_i32_0 = arith.constant 0 : i32
    %c0_i32_1 = arith.constant 0 : i32
    return %c0_i32, %c0_i32_0 : i32, i32
  }
  func.func @transform_3(%arg0: i32) -> (i32, i32) {
    %c0_i32 = arith.constant 0 : i32
    %c0_i32_0 = arith.constant 0 : i32
    %c0_i32_1 = arith.constant 0 : i32
    return %c0_i32, %c0_i32_0 : i32, i32
  }
  func.func @transform_4(%arg0: i32) -> (i32, i32) {
    %c0_i32 = arith.constant 0 : i32
    %c0_i32_0 = arith.constant 0 : i32
    return %arg0, %c0_i32 : i32, i32
  }
}

module attributes {stable_mosaic.version = 11 : i64} {
  func.func @_mm_epilogue_kernel(%arg0: i32, %arg1: memref<32x512xbf16, #tpu.memory_space<vmem>>, %arg2: memref<512x128xbf16, #tpu.memory_space<vmem>>, %arg3: memref<1x128xf32, #tpu.memory_space<vmem>>, %arg4: memref<1x128xf32, #tpu.memory_space<vmem>>, %arg5: memref<32x128xbf16, #tpu.memory_space<vmem>>) attributes {dimension_semantics = [#tpu.dimension_semantics<parallel>], iteration_bounds = array<i64: 1>, scalar_prefetch = 0 : i64, scratch_operands = 0 : i64, tpu.core_type = #tpu.core_type<tc>, window_params = [{transform_indices = @transform_0, window_bounds = array<i64: 32, 512>}, {pipeline_mode = #tpu.pipeline_mode<synchronous>, transform_indices = @transform_1, window_bounds = array<i64: 512, 128>}, {pipeline_mode = #tpu.pipeline_mode<synchronous>, transform_indices = @transform_2, window_bounds = array<i64: 1, 128>}, {pipeline_mode = #tpu.pipeline_mode<synchronous>, transform_indices = @transform_3, window_bounds = array<i64: 1, 128>}, {transform_indices = @transform_4, window_bounds = array<i64: 32, 128>}]} {
    %c0 = arith.constant 0 : index
    %c0_0 = arith.constant 0 : index
    %0 = vector.load %arg1[%c0, %c0_0] : memref<32x512xbf16, #tpu.memory_space<vmem>>, vector<32x512xbf16>
    %c0_1 = arith.constant 0 : index
    %c0_2 = arith.constant 0 : index
    %1 = vector.load %arg2[%c0_1, %c0_2] : memref<512x128xbf16, #tpu.memory_space<vmem>>, vector<512x128xbf16>
    %cst = arith.constant dense<0.000000e+00> : vector<32x128xf32>
    %2 = tpu.matmul %0, %1, %cst {dimension_numbers = #tpu.dot_dimension_numbers<[1], [0], [0], [1], [0, 0, 1, 1], [], []>} : vector<32x512xbf16>, vector<512x128xbf16>, vector<32x128xf32> -> vector<32x128xf32>
    %c0_3 = arith.constant 0 : index
    %c0_4 = arith.constant 0 : index
    %3 = vector.load %arg3[%c0_3, %c0_4] : memref<1x128xf32, #tpu.memory_space<vmem>>, vector<1x128xf32>
    %4 = vector.broadcast %3 : vector<1x128xf32> to vector<32x128xf32>
    %5 = arith.mulf %2, %4 : vector<32x128xf32>
    %c0_5 = arith.constant 0 : index
    %c0_6 = arith.constant 0 : index
    %6 = vector.load %arg4[%c0_5, %c0_6] : memref<1x128xf32, #tpu.memory_space<vmem>>, vector<1x128xf32>
    %7 = vector.broadcast %6 : vector<1x128xf32> to vector<32x128xf32>
    %8 = arith.addf %5, %7 : vector<32x128xf32>
    %cst_7 = arith.constant 0.000000e+00 : f32
    %9 = vector.broadcast %cst_7 : f32 to vector<32x128xf32>
    %10 = arith.cmpf ogt, %8, %9 : vector<32x128xf32>
    %cst_8 = arith.constant 2.000000e-01 : f32
    %11 = vector.broadcast %cst_8 : f32 to vector<32x128xf32>
    %12 = arith.mulf %11, %8 : vector<32x128xf32>
    %13 = arith.select %10, %8, %12 : vector<32x128xi1>, vector<32x128xf32>
    %14 = arith.truncf %13 : vector<32x128xf32> to vector<32x128xbf16>
    %c0_9 = arith.constant 0 : index
    %c0_10 = arith.constant 0 : index
    %15 = vector.load %arg5[%c0_9, %c0_10] : memref<32x128xbf16, #tpu.memory_space<vmem>>, vector<32x128xbf16>
    tpu.vector_store %arg5[%c0_9, %c0_10], %14 {strides = array<i32>} : memref<32x128xbf16, #tpu.memory_space<vmem>>, vector<32x128xbf16>,
    return
  }
  func.func @transform_0(%arg0: i32) -> (i32, i32) {
    %c0_i32 = arith.constant 0 : i32
    %c0_i32_0 = arith.constant 0 : i32
    return %arg0, %c0_i32 : i32, i32
  }
  func.func @transform_1(%arg0: i32) -> (i32, i32) {
    %c0_i32 = arith.constant 0 : i32
    %c0_i32_0 = arith.constant 0 : i32
    %c0_i32_1 = arith.constant 0 : i32
    return %c0_i32, %c0_i32_0 : i32, i32
  }
  func.func @transform_2(%arg0: i32) -> (i32, i32) {
    %c0_i32 = arith.constant 0 : i32
    %c0_i32_0 = arith.constant 0 : i32
    %c0_i32_1 = arith.constant 0 : i32
    return %c0_i32, %c0_i32_0 : i32, i32
  }
  func.func @transform_3(%arg0: i32) -> (i32, i32) {
    %c0_i32 = arith.constant 0 : i32
    %c0_i32_0 = arith.constant 0 : i32
    %c0_i32_1 = arith.constant 0 : i32
    return %c0_i32, %c0_i32_0 : i32, i32
  }
  func.func @transform_4(%arg0: i32) -> (i32, i32) {
    %c0_i32 = arith.constant 0 : i32
    %c0_i32_0 = arith.constant 0 : i32
    return %arg0, %c0_i32 : i32, i32
  }
}

module attributes {stable_mosaic.version = 11 : i64} {
  func.func @_mm_epilogue_kernel(%arg0: i32, %arg1: memref<8x1024xbf16, #tpu.memory_space<vmem>>, %arg2: memref<1024x128xbf16, #tpu.memory_space<vmem>>, %arg3: memref<1x128xf32, #tpu.memory_space<vmem>>, %arg4: memref<1x128xf32, #tpu.memory_space<vmem>>, %arg5: memref<8x128xf32, #tpu.memory_space<vmem>>) attributes {dimension_semantics = [#tpu.dimension_semantics<parallel>], iteration_bounds = array<i64: 1>, scalar_prefetch = 0 : i64, scratch_operands = 0 : i64, tpu.core_type = #tpu.core_type<tc>, window_params = [{transform_indices = @transform_0, window_bounds = array<i64: 8, 1024>}, {pipeline_mode = #tpu.pipeline_mode<synchronous>, transform_indices = @transform_1, window_bounds = array<i64: 1024, 128>}, {pipeline_mode = #tpu.pipeline_mode<synchronous>, transform_indices = @transform_2, window_bounds = array<i64: 1, 128>}, {pipeline_mode = #tpu.pipeline_mode<synchronous>, transform_indices = @transform_3, window_bounds = array<i64: 1, 128>}, {transform_indices = @transform_4, window_bounds = array<i64: 8, 128>}]} {
    %c0 = arith.constant 0 : index
    %c0_0 = arith.constant 0 : index
    %0 = vector.load %arg1[%c0, %c0_0] : memref<8x1024xbf16, #tpu.memory_space<vmem>>, vector<8x1024xbf16>
    %c0_1 = arith.constant 0 : index
    %c0_2 = arith.constant 0 : index
    %1 = vector.load %arg2[%c0_1, %c0_2] : memref<1024x128xbf16, #tpu.memory_space<vmem>>, vector<1024x128xbf16>
    %cst = arith.constant dense<0.000000e+00> : vector<8x128xf32>
    %2 = tpu.matmul %0, %1, %cst {dimension_numbers = #tpu.dot_dimension_numbers<[1], [0], [0], [1], [0, 0, 1, 1], [], []>} : vector<8x1024xbf16>, vector<1024x128xbf16>, vector<8x128xf32> -> vector<8x128xf32>
    %c0_3 = arith.constant 0 : index
    %c0_4 = arith.constant 0 : index
    %3 = vector.load %arg3[%c0_3, %c0_4] : memref<1x128xf32, #tpu.memory_space<vmem>>, vector<1x128xf32>
    %4 = vector.broadcast %3 : vector<1x128xf32> to vector<8x128xf32>
    %5 = arith.mulf %2, %4 : vector<8x128xf32>
    %c0_5 = arith.constant 0 : index
    %c0_6 = arith.constant 0 : index
    %6 = vector.load %arg4[%c0_5, %c0_6] : memref<1x128xf32, #tpu.memory_space<vmem>>, vector<1x128xf32>
    %7 = vector.broadcast %6 : vector<1x128xf32> to vector<8x128xf32>
    %8 = arith.addf %5, %7 : vector<8x128xf32>
    %cst_7 = arith.constant 0.000000e+00 : f32
    %9 = vector.broadcast %cst_7 : f32 to vector<8x128xf32>
    %10 = arith.subf %9, %8 : vector<8x128xf32>
    %11 = math.exp %10 : vector<8x128xf32>
    %cst_8 = arith.constant 1.000000e+00 : f32
    %12 = vector.broadcast %cst_8 : f32 to vector<8x128xf32>
    %13 = arith.addf %12, %11 : vector<8x128xf32>
    %cst_9 = arith.constant 1.000000e+00 : f32
    %14 = vector.broadcast %cst_9 : f32 to vector<8x128xf32>
    %15 = arith.divf %14, %13 : vector<8x128xf32>
    %c0_10 = arith.constant 0 : index
    %c0_11 = arith.constant 0 : index
    %16 = vector.load %arg5[%c0_10, %c0_11] : memref<8x128xf32, #tpu.memory_space<vmem>>, vector<8x128xf32>
    tpu.vector_store %arg5[%c0_10, %c0_11], %15 {strides = array<i32>} : memref<8x128xf32, #tpu.memory_space<vmem>>, vector<8x128xf32>,
    return
  }
  func.func @transform_0(%arg0: i32) -> (i32, i32) {
    %c0_i32 = arith.constant 0 : i32
    %c0_i32_0 = arith.constant 0 : i32
    return %arg0, %c0_i32 : i32, i32
  }
  func.func @transform_1(%arg0: i32) -> (i32, i32) {
    %c0_i32 = arith.constant 0 : i32
    %c0_i32_0 = arith.constant 0 : i32
    %c0_i32_1 = arith.constant 0 : i32
    return %c0_i32, %c0_i32_0 : i32, i32
  }
  func.func @transform_2(%arg0: i32) -> (i32, i32) {
    %c0_i32 = arith.constant 0 : i32
    %c0_i32_0 = arith.constant 0 : i32
    %c0_i32_1 = arith.constant 0 : i32
    return %c0_i32, %c0_i32_0 : i32, i32
  }
  func.func @transform_3(%arg0: i32) -> (i32, i32) {
    %c0_i32 = arith.constant 0 : i32
    %c0_i32_0 = arith.constant 0 : i32
    %c0_i32_1 = arith.constant 0 : i32
    return %c0_i32, %c0_i32_0 : i32, i32
  }
  func.func @transform_4(%arg0: i32) -> (i32, i32) {
    %c0_i32 = arith.constant 0 : i32
    %c0_i32_0 = arith.constant 0 : i32
    return %arg0, %c0_i32 : i32, i32
  }
}

</mosaic_0001>

<llo_original>
// kernel: netD_forward.5
$region0: #{netD_forward.5}
  #allocation0 [shape = 'u32[]', space=smem, size = 0x4, offset = 0x4, fixed_abs, tag = 'smem constant byte address 0x4 - core index']
  #allocation1 [shape = 'u32[144,128]{1,0:T(1,128)}', space=vmem, size = 0x12000, scoped, tag = 'internal scratch']
  %s0 = inlined_call_operand.vmem [shape: bf16[2,1056,32], index: 0, kind: input, shape index: {}]
  %s1 = inlined_call_operand.vmem [shape: bf16[2,1056,32], index: 1, kind: input, shape index: {}]
  %s2 = inlined_call_operand.vmem [shape: bf16[4,32,128], index: 2, kind: input, shape index: {}]
  %s3 = inlined_call_operand.vmem [shape: f32[1,128], index: 3, kind: input, shape index: {}]
  %s4 = inlined_call_operand.vmem [shape: f32[1,128], index: 4, kind: input, shape index: {}]
  %s5 = inlined_call_operand.vmem [shape: bf16[2,1024,128], index: 5, kind: output, shape index: {}]
  %s6 = sld [smem:[#allocation0]]
  $region53: #{netD_forward.5} parent=0
    _
  %s8 = ssub.s32 1, %s6
  %s9 = scalar_select 0, %s8, %s6
  loop: start=0, step=1, limit=4
  $region2: #{netD_forward.5} parent=0 // loop_pre_header
    _
  $region3: #{netD_forward.5} parent=0 // loop_header
    %s11 = sphi 0, %s15
    %p12 = scmp.ge.s32.totalorder %s11, 4
    %s21 = sphi 0, %s23
    %s24 = sphi 0, %s21
    %s25 = sphi 0, %s24
    %s41 = sphi 0, %s25
    %s47 = sphi 0, %s49
    %s50 = sphi 0, %s47
    %s51 = sphi 0, %s50
    %s67 = sphi 0, %s51
    %s71 = sphi 0, %s71
    %s73 = sphi 0, %s71
    %s74 = sphi 0, %s73
    %s88 = sphi 0, %s74
    %s92 = sphi 0, %s92
    %s94 = sphi 0, %s92
    %s95 = sphi 0, %s94
    %s109 = sphi 0, %s95
    %s113 = sphi 0, %s113
    %s115 = sphi 0, %s113
    %s116 = sphi 0, %s115
    %s130 = sphi 0, %s116
    %s136 = sphi 0, %s138
    %s139 = sphi 0, %s136
    %s140 = sphi 0, %s139
    %s156 = sphi 0, %s140
  $region4: #{netD_forward.5} parent=0 // loop_header_branch
    %14 = sbr.rel (%p12) target = $region8
  $region5: #{netD_forward.5} parent=0 // loop_body
    %s16 = ssub.s32 %s11, 1
    %s17 = ssub.s32 %s11, 2
    %s18 = sadd.s32 %s11, 1
    %s19 = ssub.s32 %s11, %s18
    %p20 = scmp.eq.s32.totalorder %s19, 0
    %s22 = sadd.s32 %s21, 1
    %s23 = scalar_select %p20, %s21, %s22
    %p26 = pneg %p20
    %p27 = scmp.eq.s32.totalorder %s11, 1
    %p28 = por %p26, %p27
    %p29 = scmp.ne.s32.totalorder %s21, %s24
    %p30 = scmp.eq.s32.totalorder %s11, 0
    %p31 = por %p29, %p30
    %p32 = scmp.ne.s32.totalorder %s21, %s24
    %p33 = scmp.eq.s32.totalorder %s16, 1
    %p34 = por %p32, %p33
    %p35 = scmp.ne.s32.totalorder %s24, %s25
    %p36 = scmp.eq.s32.totalorder %s16, 0
    %p37 = por %p35, %p36
    %p38 = scmp.ne.s32.totalorder %s24, %s25
    %p39 = scmp.eq.s32.totalorder %s17, 1
    %p40 = por %p38, %p39
    %p42 = scmp.ne.s32.totalorder %s25, %s41
    %p43 = scmp.eq.s32.totalorder %s17, 0
    %p44 = por %p42, %p43
    %s45 = ssub.s32 %s11, %s18
    %p46 = scmp.eq.s32.totalorder %s45, 0
    %s48 = sadd.s32 %s47, 1
    %s49 = scalar_select %p46, %s47, %s48
    %p52 = pneg %p46
    %p53 = scmp.eq.s32.totalorder %s11, 1
    %p54 = por %p52, %p53
    %p55 = scmp.ne.s32.totalorder %s47, %s50
    %p56 = scmp.eq.s32.totalorder %s11, 0
    %p57 = por %p55, %p56
    %p58 = scmp.ne.s32.totalorder %s47, %s50
    %p59 = scmp.eq.s32.totalorder %s16, 1
    %p60 = por %p58, %p59
    %p61 = scmp.ne.s32.totalorder %s50, %s51
    %p62 = scmp.eq.s32.totalorder %s16, 0
    %p63 = por %p61, %p62
    %p64 = scmp.ne.s32.totalorder %s50, %s51
    %p65 = scmp.eq.s32.totalorder %s17, 1
    %p66 = por %p64, %p65
    %p68 = scmp.ne.s32.totalorder %s51, %s67
    %p69 = scmp.eq.s32.totalorder %s17, 0
    %p70 = por %p68, %p69
    %s72 = sadd.s32 %s71, 1
    %p75 = scmp.eq.s32.totalorder %s11, 1
    %p76 = scmp.ne.s32.totalorder %s71, %s73
    %p77 = scmp.eq.s32.totalorder %s11, 0
    %p78 = por %p76, %p77
    %p79 = scmp.ne.s32.totalorder %s71, %s73
    %p80 = scmp.eq.s32.totalorder %s16, 1
    %p81 = por %p79, %p80
    %p82 = scmp.ne.s32.totalorder %s73, %s74
    %p83 = scmp.eq.s32.totalorder %s16, 0
    %p84 = por %p82, %p83
    %p85 = scmp.ne.s32.totalorder %s73, %s74
    %p86 = scmp.eq.s32.totalorder %s17, 1
    %p87 = por %p85, %p86
    %p89 = scmp.ne.s32.totalorder %s74, %s88
    %p90 = scmp.eq.s32.totalorder %s17, 0
    %p91 = por %p89, %p90
    %s93 = sadd.s32 %s92, 1
    %p96 = scmp.eq.s32.totalorder %s11, 1
    %p97 = scmp.ne.s32.totalorder %s92, %s94
    %p98 = scmp.eq.s32.totalorder %s11, 0
    %p99 = por %p97, %p98
    %p100 = scmp.ne.s32.totalorder %s92, %s94
    %p101 = scmp.eq.s32.totalorder %s16, 1
    %p102 = por %p100, %p101
    %p103 = scmp.ne.s32.totalorder %s94, %s95
    %p104 = scmp.eq.s32.totalorder %s16, 0
    %p105 = por %p103, %p104
    %p106 = scmp.ne.s32.totalorder %s94, %s95
    %p107 = scmp.eq.s32.totalorder %s17, 1
    %p108 = por %p106, %p107
    %p110 = scmp.ne.s32.totalorder %s95, %s109
    %p111 = scmp.eq.s32.totalorder %s17, 0
    %p112 = por %p110, %p111
    %s114 = sadd.s32 %s113, 1
    %p117 = scmp.eq.s32.totalorder %s11, 1
    %p118 = scmp.ne.s32.totalorder %s113, %s115
    %p119 = scmp.eq.s32.totalorder %s11, 0
    %p120 = por %p118, %p119
    %p121 = scmp.ne.s32.totalorder %s113, %s115
    %p122 = scmp.eq.s32.totalorder %s16, 1
    %p123 = por %p121, %p122
    %p124 = scmp.ne.s32.totalorder %s115, %s116
    %p125 = scmp.eq.s32.totalorder %s16, 0
    %p126 = por %p124, %p125
    %p127 = scmp.ne.s32.totalorder %s115, %s116
    %p128 = scmp.eq.s32.totalorder %s17, 1
    %p129 = por %p127, %p128
    %p131 = scmp.ne.s32.totalorder %s116, %s130
    %p132 = scmp.eq.s32.totalorder %s17, 0
    %p133 = por %p131, %p132
    %s134 = ssub.s32 %s11, %s18
    %p135 = scmp.eq.s32.totalorder %s134, 0
    %s137 = sadd.s32 %s136, 1
    %s138 = scalar_select %p135, %s136, %s137
    %p141 = pneg %p135
    %p142 = scmp.eq.s32.totalorder %s11, 1
    %p143 = por %p141, %p142
    %p144 = scmp.ne.s32.totalorder %s136, %s139
    %p145 = scmp.eq.s32.totalorder %s11, 0
    %p146 = por %p144, %p145
    %p147 = scmp.ne.s32.totalorder %s136, %s139
    %p148 = scmp.eq.s32.totalorder %s16, 1
    %p149 = por %p147, %p148
    %p150 = scmp.ne.s32.totalorder %s139, %s140
    %p151 = scmp.eq.s32.totalorder %s16, 0
    %p152 = por %p150, %p151
    %p153 = scmp.ne.s32.totalorder %s139, %s140
    %p154 = scmp.eq.s32.totalorder %s17, 1
    %p155 = por %p153, %p154
    %p157 = scmp.ne.s32.totalorder %s140, %s156
    %p158 = scmp.eq.s32.totalorder %s17, 0
    %p159 = por %p157, %p158
    %p160 = scmp.le.s32.totalorder 1, %s11
    %p161 = scmp.lt.s32.totalorder %s11, 3
    %p162 = pnand %p160, %p161
    %p163 = pneg %p162
    // Predicated region
    $region9: #{netD_forward.5} parent=5 // pred_check
      _
    $region10: #{netD_forward.5} parent=5 // pred_check_branch
      %165 = sbr.rel (%p162) target = $region12
    $region11: #{netD_forward.5} parent=5 // pred_region
      %s166 = ssub.s32 %s11, 1
      // Predicated region
      $region13: #{netD_forward.5} parent=11 // pred_check
        %p167 = pneg %p84
      $region14: #{netD_forward.5} parent=11 // pred_check_branch
        %169 = sbr.rel (%p167) target = $region16
      $region15: #{netD_forward.5} parent=11 // pred_region
        _
      $region16: #{netD_forward.5} parent=11 // pred_fallthru
        _
      // Predicated region
      $region17: #{netD_forward.5} parent=11 // pred_check
        %p170 = pneg %p105
      $region18: #{netD_forward.5} parent=11 // pred_check_branch
        %172 = sbr.rel (%p170) target = $region20
      $region19: #{netD_forward.5} parent=11 // pred_region
        _
      $region20: #{netD_forward.5} parent=11 // pred_fallthru
        _
      // Predicated region
      $region21: #{netD_forward.5} parent=11 // pred_check
        %p173 = pneg %p126
      $region22: #{netD_forward.5} parent=11 // pred_check_branch
        %175 = sbr.rel (%p173) target = $region24
      $region23: #{netD_forward.5} parent=11 // pred_region
        _
      $region24: #{netD_forward.5} parent=11 // pred_fallthru
        _
    $region12: #{netD_forward.5} parent=5 // pred_fallthru
      _
    %p176 = scmp.lt.s32.totalorder %s11, 2
    // Predicated region
    $region25: #{netD_forward.5} parent=5 // pred_check
      %p177 = pneg %p176
    $region26: #{netD_forward.5} parent=5 // pred_check_branch
      %179 = sbr.rel (%p177) target = $region28
    $region27: #{netD_forward.5} parent=5 // pred_region
      // Predicated region
      $region29: #{netD_forward.5} parent=27 // pred_check
        %p180 = pneg %p31
      $region30: #{netD_forward.5} parent=27 // pred_check_branch
        %182 = sbr.rel (%p180) target = $region32
      $region31: #{netD_forward.5} parent=27 // pred_region
        %p183 = scmp.lt.s32.totalorder %s11, 1
        %s184 = scalar_select %p183, %s11, 1
        %s185 = smul.addr %s184, 132
        %s186 = smul.addr %s185, 4
        %s187 = scalar_lea.vmem %s0, %s186
      $region32: #{netD_forward.5} parent=27 // pred_fallthru
        _
      // Predicated region
      $region33: #{netD_forward.5} parent=27 // pred_check
        %p188 = pneg %p57
      $region34: #{netD_forward.5} parent=27 // pred_check_branch
        %190 = sbr.rel (%p188) target = $region36
      $region35: #{netD_forward.5} parent=27 // pred_region
        %p191 = scmp.lt.s32.totalorder %s11, 1
        %s192 = scalar_select %p191, %s11, 1
        %s193 = smul.addr %s192, 132
        %s194 = smul.addr %s193, 4
        %s195 = scalar_lea.vmem %s1, %s194
      $region36: #{netD_forward.5} parent=27 // pred_fallthru
        _
    $region28: #{netD_forward.5} parent=5 // pred_fallthru
      _
    %p196 = scmp.le.s32.totalorder 1, %s11
    %p197 = scmp.lt.s32.totalorder %s11, 3
    %p198 = pnand %p196, %p197
    %p199 = pneg %p198
    // Predicated region
    $region37: #{netD_forward.5} parent=5 // pred_check
      _
    $region38: #{netD_forward.5} parent=5 // pred_check_branch
      %201 = sbr.rel (%p198) target = $region40
    $region39: #{netD_forward.5} parent=5 // pred_region
      %s202 = ssub.s32 %s11, 1
      %p203 = scmp.lt.s32.totalorder %s16, 1
      %s204 = scalar_select %p203, %s16, 1
      %s205 = smul.addr %s204, 132
      %s206 = smul.addr %s205, 4
      %s207 = scalar_lea.vmem %s0, %s206
      %p208 = pneg %p37
      %p209 = pneg %p34
      %p210 = scmp.lt.s32.totalorder %s16, 1
      %s211 = scalar_select %p210, %s16, 1
      %s212 = smul.addr %s211, 132
      %s213 = smul.addr %s212, 4
      %s214 = scalar_lea.vmem %s1, %s213
      %p215 = pneg %p63
      %p216 = pneg %p60
      %p217 = pneg %p84
      %p218 = pneg %p81
      %p219 = pneg %p105
      %p220 = pneg %p102
      %p221 = pneg %p126
      %p222 = pneg %p123
      %p223 = pneg %p152
      %p224 = pneg %p149
      %p225 = scmp.lt.s32.totalorder %s16, 1
      %s226 = scalar_select %p225, %s16, 1
      %s227 = smul.addr %s226, 128
      %s228 = smul.addr %s227, 4
      %s229 = scalar_lea.vmem %s5, %s228
      %p230 = scmp.lt.s32.totalorder %s16, 1
      %s231 = scalar_select %p230, %s16, 1
      %s232 = smul.addr %s231, 132
      %s233 = smul.addr %s232, 4
      %s234 = scalar_lea.vmem %s0, %s233
      %p235 = scmp.lt.s32.totalorder %s16, 1
      %s236 = scalar_select %p235, %s16, 1
      %s237 = smul.addr %s236, 132
      %s238 = smul.addr %s237, 4
      %s239 = scalar_lea.vmem %s1, %s238
      %p240 = scmp.lt.s32.totalorder %s16, 1
      %s241 = scalar_select %p240, %s16, 1
      %s242 = smul.addr %s241, 128
      %s243 = smul.addr %s242, 4
      %s244 = scalar_lea.vmem %s5, %s243
      %v246 = vld [vmem:[%s234] sm:$0xf]
      %v247 = vld [vmem:[%s234 + $0x4] sm:$0xf]
      %v248 = vld [vmem:[%s234 + $0x8] sm:$0xf]
      %v249 = vld [vmem:[%s234 + $0xc] sm:$0xf]
      %v250 = vld [vmem:[%s234 + $0x10] sm:$0xf]
      %v251 = vld [vmem:[%s234 + $0x14] sm:$0xf]
      %v252 = vld [vmem:[%s234 + $0x18] sm:$0xf]
      %v253 = vld [vmem:[%s234 + $0x1c] sm:$0xf]
      %v254 = vld [vmem:[%s234 + $0x20] sm:$0xf]
      %v255 = vld [vmem:[%s234 + $0x24] sm:$0xf]
      %v256 = vld [vmem:[%s234 + $0x28] sm:$0xf]
      %v257 = vld [vmem:[%s234 + $0x2c] sm:$0xf]
      %v258 = vld [vmem:[%s234 + $0x30] sm:$0xf]
      %v259 = vld [vmem:[%s234 + $0x34] sm:$0xf]
      %v260 = vld [vmem:[%s234 + $0x38] sm:$0xf]
      %v261 = vld [vmem:[%s234 + $0x3c] sm:$0xf]
      %v262 = vld [vmem:[%s234 + $0x40] sm:$0xf]
      %v263 = vld [vmem:[%s234 + $0x44] sm:$0xf]
      %v264 = vld [vmem:[%s234 + $0x48] sm:$0xf]
      %v265 = vld [vmem:[%s234 + $0x4c] sm:$0xf]
      %v266 = vld [vmem:[%s234 + $0x50] sm:$0xf]
      %v267 = vld [vmem:[%s234 + $0x54] sm:$0xf]
      %v268 = vld [vmem:[%s234 + $0x58] sm:$0xf]
      %v269 = vld [vmem:[%s234 + $0x5c] sm:$0xf]
      %v270 = vld [vmem:[%s234 + $0x60] sm:$0xf]
      %v271 = vld [vmem:[%s234 + $0x64] sm:$0xf]
      %v272 = vld [vmem:[%s234 + $0x68] sm:$0xf]
      %v273 = vld [vmem:[%s234 + $0x6c] sm:$0xf]
      %v274 = vld [vmem:[%s234 + $0x70] sm:$0xf]
      %v275 = vld [vmem:[%s234 + $0x74] sm:$0xf]
      %v276 = vld [vmem:[%s234 + $0x78] sm:$0xf]
      %v277 = vld [vmem:[%s234 + $0x7c] sm:$0xf]
      %v278 = vld [vmem:[%s234 + $0x80] sm:$0xf]
      %v279 = vld [vmem:[%s234 + $0x84] sm:$0xf]
      %v280 = vld [vmem:[%s234 + $0x88] sm:$0xf]
      %v281 = vld [vmem:[%s234 + $0x8c] sm:$0xf]
      %v282 = vld [vmem:[%s234 + $0x90] sm:$0xf]
      %v283 = vld [vmem:[%s234 + $0x94] sm:$0xf]
      %v284 = vld [vmem:[%s234 + $0x98] sm:$0xf]
      %v285 = vld [vmem:[%s234 + $0x9c] sm:$0xf]
      %v286 = vld [vmem:[%s234 + $0xa0] sm:$0xf]
      %v287 = vld [vmem:[%s234 + $0xa4] sm:$0xf]
      %v288 = vld [vmem:[%s234 + $0xa8] sm:$0xf]
      %v289 = vld [vmem:[%s234 + $0xac] sm:$0xf]
      %v290 = vld [vmem:[%s234 + $0xb0] sm:$0xf]
      %v291 = vld [vmem:[%s234 + $0xb4] sm:$0xf]
      %v292 = vld [vmem:[%s234 + $0xb8] sm:$0xf]
      %v293 = vld [vmem:[%s234 + $0xbc] sm:$0xf]
      %v294 = vld [vmem:[%s234 + $0xc0] sm:$0xf]
      %v295 = vld [vmem:[%s234 + $0xc4] sm:$0xf]
      %v296 = vld [vmem:[%s234 + $0xc8] sm:$0xf]
      %v297 = vld [vmem:[%s234 + $0xcc] sm:$0xf]
      %v298 = vld [vmem:[%s234 + $0xd0] sm:$0xf]
      %v299 = vld [vmem:[%s234 + $0xd4] sm:$0xf]
      %v300 = vld [vmem:[%s234 + $0xd8] sm:$0xf]
      %v301 = vld [vmem:[%s234 + $0xdc] sm:$0xf]
      %v302 = vld [vmem:[%s234 + $0xe0] sm:$0xf]
      %v303 = vld [vmem:[%s234 + $0xe4] sm:$0xf]
      %v304 = vld [vmem:[%s234 + $0xe8] sm:$0xf]
      %v305 = vld [vmem:[%s234 + $0xec] sm:$0xf]
      %v306 = vld [vmem:[%s234 + $0xf0] sm:$0xf]
      %v307 = vld [vmem:[%s234 + $0xf4] sm:$0xf]
      %v308 = vld [vmem:[%s234 + $0xf8] sm:$0xf]
      %v309 = vld [vmem:[%s234 + $0xfc] sm:$0xf]
      %v310 = vld [vmem:[%s234 + $0x100] sm:$0xf]
      %v311 = vld [vmem:[%s234 + $0x104] sm:$0xf]
      %v312 = vld [vmem:[%s234 + $0x108] sm:$0xf]
      %v313 = vld [vmem:[%s234 + $0x10c] sm:$0xf]
      %v314 = vld [vmem:[%s234 + $0x110] sm:$0xf]
      %v315 = vld [vmem:[%s234 + $0x114] sm:$0xf]
      %v316 = vld [vmem:[%s234 + $0x118] sm:$0xf]
      %v317 = vld [vmem:[%s234 + $0x11c] sm:$0xf]
      %v318 = vld [vmem:[%s234 + $0x120] sm:$0xf]
      %v319 = vld [vmem:[%s234 + $0x124] sm:$0xf]
      %v320 = vld [vmem:[%s234 + $0x128] sm:$0xf]
      %v321 = vld [vmem:[%s234 + $0x12c] sm:$0xf]
      %v322 = vld [vmem:[%s234 + $0x130] sm:$0xf]
      %v323 = vld [vmem:[%s234 + $0x134] sm:$0xf]
      %v324 = vld [vmem:[%s234 + $0x138] sm:$0xf]
      %v325 = vld [vmem:[%s234 + $0x13c] sm:$0xf]
      %v326 = vld [vmem:[%s234 + $0x140] sm:$0xf]
      %v327 = vld [vmem:[%s234 + $0x144] sm:$0xf]
      %v328 = vld [vmem:[%s234 + $0x148] sm:$0xf]
      %v329 = vld [vmem:[%s234 + $0x14c] sm:$0xf]
      %v330 = vld [vmem:[%s234 + $0x150] sm:$0xf]
      %v331 = vld [vmem:[%s234 + $0x154] sm:$0xf]
      %v332 = vld [vmem:[%s234 + $0x158] sm:$0xf]
      %v333 = vld [vmem:[%s234 + $0x15c] sm:$0xf]
      %v334 = vld [vmem:[%s234 + $0x160] sm:$0xf]
      %v335 = vld [vmem:[%s234 + $0x164] sm:$0xf]
      %v336 = vld [vmem:[%s234 + $0x168] sm:$0xf]
      %v337 = vld [vmem:[%s234 + $0x16c] sm:$0xf]
      %v338 = vld [vmem:[%s234 + $0x170] sm:$0xf]
      %v339 = vld [vmem:[%s234 + $0x174] sm:$0xf]
      %v340 = vld [vmem:[%s234 + $0x178] sm:$0xf]
      %v341 = vld [vmem:[%s234 + $0x17c] sm:$0xf]
      %v342 = vld [vmem:[%s234 + $0x180] sm:$0xf]
      %v343 = vld [vmem:[%s234 + $0x184] sm:$0xf]
      %v344 = vld [vmem:[%s234 + $0x188] sm:$0xf]
      %v345 = vld [vmem:[%s234 + $0x18c] sm:$0xf]
      %v346 = vld [vmem:[%s234 + $0x190] sm:$0xf]
      %v347 = vld [vmem:[%s234 + $0x194] sm:$0xf]
      %v348 = vld [vmem:[%s234 + $0x198] sm:$0xf]
      %v349 = vld [vmem:[%s234 + $0x19c] sm:$0xf]
      %v350 = vld [vmem:[%s234 + $0x1a0] sm:$0xf]
      %v351 = vld [vmem:[%s234 + $0x1a4] sm:$0xf]
      %v352 = vld [vmem:[%s234 + $0x1a8] sm:$0xf]
      %v353 = vld [vmem:[%s234 + $0x1ac] sm:$0xf]
      %v354 = vld [vmem:[%s234 + $0x1b0] sm:$0xf]
      %v355 = vld [vmem:[%s234 + $0x1b4] sm:$0xf]
      %v356 = vld [vmem:[%s234 + $0x1b8] sm:$0xf]
      %v357 = vld [vmem:[%s234 + $0x1bc] sm:$0xf]
      %v358 = vld [vmem:[%s234 + $0x1c0] sm:$0xf]
      %v359 = vld [vmem:[%s234 + $0x1c4] sm:$0xf]
      %v360 = vld [vmem:[%s234 + $0x1c8] sm:$0xf]
      %v361 = vld [vmem:[%s234 + $0x1cc] sm:$0xf]
      %v362 = vld [vmem:[%s234 + $0x1d0] sm:$0xf]
      %v363 = vld [vmem:[%s234 + $0x1d4] sm:$0xf]
      %v364 = vld [vmem:[%s234 + $0x1d8] sm:$0xf]
      %v365 = vld [vmem:[%s234 + $0x1dc] sm:$0xf]
      %v366 = vld [vmem:[%s234 + $0x1e0] sm:$0xf]
      %v367 = vld [vmem:[%s234 + $0x1e4] sm:$0xf]
      %v368 = vld [vmem:[%s234 + $0x1e8] sm:$0xf]
      %v369 = vld [vmem:[%s234 + $0x1ec] sm:$0xf]
      %v370 = vld [vmem:[%s234 + $0x1f0] sm:$0xf]
      %v371 = vld [vmem:[%s234 + $0x1f4] sm:$0xf]
      %v372 = vld [vmem:[%s234 + $0x1f8] sm:$0xf]
      %v373 = vld [vmem:[%s234 + $0x1fc] sm:$0xf]
      %v374 = vld [vmem:[%s2] sm:$0xf]
      %v375 = vld [vmem:[%s2 + $0x4] sm:$0xf]
      %v376 = vld [vmem:[%s2 + $0x8] sm:$0xf]
      %v377 = vld [vmem:[%s2 + $0xc] sm:$0xf]
      %v378 = vld [vmem:[%s239] sm:$0xf]
      %v379 = vld [vmem:[%s239 + $0x4] sm:$0xf]
      %v380 = vld [vmem:[%s239 + $0x8] sm:$0xf]
      %v381 = vld [vmem:[%s239 + $0xc] sm:$0xf]
      %v382 = vld [vmem:[%s239 + $0x10] sm:$0xf]
      %v383 = vld [vmem:[%s239 + $0x14] sm:$0xf]
      %v384 = vld [vmem:[%s239 + $0x18] sm:$0xf]
      %v385 = vld [vmem:[%s239 + $0x1c] sm:$0xf]
      %v386 = vld [vmem:[%s239 + $0x20] sm:$0xf]
      %v387 = vld [vmem:[%s239 + $0x24] sm:$0xf]
      %v388 = vld [vmem:[%s239 + $0x28] sm:$0xf]
      %v389 = vld [vmem:[%s239 + $0x2c] sm:$0xf]
      %v390 = vld [vmem:[%s239 + $0x30] sm:$0xf]
      %v391 = vld [vmem:[%s239 + $0x34] sm:$0xf]
      %v392 = vld [vmem:[%s239 + $0x38] sm:$0xf]
      %v393 = vld [vmem:[%s239 + $0x3c] sm:$0xf]
      %v394 = vld [vmem:[%s239 + $0x40] sm:$0xf]
      %v395 = vld [vmem:[%s239 + $0x44] sm:$0xf]
      %v396 = vld [vmem:[%s239 + $0x48] sm:$0xf]
      %v397 = vld [vmem:[%s239 + $0x4c] sm:$0xf]
      %v398 = vld [vmem:[%s239 + $0x50] sm:$0xf]
      %v399 = vld [vmem:[%s239 + $0x54] sm:$0xf]
      %v400 = vld [vmem:[%s239 + $0x58] sm:$0xf]
      %v401 = vld [vmem:[%s239 + $0x5c] sm:$0xf]
      %v402 = vld [vmem:[%s239 + $0x60] sm:$0xf]
      %v403 = vld [vmem:[%s239 + $0x64] sm:$0xf]
      %v404 = vld [vmem:[%s239 + $0x68] sm:$0xf]
      %v405 = vld [vmem:[%s239 + $0x6c] sm:$0xf]
      %v406 = vld [vmem:[%s239 + $0x70] sm:$0xf]
      %v407 = vld [vmem:[%s239 + $0x74] sm:$0xf]
      %v408 = vld [vmem:[%s239 + $0x78] sm:$0xf]
      %v409 = vld [vmem:[%s239 + $0x7c] sm:$0xf]
      %v410 = vld [vmem:[%s239 + $0x80] sm:$0xf]
      %v411 = vld [vmem:[%s239 + $0x84] sm:$0xf]
      %v412 = vld [vmem:[%s239 + $0x88] sm:$0xf]
      %v413 = vld [vmem:[%s239 + $0x8c] sm:$0xf]
      %v414 = vld [vmem:[%s239 + $0x90] sm:$0xf]
      %v415 = vld [vmem:[%s239 + $0x94] sm:$0xf]
      %v416 = vld [vmem:[%s239 + $0x98] sm:$0xf]
      %v417 = vld [vmem:[%s239 + $0x9c] sm:$0xf]
      %v418 = vld [vmem:[%s239 + $0xa0] sm:$0xf]
      %v419 = vld [vmem:[%s239 + $0xa4] sm:$0xf]
      %v420 = vld [vmem:[%s239 + $0xa8] sm:$0xf]
      %v421 = vld [vmem:[%s239 + $0xac] sm:$0xf]
      %v422 = vld [vmem:[%s239 + $0xb0] sm:$0xf]
      %v423 = vld [vmem:[%s239 + $0xb4] sm:$0xf]
      %v424 = vld [vmem:[%s239 + $0xb8] sm:$0xf]
      %v425 = vld [vmem:[%s239 + $0xbc] sm:$0xf]
      %v426 = vld [vmem:[%s239 + $0xc0] sm:$0xf]
      %v427 = vld [vmem:[%s239 + $0xc4] sm:$0xf]
      %v428 = vld [vmem:[%s239 + $0xc8] sm:$0xf]
      %v429 = vld [vmem:[%s239 + $0xcc] sm:$0xf]
      %v430 = vld [vmem:[%s239 + $0xd0] sm:$0xf]
      %v431 = vld [vmem:[%s239 + $0xd4] sm:$0xf]
      %v432 = vld [vmem:[%s239 + $0xd8] sm:$0xf]
      %v433 = vld [vmem:[%s239 + $0xdc] sm:$0xf]
      %v434 = vld [vmem:[%s239 + $0xe0] sm:$0xf]
      %v435 = vld [vmem:[%s239 + $0xe4] sm:$0xf]
      %v436 = vld [vmem:[%s239 + $0xe8] sm:$0xf]
      %v437 = vld [vmem:[%s239 + $0xec] sm:$0xf]
      %v438 = vld [vmem:[%s239 + $0xf0] sm:$0xf]
      %v439 = vld [vmem:[%s239 + $0xf4] sm:$0xf]
      %v440 = vld [vmem:[%s239 + $0xf8] sm:$0xf]
      %v441 = vld [vmem:[%s239 + $0xfc] sm:$0xf]
      %v442 = vld [vmem:[%s239 + $0x100] sm:$0xf]
      %v443 = vld [vmem:[%s239 + $0x104] sm:$0xf]
      %v444 = vld [vmem:[%s239 + $0x108] sm:$0xf]
      %v445 = vld [vmem:[%s239 + $0x10c] sm:$0xf]
      %v446 = vld [vmem:[%s239 + $0x110] sm:$0xf]
      %v447 = vld [vmem:[%s239 + $0x114] sm:$0xf]
      %v448 = vld [vmem:[%s239 + $0x118] sm:$0xf]
      %v449 = vld [vmem:[%s239 + $0x11c] sm:$0xf]
      %v450 = vld [vmem:[%s239 + $0x120] sm:$0xf]
      %v451 = vld [vmem:[%s239 + $0x124] sm:$0xf]
      %v452 = vld [vmem:[%s239 + $0x128] sm:$0xf]
      %v453 = vld [vmem:[%s239 + $0x12c] sm:$0xf]
      %v454 = vld [vmem:[%s239 + $0x130] sm:$0xf]
      %v455 = vld [vmem:[%s239 + $0x134] sm:$0xf]
      %v456 = vld [vmem:[%s239 + $0x138] sm:$0xf]
      %v457 = vld [vmem:[%s239 + $0x13c] sm:$0xf]
      %v458 = vld [vmem:[%s239 + $0x140] sm:$0xf]
      %v459 = vld [vmem:[%s239 + $0x144] sm:$0xf]
      %v460 = vld [vmem:[%s239 + $0x148] sm:$0xf]
      %v461 = vld [vmem:[%s239 + $0x14c] sm:$0xf]
      %v462 = vld [vmem:[%s239 + $0x150] sm:$0xf]
      %v463 = vld [vmem:[%s239 + $0x154] sm:$0xf]
      %v464 = vld [vmem:[%s239 + $0x158] sm:$0xf]
      %v465 = vld [vmem:[%s239 + $0x15c] sm:$0xf]
      %v466 = vld [vmem:[%s239 + $0x160] sm:$0xf]
      %v467 = vld [vmem:[%s239 + $0x164] sm:$0xf]
      %v468 = vld [vmem:[%s239 + $0x168] sm:$0xf]
      %v469 = vld [vmem:[%s239 + $0x16c] sm:$0xf]
      %v470 = vld [vmem:[%s239 + $0x170] sm:$0xf]
      %v471 = vld [vmem:[%s239 + $0x174] sm:$0xf]
      %v472 = vld [vmem:[%s239 + $0x178] sm:$0xf]
      %v473 = vld [vmem:[%s239 + $0x17c] sm:$0xf]
      %v474 = vld [vmem:[%s239 + $0x180] sm:$0xf]
      %v475 = vld [vmem:[%s239 + $0x184] sm:$0xf]
      %v476 = vld [vmem:[%s239 + $0x188] sm:$0xf]
      %v477 = vld [vmem:[%s239 + $0x18c] sm:$0xf]
      %v478 = vld [vmem:[%s239 + $0x190] sm:$0xf]
      %v479 = vld [vmem:[%s239 + $0x194] sm:$0xf]
      %v480 = vld [vmem:[%s239 + $0x198] sm:$0xf]
      %v481 = vld [vmem:[%s239 + $0x19c] sm:$0xf]
      %v482 = vld [vmem:[%s239 + $0x1a0] sm:$0xf]
      %v483 = vld [vmem:[%s239 + $0x1a4] sm:$0xf]
      %v484 = vld [vmem:[%s239 + $0x1a8] sm:$0xf]
      %v485 = vld [vmem:[%s239 + $0x1ac] sm:$0xf]
      %v486 = vld [vmem:[%s239 + $0x1b0] sm:$0xf]
      %v487 = vld [vmem:[%s239 + $0x1b4] sm:$0xf]
      %v488 = vld [vmem:[%s239 + $0x1b8] sm:$0xf]
      %v489 = vld [vmem:[%s239 + $0x1bc] sm:$0xf]
      %v490 = vld [vmem:[%s239 + $0x1c0] sm:$0xf]
      %v491 = vld [vmem:[%s239 + $0x1c4] sm:$0xf]
      %v492 = vld [vmem:[%s239 + $0x1c8] sm:$0xf]
      %v493 = vld [vmem:[%s239 + $0x1cc] sm:$0xf]
      %v494 = vld [vmem:[%s239 + $0x1d0] sm:$0xf]
      %v495 = vld [vmem:[%s239 + $0x1d4] sm:$0xf]
      %v496 = vld [vmem:[%s239 + $0x1d8] sm:$0xf]
      %v497 = vld [vmem:[%s239 + $0x1dc] sm:$0xf]
      %v498 = vld [vmem:[%s239 + $0x1e0] sm:$0xf]
      %v499 = vld [vmem:[%s239 + $0x1e4] sm:$0xf]
      %v500 = vld [vmem:[%s239 + $0x1e8] sm:$0xf]
      %v501 = vld [vmem:[%s239 + $0x1ec] sm:$0xf]
      %v502 = vld [vmem:[%s239 + $0x1f0] sm:$0xf]
      %v503 = vld [vmem:[%s239 + $0x1f4] sm:$0xf]
      %v504 = vld [vmem:[%s239 + $0x1f8] sm:$0xf]
      %v505 = vld [vmem:[%s239 + $0x1fc] sm:$0xf]
      %s506 = scalar_lea.vmem %s2, 16
      %v507 = vld [vmem:[%s506] sm:$0xf]
      %v508 = vld [vmem:[%s506 + $0x4] sm:$0xf]
      %v509 = vld [vmem:[%s506 + $0x8] sm:$0xf]
      %v510 = vld [vmem:[%s506 + $0xc] sm:$0xf]
      %v639 = vunpack.c.l.b16 %v378
      %v640 = vunpack.c.l.b16 %v379
      %v641 = vunpack.c.l.b16 %v380
      %v642 = vunpack.c.l.b16 %v381
      %v643 = vunpack.c.l.b16 %v382
      %v644 = vunpack.c.l.b16 %v383
      %v645 = vunpack.c.l.b16 %v384
      %v646 = vunpack.c.l.b16 %v385
      %v647 = vunpack.c.l.b16 %v386
      %v648 = vunpack.c.l.b16 %v387
      %v649 = vunpack.c.l.b16 %v388
      %v650 = vunpack.c.l.b16 %v389
      %v651 = vunpack.c.l.b16 %v390
      %v652 = vunpack.c.l.b16 %v391
      %v653 = vunpack.c.l.b16 %v392
      %v654 = vunpack.c.l.b16 %v393
      %v655 = vunpack.c.l.b16 %v394
      %v656 = vunpack.c.l.b16 %v395
      %v657 = vunpack.c.l.b16 %v396
      %v658 = vunpack.c.l.b16 %v397
      %v659 = vunpack.c.l.b16 %v398
      %v660 = vunpack.c.l.b16 %v399
      %v661 = vunpack.c.l.b16 %v400
      %v662 = vunpack.c.l.b16 %v401
      %v663 = vunpack.c.l.b16 %v402
      %v664 = vunpack.c.l.b16 %v403
      %v665 = vunpack.c.l.b16 %v404
      %v666 = vunpack.c.l.b16 %v405
      %v667 = vunpack.c.l.b16 %v406
      %v668 = vunpack.c.l.b16 %v407
      %v669 = vunpack.c.l.b16 %v408
      %v670 = vunpack.c.l.b16 %v409
      %v671 = vunpack.c.l.b16 %v410
      %v672 = vunpack.c.l.b16 %v411
      %v673 = vunpack.c.l.b16 %v412
      %v674 = vunpack.c.l.b16 %v413
      %v675 = vunpack.c.l.b16 %v414
      %v676 = vunpack.c.l.b16 %v415
      %v677 = vunpack.c.l.b16 %v416
      %v678 = vunpack.c.l.b16 %v417
      %v679 = vunpack.c.l.b16 %v418
      %v680 = vunpack.c.l.b16 %v419
      %v681 = vunpack.c.l.b16 %v420
      %v682 = vunpack.c.l.b16 %v421
      %v683 = vunpack.c.l.b16 %v422
      %v684 = vunpack.c.l.b16 %v423
      %v685 = vunpack.c.l.b16 %v424
      %v686 = vunpack.c.l.b16 %v425
      %v687 = vunpack.c.l.b16 %v426
      %v688 = vunpack.c.l.b16 %v427
      %v689 = vunpack.c.l.b16 %v428
      %v690 = vunpack.c.l.b16 %v429
      %v691 = vunpack.c.l.b16 %v430
      %v692 = vunpack.c.l.b16 %v431
      %v693 = vunpack.c.l.b16 %v432
      %v694 = vunpack.c.l.b16 %v433
      %v695 = vunpack.c.l.b16 %v434
      %v696 = vunpack.c.l.b16 %v435
      %v697 = vunpack.c.l.b16 %v436
      %v698 = vunpack.c.l.b16 %v437
      %v699 = vunpack.c.l.b16 %v438
      %v700 = vunpack.c.l.b16 %v439
      %v701 = vunpack.c.l.b16 %v440
      %v702 = vunpack.c.l.b16 %v441
      %v703 = vunpack.c.l.b16 %v442
      %v704 = vunpack.c.l.b16 %v443
      %v705 = vunpack.c.l.b16 %v444
      %v706 = vunpack.c.l.b16 %v445
      %v707 = vunpack.c.l.b16 %v446
      %v708 = vunpack.c.l.b16 %v447
      %v709 = vunpack.c.l.b16 %v448
      %v710 = vunpack.c.l.b16 %v449
      %v711 = vunpack.c.l.b16 %v450
      %v712 = vunpack.c.l.b16 %v451
      %v713 = vunpack.c.l.b16 %v452
      %v714 = vunpack.c.l.b16 %v453
      %v715 = vunpack.c.l.b16 %v454
      %v716 = vunpack.c.l.b16 %v455
      %v717 = vunpack.c.l.b16 %v456
      %v718 = vunpack.c.l.b16 %v457
      %v719 = vunpack.c.l.b16 %v458
      %v720 = vunpack.c.l.b16 %v459
      %v721 = vunpack.c.l.b16 %v460
      %v722 = vunpack.c.l.b16 %v461
      %v723 = vunpack.c.l.b16 %v462
      %v724 = vunpack.c.l.b16 %v463
      %v725 = vunpack.c.l.b16 %v464
      %v726 = vunpack.c.l.b16 %v465
      %v727 = vunpack.c.l.b16 %v466
      %v728 = vunpack.c.l.b16 %v467
      %v729 = vunpack.c.l.b16 %v468
      %v730 = vunpack.c.l.b16 %v469
      %v731 = vunpack.c.l.b16 %v470
      %v732 = vunpack.c.l.b16 %v471
      %v733 = vunpack.c.l.b16 %v472
      %v734 = vunpack.c.l.b16 %v473
      %v735 = vunpack.c.l.b16 %v474
      %v736 = vunpack.c.l.b16 %v475
      %v737 = vunpack.c.l.b16 %v476
      %v738 = vunpack.c.l.b16 %v477
      %v739 = vunpack.c.l.b16 %v478
      %v740 = vunpack.c.l.b16 %v479
      %v741 = vunpack.c.l.b16 %v480
      %v742 = vunpack.c.l.b16 %v481
      %v743 = vunpack.c.l.b16 %v482
      %v744 = vunpack.c.l.b16 %v483
      %v745 = vunpack.c.l.b16 %v484
      %v746 = vunpack.c.l.b16 %v485
      %v747 = vunpack.c.l.b16 %v486
      %v748 = vunpack.c.l.b16 %v487
      %v749 = vunpack.c.l.b16 %v488
      %v750 = vunpack.c.l.b16 %v489
      %v751 = vunpack.c.l.b16 %v490
      %v752 = vunpack.c.l.b16 %v491
      %v753 = vunpack.c.l.b16 %v492
      %v754 = vunpack.c.l.b16 %v493
      %v755 = vunpack.c.l.b16 %v494
      %v756 = vunpack.c.l.b16 %v495
      %v757 = vunpack.c.l.b16 %v496
      %v758 = vunpack.c.l.b16 %v497
      %v759 = vunpack.c.l.b16 %v498
      %v760 = vunpack.c.l.b16 %v499
      %v761 = vunpack.c.l.b16 %v500
      %v762 = vunpack.c.l.b16 %v501
      %v763 = vunpack.c.l.b16 %v502
      %v764 = vunpack.c.l.b16 %v503
      %v765 = vunpack.c.l.b16 %v504
      %v766 = vunpack.c.l.b16 %v505
      %v767 = vpack.c.b16 %v640, %v639
      %v768 = vpack.c.b16 %v642, %v641
      %v769 = vpack.c.b16 %v644, %v643
      %v770 = vpack.c.b16 %v646, %v645
      %v771 = vpack.c.b16 %v648, %v647
      %v772 = vpack.c.b16 %v650, %v649
      %v773 = vpack.c.b16 %v652, %v651
      %v774 = vpack.c.b16 %v654, %v653
      %v775 = vpack.c.b16 %v656, %v655
      %v776 = vpack.c.b16 %v658, %v657
      %v777 = vpack.c.b16 %v660, %v659
      %v778 = vpack.c.b16 %v662, %v661
      %v779 = vpack.c.b16 %v664, %v663
      %v780 = vpack.c.b16 %v666, %v665
      %v781 = vpack.c.b16 %v668, %v667
      %v782 = vpack.c.b16 %v670, %v669
      %v783 = vpack.c.b16 %v672, %v671
      %v784 = vpack.c.b16 %v674, %v673
      %v785 = vpack.c.b16 %v676, %v675
      %v786 = vpack.c.b16 %v678, %v677
      %v787 = vpack.c.b16 %v680, %v679
      %v788 = vpack.c.b16 %v682, %v681
      %v789 = vpack.c.b16 %v684, %v683
      %v790 = vpack.c.b16 %v686, %v685
      %v791 = vpack.c.b16 %v688, %v687
      %v792 = vpack.c.b16 %v690, %v689
      %v793 = vpack.c.b16 %v692, %v691
      %v794 = vpack.c.b16 %v694, %v693
      %v795 = vpack.c.b16 %v696, %v695
      %v796 = vpack.c.b16 %v698, %v697
      %v797 = vpack.c.b16 %v700, %v699
      %v798 = vpack.c.b16 %v702, %v701
      %v799 = vpack.c.b16 %v704, %v703
      %v800 = vpack.c.b16 %v706, %v705
      %v801 = vpack.c.b16 %v708, %v707
      %v802 = vpack.c.b16 %v710, %v709
      %v803 = vpack.c.b16 %v712, %v711
      %v804 = vpack.c.b16 %v714, %v713
      %v805 = vpack.c.b16 %v716, %v715
      %v806 = vpack.c.b16 %v718, %v717
      %v807 = vpack.c.b16 %v720, %v719
      %v808 = vpack.c.b16 %v722, %v721
      %v809 = vpack.c.b16 %v724, %v723
      %v810 = vpack.c.b16 %v726, %v725
      %v811 = vpack.c.b16 %v728, %v727
      %v812 = vpack.c.b16 %v730, %v729
      %v813 = vpack.c.b16 %v732, %v731
      %v814 = vpack.c.b16 %v734, %v733
      %v815 = vpack.c.b16 %v736, %v735
      %v816 = vpack.c.b16 %v738, %v737
      %v817 = vpack.c.b16 %v740, %v739
      %v818 = vpack.c.b16 %v742, %v741
      %v819 = vpack.c.b16 %v744, %v743
      %v820 = vpack.c.b16 %v746, %v745
      %v821 = vpack.c.b16 %v748, %v747
      %v822 = vpack.c.b16 %v750, %v749
      %v823 = vpack.c.b16 %v752, %v751
      %v824 = vpack.c.b16 %v754, %v753
      %v825 = vpack.c.b16 %v756, %v755
      %v826 = vpack.c.b16 %v758, %v757
      %v827 = vpack.c.b16 %v760, %v759
      %v828 = vpack.c.b16 %v762, %v761
      %v829 = vpack.c.b16 %v764, %v763
      %v830 = vpack.c.b16 %v766, %v765
      %v835 = vunpack.c.l.b16 %v507
      %v836 = vunpack.c.l.b16 %v508
      %v837 = vunpack.c.l.b16 %v509
      %v838 = vunpack.c.l.b16 %v510
      %v839 = vpack.c.b16 %v836, %v835
      %v840 = vpack.c.b16 %v838, %v837
      %vm843 = vcmask 261120
      %v845 = vsel %vm843, %v767, 0
      %v848 = vsel %vm843, %v768, 0
      %v851 = vsel %vm843, %v769, 0
      %v854 = vsel %vm843, %v770, 0
      %v857 = vsel %vm843, %v771, 0
      %v860 = vsel %vm843, %v772, 0
      %v863 = vsel %vm843, %v773, 0
      %v866 = vsel %vm843, %v774, 0
      %v869 = vsel %vm843, %v775, 0
      %v872 = vsel %vm843, %v776, 0
      %v875 = vsel %vm843, %v777, 0
      %v878 = vsel %vm843, %v778, 0
      %v881 = vsel %vm843, %v779, 0
      %v884 = vsel %vm843, %v780, 0
      %v887 = vsel %vm843, %v781, 0
      %v890 = vsel %vm843, %v782, 0
      %v893 = vsel %vm843, %v783, 0
      %v896 = vsel %vm843, %v784, 0
      %v899 = vsel %vm843, %v785, 0
      %v902 = vsel %vm843, %v786, 0
      %v905 = vsel %vm843, %v787, 0
      %v908 = vsel %vm843, %v788, 0
      %v911 = vsel %vm843, %v789, 0
      %v914 = vsel %vm843, %v790, 0
      %v917 = vsel %vm843, %v791, 0
      %v920 = vsel %vm843, %v792, 0
      %v923 = vsel %vm843, %v793, 0
      %v926 = vsel %vm843, %v794, 0
      %v929 = vsel %vm843, %v795, 0
      %v932 = vsel %vm843, %v796, 0
      %v935 = vsel %vm843, %v797, 0
      %v938 = vsel %vm843, %v798, 0
      %v941 = vsel %vm843, %v799, 0
      %v944 = vsel %vm843, %v800, 0
      %v947 = vsel %vm843, %v801, 0
      %v950 = vsel %vm843, %v802, 0
      %v953 = vsel %vm843, %v803, 0
      %v956 = vsel %vm843, %v804, 0
      %v959 = vsel %vm843, %v805, 0
      %v962 = vsel %vm843, %v806, 0
      %v965 = vsel %vm843, %v807, 0
      %v968 = vsel %vm843, %v808, 0
      %v971 = vsel %vm843, %v809, 0
      %v974 = vsel %vm843, %v810, 0
      %v977 = vsel %vm843, %v811, 0
      %v980 = vsel %vm843, %v812, 0
      %v983 = vsel %vm843, %v813, 0
      %v986 = vsel %vm843, %v814, 0
      %v989 = vsel %vm843, %v815, 0
      %v992 = vsel %vm843, %v816, 0
      %v995 = vsel %vm843, %v817, 0
      %v998 = vsel %vm843, %v818, 0
      %v1001 = vsel %vm843, %v819, 0
      %v1004 = vsel %vm843, %v820, 0
      %v1007 = vsel %vm843, %v821, 0
      %v1010 = vsel %vm843, %v822, 0
      %v1013 = vsel %vm843, %v823, 0
      %v1016 = vsel %vm843, %v824, 0
      %v1019 = vsel %vm843, %v825, 0
      %v1022 = vsel %vm843, %v826, 0
      %v1025 = vsel %vm843, %v827, 0
      %v1028 = vsel %vm843, %v828, 0
      %v1031 = vsel %vm843, %v829, 0
      %v1034 = vsel %vm843, %v830, 0
      %1036 = vmatprep.subr.bf16.mxu0 0
      %1037 = vmatpush1.bf16.msra.mxu0 %v839
      %1038 = vmatprep.subr.bf16.mxu0 0
      %1039 = vmatpush1.bf16.msra.mxu0 %v840
      %1040 = vmatprep.subr.bf16.mxu0 0
      %1041 = vmatpush1.bf16.msra.mxu0 0
      %1042 = vmatprep.subr.bf16.mxu0 0
      %1043 = vmatpush1.bf16.msra.mxu0 0
      %1044 = vmatprep.subr.bf16.mxu0 0
      %1045 = vmatpush1.bf16.msra.mxu0 0
      %1046 = vmatprep.subr.bf16.mxu0 0
      %1047 = vmatpush1.bf16.msra.mxu0 0
      %1048 = vmatprep.subr.bf16.mxu0 0
      %1049 = vmatpush1.bf16.msra.mxu0 0
      %1050 = vmatprep.subr.bf16.mxu0 0
      %1051 = vmatpush1.bf16.msra.mxu0 0
      %1052 = vmatprep.subr.bf16.mxu0 0
      %1053 = vmatpush1.bf16.msra.mxu0 0
      %1054 = vmatprep.subr.bf16.mxu0 0
      %1055 = vmatpush1.bf16.msra.mxu0 0
      %1056 = vmatprep.subr.bf16.mxu0 0
      %1057 = vmatpush1.bf16.msra.mxu0 0
      %1058 = vmatprep.subr.bf16.mxu0 0
      %1059 = vmatpush1.bf16.msra.mxu0 0
      %1060 = vmatprep.subr.bf16.mxu0 0
      %1061 = vmatpush1.bf16.msra.mxu0 0
      %1062 = vmatprep.subr.bf16.mxu0 0
      %1063 = vmatpush1.bf16.msra.mxu0 0
      %1064 = vmatprep.subr.bf16.mxu0 0
      %1065 = vmatpush1.bf16.msra.mxu0 0
      %1066 = vmatprep.subr.bf16.mxu0 0
      %1067 = vmatpush1.bf16.msra.mxu0 0
      %1068 = vmatprep.mubr.bf16.mxu0 0
      %1069 = vmatmul.mubr.bf16.gmra.mrb[0].mxu0 %v845
      %v1070 = vpop.f32.mrb[0].mxu0
      %v1071 = vadd.f32 0.0, %v1070
      %v1072 = vpop.f32.mrb[0].mxu0
      %v1073 = vpop.f32.mrb[0].mxu0
      %v1074 = vadd.f32 0.0, %v1073
      %v1075 = vpop.f32.mrb[0].mxu0
      %1076 = vmatprep.mubr.bf16.mxu0 0
      %1077 = vmatmul.mubr.bf16.gmra.mrb[0].mxu0 %v848
      %v1078 = vpop.f32.mrb[0].mxu0
      %v1079 = vadd.f32 0.0, %v1078
      %v1080 = vpop.f32.mrb[0].mxu0
      %v1081 = vpop.f32.mrb[0].mxu0
      %v1082 = vadd.f32 0.0, %v1081
      %v1083 = vpop.f32.mrb[0].mxu0
      %1084 = vmatprep.mubr.bf16.mxu0 0
      %1085 = vmatmul.mubr.bf16.gmra.mrb[0].mxu0 %v851
      %v1086 = vpop.f32.mrb[0].mxu0
      %v1087 = vadd.f32 0.0, %v1086
      %v1088 = vpop.f32.mrb[0].mxu0
      %v1089 = vpop.f32.mrb[0].mxu0
      %v1090 = vadd.f32 0.0, %v1089
      %v1091 = vpop.f32.mrb[0].mxu0
      %1092 = vmatprep.mubr.bf16.mxu0 0
      %1093 = vmatmul.mubr.bf16.gmra.mrb[0].mxu0 %v854
      %v1094 = vpop.f32.mrb[0].mxu0
      %v1095 = vadd.f32 0.0, %v1094
      %v1096 = vpop.f32.mrb[0].mxu0
      %v1097 = vpop.f32.mrb[0].mxu0
      %v1098 = vadd.f32 0.0, %v1097
      %v1099 = vpop.f32.mrb[0].mxu0
      %1100 = vmatprep.mubr.bf16.mxu0 0
      %1101 = vmatmul.mubr.bf16.gmra.mrb[0].mxu0 %v857
      %v1102 = vpop.f32.mrb[0].mxu0
      %v1103 = vadd.f32 0.0, %v1102
      %v1104 = vpop.f32.mrb[0].mxu0
      %v1105 = vpop.f32.mrb[0].mxu0
      %v1106 = vadd.f32 0.0, %v1105
      %v1107 = vpop.f32.mrb[0].mxu0
      %1108 = vmatprep.mubr.bf16.mxu0 0
      %1109 = vmatmul.mubr.bf16.gmra.mrb[0].mxu0 %v860
      %v1110 = vpop.f32.mrb[0].mxu0
      %v1111 = vadd.f32 0.0, %v1110
      %v1112 = vpop.f32.mrb[0].mxu0
      %v1113 = vpop.f32.mrb[0].mxu0
      %v1114 = vadd.f32 0.0, %v1113
      %v1115 = vpop.f32.mrb[0].mxu0
      %1116 = vmatprep.mubr.bf16.mxu0 0
      %1117 = vmatmul.mubr.bf16.gmra.mrb[0].mxu0 %v863
      %v1118 = vpop.f32.mrb[0].mxu0
      %v1119 = vadd.f32 0.0, %v1118
      %v1120 = vpop.f32.mrb[0].mxu0
      %v1121 = vpop.f32.mrb[0].mxu0
      %v1122 = vadd.f32 0.0, %v1121
      %v1123 = vpop.f32.mrb[0].mxu0
      %1124 = vmatprep.mubr.bf16.mxu0 0
      %1125 = vmatmul.mubr.bf16.gmra.mrb[0].mxu0 %v866
      %v1126 = vpop.f32.mrb[0].mxu0
      %v1127 = vadd.f32 0.0, %v1126
      %v1128 = vpop.f32.mrb[0].mxu0
      %v1129 = vpop.f32.mrb[0].mxu0
      %v1130 = vadd.f32 0.0, %v1129
      %v1131 = vpop.f32.mrb[0].mxu0
      %1132 = vmatprep.mubr.bf16.mxu0 0
      %1133 = vmatmul.mubr.bf16.gmra.mrb[0].mxu0 %v869
      %v1134 = vpop.f32.mrb[0].mxu0
      %v1135 = vadd.f32 0.0, %v1134
      %v1136 = vpop.f32.mrb[0].mxu0
      %v1137 = vpop.f32.mrb[0].mxu0
      %v1138 = vadd.f32 0.0, %v1137
      %v1139 = vpop.f32.mrb[0].mxu0
      %1140 = vmatprep.mubr.bf16.mxu0 0
      %1141 = vmatmul.mubr.bf16.gmra.mrb[0].mxu0 %v872
      %v1142 = vpop.f32.mrb[0].mxu0
      %v1143 = vadd.f32 0.0, %v1142
      %v1144 = vpop.f32.mrb[0].mxu0
      %v1145 = vpop.f32.mrb[0].mxu0
      %v1146 = vadd.f32 0.0, %v1145
      %v1147 = vpop.f32.mrb[0].mxu0
      %1148 = vmatprep.mubr.bf16.mxu0 0
      %1149 = vmatmul.mubr.bf16.gmra.mrb[0].mxu0 %v875
      %v1150 = vpop.f32.mrb[0].mxu0
      %v1151 = vadd.f32 0.0, %v1150
      %v1152 = vpop.f32.mrb[0].mxu0
      %v1153 = vpop.f32.mrb[0].mxu0
      %v1154 = vadd.f32 0.0, %v1153
      %v1155 = vpop.f32.mrb[0].mxu0
      %1156 = vmatprep.mubr.bf16.mxu0 0
      %1157 = vmatmul.mubr.bf16.gmra.mrb[0].mxu0 %v878
      %v1158 = vpop.f32.mrb[0].mxu0
      %v1159 = vadd.f32 0.0, %v1158
      %v1160 = vpop.f32.mrb[0].mxu0
      %v1161 = vpop.f32.mrb[0].mxu0
      %v1162 = vadd.f32 0.0, %v1161
      %v1163 = vpop.f32.mrb[0].mxu0
      %1164 = vmatprep.mubr.bf16.mxu0 0
      %1165 = vmatmul.mubr.bf16.gmra.mrb[0].mxu0 %v881
      %v1166 = vpop.f32.mrb[0].mxu0
      %v1167 = vadd.f32 0.0, %v1166
      %v1168 = vpop.f32.mrb[0].mxu0
      %v1169 = vpop.f32.mrb[0].mxu0
      %v1170 = vadd.f32 0.0, %v1169
      %v1171 = vpop.f32.mrb[0].mxu0
      %1172 = vmatprep.mubr.bf16.mxu0 0
      %1173 = vmatmul.mubr.bf16.gmra.mrb[0].mxu0 %v884
      %v1174 = vpop.f32.mrb[0].mxu0
      %v1175 = vadd.f32 0.0, %v1174
      %v1176 = vpop.f32.mrb[0].mxu0
      %v1177 = vpop.f32.mrb[0].mxu0
      %v1178 = vadd.f32 0.0, %v1177
      %v1179 = vpop.f32.mrb[0].mxu0
      %1180 = vmatprep.mubr.bf16.mxu0 0
      %1181 = vmatmul.mubr.bf16.gmra.mrb[0].mxu0 %v887
      %v1182 = vpop.f32.mrb[0].mxu0
      %v1183 = vadd.f32 0.0, %v1182
      %v1184 = vpop.f32.mrb[0].mxu0
      %v1185 = vpop.f32.mrb[0].mxu0
      %v1186 = vadd.f32 0.0, %v1185
      %v1187 = vpop.f32.mrb[0].mxu0
      %1188 = vmatprep.mubr.bf16.mxu0 0
      %1189 = vmatmul.mubr.bf16.gmra.mrb[0].mxu0 %v890
      %v1190 = vpop.f32.mrb[0].mxu0
      %v1191 = vadd.f32 0.0, %v1190
      %v1192 = vpop.f32.mrb[0].mxu0
      %v1193 = vpop.f32.mrb[0].mxu0
      %v1194 = vadd.f32 0.0, %v1193
      %v1195 = vpop.f32.mrb[0].mxu0
      %1196 = vmatprep.mubr.bf16.mxu0 0
      %1197 = vmatmul.mubr.bf16.gmra.mrb[0].mxu0 %v893
      %v1198 = vpop.f32.mrb[0].mxu0
      %v1199 = vadd.f32 0.0, %v1198
      %v1200 = vpop.f32.mrb[0].mxu0
      %v1201 = vpop.f32.mrb[0].mxu0
      %v1202 = vadd.f32 0.0, %v1201
      %v1203 = vpop.f32.mrb[0].mxu0
      %1204 = vmatprep.mubr.bf16.mxu0 0
      %1205 = vmatmul.mubr.bf16.gmra.mrb[0].mxu0 %v896
      %v1206 = vpop.f32.mrb[0].mxu0
      %v1207 = vadd.f32 0.0, %v1206
      %v1208 = vpop.f32.mrb[0].mxu0
      %v1209 = vpop.f32.mrb[0].mxu0
      %v1210 = vadd.f32 0.0, %v1209
      %v1211 = vpop.f32.mrb[0].mxu0
      %1212 = vmatprep.mubr.bf16.mxu0 0
      %1213 = vmatmul.mubr.bf16.gmra.mrb[0].mxu0 %v899
      %v1214 = vpop.f32.mrb[0].mxu0
      %v1215 = vadd.f32 0.0, %v1214
      %v1216 = vpop.f32.mrb[0].mxu0
      %v1217 = vpop.f32.mrb[0].mxu0
      %v1218 = vadd.f32 0.0, %v1217
      %v1219 = vpop.f32.mrb[0].mxu0
      %1220 = vmatprep.mubr.bf16.mxu0 0
      %1221 = vmatmul.mubr.bf16.gmra.mrb[0].mxu0 %v902
      %v1222 = vpop.f32.mrb[0].mxu0
      %v1223 = vadd.f32 0.0, %v1222
      %v1224 = vpop.f32.mrb[0].mxu0
      %v1225 = vpop.f32.mrb[0].mxu0
      %v1226 = vadd.f32 0.0, %v1225
      %v1227 = vpop.f32.mrb[0].mxu0
      %1228 = vmatprep.mubr.bf16.mxu0 0
      %1229 = vmatmul.mubr.bf16.gmra.mrb[0].mxu0 %v905
      %v1230 = vpop.f32.mrb[0].mxu0
      %v1231 = vadd.f32 0.0, %v1230
      %v1232 = vpop.f32.mrb[0].mxu0
      %v1233 = vpop.f32.mrb[0].mxu0
      %v1234 = vadd.f32 0.0, %v1233
      %v1235 = vpop.f32.mrb[0].mxu0
      %1236 = vmatprep.mubr.bf16.mxu0 0
      %1237 = vmatmul.mubr.bf16.gmra.mrb[0].mxu0 %v908
      %v1238 = vpop.f32.mrb[0].mxu0
      %v1239 = vadd.f32 0.0, %v1238
      %v1240 = vpop.f32.mrb[0].mxu0
      %v1241 = vpop.f32.mrb[0].mxu0
      %v1242 = vadd.f32 0.0, %v1241
      %v1243 = vpop.f32.mrb[0].mxu0
      %1244 = vmatprep.mubr.bf16.mxu0 0
      %1245 = vmatmul.mubr.bf16.gmra.mrb[0].mxu0 %v911
      %v1246 = vpop.f32.mrb[0].mxu0
      %v1247 = vadd.f32 0.0, %v1246
      %v1248 = vpop.f32.mrb[0].mxu0
      %v1249 = vpop.f32.mrb[0].mxu0
      %v1250 = vadd.f32 0.0, %v1249
      %v1251 = vpop.f32.mrb[0].mxu0
      %1252 = vmatprep.mubr.bf16.mxu0 0
      %1253 = vmatmul.mubr.bf16.gmra.mrb[0].mxu0 %v914
      %v1254 = vpop.f32.mrb[0].mxu0
      %v1255 = vadd.f32 0.0, %v1254
      %v1256 = vpop.f32.mrb[0].mxu0
      %v1257 = vpop.f32.mrb[0].mxu0
      %v1258 = vadd.f32 0.0, %v1257
      %v1259 = vpop.f32.mrb[0].mxu0
      %1260 = vmatprep.mubr.bf16.mxu0 0
      %1261 = vmatmul.mubr.bf16.gmra.mrb[0].mxu0 %v917
      %v1262 = vpop.f32.mrb[0].mxu0
      %v1263 = vadd.f32 0.0, %v1262
      %v1264 = vpop.f32.mrb[0].mxu0
      %v1265 = vpop.f32.mrb[0].mxu0
      %v1266 = vadd.f32 0.0, %v1265
      %v1267 = vpop.f32.mrb[0].mxu0
      %1268 = vmatprep.mubr.bf16.mxu0 0
      %1269 = vmatmul.mubr.bf16.gmra.mrb[0].mxu0 %v920
      %v1270 = vpop.f32.mrb[0].mxu0
      %v1271 = vadd.f32 0.0, %v1270
      %v1272 = vpop.f32.mrb[0].mxu0
      %v1273 = vpop.f32.mrb[0].mxu0
      %v1274 = vadd.f32 0.0, %v1273
      %v1275 = vpop.f32.mrb[0].mxu0
      %1276 = vmatprep.mubr.bf16.mxu0 0
      %1277 = vmatmul.mubr.bf16.gmra.mrb[0].mxu0 %v923
      %v1278 = vpop.f32.mrb[0].mxu0
      %v1279 = vadd.f32 0.0, %v1278
      %v1280 = vpop.f32.mrb[0].mxu0
      %v1281 = vpop.f32.mrb[0].mxu0
      %v1282 = vadd.f32 0.0, %v1281
      %v1283 = vpop.f32.mrb[0].mxu0
      %1284 = vmatprep.mubr.bf16.mxu0 0
      %1285 = vmatmul.mubr.bf16.gmra.mrb[0].mxu0 %v926
      %v1286 = vpop.f32.mrb[0].mxu0
      %v1287 = vadd.f32 0.0, %v1286
      %v1288 = vpop.f32.mrb[0].mxu0
      %v1289 = vpop.f32.mrb[0].mxu0
      %v1290 = vadd.f32 0.0, %v1289
      %v1291 = vpop.f32.mrb[0].mxu0
      %1292 = vmatprep.mubr.bf16.mxu0 0
      %1293 = vmatmul.mubr.bf16.gmra.mrb[0].mxu0 %v929
      %v1294 = vpop.f32.mrb[0].mxu0
      %v1295 = vadd.f32 0.0, %v1294
      %v1296 = vpop.f32.mrb[0].mxu0
      %v1297 = vpop.f32.mrb[0].mxu0
      %v1298 = vadd.f32 0.0, %v1297
      %v1299 = vpop.f32.mrb[0].mxu0
      %1300 = vmatprep.mubr.bf16.mxu0 0
      %1301 = vmatmul.mubr.bf16.gmra.mrb[0].mxu0 %v932
      %v1302 = vpop.f32.mrb[0].mxu0
      %v1303 = vadd.f32 0.0, %v1302
      %v1304 = vpop.f32.mrb[0].mxu0
      %v1305 = vpop.f32.mrb[0].mxu0
      %v1306 = vadd.f32 0.0, %v1305
      %v1307 = vpop.f32.mrb[0].mxu0
      %1308 = vmatprep.mubr.bf16.mxu0 0
      %1309 = vmatmul.mubr.bf16.gmra.mrb[0].mxu0 %v935
      %v1310 = vpop.f32.mrb[0].mxu0
      %v1311 = vadd.f32 0.0, %v1310
      %v1312 = vpop.f32.mrb[0].mxu0
      %v1313 = vpop.f32.mrb[0].mxu0
      %v1314 = vadd.f32 0.0, %v1313
      %v1315 = vpop.f32.mrb[0].mxu0
      %1316 = vmatprep.mubr.bf16.mxu0 0
      %1317 = vmatmul.mubr.bf16.gmra.mrb[0].mxu0 %v938
      %v1318 = vpop.f32.mrb[0].mxu0
      %v1319 = vadd.f32 0.0, %v1318
      %v1320 = vpop.f32.mrb[0].mxu0
      %v1321 = vpop.f32.mrb[0].mxu0
      %v1322 = vadd.f32 0.0, %v1321
      %v1323 = vpop.f32.mrb[0].mxu0
      %1324 = vmatprep.mubr.bf16.mxu0 0
      %1325 = vmatmul.mubr.bf16.gmra.mrb[0].mxu0 %v941
      %v1326 = vpop.f32.mrb[0].mxu0
      %v1327 = vadd.f32 0.0, %v1326
      %v1328 = vpop.f32.mrb[0].mxu0
      %v1329 = vpop.f32.mrb[0].mxu0
      %v1330 = vadd.f32 0.0, %v1329
      %v1331 = vpop.f32.mrb[0].mxu0
      %1332 = vmatprep.mubr.bf16.mxu0 0
      %1333 = vmatmul.mubr.bf16.gmra.mrb[0].mxu0 %v944
      %v1334 = vpop.f32.mrb[0].mxu0
      %v1335 = vadd.f32 0.0, %v1334
      %v1336 = vpop.f32.mrb[0].mxu0
      %v1337 = vpop.f32.mrb[0].mxu0
      %v1338 = vadd.f32 0.0, %v1337
      %v1339 = vpop.f32.mrb[0].mxu0
      %1340 = vmatprep.mubr.bf16.mxu0 0
      %1341 = vmatmul.mubr.bf16.gmra.mrb[0].mxu0 %v947
      %v1342 = vpop.f32.mrb[0].mxu0
      %v1343 = vadd.f32 0.0, %v1342
      %v1344 = vpop.f32.mrb[0].mxu0
      %v1345 = vpop.f32.mrb[0].mxu0
      %v1346 = vadd.f32 0.0, %v1345
      %v1347 = vpop.f32.mrb[0].mxu0
      %1348 = vmatprep.mubr.bf16.mxu0 0
      %1349 = vmatmul.mubr.bf16.gmra.mrb[0].mxu0 %v950
      %v1350 = vpop.f32.mrb[0].mxu0
      %v1351 = vadd.f32 0.0, %v1350
      %v1352 = vpop.f32.mrb[0].mxu0
      %v1353 = vpop.f32.mrb[0].mxu0
      %v1354 = vadd.f32 0.0, %v1353
      %v1355 = vpop.f32.mrb[0].mxu0
      %1356 = vmatprep.mubr.bf16.mxu0 0
      %1357 = vmatmul.mubr.bf16.gmra.mrb[0].mxu0 %v953
      %v1358 = vpop.f32.mrb[0].mxu0
      %v1359 = vadd.f32 0.0, %v1358
      %v1360 = vpop.f32.mrb[0].mxu0
      %v1361 = vpop.f32.mrb[0].mxu0
      %v1362 = vadd.f32 0.0, %v1361
      %v1363 = vpop.f32.mrb[0].mxu0
      %1364 = vmatprep.mubr.bf16.mxu0 0
      %1365 = vmatmul.mubr.bf16.gmra.mrb[0].mxu0 %v956
      %v1366 = vpop.f32.mrb[0].mxu0
      %v1367 = vadd.f32 0.0, %v1366
      %v1368 = vpop.f32.mrb[0].mxu0
      %v1369 = vpop.f32.mrb[0].mxu0
      %v1370 = vadd.f32 0.0, %v1369
      %v1371 = vpop.f32.mrb[0].mxu0
      %1372 = vmatprep.mubr.bf16.mxu0 0
      %1373 = vmatmul.mubr.bf16.gmra.mrb[0].mxu0 %v959
      %v1374 = vpop.f32.mrb[0].mxu0
      %v1375 = vadd.f32 0.0, %v1374
      %v1376 = vpop.f32.mrb[0].mxu0
      %v1377 = vpop.f32.mrb[0].mxu0
      %v1378 = vadd.f32 0.0, %v1377
      %v1379 = vpop.f32.mrb[0].mxu0
      %1380 = vmatprep.mubr.bf16.mxu0 0
      %1381 = vmatmul.mubr.bf16.gmra.mrb[0].mxu0 %v962
      %v1382 = vpop.f32.mrb[0].mxu0
      %v1383 = vadd.f32 0.0, %v1382
      %v1384 = vpop.f32.mrb[0].mxu0
      %v1385 = vpop.f32.mrb[0].mxu0
      %v1386 = vadd.f32 0.0, %v1385
      %v1387 = vpop.f32.mrb[0].mxu0
      %1388 = vmatprep.mubr.bf16.mxu0 0
      %1389 = vmatmul.mubr.bf16.gmra.mrb[0].mxu0 %v965
      %v1390 = vpop.f32.mrb[0].mxu0
      %v1391 = vadd.f32 0.0, %v1390
      %v1392 = vpop.f32.mrb[0].mxu0
      %v1393 = vpop.f32.mrb[0].mxu0
      %v1394 = vadd.f32 0.0, %v1393
      %v1395 = vpop.f32.mrb[0].mxu0
      %1396 = vmatprep.mubr.bf16.mxu0 0
      %1397 = vmatmul.mubr.bf16.gmra.mrb[0].mxu0 %v968
      %v1398 = vpop.f32.mrb[0].mxu0
      %v1399 = vadd.f32 0.0, %v1398
      %v1400 = vpop.f32.mrb[0].mxu0
      %v1401 = vpop.f32.mrb[0].mxu0
      %v1402 = vadd.f32 0.0, %v1401
      %v1403 = vpop.f32.mrb[0].mxu0
      %1404 = vmatprep.mubr.bf16.mxu0 0
      %1405 = vmatmul.mubr.bf16.gmra.mrb[0].mxu0 %v971
      %v1406 = vpop.f32.mrb[0].mxu0
      %v1407 = vadd.f32 0.0, %v1406
      %v1408 = vpop.f32.mrb[0].mxu0
      %v1409 = vpop.f32.mrb[0].mxu0
      %v1410 = vadd.f32 0.0, %v1409
      %v1411 = vpop.f32.mrb[0].mxu0
      %1412 = vmatprep.mubr.bf16.mxu0 0
      %1413 = vmatmul.mubr.bf16.gmra.mrb[0].mxu0 %v974
      %v1414 = vpop.f32.mrb[0].mxu0
      %v1415 = vadd.f32 0.0, %v1414
      %v1416 = vpop.f32.mrb[0].mxu0
      %v1417 = vpop.f32.mrb[0].mxu0
      %v1418 = vadd.f32 0.0, %v1417
      %v1419 = vpop.f32.mrb[0].mxu0
      %1420 = vmatprep.mubr.bf16.mxu0 0
      %1421 = vmatmul.mubr.bf16.gmra.mrb[0].mxu0 %v977
      %v1422 = vpop.f32.mrb[0].mxu0
      %v1423 = vadd.f32 0.0, %v1422
      %v1424 = vpop.f32.mrb[0].mxu0
      %v1425 = vpop.f32.mrb[0].mxu0
      %v1426 = vadd.f32 0.0, %v1425
      %v1427 = vpop.f32.mrb[0].mxu0
      %1428 = vmatprep.mubr.bf16.mxu0 0
      %1429 = vmatmul.mubr.bf16.gmra.mrb[0].mxu0 %v980
      %v1430 = vpop.f32.mrb[0].mxu0
      %v1431 = vadd.f32 0.0, %v1430
      %v1432 = vpop.f32.mrb[0].mxu0
      %v1433 = vpop.f32.mrb[0].mxu0
      %v1434 = vadd.f32 0.0, %v1433
      %v1435 = vpop.f32.mrb[0].mxu0
      %1436 = vmatprep.mubr.bf16.mxu0 0
      %1437 = vmatmul.mubr.bf16.gmra.mrb[0].mxu0 %v983
      %v1438 = vpop.f32.mrb[0].mxu0
      %v1439 = vadd.f32 0.0, %v1438
      %v1440 = vpop.f32.mrb[0].mxu0
      %v1441 = vpop.f32.mrb[0].mxu0
      %v1442 = vadd.f32 0.0, %v1441
      %v1443 = vpop.f32.mrb[0].mxu0
      %1444 = vmatprep.mubr.bf16.mxu0 0
      %1445 = vmatmul.mubr.bf16.gmra.mrb[0].mxu0 %v986
      %v1446 = vpop.f32.mrb[0].mxu0
      %v1447 = vadd.f32 0.0, %v1446
      %v1448 = vpop.f32.mrb[0].mxu0
      %v1449 = vpop.f32.mrb[0].mxu0
      %v1450 = vadd.f32 0.0, %v1449
      %v1451 = vpop.f32.mrb[0].mxu0
      %1452 = vmatprep.mubr.bf16.mxu0 0
      %1453 = vmatmul.mubr.bf16.gmra.mrb[0].mxu0 %v989
      %v1454 = vpop.f32.mrb[0].mxu0
      %v1455 = vadd.f32 0.0, %v1454
      %v1456 = vpop.f32.mrb[0].mxu0
      %v1457 = vpop.f32.mrb[0].mxu0
      %v1458 = vadd.f32 0.0, %v1457
      %v1459 = vpop.f32.mrb[0].mxu0
      %1460 = vmatprep.mubr.bf16.mxu0 0
      %1461 = vmatmul.mubr.bf16.gmra.mrb[0].mxu0 %v992
      %v1462 = vpop.f32.mrb[0].mxu0
      %v1463 = vadd.f32 0.0, %v1462
      %v1464 = vpop.f32.mrb[0].mxu0
      %v1465 = vpop.f32.mrb[0].mxu0
      %v1466 = vadd.f32 0.0, %v1465
      %v1467 = vpop.f32.mrb[0].mxu0
      %1468 = vmatprep.mubr.bf16.mxu0 0
      %1469 = vmatmul.mubr.bf16.gmra.mrb[0].mxu0 %v995
      %v1470 = vpop.f32.mrb[0].mxu0
      %v1471 = vadd.f32 0.0, %v1470
      %v1472 = vpop.f32.mrb[0].mxu0
      %v1473 = vpop.f32.mrb[0].mxu0
      %v1474 = vadd.f32 0.0, %v1473
      %v1475 = vpop.f32.mrb[0].mxu0
      %1476 = vmatprep.mubr.bf16.mxu0 0
      %1477 = vmatmul.mubr.bf16.gmra.mrb[0].mxu0 %v998
      %v1478 = vpop.f32.mrb[0].mxu0
      %v1479 = vadd.f32 0.0, %v1478
      %v1480 = vpop.f32.mrb[0].mxu0
      %v1481 = vpop.f32.mrb[0].mxu0
      %v1482 = vadd.f32 0.0, %v1481
      %v1483 = vpop.f32.mrb[0].mxu0
      %1484 = vmatprep.mubr.bf16.mxu0 0
      %1485 = vmatmul.mubr.bf16.gmra.mrb[0].mxu0 %v1001
      %v1486 = vpop.f32.mrb[0].mxu0
      %v1487 = vadd.f32 0.0, %v1486
      %v1488 = vpop.f32.mrb[0].mxu0
      %v1489 = vpop.f32.mrb[0].mxu0
      %v1490 = vadd.f32 0.0, %v1489
      %v1491 = vpop.f32.mrb[0].mxu0
      %1492 = vmatprep.mubr.bf16.mxu0 0
      %1493 = vmatmul.mubr.bf16.gmra.mrb[0].mxu0 %v1004
      %v1494 = vpop.f32.mrb[0].mxu0
      %v1495 = vadd.f32 0.0, %v1494
      %v1496 = vpop.f32.mrb[0].mxu0
      %v1497 = vpop.f32.mrb[0].mxu0
      %v1498 = vadd.f32 0.0, %v1497
      %v1499 = vpop.f32.mrb[0].mxu0
      %1500 = vmatprep.mubr.bf16.mxu0 0
      %1501 = vmatmul.mubr.bf16.gmra.mrb[0].mxu0 %v1007
      %v1502 = vpop.f32.mrb[0].mxu0
      %v1503 = vadd.f32 0.0, %v1502
      %v1504 = vpop.f32.mrb[0].mxu0
      %v1505 = vpop.f32.mrb[0].mxu0
      %v1506 = vadd.f32 0.0, %v1505
      %v1507 = vpop.f32.mrb[0].mxu0
      %1508 = vmatprep.mubr.bf16.mxu0 0
      %1509 = vmatmul.mubr.bf16.gmra.mrb[0].mxu0 %v1010
      %v1510 = vpop.f32.mrb[0].mxu0
      %v1511 = vadd.f32 0.0, %v1510
      %v1512 = vpop.f32.mrb[0].mxu0
      %v1513 = vpop.f32.mrb[0].mxu0
      %v1514 = vadd.f32 0.0, %v1513
      %v1515 = vpop.f32.mrb[0].mxu0
      %1516 = vmatprep.mubr.bf16.mxu0 0
      %1517 = vmatmul.mubr.bf16.gmra.mrb[0].mxu0 %v1013
      %v1518 = vpop.f32.mrb[0].mxu0
      %v1519 = vadd.f32 0.0, %v1518
      %v1520 = vpop.f32.mrb[0].mxu0
      %v1521 = vpop.f32.mrb[0].mxu0
      %v1522 = vadd.f32 0.0, %v1521
      %v1523 = vpop.f32.mrb[0].mxu0
      %1524 = vmatprep.mubr.bf16.mxu0 0
      %1525 = vmatmul.mubr.bf16.gmra.mrb[0].mxu0 %v1016
      %v1526 = vpop.f32.mrb[0].mxu0
      %v1527 = vadd.f32 0.0, %v1526
      %v1528 = vpop.f32.mrb[0].mxu0
      %v1529 = vpop.f32.mrb[0].mxu0
      %v1530 = vadd.f32 0.0, %v1529
      %v1531 = vpop.f32.mrb[0].mxu0
      %1532 = vmatprep.mubr.bf16.mxu0 0
      %1533 = vmatmul.mubr.bf16.gmra.mrb[0].mxu0 %v1019
      %v1534 = vpop.f32.mrb[0].mxu0
      %v1535 = vadd.f32 0.0, %v1534
      %v1536 = vpop.f32.mrb[0].mxu0
      %v1537 = vpop.f32.mrb[0].mxu0
      %v1538 = vadd.f32 0.0, %v1537
      %v1539 = vpop.f32.mrb[0].mxu0
      %1540 = vmatprep.mubr.bf16.mxu0 0
      %1541 = vmatmul.mubr.bf16.gmra.mrb[0].mxu0 %v1022
      %v1542 = vpop.f32.mrb[0].mxu0
      %v1543 = vadd.f32 0.0, %v1542
      %v1544 = vpop.f32.mrb[0].mxu0
      %v1545 = vpop.f32.mrb[0].mxu0
      %v1546 = vadd.f32 0.0, %v1545
      %v1547 = vpop.f32.mrb[0].mxu0
      %1548 = vmatprep.mubr.bf16.mxu0 0
      %1549 = vmatmul.mubr.bf16.gmra.mrb[0].mxu0 %v1025
      %v1550 = vpop.f32.mrb[0].mxu0
      %v1551 = vadd.f32 0.0, %v1550
      %v1552 = vpop.f32.mrb[0].mxu0
      %v1553 = vpop.f32.mrb[0].mxu0
      %v1554 = vadd.f32 0.0, %v1553
      %v1555 = vpop.f32.mrb[0].mxu0
      %1556 = vmatprep.mubr.bf16.mxu0 0
      %1557 = vmatmul.mubr.bf16.gmra.mrb[0].mxu0 %v1028
      %v1558 = vpop.f32.mrb[0].mxu0
      %v1559 = vadd.f32 0.0, %v1558
      %v1560 = vpop.f32.mrb[0].mxu0
      %v1561 = vpop.f32.mrb[0].mxu0
      %v1562 = vadd.f32 0.0, %v1561
      %v1563 = vpop.f32.mrb[0].mxu0
      %1564 = vmatprep.mubr.bf16.mxu0 0
      %1565 = vmatmul.mubr.bf16.gmra.mrb[0].mxu0 %v1031
      %v1566 = vpop.f32.mrb[0].mxu0
      %v1567 = vadd.f32 0.0, %v1566
      %v1568 = vpop.f32.mrb[0].mxu0
      %v1569 = vpop.f32.mrb[0].mxu0
      %v1570 = vadd.f32 0.0, %v1569
      %v1571 = vpop.f32.mrb[0].mxu0
      %1572 = vmatprep.mubr.bf16.mxu0 0
      %1573 = vmatmul.mubr.bf16.gmra.mrb[0].mxu0 %v1034
      %v1574 = vpop.f32.mrb[0].mxu0
      %v1575 = vadd.f32 0.0, %v1574
      %v1576 = vpop.f32.mrb[0].mxu0
      %v1577 = vpop.f32.mrb[0].mxu0
      %v1578 = vadd.f32 0.0, %v1577
      %v1579 = vpop.f32.mrb[0].mxu0
      %1580 = vdwg.mxu0
      %v1709 = vunpack.c.l.b16 %v246
      %v1710 = vunpack.c.l.b16 %v247
      %v1711 = vunpack.c.l.b16 %v248
      %v1712 = vunpack.c.l.b16 %v249
      %v1713 = vunpack.c.l.b16 %v250
      %v1714 = vunpack.c.l.b16 %v251
      %v1715 = vunpack.c.l.b16 %v252
      %v1716 = vunpack.c.l.b16 %v253
      %v1717 = vunpack.c.l.b16 %v254
      %v1718 = vunpack.c.l.b16 %v255
      %v1719 = vunpack.c.l.b16 %v256
      %v1720 = vunpack.c.l.b16 %v257
      %v1721 = vunpack.c.l.b16 %v258
      %v1722 = vunpack.c.l.b16 %v259
      %v1723 = vunpack.c.l.b16 %v260
      %v1724 = vunpack.c.l.b16 %v261
      %v1725 = vunpack.c.l.b16 %v262
      %v1726 = vunpack.c.l.b16 %v263
      %v1727 = vunpack.c.l.b16 %v264
      %v1728 = vunpack.c.l.b16 %v265
      %v1729 = vunpack.c.l.b16 %v266
      %v1730 = vunpack.c.l.b16 %v267
      %v1731 = vunpack.c.l.b16 %v268
      %v1732 = vunpack.c.l.b16 %v269
      %v1733 = vunpack.c.l.b16 %v270
      %v1734 = vunpack.c.l.b16 %v271
      %v1735 = vunpack.c.l.b16 %v272
      %v1736 = vunpack.c.l.b16 %v273
      %v1737 = vunpack.c.l.b16 %v274
      %v1738 = vunpack.c.l.b16 %v275
      %v1739 = vunpack.c.l.b16 %v276
      %v1740 = vunpack.c.l.b16 %v277
      %v1741 = vunpack.c.l.b16 %v278
      %v1742 = vunpack.c.l.b16 %v279
      %v1743 = vunpack.c.l.b16 %v280
      %v1744 = vunpack.c.l.b16 %v281
      %v1745 = vunpack.c.l.b16 %v282
      %v1746 = vunpack.c.l.b16 %v283
      %v1747 = vunpack.c.l.b16 %v284
      %v1748 = vunpack.c.l.b16 %v285
      %v1749 = vunpack.c.l.b16 %v286
      %v1750 = vunpack.c.l.b16 %v287
      %v1751 = vunpack.c.l.b16 %v288
      %v1752 = vunpack.c.l.b16 %v289
      %v1753 = vunpack.c.l.b16 %v290
      %v1754 = vunpack.c.l.b16 %v291
      %v1755 = vunpack.c.l.b16 %v292
      %v1756 = vunpack.c.l.b16 %v293
      %v1757 = vunpack.c.l.b16 %v294
      %v1758 = vunpack.c.l.b16 %v295
      %v1759 = vunpack.c.l.b16 %v296
      %v1760 = vunpack.c.l.b16 %v297
      %v1761 = vunpack.c.l.b16 %v298
      %v1762 = vunpack.c.l.b16 %v299
      %v1763 = vunpack.c.l.b16 %v300
      %v1764 = vunpack.c.l.b16 %v301
      %v1765 = vunpack.c.l.b16 %v302
      %v1766 = vunpack.c.l.b16 %v303
      %v1767 = vunpack.c.l.b16 %v304
      %v1768 = vunpack.c.l.b16 %v305
      %v1769 = vunpack.c.l.b16 %v306
      %v1770 = vunpack.c.l.b16 %v307
      %v1771 = vunpack.c.l.b16 %v308
      %v1772 = vunpack.c.l.b16 %v309
      %v1773 = vunpack.c.l.b16 %v310
      %v1774 = vunpack.c.l.b16 %v311
      %v1775 = vunpack.c.l.b16 %v312
      %v1776 = vunpack.c.l.b16 %v313
      %v1777 = vunpack.c.l.b16 %v314
      %v1778 = vunpack.c.l.b16 %v315
      %v1779 = vunpack.c.l.b16 %v316
      %v1780 = vunpack.c.l.b16 %v317
      %v1781 = vunpack.c.l.b16 %v318
      %v1782 = vunpack.c.l.b16 %v319
      %v1783 = vunpack.c.l.b16 %v320
      %v1784 = vunpack.c.l.b16 %v321
      %v1785 = vunpack.c.l.b16 %v322
      %v1786 = vunpack.c.l.b16 %v323
      %v1787 = vunpack.c.l.b16 %v324
      %v1788 = vunpack.c.l.b16 %v325
      %v1789 = vunpack.c.l.b16 %v326
      %v1790 = vunpack.c.l.b16 %v327
      %v1791 = vunpack.c.l.b16 %v328
      %v1792 = vunpack.c.l.b16 %v329
      %v1793 = vunpack.c.l.b16 %v330
      %v1794 = vunpack.c.l.b16 %v331
      %v1795 = vunpack.c.l.b16 %v332
      %v1796 = vunpack.c.l.b16 %v333
      %v1797 = vunpack.c.l.b16 %v334
      %v1798 = vunpack.c.l.b16 %v335
      %v1799 = vunpack.c.l.b16 %v336
      %v1800 = vunpack.c.l.b16 %v337
      %v1801 = vunpack.c.l.b16 %v338
      %v1802 = vunpack.c.l.b16 %v339
      %v1803 = vunpack.c.l.b16 %v340
      %v1804 = vunpack.c.l.b16 %v341
      %v1805 = vunpack.c.l.b16 %v342
      %v1806 = vunpack.c.l.b16 %v343
      %v1807 = vunpack.c.l.b16 %v344
      %v1808 = vunpack.c.l.b16 %v345
      %v1809 = vunpack.c.l.b16 %v346
      %v1810 = vunpack.c.l.b16 %v347
      %v1811 = vunpack.c.l.b16 %v348
      %v1812 = vunpack.c.l.b16 %v349
      %v1813 = vunpack.c.l.b16 %v350
      %v1814 = vunpack.c.l.b16 %v351
      %v1815 = vunpack.c.l.b16 %v352
      %v1816 = vunpack.c.l.b16 %v353
      %v1817 = vunpack.c.l.b16 %v354
      %v1818 = vunpack.c.l.b16 %v355
      %v1819 = vunpack.c.l.b16 %v356
      %v1820 = vunpack.c.l.b16 %v357
      %v1821 = vunpack.c.l.b16 %v358
      %v1822 = vunpack.c.l.b16 %v359
      %v1823 = vunpack.c.l.b16 %v360
      %v1824 = vunpack.c.l.b16 %v361
      %v1825 = vunpack.c.l.b16 %v362
      %v1826 = vunpack.c.l.b16 %v363
      %v1827 = vunpack.c.l.b16 %v364
      %v1828 = vunpack.c.l.b16 %v365
      %v1829 = vunpack.c.l.b16 %v366
      %v1830 = vunpack.c.l.b16 %v367
      %v1831 = vunpack.c.l.b16 %v368
      %v1832 = vunpack.c.l.b16 %v369
      %v1833 = vunpack.c.l.b16 %v370
      %v1834 = vunpack.c.l.b16 %v371
      %v1835 = vunpack.c.l.b16 %v372
      %v1836 = vunpack.c.l.b16 %v373
      %v1837 = vpack.c.b16 %v1710, %v1709
      %v1838 = vpack.c.b16 %v1712, %v1711
      %v1839 = vpack.c.b16 %v1714, %v1713
      %v1840 = vpack.c.b16 %v1716, %v1715
      %v1841 = vpack.c.b16 %v1718, %v1717
      %v1842 = vpack.c.b16 %v1720, %v1719
      %v1843 = vpack.c.b16 %v1722, %v1721
      %v1844 = vpack.c.b16 %v1724, %v1723
      %v1845 = vpack.c.b16 %v1726, %v1725
      %v1846 = vpack.c.b16 %v1728, %v1727
      %v1847 = vpack.c.b16 %v1730, %v1729
      %v1848 = vpack.c.b16 %v1732, %v1731
      %v1849 = vpack.c.b16 %v1734, %v1733
      %v1850 = vpack.c.b16 %v1736, %v1735
      %v1851 = vpack.c.b16 %v1738, %v1737
      %v1852 = vpack.c.b16 %v1740, %v1739
      %v1853 = vpack.c.b16 %v1742, %v1741
      %v1854 = vpack.c.b16 %v1744, %v1743
      %v1855 = vpack.c.b16 %v1746, %v1745
      %v1856 = vpack.c.b16 %v1748, %v1747
      %v1857 = vpack.c.b16 %v1750, %v1749
      %v1858 = vpack.c.b16 %v1752, %v1751
      %v1859 = vpack.c.b16 %v1754, %v1753
      %v1860 = vpack.c.b16 %v1756, %v1755
      %v1861 = vpack.c.b16 %v1758, %v1757
      %v1862 = vpack.c.b16 %v1760, %v1759
      %v1863 = vpack.c.b16 %v1762, %v1761
      %v1864 = vpack.c.b16 %v1764, %v1763
      %v1865 = vpack.c.b16 %v1766, %v1765
      %v1866 = vpack.c.b16 %v1768, %v1767
      %v1867 = vpack.c.b16 %v1770, %v1769
      %v1868 = vpack.c.b16 %v1772, %v1771
      %v1869 = vpack.c.b16 %v1774, %v1773
      %v1870 = vpack.c.b16 %v1776, %v1775
      %v1871 = vpack.c.b16 %v1778, %v1777
      %v1872 = vpack.c.b16 %v1780, %v1779
      %v1873 = vpack.c.b16 %v1782, %v1781
      %v1874 = vpack.c.b16 %v1784, %v1783
      %v1875 = vpack.c.b16 %v1786, %v1785
      %v1876 = vpack.c.b16 %v1788, %v1787
      %v1877 = vpack.c.b16 %v1790, %v1789
      %v1878 = vpack.c.b16 %v1792, %v1791
      %v1879 = vpack.c.b16 %v1794, %v1793
      %v1880 = vpack.c.b16 %v1796, %v1795
      %v1881 = vpack.c.b16 %v1798, %v1797
      %v1882 = vpack.c.b16 %v1800, %v1799
      %v1883 = vpack.c.b16 %v1802, %v1801
      %v1884 = vpack.c.b16 %v1804, %v1803
      %v1885 = vpack.c.b16 %v1806, %v1805
      %v1886 = vpack.c.b16 %v1808, %v1807
      %v1887 = vpack.c.b16 %v1810, %v1809
      %v1888 = vpack.c.b16 %v1812, %v1811
      %v1889 = vpack.c.b16 %v1814, %v1813
      %v1890 = vpack.c.b16 %v1816, %v1815
      %v1891 = vpack.c.b16 %v1818, %v1817
      %v1892 = vpack.c.b16 %v1820, %v1819
      %v1893 = vpack.c.b16 %v1822, %v1821
      %v1894 = vpack.c.b16 %v1824, %v1823
      %v1895 = vpack.c.b16 %v1826, %v1825
      %v1896 = vpack.c.b16 %v1828, %v1827
      %v1897 = vpack.c.b16 %v1830, %v1829
      %v1898 = vpack.c.b16 %v1832, %v1831
      %v1899 = vpack.c.b16 %v1834, %v1833
      %v1900 = vpack.c.b16 %v1836, %v1835
      %v1905 = vunpack.c.l.b16 %v374
      %v1906 = vunpack.c.l.b16 %v375
      %v1907 = vunpack.c.l.b16 %v376
      %v1908 = vunpack.c.l.b16 %v377
      %v1909 = vpack.c.b16 %v1906, %v1905
      %v1910 = vpack.c.b16 %v1908, %v1907
      %v1914 = vsel %vm843, %v1837, 0
      %v1917 = vsel %vm843, %v1838, 0
      %v1920 = vsel %vm843, %v1839, 0
      %v1923 = vsel %vm843, %v1840, 0
      %v1926 = vsel %vm843, %v1841, 0
      %v1929 = vsel %vm843, %v1842, 0
      %v1932 = vsel %vm843, %v1843, 0
      %v1935 = vsel %vm843, %v1844, 0
      %v1938 = vsel %vm843, %v1845, 0
      %v1941 = vsel %vm843, %v1846, 0
      %v1944 = vsel %vm843, %v1847, 0
      %v1947 = vsel %vm843, %v1848, 0
      %v1950 = vsel %vm843, %v1849, 0
      %v1953 = vsel %vm843, %v1850, 0
      %v1956 = vsel %vm843, %v1851, 0
      %v1959 = vsel %vm843, %v1852, 0
      %v1962 = vsel %vm843, %v1853, 0
      %v1965 = vsel %vm843, %v1854, 0
      %v1968 = vsel %vm843, %v1855, 0
      %v1971 = vsel %vm843, %v1856, 0
      %v1974 = vsel %vm843, %v1857, 0
      %v1977 = vsel %vm843, %v1858, 0
      %v1980 = vsel %vm843, %v1859, 0
      %v1983 = vsel %vm843, %v1860, 0
      %v1986 = vsel %vm843, %v1861, 0
      %v1989 = vsel %vm843, %v1862, 0
      %v1992 = vsel %vm843, %v1863, 0
      %v1995 = vsel %vm843, %v1864, 0
      %v1998 = vsel %vm843, %v1865, 0
      %v2001 = vsel %vm843, %v1866, 0
      %v2004 = vsel %vm843, %v1867, 0
      %v2007 = vsel %vm843, %v1868, 0
      %v2010 = vsel %vm843, %v1869, 0
      %v2013 = vsel %vm843, %v1870, 0
      %v2016 = vsel %vm843, %v1871, 0
      %v2019 = vsel %vm843, %v1872, 0
      %v2022 = vsel %vm843, %v1873, 0
      %v2025 = vsel %vm843, %v1874, 0
      %v2028 = vsel %vm843, %v1875, 0
      %v2031 = vsel %vm843, %v1876, 0
      %v2034 = vsel %vm843, %v1877, 0
      %v2037 = vsel %vm843, %v1878, 0
      %v2040 = vsel %vm843, %v1879, 0
      %v2043 = vsel %vm843, %v1880, 0
      %v2046 = vsel %vm843, %v1881, 0
      %v2049 = vsel %vm843, %v1882, 0
      %v2052 = vsel %vm843, %v1883, 0
      %v2055 = vsel %vm843, %v1884, 0
      %v2058 = vsel %vm843, %v1885, 0
      %v2061 = vsel %vm843, %v1886, 0
      %v2064 = vsel %vm843, %v1887, 0
      %v2067 = vsel %vm843, %v1888, 0
      %v2070 = vsel %vm843, %v1889, 0
      %v2073 = vsel %vm843, %v1890, 0
      %v2076 = vsel %vm843, %v1891, 0
      %v2079 = vsel %vm843, %v1892, 0
      %v2082 = vsel %vm843, %v1893, 0
      %v2085 = vsel %vm843, %v1894, 0
      %v2088 = vsel %vm843, %v1895, 0
      %v2091 = vsel %vm843, %v1896, 0
      %v2094 = vsel %vm843, %v1897, 0
      %v2097 = vsel %vm843, %v1898, 0
      %v2100 = vsel %vm843, %v1899, 0
      %v2103 = vsel %vm843, %v1900, 0
      %2105 = vmatprep.subr.bf16.mxu0 0
      %2106 = vmatpush1.bf16.msra.mxu0 %v1909
      %2107 = vmatprep.subr.bf16.mxu0 0
      %2108 = vmatpush1.bf16.msra.mxu0 %v1910
      %2109 = vmatprep.subr.bf16.mxu0 0
      %2110 = vmatpush1.bf16.msra.mxu0 0
      %2111 = vmatprep.subr.bf16.mxu0 0
      %2112 = vmatpush1.bf16.msra.mxu0 0
      %2113 = vmatprep.subr.bf16.mxu0 0
      %2114 = vmatpush1.bf16.msra.mxu0 0
      %2115 = vmatprep.subr.bf16.mxu0 0
      %2116 = vmatpush1.bf16.msra.mxu0 0
      %2117 = vmatprep.subr.bf16.mxu0 0
      %2118 = vmatpush1.bf16.msra.mxu0 0
      %2119 = vmatprep.subr.bf16.mxu0 0
      %2120 = vmatpush1.bf16.msra.mxu0 0
      %2121 = vmatprep.subr.bf16.mxu0 0
      %2122 = vmatpush1.bf16.msra.mxu0 0
      %2123 = vmatprep.subr.bf16.mxu0 0
      %2124 = vmatpush1.bf16.msra.mxu0 0
      %2125 = vmatprep.subr.bf16.mxu0 0
      %2126 = vmatpush1.bf16.msra.mxu0 0
      %2127 = vmatprep.subr.bf16.mxu0 0
      %2128 = vmatpush1.bf16.msra.mxu0 0
      %2129 = vmatprep.subr.bf16.mxu0 0
      %2130 = vmatpush1.bf16.msra.mxu0 0
      %2131 = vmatprep.subr.bf16.mxu0 0
      %2132 = vmatpush1.bf16.msra.mxu0 0
      %2133 = vmatprep.subr.bf16.mxu0 0
      %2134 = vmatpush1.bf16.msra.mxu0 0
      %2135 = vmatprep.subr.bf16.mxu0 0
      %2136 = vmatpush1.bf16.msra.mxu0 0
      %2137 = vmatprep.mubr.bf16.mxu0 0
      %2138 = vmatmul.mubr.bf16.gmra.mrb[0].mxu0 %v1914
      %v2139 = vpop.f32.mrb[0].mxu0
      %v2140 = vadd.f32 %v1071, %v2139
      %v2141 = vpop.f32.mrb[0].mxu0
      %v2142 = vpop.f32.mrb[0].mxu0
      %v2143 = vadd.f32 %v1074, %v2142
      %v2144 = vpop.f32.mrb[0].mxu0
      %2145 = vmatprep.mubr.bf16.mxu0 0
      %2146 = vmatmul.mubr.bf16.gmra.mrb[0].mxu0 %v1917
      %v2147 = vpop.f32.mrb[0].mxu0
      %v2148 = vadd.f32 %v1079, %v2147
      %v2149 = vpop.f32.mrb[0].mxu0
      %v2150 = vpop.f32.mrb[0].mxu0
      %v2151 = vadd.f32 %v1082, %v2150
      %v2152 = vpop.f32.mrb[0].mxu0
      %2153 = vmatprep.mubr.bf16.mxu0 0
      %2154 = vmatmul.mubr.bf16.gmra.mrb[0].mxu0 %v1920
      %v2155 = vpop.f32.mrb[0].mxu0
      %v2156 = vadd.f32 %v1087, %v2155
      %v2157 = vpop.f32.mrb[0].mxu0
      %v2158 = vpop.f32.mrb[0].mxu0
      %v2159 = vadd.f32 %v1090, %v2158
      %v2160 = vpop.f32.mrb[0].mxu0
      %2161 = vmatprep.mubr.bf16.mxu0 0
      %2162 = vmatmul.mubr.bf16.gmra.mrb[0].mxu0 %v1923
      %v2163 = vpop.f32.mrb[0].mxu0
      %v2164 = vadd.f32 %v1095, %v2163
      %v2165 = vpop.f32.mrb[0].mxu0
      %v2166 = vpop.f32.mrb[0].mxu0
      %v2167 = vadd.f32 %v1098, %v2166
      %v2168 = vpop.f32.mrb[0].mxu0
      %2169 = vmatprep.mubr.bf16.mxu0 0
      %2170 = vmatmul.mubr.bf16.gmra.mrb[0].mxu0 %v1926
      %v2171 = vpop.f32.mrb[0].mxu0
      %v2172 = vadd.f32 %v1103, %v2171
      %v2173 = vpop.f32.mrb[0].mxu0
      %v2174 = vpop.f32.mrb[0].mxu0
      %v2175 = vadd.f32 %v1106, %v2174
      %v2176 = vpop.f32.mrb[0].mxu0
      %2177 = vmatprep.mubr.bf16.mxu0 0
      %2178 = vmatmul.mubr.bf16.gmra.mrb[0].mxu0 %v1929
      %v2179 = vpop.f32.mrb[0].mxu0
      %v2180 = vadd.f32 %v1111, %v2179
      %v2181 = vpop.f32.mrb[0].mxu0
      %v2182 = vpop.f32.mrb[0].mxu0
      %v2183 = vadd.f32 %v1114, %v2182
      %v2184 = vpop.f32.mrb[0].mxu0
      %2185 = vmatprep.mubr.bf16.mxu0 0
      %2186 = vmatmul.mubr.bf16.gmra.mrb[0].mxu0 %v1932
      %v2187 = vpop.f32.mrb[0].mxu0
      %v2188 = vadd.f32 %v1119, %v2187
      %v2189 = vpop.f32.mrb[0].mxu0
      %v2190 = vpop.f32.mrb[0].mxu0
      %v2191 = vadd.f32 %v1122, %v2190
      %v2192 = vpop.f32.mrb[0].mxu0
      %2193 = vmatprep.mubr.bf16.mxu0 0
      %2194 = vmatmul.mubr.bf16.gmra.mrb[0].mxu0 %v1935
      %v2195 = vpop.f32.mrb[0].mxu0
      %v2196 = vadd.f32 %v1127, %v2195
      %v2197 = vpop.f32.mrb[0].mxu0
      %v2198 = vpop.f32.mrb[0].mxu0
      %v2199 = vadd.f32 %v1130, %v2198
      %v2200 = vpop.f32.mrb[0].mxu0
      %2201 = vmatprep.mubr.bf16.mxu0 0
      %2202 = vmatmul.mubr.bf16.gmra.mrb[0].mxu0 %v1938
      %v2203 = vpop.f32.mrb[0].mxu0
      %v2204 = vadd.f32 %v1135, %v2203
      %v2205 = vpop.f32.mrb[0].mxu0
      %v2206 = vpop.f32.mrb[0].mxu0
      %v2207 = vadd.f32 %v1138, %v2206
      %v2208 = vpop.f32.mrb[0].mxu0
      %2209 = vmatprep.mubr.bf16.mxu0 0
      %2210 = vmatmul.mubr.bf16.gmra.mrb[0].mxu0 %v1941
      %v2211 = vpop.f32.mrb[0].mxu0
      %v2212 = vadd.f32 %v1143, %v2211
      %v2213 = vpop.f32.mrb[0].mxu0
      %v2214 = vpop.f32.mrb[0].mxu0
      %v2215 = vadd.f32 %v1146, %v2214
      %v2216 = vpop.f32.mrb[0].mxu0
      %2217 = vmatprep.mubr.bf16.mxu0 0
      %2218 = vmatmul.mubr.bf16.gmra.mrb[0].mxu0 %v1944
      %v2219 = vpop.f32.mrb[0].mxu0
      %v2220 = vadd.f32 %v1151, %v2219
      %v2221 = vpop.f32.mrb[0].mxu0
      %v2222 = vpop.f32.mrb[0].mxu0
      %v2223 = vadd.f32 %v1154, %v2222
      %v2224 = vpop.f32.mrb[0].mxu0
      %2225 = vmatprep.mubr.bf16.mxu0 0
      %2226 = vmatmul.mubr.bf16.gmra.mrb[0].mxu0 %v1947
      %v2227 = vpop.f32.mrb[0].mxu0
      %v2228 = vadd.f32 %v1159, %v2227
      %v2229 = vpop.f32.mrb[0].mxu0
      %v2230 = vpop.f32.mrb[0].mxu0
      %v2231 = vadd.f32 %v1162, %v2230
      %v2232 = vpop.f32.mrb[0].mxu0
      %2233 = vmatprep.mubr.bf16.mxu0 0
      %2234 = vmatmul.mubr.bf16.gmra.mrb[0].mxu0 %v1950
      %v2235 = vpop.f32.mrb[0].mxu0
      %v2236 = vadd.f32 %v1167, %v2235
      %v2237 = vpop.f32.mrb[0].mxu0
      %v2238 = vpop.f32.mrb[0].mxu0
      %v2239 = vadd.f32 %v1170, %v2238
      %v2240 = vpop.f32.mrb[0].mxu0
      %2241 = vmatprep.mubr.bf16.mxu0 0
      %2242 = vmatmul.mubr.bf16.gmra.mrb[0].mxu0 %v1953
      %v2243 = vpop.f32.mrb[0].mxu0
      %v2244 = vadd.f32 %v1175, %v2243
      %v2245 = vpop.f32.mrb[0].mxu0
      %v2246 = vpop.f32.mrb[0].mxu0
      %v2247 = vadd.f32 %v1178, %v2246
      %v2248 = vpop.f32.mrb[0].mxu0
      %2249 = vmatprep.mubr.bf16.mxu0 0
      %2250 = vmatmul.mubr.bf16.gmra.mrb[0].mxu0 %v1956
      %v2251 = vpop.f32.mrb[0].mxu0
      %v2252 = vadd.f32 %v1183, %v2251
      %v2253 = vpop.f32.mrb[0].mxu0
      %v2254 = vpop.f32.mrb[0].mxu0
      %v2255 = vadd.f32 %v1186, %v2254
      %v2256 = vpop.f32.mrb[0].mxu0
      %2257 = vmatprep.mubr.bf16.mxu0 0
      %2258 = vmatmul.mubr.bf16.gmra.mrb[0].mxu0 %v1959
      %v2259 = vpop.f32.mrb[0].mxu0
      %v2260 = vadd.f32 %v1191, %v2259
      %v2261 = vpop.f32.mrb[0].mxu0
      %v2262 = vpop.f32.mrb[0].mxu0
      %v2263 = vadd.f32 %v1194, %v2262
      %v2264 = vpop.f32.mrb[0].mxu0
      %2265 = vmatprep.mubr.bf16.mxu0 0
      %2266 = vmatmul.mubr.bf16.gmra.mrb[0].mxu0 %v1962
      %v2267 = vpop.f32.mrb[0].mxu0
      %v2268 = vadd.f32 %v1199, %v2267
      %v2269 = vpop.f32.mrb[0].mxu0
      %v2270 = vpop.f32.mrb[0].mxu0
      %v2271 = vadd.f32 %v1202, %v2270
      %v2272 = vpop.f32.mrb[0].mxu0
      %2273 = vmatprep.mubr.bf16.mxu0 0
      %2274 = vmatmul.mubr.bf16.gmra.mrb[0].mxu0 %v1965
      %v2275 = vpop.f32.mrb[0].mxu0
      %v2276 = vadd.f32 %v1207, %v2275
      %v2277 = vpop.f32.mrb[0].mxu0
      %v2278 = vpop.f32.mrb[0].mxu0
      %v2279 = vadd.f32 %v1210, %v2278
      %v2280 = vpop.f32.mrb[0].mxu0
      %2281 = vmatprep.mubr.bf16.mxu0 0
      %2282 = vmatmul.mubr.bf16.gmra.mrb[0].mxu0 %v1968
      %v2283 = vpop.f32.mrb[0].mxu0
      %v2284 = vadd.f32 %v1215, %v2283
      %v2285 = vpop.f32.mrb[0].mxu0
      %v2286 = vpop.f32.mrb[0].mxu0
      %v2287 = vadd.f32 %v1218, %v2286
      %v2288 = vpop.f32.mrb[0].mxu0
      %2289 = vmatprep.mubr.bf16.mxu0 0
      %2290 = vmatmul.mubr.bf16.gmra.mrb[0].mxu0 %v1971
      %v2291 = vpop.f32.mrb[0].mxu0
      %v2292 = vadd.f32 %v1223, %v2291
      %v2293 = vpop.f32.mrb[0].mxu0
      %v2294 = vpop.f32.mrb[0].mxu0
      %v2295 = vadd.f32 %v1226, %v2294
      %v2296 = vpop.f32.mrb[0].mxu0
      %2297 = vmatprep.mubr.bf16.mxu0 0
      %2298 = vmatmul.mubr.bf16.gmra.mrb[0].mxu0 %v1974
      %v2299 = vpop.f32.mrb[0].mxu0
      %v2300 = vadd.f32 %v1231, %v2299
      %v2301 = vpop.f32.mrb[0].mxu0
      %v2302 = vpop.f32.mrb[0].mxu0
      %v2303 = vadd.f32 %v1234, %v2302
      %v2304 = vpop.f32.mrb[0].mxu0
      %2305 = vmatprep.mubr.bf16.mxu0 0
      %2306 = vmatmul.mubr.bf16.gmra.mrb[0].mxu0 %v1977
      %v2307 = vpop.f32.mrb[0].mxu0
      %v2308 = vadd.f32 %v1239, %v2307
      %v2309 = vpop.f32.mrb[0].mxu0
      %v2310 = vpop.f32.mrb[0].mxu0
      %v2311 = vadd.f32 %v1242, %v2310
      %v2312 = vpop.f32.mrb[0].mxu0
      %2313 = vmatprep.mubr.bf16.mxu0 0
      %2314 = vmatmul.mubr.bf16.gmra.mrb[0].mxu0 %v1980
      %v2315 = vpop.f32.mrb[0].mxu0
      %v2316 = vadd.f32 %v1247, %v2315
      %v2317 = vpop.f32.mrb[0].mxu0
      %v2318 = vpop.f32.mrb[0].mxu0
      %v2319 = vadd.f32 %v1250, %v2318
      %v2320 = vpop.f32.mrb[0].mxu0
      %2321 = vmatprep.mubr.bf16.mxu0 0
      %2322 = vmatmul.mubr.bf16.gmra.mrb[0].mxu0 %v1983
      %v2323 = vpop.f32.mrb[0].mxu0
      %v2324 = vadd.f32 %v1255, %v2323
      %v2325 = vpop.f32.mrb[0].mxu0
      %v2326 = vpop.f32.mrb[0].mxu0
      %v2327 = vadd.f32 %v1258, %v2326
      %v2328 = vpop.f32.mrb[0].mxu0
      %2329 = vmatprep.mubr.bf16.mxu0 0
      %2330 = vmatmul.mubr.bf16.gmra.mrb[0].mxu0 %v1986
      %v2331 = vpop.f32.mrb[0].mxu0
      %v2332 = vadd.f32 %v1263, %v2331
      %v2333 = vpop.f32.mrb[0].mxu0
      %v2334 = vpop.f32.mrb[0].mxu0
      %v2335 = vadd.f32 %v1266, %v2334
      %v2336 = vpop.f32.mrb[0].mxu0
      %2337 = vmatprep.mubr.bf16.mxu0 0
      %2338 = vmatmul.mubr.bf16.gmra.mrb[0].mxu0 %v1989
      %v2339 = vpop.f32.mrb[0].mxu0
      %v2340 = vadd.f32 %v1271, %v2339
      %v2341 = vpop.f32.mrb[0].mxu0
      %v2342 = vpop.f32.mrb[0].mxu0
      %v2343 = vadd.f32 %v1274, %v2342
      %v2344 = vpop.f32.mrb[0].mxu0
      %2345 = vmatprep.mubr.bf16.mxu0 0
      %2346 = vmatmul.mubr.bf16.gmra.mrb[0].mxu0 %v1992
      %v2347 = vpop.f32.mrb[0].mxu0
      %v2348 = vadd.f32 %v1279, %v2347
      %v2349 = vpop.f32.mrb[0].mxu0
      %v2350 = vpop.f32.mrb[0].mxu0
      %v2351 = vadd.f32 %v1282, %v2350
      %v2352 = vpop.f32.mrb[0].mxu0
      %2353 = vmatprep.mubr.bf16.mxu0 0
      %2354 = vmatmul.mubr.bf16.gmra.mrb[0].mxu0 %v1995
      %v2355 = vpop.f32.mrb[0].mxu0
      %v2356 = vadd.f32 %v1287, %v2355
      %v2357 = vpop.f32.mrb[0].mxu0
      %v2358 = vpop.f32.mrb[0].mxu0
      %v2359 = vadd.f32 %v1290, %v2358
      %v2360 = vpop.f32.mrb[0].mxu0
      %2361 = vmatprep.mubr.bf16.mxu0 0
      %2362 = vmatmul.mubr.bf16.gmra.mrb[0].mxu0 %v1998
      %v2363 = vpop.f32.mrb[0].mxu0
      %v2364 = vadd.f32 %v1295, %v2363
      %v2365 = vpop.f32.mrb[0].mxu0
      %v2366 = vpop.f32.mrb[0].mxu0
      %v2367 = vadd.f32 %v1298, %v2366
      %v2368 = vpop.f32.mrb[0].mxu0
      %2369 = vmatprep.mubr.bf16.mxu0 0
      %2370 = vmatmul.mubr.bf16.gmra.mrb[0].mxu0 %v2001
      %v2371 = vpop.f32.mrb[0].mxu0
      %v2372 = vadd.f32 %v1303, %v2371
      %v2373 = vpop.f32.mrb[0].mxu0
      %v2374 = vpop.f32.mrb[0].mxu0
      %v2375 = vadd.f32 %v1306, %v2374
      %v2376 = vpop.f32.mrb[0].mxu0
      %2377 = vmatprep.mubr.bf16.mxu0 0
      %2378 = vmatmul.mubr.bf16.gmra.mrb[0].mxu0 %v2004
      %v2379 = vpop.f32.mrb[0].mxu0
      %v2380 = vadd.f32 %v1311, %v2379
      %v2381 = vpop.f32.mrb[0].mxu0
      %v2382 = vpop.f32.mrb[0].mxu0
      %v2383 = vadd.f32 %v1314, %v2382
      %v2384 = vpop.f32.mrb[0].mxu0
      %2385 = vmatprep.mubr.bf16.mxu0 0
      %2386 = vmatmul.mubr.bf16.gmra.mrb[0].mxu0 %v2007
      %v2387 = vpop.f32.mrb[0].mxu0
      %v2388 = vadd.f32 %v1319, %v2387
      %v2389 = vpop.f32.mrb[0].mxu0
      %v2390 = vpop.f32.mrb[0].mxu0
      %v2391 = vadd.f32 %v1322, %v2390
      %v2392 = vpop.f32.mrb[0].mxu0
      %2393 = vmatprep.mubr.bf16.mxu0 0
      %2394 = vmatmul.mubr.bf16.gmra.mrb[0].mxu0 %v2010
      %v2395 = vpop.f32.mrb[0].mxu0
      %v2396 = vadd.f32 %v1327, %v2395
      %v2397 = vpop.f32.mrb[0].mxu0
      %v2398 = vpop.f32.mrb[0].mxu0
      %v2399 = vadd.f32 %v1330, %v2398
      %v2400 = vpop.f32.mrb[0].mxu0
      %2401 = vmatprep.mubr.bf16.mxu0 0
      %2402 = vmatmul.mubr.bf16.gmra.mrb[0].mxu0 %v2013
      %v2403 = vpop.f32.mrb[0].mxu0
      %v2404 = vadd.f32 %v1335, %v2403
      %v2405 = vpop.f32.mrb[0].mxu0
      %v2406 = vpop.f32.mrb[0].mxu0
      %v2407 = vadd.f32 %v1338, %v2406
      %v2408 = vpop.f32.mrb[0].mxu0
      %2409 = vmatprep.mubr.bf16.mxu0 0
      %2410 = vmatmul.mubr.bf16.gmra.mrb[0].mxu0 %v2016
      %v2411 = vpop.f32.mrb[0].mxu0
      %v2412 = vadd.f32 %v1343, %v2411
      %v2413 = vpop.f32.mrb[0].mxu0
      %v2414 = vpop.f32.mrb[0].mxu0
      %v2415 = vadd.f32 %v1346, %v2414
      %v2416 = vpop.f32.mrb[0].mxu0
      %2417 = vmatprep.mubr.bf16.mxu0 0
      %2418 = vmatmul.mubr.bf16.gmra.mrb[0].mxu0 %v2019
      %v2419 = vpop.f32.mrb[0].mxu0
      %v2420 = vadd.f32 %v1351, %v2419
      %v2421 = vpop.f32.mrb[0].mxu0
      %v2422 = vpop.f32.mrb[0].mxu0
      %v2423 = vadd.f32 %v1354, %v2422
      %v2424 = vpop.f32.mrb[0].mxu0
      %2425 = vmatprep.mubr.bf16.mxu0 0
      %2426 = vmatmul.mubr.bf16.gmra.mrb[0].mxu0 %v2022
      %v2427 = vpop.f32.mrb[0].mxu0
      %v2428 = vadd.f32 %v1359, %v2427
      %v2429 = vpop.f32.mrb[0].mxu0
      %v2430 = vpop.f32.mrb[0].mxu0
      %v2431 = vadd.f32 %v1362, %v2430
      %v2432 = vpop.f32.mrb[0].mxu0
      %2433 = vmatprep.mubr.bf16.mxu0 0
      %2434 = vmatmul.mubr.bf16.gmra.mrb[0].mxu0 %v2025
      %v2435 = vpop.f32.mrb[0].mxu0
      %v2436 = vadd.f32 %v1367, %v2435
      %v2437 = vpop.f32.mrb[0].mxu0
      %v2438 = vpop.f32.mrb[0].mxu0
      %v2439 = vadd.f32 %v1370, %v2438
      %v2440 = vpop.f32.mrb[0].mxu0
      %2441 = vmatprep.mubr.bf16.mxu0 0
      %2442 = vmatmul.mubr.bf16.gmra.mrb[0].mxu0 %v2028
      %v2443 = vpop.f32.mrb[0].mxu0
      %v2444 = vadd.f32 %v1375, %v2443
      %v2445 = vpop.f32.mrb[0].mxu0
      %v2446 = vpop.f32.mrb[0].mxu0
      %v2447 = vadd.f32 %v1378, %v2446
      %v2448 = vpop.f32.mrb[0].mxu0
      %2449 = vmatprep.mubr.bf16.mxu0 0
      %2450 = vmatmul.mubr.bf16.gmra.mrb[0].mxu0 %v2031
      %v2451 = vpop.f32.mrb[0].mxu0
      %v2452 = vadd.f32 %v1383, %v2451
      %v2453 = vpop.f32.mrb[0].mxu0
      %v2454 = vpop.f32.mrb[0].mxu0
      %v2455 = vadd.f32 %v1386, %v2454
      %v2456 = vpop.f32.mrb[0].mxu0
      %2457 = vmatprep.mubr.bf16.mxu0 0
      %2458 = vmatmul.mubr.bf16.gmra.mrb[0].mxu0 %v2034
      %v2459 = vpop.f32.mrb[0].mxu0
      %v2460 = vadd.f32 %v1391, %v2459
      %v2461 = vpop.f32.mrb[0].mxu0
      %v2462 = vpop.f32.mrb[0].mxu0
      %v2463 = vadd.f32 %v1394, %v2462
      %v2464 = vpop.f32.mrb[0].mxu0
      %2465 = vmatprep.mubr.bf16.mxu0 0
      %2466 = vmatmul.mubr.bf16.gmra.mrb[0].mxu0 %v2037
      %v2467 = vpop.f32.mrb[0].mxu0
      %v2468 = vadd.f32 %v1399, %v2467
      %v2469 = vpop.f32.mrb[0].mxu0
      %v2470 = vpop.f32.mrb[0].mxu0
      %v2471 = vadd.f32 %v1402, %v2470
      %v2472 = vpop.f32.mrb[0].mxu0
      %2473 = vmatprep.mubr.bf16.mxu0 0
      %2474 = vmatmul.mubr.bf16.gmra.mrb[0].mxu0 %v2040
      %v2475 = vpop.f32.mrb[0].mxu0
      %v2476 = vadd.f32 %v1407, %v2475
      %v2477 = vpop.f32.mrb[0].mxu0
      %v2478 = vpop.f32.mrb[0].mxu0
      %v2479 = vadd.f32 %v1410, %v2478
      %v2480 = vpop.f32.mrb[0].mxu0
      %2481 = vmatprep.mubr.bf16.mxu0 0
      %2482 = vmatmul.mubr.bf16.gmra.mrb[0].mxu0 %v2043
      %v2483 = vpop.f32.mrb[0].mxu0
      %v2484 = vadd.f32 %v1415, %v2483
      %v2485 = vpop.f32.mrb[0].mxu0
      %v2486 = vpop.f32.mrb[0].mxu0
      %v2487 = vadd.f32 %v1418, %v2486
      %v2488 = vpop.f32.mrb[0].mxu0
      %2489 = vmatprep.mubr.bf16.mxu0 0
      %2490 = vmatmul.mubr.bf16.gmra.mrb[0].mxu0 %v2046
      %v2491 = vpop.f32.mrb[0].mxu0
      %v2492 = vadd.f32 %v1423, %v2491
      %v2493 = vpop.f32.mrb[0].mxu0
      %v2494 = vpop.f32.mrb[0].mxu0
      %v2495 = vadd.f32 %v1426, %v2494
      %v2496 = vpop.f32.mrb[0].mxu0
      %2497 = vmatprep.mubr.bf16.mxu0 0
      %2498 = vmatmul.mubr.bf16.gmra.mrb[0].mxu0 %v2049
      %v2499 = vpop.f32.mrb[0].mxu0
      %v2500 = vadd.f32 %v1431, %v2499
      %v2501 = vpop.f32.mrb[0].mxu0
      %v2502 = vpop.f32.mrb[0].mxu0
      %v2503 = vadd.f32 %v1434, %v2502
      %v2504 = vpop.f32.mrb[0].mxu0
      %2505 = vmatprep.mubr.bf16.mxu0 0
      %2506 = vmatmul.mubr.bf16.gmra.mrb[0].mxu0 %v2052
      %v2507 = vpop.f32.mrb[0].mxu0
      %v2508 = vadd.f32 %v1439, %v2507
      %v2509 = vpop.f32.mrb[0].mxu0
      %v2510 = vpop.f32.mrb[0].mxu0
      %v2511 = vadd.f32 %v1442, %v2510
      %v2512 = vpop.f32.mrb[0].mxu0
      %2513 = vmatprep.mubr.bf16.mxu0 0
      %2514 = vmatmul.mubr.bf16.gmra.mrb[0].mxu0 %v2055
      %v2515 = vpop.f32.mrb[0].mxu0
      %v2516 = vadd.f32 %v1447, %v2515
      %v2517 = vpop.f32.mrb[0].mxu0
      %v2518 = vpop.f32.mrb[0].mxu0
      %v2519 = vadd.f32 %v1450, %v2518
      %v2520 = vpop.f32.mrb[0].mxu0
      %2521 = vmatprep.mubr.bf16.mxu0 0
      %2522 = vmatmul.mubr.bf16.gmra.mrb[0].mxu0 %v2058
      %v2523 = vpop.f32.mrb[0].mxu0
      %v2524 = vadd.f32 %v1455, %v2523
      %v2525 = vpop.f32.mrb[0].mxu0
      %v2526 = vpop.f32.mrb[0].mxu0
      %v2527 = vadd.f32 %v1458, %v2526
      %v2528 = vpop.f32.mrb[0].mxu0
      %2529 = vmatprep.mubr.bf16.mxu0 0
      %2530 = vmatmul.mubr.bf16.gmra.mrb[0].mxu0 %v2061
      %v2531 = vpop.f32.mrb[0].mxu0
      %v2532 = vadd.f32 %v1463, %v2531
      %v2533 = vpop.f32.mrb[0].mxu0
      %v2534 = vpop.f32.mrb[0].mxu0
      %v2535 = vadd.f32 %v1466, %v2534
      %v2536 = vpop.f32.mrb[0].mxu0
      %2537 = vmatprep.mubr.bf16.mxu0 0
      %2538 = vmatmul.mubr.bf16.gmra.mrb[0].mxu0 %v2064
      %v2539 = vpop.f32.mrb[0].mxu0
      %v2540 = vadd.f32 %v1471, %v2539
      %v2541 = vpop.f32.mrb[0].mxu0
      %v2542 = vpop.f32.mrb[0].mxu0
      %v2543 = vadd.f32 %v1474, %v2542
      %v2544 = vpop.f32.mrb[0].mxu0
      %2545 = vmatprep.mubr.bf16.mxu0 0
      %2546 = vmatmul.mubr.bf16.gmra.mrb[0].mxu0 %v2067
      %v2547 = vpop.f32.mrb[0].mxu0
      %v2548 = vadd.f32 %v1479, %v2547
      %v2549 = vpop.f32.mrb[0].mxu0
      %v2550 = vpop.f32.mrb[0].mxu0
      %v2551 = vadd.f32 %v1482, %v2550
      %v2552 = vpop.f32.mrb[0].mxu0
      %2553 = vmatprep.mubr.bf16.mxu0 0
      %2554 = vmatmul.mubr.bf16.gmra.mrb[0].mxu0 %v2070
      %v2555 = vpop.f32.mrb[0].mxu0
      %v2556 = vadd.f32 %v1487, %v2555
      %v2557 = vpop.f32.mrb[0].mxu0
      %v2558 = vpop.f32.mrb[0].mxu0
      %v2559 = vadd.f32 %v1490, %v2558
      %v2560 = vpop.f32.mrb[0].mxu0
      %2561 = vmatprep.mubr.bf16.mxu0 0
      %2562 = vmatmul.mubr.bf16.gmra.mrb[0].mxu0 %v2073
      %v2563 = vpop.f32.mrb[0].mxu0
      %v2564 = vadd.f32 %v1495, %v2563
      %v2565 = vpop.f32.mrb[0].mxu0
      %v2566 = vpop.f32.mrb[0].mxu0
      %v2567 = vadd.f32 %v1498, %v2566
      %v2568 = vpop.f32.mrb[0].mxu0
      %2569 = vmatprep.mubr.bf16.mxu0 0
      %2570 = vmatmul.mubr.bf16.gmra.mrb[0].mxu0 %v2076
      %v2571 = vpop.f32.mrb[0].mxu0
      %v2572 = vadd.f32 %v1503, %v2571
      %v2573 = vpop.f32.mrb[0].mxu0
      %v2574 = vpop.f32.mrb[0].mxu0
      %v2575 = vadd.f32 %v1506, %v2574
      %v2576 = vpop.f32.mrb[0].mxu0
      %2577 = vmatprep.mubr.bf16.mxu0 0
      %2578 = vmatmul.mubr.bf16.gmra.mrb[0].mxu0 %v2079
      %v2579 = vpop.f32.mrb[0].mxu0
      %v2580 = vadd.f32 %v1511, %v2579
      %v2581 = vpop.f32.mrb[0].mxu0
      %v2582 = vpop.f32.mrb[0].mxu0
      %v2583 = vadd.f32 %v1514, %v2582
      %v2584 = vpop.f32.mrb[0].mxu0
      %2585 = vmatprep.mubr.bf16.mxu0 0
      %2586 = vmatmul.mubr.bf16.gmra.mrb[0].mxu0 %v2082
      %v2587 = vpop.f32.mrb[0].mxu0
      %v2588 = vadd.f32 %v1519, %v2587
      %v2589 = vpop.f32.mrb[0].mxu0
      %v2590 = vpop.f32.mrb[0].mxu0
      %v2591 = vadd.f32 %v1522, %v2590
      %v2592 = vpop.f32.mrb[0].mxu0
      %2593 = vmatprep.mubr.bf16.mxu0 0
      %2594 = vmatmul.mubr.bf16.gmra.mrb[0].mxu0 %v2085
      %v2595 = vpop.f32.mrb[0].mxu0
      %v2596 = vadd.f32 %v1527, %v2595
      %v2597 = vpop.f32.mrb[0].mxu0
      %v2598 = vpop.f32.mrb[0].mxu0
      %v2599 = vadd.f32 %v1530, %v2598
      %v2600 = vpop.f32.mrb[0].mxu0
      %2601 = vmatprep.mubr.bf16.mxu0 0
      %2602 = vmatmul.mubr.bf16.gmra.mrb[0].mxu0 %v2088
      %v2603 = vpop.f32.mrb[0].mxu0
      %v2604 = vadd.f32 %v1535, %v2603
      %v2605 = vpop.f32.mrb[0].mxu0
      %v2606 = vpop.f32.mrb[0].mxu0
      %v2607 = vadd.f32 %v1538, %v2606
      %v2608 = vpop.f32.mrb[0].mxu0
      %2609 = vmatprep.mubr.bf16.mxu0 0
      %2610 = vmatmul.mubr.bf16.gmra.mrb[0].mxu0 %v2091
      %v2611 = vpop.f32.mrb[0].mxu0
      %v2612 = vadd.f32 %v1543, %v2611
      %v2613 = vpop.f32.mrb[0].mxu0
      %v2614 = vpop.f32.mrb[0].mxu0
      %v2615 = vadd.f32 %v1546, %v2614
      %v2616 = vpop.f32.mrb[0].mxu0
      %2617 = vmatprep.mubr.bf16.mxu0 0
      %2618 = vmatmul.mubr.bf16.gmra.mrb[0].mxu0 %v2094
      %v2619 = vpop.f32.mrb[0].mxu0
      %v2620 = vadd.f32 %v1551, %v2619
      %v2621 = vpop.f32.mrb[0].mxu0
      %v2622 = vpop.f32.mrb[0].mxu0
      %v2623 = vadd.f32 %v1554, %v2622
      %v2624 = vpop.f32.mrb[0].mxu0
      %2625 = vmatprep.mubr.bf16.mxu0 0
      %2626 = vmatmul.mubr.bf16.gmra.mrb[0].mxu0 %v2097
      %v2627 = vpop.f32.mrb[0].mxu0
      %v2628 = vadd.f32 %v1559, %v2627
      %v2629 = vpop.f32.mrb[0].mxu0
      %v2630 = vpop.f32.mrb[0].mxu0
      %v2631 = vadd.f32 %v1562, %v2630
      %v2632 = vpop.f32.mrb[0].mxu0
      %2633 = vmatprep.mubr.bf16.mxu0 0
      %2634 = vmatmul.mubr.bf16.gmra.mrb[0].mxu0 %v2100
      %v2635 = vpop.f32.mrb[0].mxu0
      %v2636 = vadd.f32 %v1567, %v2635
      %v2637 = vpop.f32.mrb[0].mxu0
      %v2638 = vpop.f32.mrb[0].mxu0
      %v2639 = vadd.f32 %v1570, %v2638
      %v2640 = vpop.f32.mrb[0].mxu0
      %2641 = vmatprep.mubr.bf16.mxu0 0
      %2642 = vmatmul.mubr.bf16.gmra.mrb[0].mxu0 %v2103
      %v2643 = vpop.f32.mrb[0].mxu0
      %v2644 = vadd.f32 %v1575, %v2643
      %v2645 = vpop.f32.mrb[0].mxu0
      %v2646 = vpop.f32.mrb[0].mxu0
      %v2647 = vadd.f32 %v1578, %v2646
      %v2648 = vpop.f32.mrb[0].mxu0
      %2649 = vdwg.mxu0
      %v2650 = vld [vmem:[%s234 + $0x10] sm:$0xf]
      %v2651 = vld [vmem:[%s234 + $0x14] sm:$0xf]
      %v2652 = vld [vmem:[%s234 + $0x18] sm:$0xf]
      %v2653 = vld [vmem:[%s234 + $0x1c] sm:$0xf]
      %v2654 = vld [vmem:[%s234 + $0x20] sm:$0xf]
      %v2655 = vld [vmem:[%s234 + $0x24] sm:$0xf]
      %v2656 = vld [vmem:[%s234 + $0x28] sm:$0xf]
      %v2657 = vld [vmem:[%s234 + $0x2c] sm:$0xf]
      %v2658 = vld [vmem:[%s234 + $0x30] sm:$0xf]
      %v2659 = vld [vmem:[%s234 + $0x34] sm:$0xf]
      %v2660 = vld [vmem:[%s234 + $0x38] sm:$0xf]
      %v2661 = vld [vmem:[%s234 + $0x3c] sm:$0xf]
      %v2662 = vld [vmem:[%s234 + $0x40] sm:$0xf]
      %v2663 = vld [vmem:[%s234 + $0x44] sm:$0xf]
      %v2664 = vld [vmem:[%s234 + $0x48] sm:$0xf]
      %v2665 = vld [vmem:[%s234 + $0x4c] sm:$0xf]
      %v2666 = vld [vmem:[%s234 + $0x50] sm:$0xf]
      %v2667 = vld [vmem:[%s234 + $0x54] sm:$0xf]
      %v2668 = vld [vmem:[%s234 + $0x58] sm:$0xf]
      %v2669 = vld [vmem:[%s234 + $0x5c] sm:$0xf]
      %v2670 = vld [vmem:[%s234 + $0x60] sm:$0xf]
      %v2671 = vld [vmem:[%s234 + $0x64] sm:$0xf]
      %v2672 = vld [vmem:[%s234 + $0x68] sm:$0xf]
      %v2673 = vld [vmem:[%s234 + $0x6c] sm:$0xf]
      %v2674 = vld [vmem:[%s234 + $0x70] sm:$0xf]
      %v2675 = vld [vmem:[%s234 + $0x74] sm:$0xf]
      %v2676 = vld [vmem:[%s234 + $0x78] sm:$0xf]
      %v2677 = vld [vmem:[%s234 + $0x7c] sm:$0xf]
      %v2678 = vld [vmem:[%s234 + $0x80] sm:$0xf]
      %v2679 = vld [vmem:[%s234 + $0x84] sm:$0xf]
      %v2680 = vld [vmem:[%s234 + $0x88] sm:$0xf]
      %v2681 = vld [vmem:[%s234 + $0x8c] sm:$0xf]
      %v2682 = vld [vmem:[%s234 + $0x90] sm:$0xf]
      %v2683 = vld [vmem:[%s234 + $0x94] sm:$0xf]
      %v2684 = vld [vmem:[%s234 + $0x98] sm:$0xf]
      %v2685 = vld [vmem:[%s234 + $0x9c] sm:$0xf]
      %v2686 = vld [vmem:[%s234 + $0xa0] sm:$0xf]
      %v2687 = vld [vmem:[%s234 + $0xa4] sm:$0xf]
      %v2688 = vld [vmem:[%s234 + $0xa8] sm:$0xf]
      %v2689 = vld [vmem:[%s234 + $0xac] sm:$0xf]
      %v2690 = vld [vmem:[%s234 + $0xb0] sm:$0xf]
      %v2691 = vld [vmem:[%s234 + $0xb4] sm:$0xf]
      %v2692 = vld [vmem:[%s234 + $0xb8] sm:$0xf]
      %v2693 = vld [vmem:[%s234 + $0xbc] sm:$0xf]
      %v2694 = vld [vmem:[%s234 + $0xc0] sm:$0xf]
      %v2695 = vld [vmem:[%s234 + $0xc4] sm:$0xf]
      %v2696 = vld [vmem:[%s234 + $0xc8] sm:$0xf]
      %v2697 = vld [vmem:[%s234 + $0xcc] sm:$0xf]
      %v2698 = vld [vmem:[%s234 + $0xd0] sm:$0xf]
      %v2699 = vld [vmem:[%s234 + $0xd4] sm:$0xf]
      %v2700 = vld [vmem:[%s234 + $0xd8] sm:$0xf]
      %v2701 = vld [vmem:[%s234 + $0xdc] sm:$0xf]
      %v2702 = vld [vmem:[%s234 + $0xe0] sm:$0xf]
      %v2703 = vld [vmem:[%s234 + $0xe4] sm:$0xf]
      %v2704 = vld [vmem:[%s234 + $0xe8] sm:$0xf]
      %v2705 = vld [vmem:[%s234 + $0xec] sm:$0xf]
      %v2706 = vld [vmem:[%s234 + $0xf0] sm:$0xf]
      %v2707 = vld [vmem:[%s234 + $0xf4] sm:$0xf]
      %v2708 = vld [vmem:[%s234 + $0xf8] sm:$0xf]
      %v2709 = vld [vmem:[%s234 + $0xfc] sm:$0xf]
      %v2710 = vld [vmem:[%s234 + $0x100] sm:$0xf]
      %v2711 = vld [vmem:[%s234 + $0x104] sm:$0xf]
      %v2712 = vld [vmem:[%s234 + $0x108] sm:$0xf]
      %v2713 = vld [vmem:[%s234 + $0x10c] sm:$0xf]
      %v2714 = vld [vmem:[%s234 + $0x110] sm:$0xf]
      %v2715 = vld [vmem:[%s234 + $0x114] sm:$0xf]
      %v2716 = vld [vmem:[%s234 + $0x118] sm:$0xf]
      %v2717 = vld [vmem:[%s234 + $0x11c] sm:$0xf]
      %v2718 = vld [vmem:[%s234 + $0x120] sm:$0xf]
      %v2719 = vld [vmem:[%s234 + $0x124] sm:$0xf]
      %v2720 = vld [vmem:[%s234 + $0x128] sm:$0xf]
      %v2721 = vld [vmem:[%s234 + $0x12c] sm:$0xf]
      %v2722 = vld [vmem:[%s234 + $0x130] sm:$0xf]
      %v2723 = vld [vmem:[%s234 + $0x134] sm:$0xf]
      %v2724 = vld [vmem:[%s234 + $0x138] sm:$0xf]
      %v2725 = vld [vmem:[%s234 + $0x13c] sm:$0xf]
      %v2726 = vld [vmem:[%s234 + $0x140] sm:$0xf]
      %v2727 = vld [vmem:[%s234 + $0x144] sm:$0xf]
      %v2728 = vld [vmem:[%s234 + $0x148] sm:$0xf]
      %v2729 = vld [vmem:[%s234 + $0x14c] sm:$0xf]
      %v2730 = vld [vmem:[%s234 + $0x150] sm:$0xf]
      %v2731 = vld [vmem:[%s234 + $0x154] sm:$0xf]
      %v2732 = vld [vmem:[%s234 + $0x158] sm:$0xf]
      %v2733 = vld [vmem:[%s234 + $0x15c] sm:$0xf]
      %v2734 = vld [vmem:[%s234 + $0x160] sm:$0xf]
      %v2735 = vld [vmem:[%s234 + $0x164] sm:$0xf]
      %v2736 = vld [vmem:[%s234 + $0x168] sm:$0xf]
      %v2737 = vld [vmem:[%s234 + $0x16c] sm:$0xf]
      %v2738 = vld [vmem:[%s234 + $0x170] sm:$0xf]
      %v2739 = vld [vmem:[%s234 + $0x174] sm:$0xf]
      %v2740 = vld [vmem:[%s234 + $0x178] sm:$0xf]
      %v2741 = vld [vmem:[%s234 + $0x17c] sm:$0xf]
      %v2742 = vld [vmem:[%s234 + $0x180] sm:$0xf]
      %v2743 = vld [vmem:[%s234 + $0x184] sm:$0xf]
      %v2744 = vld [vmem:[%s234 + $0x188] sm:$0xf]
      %v2745 = vld [vmem:[%s234 + $0x18c] sm:$0xf]
      %v2746 = vld [vmem:[%s234 + $0x190] sm:$0xf]
      %v2747 = vld [vmem:[%s234 + $0x194] sm:$0xf]
      %v2748 = vld [vmem:[%s234 + $0x198] sm:$0xf]
      %v2749 = vld [vmem:[%s234 + $0x19c] sm:$0xf]
      %v2750 = vld [vmem:[%s234 + $0x1a0] sm:$0xf]
      %v2751 = vld [vmem:[%s234 + $0x1a4] sm:$0xf]
      %v2752 = vld [vmem:[%s234 + $0x1a8] sm:$0xf]
      %v2753 = vld [vmem:[%s234 + $0x1ac] sm:$0xf]
      %v2754 = vld [vmem:[%s234 + $0x1b0] sm:$0xf]
      %v2755 = vld [vmem:[%s234 + $0x1b4] sm:$0xf]
      %v2756 = vld [vmem:[%s234 + $0x1b8] sm:$0xf]
      %v2757 = vld [vmem:[%s234 + $0x1bc] sm:$0xf]
      %v2758 = vld [vmem:[%s234 + $0x1c0] sm:$0xf]
      %v2759 = vld [vmem:[%s234 + $0x1c4] sm:$0xf]
      %v2760 = vld [vmem:[%s234 + $0x1c8] sm:$0xf]
      %v2761 = vld [vmem:[%s234 + $0x1cc] sm:$0xf]
      %v2762 = vld [vmem:[%s234 + $0x1d0] sm:$0xf]
      %v2763 = vld [vmem:[%s234 + $0x1d4] sm:$0xf]
      %v2764 = vld [vmem:[%s234 + $0x1d8] sm:$0xf]
      %v2765 = vld [vmem:[%s234 + $0x1dc] sm:$0xf]
      %v2766 = vld [vmem:[%s234 + $0x1e0] sm:$0xf]
      %v2767 = vld [vmem:[%s234 + $0x1e4] sm:$0xf]
      %v2768 = vld [vmem:[%s234 + $0x1e8] sm:$0xf]
      %v2769 = vld [vmem:[%s234 + $0x1ec] sm:$0xf]
      %v2770 = vld [vmem:[%s234 + $0x1f0] sm:$0xf]
      %v2771 = vld [vmem:[%s234 + $0x1f4] sm:$0xf]
      %v2772 = vld [vmem:[%s234 + $0x1f8] sm:$0xf]
      %v2773 = vld [vmem:[%s234 + $0x1fc] sm:$0xf]
      %v2774 = vld [vmem:[%s234 + $0x200] sm:$0xf]
      %v2775 = vld [vmem:[%s234 + $0x204] sm:$0xf]
      %v2776 = vld [vmem:[%s234 + $0x208] sm:$0xf]
      %v2777 = vld [vmem:[%s234 + $0x20c] sm:$0xf]
      %s2778 = scalar_lea.vmem %s2, 32
      %v2779 = vld [vmem:[%s2778] sm:$0xf]
      %v2780 = vld [vmem:[%s2778 + $0x4] sm:$0xf]
      %v2781 = vld [vmem:[%s2778 + $0x8] sm:$0xf]
      %v2782 = vld [vmem:[%s2778 + $0xc] sm:$0xf]
      %v2911 = vunpack.c.l.b16 %v2650
      %v2912 = vunpack.c.l.b16 %v2651
      %v2913 = vunpack.c.l.b16 %v2652
      %v2914 = vunpack.c.l.b16 %v2653
      %v2915 = vunpack.c.l.b16 %v2654
      %v2916 = vunpack.c.l.b16 %v2655
      %v2917 = vunpack.c.l.b16 %v2656
      %v2918 = vunpack.c.l.b16 %v2657
      %v2919 = vunpack.c.l.b16 %v2658
      %v2920 = vunpack.c.l.b16 %v2659
      %v2921 = vunpack.c.l.b16 %v2660
      %v2922 = vunpack.c.l.b16 %v2661
      %v2923 = vunpack.c.l.b16 %v2662
      %v2924 = vunpack.c.l.b16 %v2663
      %v2925 = vunpack.c.l.b16 %v2664
      %v2926 = vunpack.c.l.b16 %v2665
      %v2927 = vunpack.c.l.b16 %v2666
      %v2928 = vunpack.c.l.b16 %v2667
      %v2929 = vunpack.c.l.b16 %v2668
      %v2930 = vunpack.c.l.b16 %v2669
      %v2931 = vunpack.c.l.b16 %v2670
      %v2932 = vunpack.c.l.b16 %v2671
      %v2933 = vunpack.c.l.b16 %v2672
      %v2934 = vunpack.c.l.b16 %v2673
      %v2935 = vunpack.c.l.b16 %v2674
      %v2936 = vunpack.c.l.b16 %v2675
      %v2937 = vunpack.c.l.b16 %v2676
      %v2938 = vunpack.c.l.b16 %v2677
      %v2939 = vunpack.c.l.b16 %v2678
      %v2940 = vunpack.c.l.b16 %v2679
      %v2941 = vunpack.c.l.b16 %v2680
      %v2942 = vunpack.c.l.b16 %v2681
      %v2943 = vunpack.c.l.b16 %v2682
      %v2944 = vunpack.c.l.b16 %v2683
      %v2945 = vunpack.c.l.b16 %v2684
      %v2946 = vunpack.c.l.b16 %v2685
      %v2947 = vunpack.c.l.b16 %v2686
      %v2948 = vunpack.c.l.b16 %v2687
      %v2949 = vunpack.c.l.b16 %v2688
      %v2950 = vunpack.c.l.b16 %v2689
      %v2951 = vunpack.c.l.b16 %v2690
      %v2952 = vunpack.c.l.b16 %v2691
      %v2953 = vunpack.c.l.b16 %v2692
      %v2954 = vunpack.c.l.b16 %v2693
      %v2955 = vunpack.c.l.b16 %v2694
      %v2956 = vunpack.c.l.b16 %v2695
      %v2957 = vunpack.c.l.b16 %v2696
      %v2958 = vunpack.c.l.b16 %v2697
      %v2959 = vunpack.c.l.b16 %v2698
      %v2960 = vunpack.c.l.b16 %v2699
      %v2961 = vunpack.c.l.b16 %v2700
      %v2962 = vunpack.c.l.b16 %v2701
      %v2963 = vunpack.c.l.b16 %v2702
      %v2964 = vunpack.c.l.b16 %v2703
      %v2965 = vunpack.c.l.b16 %v2704
      %v2966 = vunpack.c.l.b16 %v2705
      %v2967 = vunpack.c.l.b16 %v2706
      %v2968 = vunpack.c.l.b16 %v2707
      %v2969 = vunpack.c.l.b16 %v2708
      %v2970 = vunpack.c.l.b16 %v2709
      %v2971 = vunpack.c.l.b16 %v2710
      %v2972 = vunpack.c.l.b16 %v2711
      %v2973 = vunpack.c.l.b16 %v2712
      %v2974 = vunpack.c.l.b16 %v2713
      %v2975 = vunpack.c.l.b16 %v2714
      %v2976 = vunpack.c.l.b16 %v2715
      %v2977 = vunpack.c.l.b16 %v2716
      %v2978 = vunpack.c.l.b16 %v2717
      %v2979 = vunpack.c.l.b16 %v2718
      %v2980 = vunpack.c.l.b16 %v2719
      %v2981 = vunpack.c.l.b16 %v2720
      %v2982 = vunpack.c.l.b16 %v2721
      %v2983 = vunpack.c.l.b16 %v2722
      %v2984 = vunpack.c.l.b16 %v2723
      %v2985 = vunpack.c.l.b16 %v2724
      %v2986 = vunpack.c.l.b16 %v2725
      %v2987 = vunpack.c.l.b16 %v2726
      %v2988 = vunpack.c.l.b16 %v2727
      %v2989 = vunpack.c.l.b16 %v2728
      %v2990 = vunpack.c.l.b16 %v2729
      %v2991 = vunpack.c.l.b16 %v2730
      %v2992 = vunpack.c.l.b16 %v2731
      %v2993 = vunpack.c.l.b16 %v2732
      %v2994 = vunpack.c.l.b16 %v2733
      %v2995 = vunpack.c.l.b16 %v2734
      %v2996 = vunpack.c.l.b16 %v2735
      %v2997 = vunpack.c.l.b16 %v2736
      %v2998 = vunpack.c.l.b16 %v2737
      %v2999 = vunpack.c.l.b16 %v2738
      %v3000 = vunpack.c.l.b16 %v2739
      %v3001 = vunpack.c.l.b16 %v2740
      %v3002 = vunpack.c.l.b16 %v2741
      %v3003 = vunpack.c.l.b16 %v2742
      %v3004 = vunpack.c.l.b16 %v2743
      %v3005 = vunpack.c.l.b16 %v2744
      %v3006 = vunpack.c.l.b16 %v2745
      %v3007 = vunpack.c.l.b16 %v2746
      %v3008 = vunpack.c.l.b16 %v2747
      %v3009 = vunpack.c.l.b16 %v2748
      %v3010 = vunpack.c.l.b16 %v2749
      %v3011 = vunpack.c.l.b16 %v2750
      %v3012 = vunpack.c.l.b16 %v2751
      %v3013 = vunpack.c.l.b16 %v2752
      %v3014 = vunpack.c.l.b16 %v2753
      %v3015 = vunpack.c.l.b16 %v2754
      %v3016 = vunpack.c.l.b16 %v2755
      %v3017 = vunpack.c.l.b16 %v2756
      %v3018 = vunpack.c.l.b16 %v2757
      %v3019 = vunpack.c.l.b16 %v2758
      %v3020 = vunpack.c.l.b16 %v2759
      %v3021 = vunpack.c.l.b16 %v2760
      %v3022 = vunpack.c.l.b16 %v2761
      %v3023 = vunpack.c.l.b16 %v2762
      %v3024 = vunpack.c.l.b16 %v2763
      %v3025 = vunpack.c.l.b16 %v2764
      %v3026 = vunpack.c.l.b16 %v2765
      %v3027 = vunpack.c.l.b16 %v2766
      %v3028 = vunpack.c.l.b16 %v2767
      %v3029 = vunpack.c.l.b16 %v2768
      %v3030 = vunpack.c.l.b16 %v2769
      %v3031 = vunpack.c.l.b16 %v2770
      %v3032 = vunpack.c.l.b16 %v2771
      %v3033 = vunpack.c.l.b16 %v2772
      %v3034 = vunpack.c.l.b16 %v2773
      %v3035 = vunpack.c.l.b16 %v2774
      %v3036 = vunpack.c.l.b16 %v2775
      %v3037 = vunpack.c.l.b16 %v2776
      %v3038 = vunpack.c.l.b16 %v2777
      %v3039 = vpack.c.b16 %v2912, %v2911
      %v3040 = vpack.c.b16 %v2914, %v2913
      %v3041 = vpack.c.b16 %v2916, %v2915
      %v3042 = vpack.c.b16 %v2918, %v2917
      %v3043 = vpack.c.b16 %v2920, %v2919
      %v3044 = vpack.c.b16 %v2922, %v2921
      %v3045 = vpack.c.b16 %v2924, %v2923
      %v3046 = vpack.c.b16 %v2926, %v2925
      %v3047 = vpack.c.b16 %v2928, %v2927
      %v3048 = vpack.c.b16 %v2930, %v2929
      %v3049 = vpack.c.b16 %v2932, %v2931
      %v3050 = vpack.c.b16 %v2934, %v2933
      %v3051 = vpack.c.b16 %v2936, %v2935
      %v3052 = vpack.c.b16 %v2938, %v2937
      %v3053 = vpack.c.b16 %v2940, %v2939
      %v3054 = vpack.c.b16 %v2942, %v2941
      %v3055 = vpack.c.b16 %v2944, %v2943
      %v3056 = vpack.c.b16 %v2946, %v2945
      %v3057 = vpack.c.b16 %v2948, %v2947
      %v3058 = vpack.c.b16 %v2950, %v2949
      %v3059 = vpack.c.b16 %v2952, %v2951
      %v3060 = vpack.c.b16 %v2954, %v2953
      %v3061 = vpack.c.b16 %v2956, %v2955
      %v3062 = vpack.c.b16 %v2958, %v2957
      %v3063 = vpack.c.b16 %v2960, %v2959
      %v3064 = vpack.c.b16 %v2962, %v2961
      %v3065 = vpack.c.b16 %v2964, %v2963
      %v3066 = vpack.c.b16 %v2966, %v2965
      %v3067 = vpack.c.b16 %v2968, %v2967
      %v3068 = vpack.c.b16 %v2970, %v2969
      %v3069 = vpack.c.b16 %v2972, %v2971
      %v3070 = vpack.c.b16 %v2974, %v2973
      %v3071 = vpack.c.b16 %v2976, %v2975
      %v3072 = vpack.c.b16 %v2978, %v2977
      %v3073 = vpack.c.b16 %v2980, %v2979
      %v3074 = vpack.c.b16 %v2982, %v2981
      %v3075 = vpack.c.b16 %v2984, %v2983
      %v3076 = vpack.c.b16 %v2986, %v2985
      %v3077 = vpack.c.b16 %v2988, %v2987
      %v3078 = vpack.c.b16 %v2990, %v2989
      %v3079 = vpack.c.b16 %v2992, %v2991
      %v3080 = vpack.c.b16 %v2994, %v2993
      %v3081 = vpack.c.b16 %v2996, %v2995
      %v3082 = vpack.c.b16 %v2998, %v2997
      %v3083 = vpack.c.b16 %v3000, %v2999
      %v3084 = vpack.c.b16 %v3002, %v3001
      %v3085 = vpack.c.b16 %v3004, %v3003
      %v3086 = vpack.c.b16 %v3006, %v3005
      %v3087 = vpack.c.b16 %v3008, %v3007
      %v3088 = vpack.c.b16 %v3010, %v3009
      %v3089 = vpack.c.b16 %v3012, %v3011
      %v3090 = vpack.c.b16 %v3014, %v3013
      %v3091 = vpack.c.b16 %v3016, %v3015
      %v3092 = vpack.c.b16 %v3018, %v3017
      %v3093 = vpack.c.b16 %v3020, %v3019
      %v3094 = vpack.c.b16 %v3022, %v3021
      %v3095 = vpack.c.b16 %v3024, %v3023
      %v3096 = vpack.c.b16 %v3026, %v3025
      %v3097 = vpack.c.b16 %v3028, %v3027
      %v3098 = vpack.c.b16 %v3030, %v3029
      %v3099 = vpack.c.b16 %v3032, %v3031
      %v3100 = vpack.c.b16 %v3034, %v3033
      %v3101 = vpack.c.b16 %v3036, %v3035
      %v3102 = vpack.c.b16 %v3038, %v3037
      %v3107 = vunpack.c.l.b16 %v2779
      %v3108 = vunpack.c.l.b16 %v2780
      %v3109 = vunpack.c.l.b16 %v2781
      %v3110 = vunpack.c.l.b16 %v2782
      %v3111 = vpack.c.b16 %v3108, %v3107
      %v3112 = vpack.c.b16 %v3110, %v3109
      %v3116 = vsel %vm843, %v3039, 0
      %v3119 = vsel %vm843, %v3040, 0
      %v3122 = vsel %vm843, %v3041, 0
      %v3125 = vsel %vm843, %v3042, 0
      %v3128 = vsel %vm843, %v3043, 0
      %v3131 = vsel %vm843, %v3044, 0
      %v3134 = vsel %vm843, %v3045, 0
      %v3137 = vsel %vm843, %v3046, 0
      %v3140 = vsel %vm843, %v3047, 0
      %v3143 = vsel %vm843, %v3048, 0
      %v3146 = vsel %vm843, %v3049, 0
      %v3149 = vsel %vm843, %v3050, 0
      %v3152 = vsel %vm843, %v3051, 0
      %v3155 = vsel %vm843, %v3052, 0
      %v3158 = vsel %vm843, %v3053, 0
      %v3161 = vsel %vm843, %v3054, 0
      %v3164 = vsel %vm843, %v3055, 0
      %v3167 = vsel %vm843, %v3056, 0
      %v3170 = vsel %vm843, %v3057, 0
      %v3173 = vsel %vm843, %v3058, 0
      %v3176 = vsel %vm843, %v3059, 0
      %v3179 = vsel %vm843, %v3060, 0
      %v3182 = vsel %vm843, %v3061, 0
      %v3185 = vsel %vm843, %v3062, 0
      %v3188 = vsel %vm843, %v3063, 0
      %v3191 = vsel %vm843, %v3064, 0
      %v3194 = vsel %vm843, %v3065, 0
      %v3197 = vsel %vm843, %v3066, 0
      %v3200 = vsel %vm843, %v3067, 0
      %v3203 = vsel %vm843, %v3068, 0
      %v3206 = vsel %vm843, %v3069, 0
      %v3209 = vsel %vm843, %v3070, 0
      %v3212 = vsel %vm843, %v3071, 0
      %v3215 = vsel %vm843, %v3072, 0
      %v3218 = vsel %vm843, %v3073, 0
      %v3221 = vsel %vm843, %v3074, 0
      %v3224 = vsel %vm843, %v3075, 0
      %v3227 = vsel %vm843, %v3076, 0
      %v3230 = vsel %vm843, %v3077, 0
      %v3233 = vsel %vm843, %v3078, 0
      %v3236 = vsel %vm843, %v3079, 0
      %v3239 = vsel %vm843, %v3080, 0
      %v3242 = vsel %vm843, %v3081, 0
      %v3245 = vsel %vm843, %v3082, 0
      %v3248 = vsel %vm843, %v3083, 0
      %v3251 = vsel %vm843, %v3084, 0
      %v3254 = vsel %vm843, %v3085, 0
      %v3257 = vsel %vm843, %v3086, 0
      %v3260 = vsel %vm843, %v3087, 0
      %v3263 = vsel %vm843, %v3088, 0
      %v3266 = vsel %vm843, %v3089, 0
      %v3269 = vsel %vm843, %v3090, 0
      %v3272 = vsel %vm843, %v3091, 0
      %v3275 = vsel %vm843, %v3092, 0
      %v3278 = vsel %vm843, %v3093, 0
      %v3281 = vsel %vm843, %v3094, 0
      %v3284 = vsel %vm843, %v3095, 0
      %v3287 = vsel %vm843, %v3096, 0
      %v3290 = vsel %vm843, %v3097, 0
      %v3293 = vsel %vm843, %v3098, 0
      %v3296 = vsel %vm843, %v3099, 0
      %v3299 = vsel %vm843, %v3100, 0
      %v3302 = vsel %vm843, %v3101, 0
      %v3305 = vsel %vm843, %v3102, 0
      %3307 = vmatprep.subr.bf16.mxu0 0
      %3308 = vmatpush1.bf16.msra.mxu0 %v3111
      %3309 = vmatprep.subr.bf16.mxu0 0
      %3310 = vmatpush1.bf16.msra.mxu0 %v3112
      %3311 = vmatprep.subr.bf16.mxu0 0
      %3312 = vmatpush1.bf16.msra.mxu0 0
      %3313 = vmatprep.subr.bf16.mxu0 0
      %3314 = vmatpush1.bf16.msra.mxu0 0
      %3315 = vmatprep.subr.bf16.mxu0 0
      %3316 = vmatpush1.bf16.msra.mxu0 0
      %3317 = vmatprep.subr.bf16.mxu0 0
      %3318 = vmatpush1.bf16.msra.mxu0 0
      %3319 = vmatprep.subr.bf16.mxu0 0
      %3320 = vmatpush1.bf16.msra.mxu0 0
      %3321 = vmatprep.subr.bf16.mxu0 0
      %3322 = vmatpush1.bf16.msra.mxu0 0
      %3323 = vmatprep.subr.bf16.mxu0 0
      %3324 = vmatpush1.bf16.msra.mxu0 0
      %3325 = vmatprep.subr.bf16.mxu0 0
      %3326 = vmatpush1.bf16.msra.mxu0 0
      %3327 = vmatprep.subr.bf16.mxu0 0
      %3328 = vmatpush1.bf16.msra.mxu0 0
      %3329 = vmatprep.subr.bf16.mxu0 0
      %3330 = vmatpush1.bf16.msra.mxu0 0
      %3331 = vmatprep.subr.bf16.mxu0 0
      %3332 = vmatpush1.bf16.msra.mxu0 0
      %3333 = vmatprep.subr.bf16.mxu0 0
      %3334 = vmatpush1.bf16.msra.mxu0 0
      %3335 = vmatprep.subr.bf16.mxu0 0
      %3336 = vmatpush1.bf16.msra.mxu0 0
      %3337 = vmatprep.subr.bf16.mxu0 0
      %3338 = vmatpush1.bf16.msra.mxu0 0
      %3339 = vmatprep.mubr.bf16.mxu0 0
      %3340 = vmatmul.mubr.bf16.gmra.mrb[0].mxu0 %v3116
      %v3341 = vpop.f32.mrb[0].mxu0
      %v3342 = vadd.f32 0.0, %v3341
      %v3343 = vpop.f32.mrb[0].mxu0
      %v3344 = vpop.f32.mrb[0].mxu0
      %v3345 = vadd.f32 0.0, %v3344
      %v3346 = vpop.f32.mrb[0].mxu0
      %3347 = vmatprep.mubr.bf16.mxu0 0
      %3348 = vmatmul.mubr.bf16.gmra.mrb[0].mxu0 %v3119
      %v3349 = vpop.f32.mrb[0].mxu0
      %v3350 = vadd.f32 0.0, %v3349
      %v3351 = vpop.f32.mrb[0].mxu0
      %v3352 = vpop.f32.mrb[0].mxu0
      %v3353 = vadd.f32 0.0, %v3352
      %v3354 = vpop.f32.mrb[0].mxu0
      %3355 = vmatprep.mubr.bf16.mxu0 0
      %3356 = vmatmul.mubr.bf16.gmra.mrb[0].mxu0 %v3122
      %v3357 = vpop.f32.mrb[0].mxu0
      %v3358 = vadd.f32 0.0, %v3357
      %v3359 = vpop.f32.mrb[0].mxu0
      %v3360 = vpop.f32.mrb[0].mxu0
      %v3361 = vadd.f32 0.0, %v3360
      %v3362 = vpop.f32.mrb[0].mxu0
      %3363 = vmatprep.mubr.bf16.mxu0 0
      %3364 = vmatmul.mubr.bf16.gmra.mrb[0].mxu0 %v3125
      %v3365 = vpop.f32.mrb[0].mxu0
      %v3366 = vadd.f32 0.0, %v3365
      %v3367 = vpop.f32.mrb[0].mxu0
      %v3368 = vpop.f32.mrb[0].mxu0
      %v3369 = vadd.f32 0.0, %v3368
      %v3370 = vpop.f32.mrb[0].mxu0
      %3371 = vmatprep.mubr.bf16.mxu0 0
      %3372 = vmatmul.mubr.bf16.gmra.mrb[0].mxu0 %v3128
      %v3373 = vpop.f32.mrb[0].mxu0
      %v3374 = vadd.f32 0.0, %v3373
      %v3375 = vpop.f32.mrb[0].mxu0
      %v3376 = vpop.f32.mrb[0].mxu0
      %v3377 = vadd.f32 0.0, %v3376
      %v3378 = vpop.f32.mrb[0].mxu0
      %3379 = vmatprep.mubr.bf16.mxu0 0
      %3380 = vmatmul.mubr.bf16.gmra.mrb[0].mxu0 %v3131
      %v3381 = vpop.f32.mrb[0].mxu0
      %v3382 = vadd.f32 0.0, %v3381
      %v3383 = vpop.f32.mrb[0].mxu0
      %v3384 = vpop.f32.mrb[0].mxu0
      %v3385 = vadd.f32 0.0, %v3384
      %v3386 = vpop.f32.mrb[0].mxu0
      %3387 = vmatprep.mubr.bf16.mxu0 0
      %3388 = vmatmul.mubr.bf16.gmra.mrb[0].mxu0 %v3134
      %v3389 = vpop.f32.mrb[0].mxu0
      %v3390 = vadd.f32 0.0, %v3389
      %v3391 = vpop.f32.mrb[0].mxu0
      %v3392 = vpop.f32.mrb[0].mxu0
      %v3393 = vadd.f32 0.0, %v3392
      %v3394 = vpop.f32.mrb[0].mxu0
      %3395 = vmatprep.mubr.bf16.mxu0 0
      %3396 = vmatmul.mubr.bf16.gmra.mrb[0].mxu0 %v3137
      %v3397 = vpop.f32.mrb[0].mxu0
      %v3398 = vadd.f32 0.0, %v3397
      %v3399 = vpop.f32.mrb[0].mxu0
      %v3400 = vpop.f32.mrb[0].mxu0
      %v3401 = vadd.f32 0.0, %v3400
      %v3402 = vpop.f32.mrb[0].mxu0
      %3403 = vmatprep.mubr.bf16.mxu0 0
      %3404 = vmatmul.mubr.bf16.gmra.mrb[0].mxu0 %v3140
      %v3405 = vpop.f32.mrb[0].mxu0
      %v3406 = vadd.f32 0.0, %v3405
      %v3407 = vpop.f32.mrb[0].mxu0
      %v3408 = vpop.f32.mrb[0].mxu0
      %v3409 = vadd.f32 0.0, %v3408
      %v3410 = vpop.f32.mrb[0].mxu0
      %3411 = vmatprep.mubr.bf16.mxu0 0
      %3412 = vmatmul.mubr.bf16.gmra.mrb[0].mxu0 %v3143
      %v3413 = vpop.f32.mrb[0].mxu0
      %v3414 = vadd.f32 0.0, %v3413
      %v3415 = vpop.f32.mrb[0].mxu0
      %v3416 = vpop.f32.mrb[0].mxu0
      %v3417 = vadd.f32 0.0, %v3416
      %v3418 = vpop.f32.mrb[0].mxu0
      %3419 = vmatprep.mubr.bf16.mxu0 0
      %3420 = vmatmul.mubr.bf16.gmra.mrb[0].mxu0 %v3146
      %v3421 = vpop.f32.mrb[0].mxu0
      %v3422 = vadd.f32 0.0, %v3421
      %v3423 = vpop.f32.mrb[0].mxu0
      %v3424 = vpop.f32.mrb[0].mxu0
      %v3425 = vadd.f32 0.0, %v3424
      %v3426 = vpop.f32.mrb[0].mxu0
      %3427 = vmatprep.mubr.bf16.mxu0 0
      %3428 = vmatmul.mubr.bf16.gmra.mrb[0].mxu0 %v3149
      %v3429 = vpop.f32.mrb[0].mxu0
      %v3430 = vadd.f32 0.0, %v3429
      %v3431 = vpop.f32.mrb[0].mxu0
      %v3432 = vpop.f32.mrb[0].mxu0
      %v3433 = vadd.f32 0.0, %v3432
      %v3434 = vpop.f32.mrb[0].mxu0
      %3435 = vmatprep.mubr.bf16.mxu0 0
      %3436 = vmatmul.mubr.bf16.gmra.mrb[0].mxu0 %v3152
      %v3437 = vpop.f32.mrb[0].mxu0
      %v3438 = vadd.f32 0.0, %v3437
      %v3439 = vpop.f32.mrb[0].mxu0
      %v3440 = vpop.f32.mrb[0].mxu0
      %v3441 = vadd.f32 0.0, %v3440
      %v3442 = vpop.f32.mrb[0].mxu0
      %3443 = vmatprep.mubr.bf16.mxu0 0
      %3444 = vmatmul.mubr.bf16.gmra.mrb[0].mxu0 %v3155
      %v3445 = vpop.f32.mrb[0].mxu0
      %v3446 = vadd.f32 0.0, %v3445
      %v3447 = vpop.f32.mrb[0].mxu0
      %v3448 = vpop.f32.mrb[0].mxu0
      %v3449 = vadd.f32 0.0, %v3448
      %v3450 = vpop.f32.mrb[0].mxu0
      %3451 = vmatprep.mubr.bf16.mxu0 0
      %3452 = vmatmul.mubr.bf16.gmra.mrb[0].mxu0 %v3158
      %v3453 = vpop.f32.mrb[0].mxu0
      %v3454 = vadd.f32 0.0, %v3453
      %v3455 = vpop.f32.mrb[0].mxu0
      %v3456 = vpop.f32.mrb[0].mxu0
      %v3457 = vadd.f32 0.0, %v3456
      %v3458 = vpop.f32.mrb[0].mxu0
      %3459 = vmatprep.mubr.bf16.mxu0 0
      %3460 = vmatmul.mubr.bf16.gmra.mrb[0].mxu0 %v3161
      %v3461 = vpop.f32.mrb[0].mxu0
      %v3462 = vadd.f32 0.0, %v3461
      %v3463 = vpop.f32.mrb[0].mxu0
      %v3464 = vpop.f32.mrb[0].mxu0
      %v3465 = vadd.f32 0.0, %v3464
      %v3466 = vpop.f32.mrb[0].mxu0
      %3467 = vmatprep.mubr.bf16.mxu0 0
      %3468 = vmatmul.mubr.bf16.gmra.mrb[0].mxu0 %v3164
      %v3469 = vpop.f32.mrb[0].mxu0
      %v3470 = vadd.f32 0.0, %v3469
      %v3471 = vpop.f32.mrb[0].mxu0
      %v3472 = vpop.f32.mrb[0].mxu0
      %v3473 = vadd.f32 0.0, %v3472
      %v3474 = vpop.f32.mrb[0].mxu0
      %3475 = vmatprep.mubr.bf16.mxu0 0
      %3476 = vmatmul.mubr.bf16.gmra.mrb[0].mxu0 %v3167
      %v3477 = vpop.f32.mrb[0].mxu0
      %v3478 = vadd.f32 0.0, %v3477
      %v3479 = vpop.f32.mrb[0].mxu0
      %v3480 = vpop.f32.mrb[0].mxu0
      %v3481 = vadd.f32 0.0, %v3480
      %v3482 = vpop.f32.mrb[0].mxu0
      %3483 = vmatprep.mubr.bf16.mxu0 0
      %3484 = vmatmul.mubr.bf16.gmra.mrb[0].mxu0 %v3170
      %v3485 = vpop.f32.mrb[0].mxu0
      %v3486 = vadd.f32 0.0, %v3485
      %v3487 = vpop.f32.mrb[0].mxu0
      %v3488 = vpop.f32.mrb[0].mxu0
      %v3489 = vadd.f32 0.0, %v3488
      %v3490 = vpop.f32.mrb[0].mxu0
      %3491 = vmatprep.mubr.bf16.mxu0 0
      %3492 = vmatmul.mubr.bf16.gmra.mrb[0].mxu0 %v3173
      %v3493 = vpop.f32.mrb[0].mxu0
      %v3494 = vadd.f32 0.0, %v3493
      %v3495 = vpop.f32.mrb[0].mxu0
      %v3496 = vpop.f32.mrb[0].mxu0
      %v3497 = vadd.f32 0.0, %v3496
      %v3498 = vpop.f32.mrb[0].mxu0
      %3499 = vmatprep.mubr.bf16.mxu0 0
      %3500 = vmatmul.mubr.bf16.gmra.mrb[0].mxu0 %v3176
      %v3501 = vpop.f32.mrb[0].mxu0
      %v3502 = vadd.f32 0.0, %v3501
      %v3503 = vpop.f32.mrb[0].mxu0
      %v3504 = vpop.f32.mrb[0].mxu0
      %v3505 = vadd.f32 0.0, %v3504
      %v3506 = vpop.f32.mrb[0].mxu0
      %3507 = vmatprep.mubr.bf16.mxu0 0
      %3508 = vmatmul.mubr.bf16.gmra.mrb[0].mxu0 %v3179
      %v3509 = vpop.f32.mrb[0].mxu0
      %v3510 = vadd.f32 0.0, %v3509
      %v3511 = vpop.f32.mrb[0].mxu0
      %v3512 = vpop.f32.mrb[0].mxu0
      %v3513 = vadd.f32 0.0, %v3512
      %v3514 = vpop.f32.mrb[0].mxu0
      %3515 = vmatprep.mubr.bf16.mxu0 0
      %3516 = vmatmul.mubr.bf16.gmra.mrb[0].mxu0 %v3182
      %v3517 = vpop.f32.mrb[0].mxu0
      %v3518 = vadd.f32 0.0, %v3517
      %v3519 = vpop.f32.mrb[0].mxu0
      %v3520 = vpop.f32.mrb[0].mxu0
      %v3521 = vadd.f32 0.0, %v3520
      %v3522 = vpop.f32.mrb[0].mxu0
      %3523 = vmatprep.mubr.bf16.mxu0 0
      %3524 = vmatmul.mubr.bf16.gmra.mrb[0].mxu0 %v3185
      %v3525 = vpop.f32.mrb[0].mxu0
      %v3526 = vadd.f32 0.0, %v3525
      %v3527 = vpop.f32.mrb[0].mxu0
      %v3528 = vpop.f32.mrb[0].mxu0
      %v3529 = vadd.f32 0.0, %v3528
      %v3530 = vpop.f32.mrb[0].mxu0
      %3531 = vmatprep.mubr.bf16.mxu0 0
      %3532 = vmatmul.mubr.bf16.gmra.mrb[0].mxu0 %v3188
      %v3533 = vpop.f32.mrb[0].mxu0
      %v3534 = vadd.f32 0.0, %v3533
      %v3535 = vpop.f32.mrb[0].mxu0
      %v3536 = vpop.f32.mrb[0].mxu0
      %v3537 = vadd.f32 0.0, %v3536
      %v3538 = vpop.f32.mrb[0].mxu0
      %3539 = vmatprep.mubr.bf16.mxu0 0
      %3540 = vmatmul.mubr.bf16.gmra.mrb[0].mxu0 %v3191
      %v3541 = vpop.f32.mrb[0].mxu0
      %v3542 = vadd.f32 0.0, %v3541
      %v3543 = vpop.f32.mrb[0].mxu0
      %v3544 = vpop.f32.mrb[0].mxu0
      %v3545 = vadd.f32 0.0, %v3544
      %v3546 = vpop.f32.mrb[0].mxu0
      %3547 = vmatprep.mubr.bf16.mxu0 0
      %3548 = vmatmul.mubr.bf16.gmra.mrb[0].mxu0 %v3194
      %v3549 = vpop.f32.mrb[0].mxu0
      %v3550 = vadd.f32 0.0, %v3549
      %v3551 = vpop.f32.mrb[0].mxu0
      %v3552 = vpop.f32.mrb[0].mxu0
      %v3553 = vadd.f32 0.0, %v3552
      %v3554 = vpop.f32.mrb[0].mxu0
      %3555 = vmatprep.mubr.bf16.mxu0 0
      %3556 = vmatmul.mubr.bf16.gmra.mrb[0].mxu0 %v3197
      %v3557 = vpop.f32.mrb[0].mxu0
      %v3558 = vadd.f32 0.0, %v3557
      %v3559 = vpop.f32.mrb[0].mxu0
      %v3560 = vpop.f32.mrb[0].mxu0
      %v3561 = vadd.f32 0.0, %v3560
      %v3562 = vpop.f32.mrb[0].mxu0
      %3563 = vmatprep.mubr.bf16.mxu0 0
      %3564 = vmatmul.mubr.bf16.gmra.mrb[0].mxu0 %v3200
      %v3565 = vpop.f32.mrb[0].mxu0
      %v3566 = vadd.f32 0.0, %v3565
      %v3567 = vpop.f32.mrb[0].mxu0
      %v3568 = vpop.f32.mrb[0].mxu0
      %v3569 = vadd.f32 0.0, %v3568
      %v3570 = vpop.f32.mrb[0].mxu0
      %3571 = vmatprep.mubr.bf16.mxu0 0
      %3572 = vmatmul.mubr.bf16.gmra.mrb[0].mxu0 %v3203
      %v3573 = vpop.f32.mrb[0].mxu0
      %v3574 = vadd.f32 0.0, %v3573
      %v3575 = vpop.f32.mrb[0].mxu0
      %v3576 = vpop.f32.mrb[0].mxu0
      %v3577 = vadd.f32 0.0, %v3576
      %v3578 = vpop.f32.mrb[0].mxu0
      %3579 = vmatprep.mubr.bf16.mxu0 0
      %3580 = vmatmul.mubr.bf16.gmra.mrb[0].mxu0 %v3206
      %v3581 = vpop.f32.mrb[0].mxu0
      %v3582 = vadd.f32 0.0, %v3581
      %v3583 = vpop.f32.mrb[0].mxu0
      %v3584 = vpop.f32.mrb[0].mxu0
      %v3585 = vadd.f32 0.0, %v3584
      %v3586 = vpop.f32.mrb[0].mxu0
      %3587 = vmatprep.mubr.bf16.mxu0 0
      %3588 = vmatmul.mubr.bf16.gmra.mrb[0].mxu0 %v3209
      %v3589 = vpop.f32.mrb[0].mxu0
      %v3590 = vadd.f32 0.0, %v3589
      %v3591 = vpop.f32.mrb[0].mxu0
      %v3592 = vpop.f32.mrb[0].mxu0
      %v3593 = vadd.f32 0.0, %v3592
      %v3594 = vpop.f32.mrb[0].mxu0
      %3595 = vmatprep.mubr.bf16.mxu0 0
      %3596 = vmatmul.mubr.bf16.gmra.mrb[0].mxu0 %v3212
      %v3597 = vpop.f32.mrb[0].mxu0
      %v3598 = vadd.f32 0.0, %v3597
      %v3599 = vpop.f32.mrb[0].mxu0
      %v3600 = vpop.f32.mrb[0].mxu0
      %v3601 = vadd.f32 0.0, %v3600
      %v3602 = vpop.f32.mrb[0].mxu0
      %3603 = vmatprep.mubr.bf16.mxu0 0
      %3604 = vmatmul.mubr.bf16.gmra.mrb[0].mxu0 %v3215
      %v3605 = vpop.f32.mrb[0].mxu0
      %v3606 = vadd.f32 0.0, %v3605
      %v3607 = vpop.f32.mrb[0].mxu0
      %v3608 = vpop.f32.mrb[0].mxu0
      %v3609 = vadd.f32 0.0, %v3608
      %v3610 = vpop.f32.mrb[0].mxu0
      %3611 = vmatprep.mubr.bf16.mxu0 0
      %3612 = vmatmul.mubr.bf16.gmra.mrb[0].mxu0 %v3218
      %v3613 = vpop.f32.mrb[0].mxu0
      %v3614 = vadd.f32 0.0, %v3613
      %v3615 = vpop.f32.mrb[0].mxu0
      %v3616 = vpop.f32.mrb[0].mxu0
      %v3617 = vadd.f32 0.0, %v3616
      %v3618 = vpop.f32.mrb[0].mxu0
      %3619 = vmatprep.mubr.bf16.mxu0 0
      %3620 = vmatmul.mubr.bf16.gmra.mrb[0].mxu0 %v3221
      %v3621 = vpop.f32.mrb[0].mxu0
      %v3622 = vadd.f32 0.0, %v3621
      %v3623 = vpop.f32.mrb[0].mxu0
      %v3624 = vpop.f32.mrb[0].mxu0
      %v3625 = vadd.f32 0.0, %v3624
      %v3626 = vpop.f32.mrb[0].mxu0
      %3627 = vmatprep.mubr.bf16.mxu0 0
      %3628 = vmatmul.mubr.bf16.gmra.mrb[0].mxu0 %v3224
      %v3629 = vpop.f32.mrb[0].mxu0
      %v3630 = vadd.f32 0.0, %v3629
      %v3631 = vpop.f32.mrb[0].mxu0
      %v3632 = vpop.f32.mrb[0].mxu0
      %v3633 = vadd.f32 0.0, %v3632
      %v3634 = vpop.f32.mrb[0].mxu0
      %3635 = vmatprep.mubr.bf16.mxu0 0
      %3636 = vmatmul.mubr.bf16.gmra.mrb[0].mxu0 %v3227
      %v3637 = vpop.f32.mrb[0].mxu0
      %v3638 = vadd.f32 0.0, %v3637
      %v3639 = vpop.f32.mrb[0].mxu0
      %v3640 = vpop.f32.mrb[0].mxu0
      %v3641 = vadd.f32 0.0, %v3640
      %v3642 = vpop.f32.mrb[0].mxu0
      %3643 = vmatprep.mubr.bf16.mxu0 0
      %3644 = vmatmul.mubr.bf16.gmra.mrb[0].mxu0 %v3230
      %v3645 = vpop.f32.mrb[0].mxu0
      %v3646 = vadd.f32 0.0, %v3645
      %v3647 = vpop.f32.mrb[0].mxu0
      %v3648 = vpop.f32.mrb[0].mxu0
      %v3649 = vadd.f32 0.0, %v3648
      %v3650 = vpop.f32.mrb[0].mxu0
      %3651 = vmatprep.mubr.bf16.mxu0 0
      %3652 = vmatmul.mubr.bf16.gmra.mrb[0].mxu0 %v3233
      %v3653 = vpop.f32.mrb[0].mxu0
      %v3654 = vadd.f32 0.0, %v3653
      %v3655 = vpop.f32.mrb[0].mxu0
      %v3656 = vpop.f32.mrb[0].mxu0
      %v3657 = vadd.f32 0.0, %v3656
      %v3658 = vpop.f32.mrb[0].mxu0
      %3659 = vmatprep.mubr.bf16.mxu0 0
      %3660 = vmatmul.mubr.bf16.gmra.mrb[0].mxu0 %v3236
      %v3661 = vpop.f32.mrb[0].mxu0
      %v3662 = vadd.f32 0.0, %v3661
      %v3663 = vpop.f32.mrb[0].mxu0
      %v3664 = vpop.f32.mrb[0].mxu0
      %v3665 = vadd.f32 0.0, %v3664
      %v3666 = vpop.f32.mrb[0].mxu0
      %3667 = vmatprep.mubr.bf16.mxu0 0
      %3668 = vmatmul.mubr.bf16.gmra.mrb[0].mxu0 %v3239
      %v3669 = vpop.f32.mrb[0].mxu0
      %v3670 = vadd.f32 0.0, %v3669
      %v3671 = vpop.f32.mrb[0].mxu0
      %v3672 = vpop.f32.mrb[0].mxu0
      %v3673 = vadd.f32 0.0, %v3672
      %v3674 = vpop.f32.mrb[0].mxu0
      %3675 = vmatprep.mubr.bf16.mxu0 0
      %3676 = vmatmul.mubr.bf16.gmra.mrb[0].mxu0 %v3242
      %v3677 = vpop.f32.mrb[0].mxu0
      %v3678 = vadd.f32 0.0, %v3677
      %v3679 = vpop.f32.mrb[0].mxu0
      %v3680 = vpop.f32.mrb[0].mxu0
      %v3681 = vadd.f32 0.0, %v3680
      %v3682 = vpop.f32.mrb[0].mxu0
      %3683 = vmatprep.mubr.bf16.mxu0 0
      %3684 = vmatmul.mubr.bf16.gmra.mrb[0].mxu0 %v3245
      %v3685 = vpop.f32.mrb[0].mxu0
      %v3686 = vadd.f32 0.0, %v3685
      %v3687 = vpop.f32.mrb[0].mxu0
      %v3688 = vpop.f32.mrb[0].mxu0
      %v3689 = vadd.f32 0.0, %v3688
      %v3690 = vpop.f32.mrb[0].mxu0
      %3691 = vmatprep.mubr.bf16.mxu0 0
      %3692 = vmatmul.mubr.bf16.gmra.mrb[0].mxu0 %v3248
      %v3693 = vpop.f32.mrb[0].mxu0
      %v3694 = vadd.f32 0.0, %v3693
      %v3695 = vpop.f32.mrb[0].mxu0
      %v3696 = vpop.f32.mrb[0].mxu0
      %v3697 = vadd.f32 0.0, %v3696
      %v3698 = vpop.f32.mrb[0].mxu0
      %3699 = vmatprep.mubr.bf16.mxu0 0
      %3700 = vmatmul.mubr.bf16.gmra.mrb[0].mxu0 %v3251
      %v3701 = vpop.f32.mrb[0].mxu0
      %v3702 = vadd.f32 0.0, %v3701
      %v3703 = vpop.f32.mrb[0].mxu0
      %v3704 = vpop.f32.mrb[0].mxu0
      %v3705 = vadd.f32 0.0, %v3704
      %v3706 = vpop.f32.mrb[0].mxu0
      %3707 = vmatprep.mubr.bf16.mxu0 0
      %3708 = vmatmul.mubr.bf16.gmra.mrb[0].mxu0 %v3254
      %v3709 = vpop.f32.mrb[0].mxu0
      %v3710 = vadd.f32 0.0, %v3709
      %v3711 = vpop.f32.mrb[0].mxu0
      %v3712 = vpop.f32.mrb[0].mxu0
      %v3713 = vadd.f32 0.0, %v3712
      %v3714 = vpop.f32.mrb[0].mxu0
      %3715 = vmatprep.mubr.bf16.mxu0 0
      %3716 = vmatmul.mubr.bf16.gmra.mrb[0].mxu0 %v3257
      %v3717 = vpop.f32.mrb[0].mxu0
      %v3718 = vadd.f32 0.0, %v3717
      %v3719 = vpop.f32.mrb[0].mxu0
      %v3720 = vpop.f32.mrb[0].mxu0
      %v3721 = vadd.f32 0.0, %v3720
      %v3722 = vpop.f32.mrb[0].mxu0
      %3723 = vmatprep.mubr.bf16.mxu0 0
      %3724 = vmatmul.mubr.bf16.gmra.mrb[0].mxu0 %v3260
      %v3725 = vpop.f32.mrb[0].mxu0
      %v3726 = vadd.f32 0.0, %v3725
      %v3727 = vpop.f32.mrb[0].mxu0
      %v3728 = vpop.f32.mrb[0].mxu0
      %v3729 = vadd.f32 0.0, %v3728
      %v3730 = vpop.f32.mrb[0].mxu0
      %3731 = vmatprep.mubr.bf16.mxu0 0
      %3732 = vmatmul.mubr.bf16.gmra.mrb[0].mxu0 %v3263
      %v3733 = vpop.f32.mrb[0].mxu0
      %v3734 = vadd.f32 0.0, %v3733
      %v3735 = vpop.f32.mrb[0].mxu0
      %v3736 = vpop.f32.mrb[0].mxu0
      %v3737 = vadd.f32 0.0, %v3736
      %v3738 = vpop.f32.mrb[0].mxu0
      %3739 = vmatprep.mubr.bf16.mxu0 0
      %3740 = vmatmul.mubr.bf16.gmra.mrb[0].mxu0 %v3266
      %v3741 = vpop.f32.mrb[0].mxu0
      %v3742 = vadd.f32 0.0, %v3741
      %v3743 = vpop.f32.mrb[0].mxu0
      %v3744 = vpop.f32.mrb[0].mxu0
      %v3745 = vadd.f32 0.0, %v3744
      %v3746 = vpop.f32.mrb[0].mxu0
      %3747 = vmatprep.mubr.bf16.mxu0 0
      %3748 = vmatmul.mubr.bf16.gmra.mrb[0].mxu0 %v3269
      %v3749 = vpop.f32.mrb[0].mxu0
      %v3750 = vadd.f32 0.0, %v3749
      %v3751 = vpop.f32.mrb[0].mxu0
      %v3752 = vpop.f32.mrb[0].mxu0
      %v3753 = vadd.f32 0.0, %v3752
      %v3754 = vpop.f32.mrb[0].mxu0
      %3755 = vmatprep.mubr.bf16.mxu0 0
      %3756 = vmatmul.mubr.bf16.gmra.mrb[0].mxu0 %v3272
      %v3757 = vpop.f32.mrb[0].mxu0
      %v3758 = vadd.f32 0.0, %v3757
      %v3759 = vpop.f32.mrb[0].mxu0
      %v3760 = vpop.f32.mrb[0].mxu0
      %v3761 = vadd.f32 0.0, %v3760
      %v3762 = vpop.f32.mrb[0].mxu0
      %3763 = vmatprep.mubr.bf16.mxu0 0
      %3764 = vmatmul.mubr.bf16.gmra.mrb[0].mxu0 %v3275
      %v3765 = vpop.f32.mrb[0].mxu0
      %v3766 = vadd.f32 0.0, %v3765
      %v3767 = vpop.f32.mrb[0].mxu0
      %v3768 = vpop.f32.mrb[0].mxu0
      %v3769 = vadd.f32 0.0, %v3768
      %v3770 = vpop.f32.mrb[0].mxu0
      %3771 = vmatprep.mubr.bf16.mxu0 0
      %3772 = vmatmul.mubr.bf16.gmra.mrb[0].mxu0 %v3278
      %v3773 = vpop.f32.mrb[0].mxu0
      %v3774 = vadd.f32 0.0, %v3773
      %v3775 = vpop.f32.mrb[0].mxu0
      %v3776 = vpop.f32.mrb[0].mxu0
      %v3777 = vadd.f32 0.0, %v3776
      %v3778 = vpop.f32.mrb[0].mxu0
      %3779 = vmatprep.mubr.bf16.mxu0 0
      %3780 = vmatmul.mubr.bf16.gmra.mrb[0].mxu0 %v3281
      %v3781 = vpop.f32.mrb[0].mxu0
      %v3782 = vadd.f32 0.0, %v3781
      %v3783 = vpop.f32.mrb[0].mxu0
      %v3784 = vpop.f32.mrb[0].mxu0
      %v3785 = vadd.f32 0.0, %v3784
      %v3786 = vpop.f32.mrb[0].mxu0
      %3787 = vmatprep.mubr.bf16.mxu0 0
      %3788 = vmatmul.mubr.bf16.gmra.mrb[0].mxu0 %v3284
      %v3789 = vpop.f32.mrb[0].mxu0
      %v3790 = vadd.f32 0.0, %v3789
      %v3791 = vpop.f32.mrb[0].mxu0
      %v3792 = vpop.f32.mrb[0].mxu0
      %v3793 = vadd.f32 0.0, %v3792
      %v3794 = vpop.f32.mrb[0].mxu0
      %3795 = vmatprep.mubr.bf16.mxu0 0
      %3796 = vmatmul.mubr.bf16.gmra.mrb[0].mxu0 %v3287
      %v3797 = vpop.f32.mrb[0].mxu0
      %v3798 = vadd.f32 0.0, %v3797
      %v3799 = vpop.f32.mrb[0].mxu0
      %v3800 = vpop.f32.mrb[0].mxu0
      %v3801 = vadd.f32 0.0, %v3800
      %v3802 = vpop.f32.mrb[0].mxu0
      %3803 = vmatprep.mubr.bf16.mxu0 0
      %3804 = vmatmul.mubr.bf16.gmra.mrb[0].mxu0 %v3290
      %v3805 = vpop.f32.mrb[0].mxu0
      %v3806 = vadd.f32 0.0, %v3805
      %v3807 = vpop.f32.mrb[0].mxu0
      %v3808 = vpop.f32.mrb[0].mxu0
      %v3809 = vadd.f32 0.0, %v3808
      %v3810 = vpop.f32.mrb[0].mxu0
      %3811 = vmatprep.mubr.bf16.mxu0 0
      %3812 = vmatmul.mubr.bf16.gmra.mrb[0].mxu0 %v3293
      %v3813 = vpop.f32.mrb[0].mxu0
      %v3814 = vadd.f32 0.0, %v3813
      %v3815 = vpop.f32.mrb[0].mxu0
      %v3816 = vpop.f32.mrb[0].mxu0
      %v3817 = vadd.f32 0.0, %v3816
      %v3818 = vpop.f32.mrb[0].mxu0
      %3819 = vmatprep.mubr.bf16.mxu0 0
      %3820 = vmatmul.mubr.bf16.gmra.mrb[0].mxu0 %v3296
      %v3821 = vpop.f32.mrb[0].mxu0
      %v3822 = vadd.f32 0.0, %v3821
      %v3823 = vpop.f32.mrb[0].mxu0
      %v3824 = vpop.f32.mrb[0].mxu0
      %v3825 = vadd.f32 0.0, %v3824
      %v3826 = vpop.f32.mrb[0].mxu0
      %3827 = vmatprep.mubr.bf16.mxu0 0
      %3828 = vmatmul.mubr.bf16.gmra.mrb[0].mxu0 %v3299
      %v3829 = vpop.f32.mrb[0].mxu0
      %v3830 = vadd.f32 0.0, %v3829
      %v3831 = vpop.f32.mrb[0].mxu0
      %v3832 = vpop.f32.mrb[0].mxu0
      %v3833 = vadd.f32 0.0, %v3832
      %v3834 = vpop.f32.mrb[0].mxu0
      %3835 = vmatprep.mubr.bf16.mxu0 0
      %3836 = vmatmul.mubr.bf16.gmra.mrb[0].mxu0 %v3302
      %v3837 = vpop.f32.mrb[0].mxu0
      %v3838 = vadd.f32 0.0, %v3837
      %v3839 = vpop.f32.mrb[0].mxu0
      %v3840 = vpop.f32.mrb[0].mxu0
      %v3841 = vadd.f32 0.0, %v3840
      %v3842 = vpop.f32.mrb[0].mxu0
      %3843 = vmatprep.mubr.bf16.mxu0 0
      %3844 = vmatmul.mubr.bf16.gmra.mrb[0].mxu0 %v3305
      %v3845 = vpop.f32.mrb[0].mxu0
      %v3846 = vadd.f32 0.0, %v3845
      %v3847 = vpop.f32.mrb[0].mxu0
      %v3848 = vpop.f32.mrb[0].mxu0
      %v3849 = vadd.f32 0.0, %v3848
      %v3850 = vpop.f32.mrb[0].mxu0
      %3851 = vdwg.mxu0
      %v3852 = vadd.f32 %v2140, %v3342
      %v3853 = vadd.f32 %v2143, %v3345
      %v3854 = vadd.f32 %v2148, %v3350
      %v3855 = vadd.f32 %v2151, %v3353
      %v3856 = vadd.f32 %v2156, %v3358
      %v3857 = vadd.f32 %v2159, %v3361
      %v3858 = vadd.f32 %v2164, %v3366
      %v3859 = vadd.f32 %v2167, %v3369
      %v3860 = vadd.f32 %v2172, %v3374
      %v3861 = vadd.f32 %v2175, %v3377
      %v3862 = vadd.f32 %v2180, %v3382
      %v3863 = vadd.f32 %v2183, %v3385
      %v3864 = vadd.f32 %v2188, %v3390
      %v3865 = vadd.f32 %v2191, %v3393
      %v3866 = vadd.f32 %v2196, %v3398
      %v3867 = vadd.f32 %v2199, %v3401
      %v3868 = vadd.f32 %v2204, %v3406
      %v3869 = vadd.f32 %v2207, %v3409
      %v3870 = vadd.f32 %v2212, %v3414
      %v3871 = vadd.f32 %v2215, %v3417
      %v3872 = vadd.f32 %v2220, %v3422
      %v3873 = vadd.f32 %v2223, %v3425
      %v3874 = vadd.f32 %v2228, %v3430
      %v3875 = vadd.f32 %v2231, %v3433
      %v3876 = vadd.f32 %v2236, %v3438
      %v3877 = vadd.f32 %v2239, %v3441
      %v3878 = vadd.f32 %v2244, %v3446
      %v3879 = vadd.f32 %v2247, %v3449
      %v3880 = vadd.f32 %v2252, %v3454
      %v3881 = vadd.f32 %v2255, %v3457
      %v3882 = vadd.f32 %v2260, %v3462
      %v3883 = vadd.f32 %v2263, %v3465
      %v3884 = vadd.f32 %v2268, %v3470
      %v3885 = vadd.f32 %v2271, %v3473
      %v3886 = vadd.f32 %v2276, %v3478
      %v3887 = vadd.f32 %v2279, %v3481
      %v3888 = vadd.f32 %v2284, %v3486
      %v3889 = vadd.f32 %v2287, %v3489
      %v3890 = vadd.f32 %v2292, %v3494
      %v3891 = vadd.f32 %v2295, %v3497
      %v3892 = vadd.f32 %v2300, %v3502
      %v3893 = vadd.f32 %v2303, %v3505
      %v3894 = vadd.f32 %v2308, %v3510
      %v3895 = vadd.f32 %v2311, %v3513
      %v3896 = vadd.f32 %v2316, %v3518
      %v3897 = vadd.f32 %v2319, %v3521
      %v3898 = vadd.f32 %v2324, %v3526
      %v3899 = vadd.f32 %v2327, %v3529
      %v3900 = vadd.f32 %v2332, %v3534
      %v3901 = vadd.f32 %v2335, %v3537
      %v3902 = vadd.f32 %v2340, %v3542
      %v3903 = vadd.f32 %v2343, %v3545
      %v3904 = vadd.f32 %v2348, %v3550
      %v3905 = vadd.f32 %v2351, %v3553
      %v3906 = vadd.f32 %v2356, %v3558
      %v3907 = vadd.f32 %v2359, %v3561
      %v3908 = vadd.f32 %v2364, %v3566
      %v3909 = vadd.f32 %v2367, %v3569
      %v3910 = vadd.f32 %v2372, %v3574
      %v3911 = vadd.f32 %v2375, %v3577
      %v3912 = vadd.f32 %v2380, %v3582
      %v3913 = vadd.f32 %v2383, %v3585
      %v3914 = vadd.f32 %v2388, %v3590
      %v3915 = vadd.f32 %v2391, %v3593
      %v3916 = vadd.f32 %v2396, %v3598
      %v3917 = vadd.f32 %v2399, %v3601
      %v3918 = vadd.f32 %v2404, %v3606
      %v3919 = vadd.f32 %v2407, %v3609
      %v3920 = vadd.f32 %v2412, %v3614
      %v3921 = vadd.f32 %v2415, %v3617
      %v3922 = vadd.f32 %v2420, %v3622
      %v3923 = vadd.f32 %v2423, %v3625
      %v3924 = vadd.f32 %v2428, %v3630
      %v3925 = vadd.f32 %v2431, %v3633
      %v3926 = vadd.f32 %v2436, %v3638
      %v3927 = vadd.f32 %v2439, %v3641
      %v3928 = vadd.f32 %v2444, %v3646
      %v3929 = vadd.f32 %v2447, %v3649
      %v3930 = vadd.f32 %v2452, %v3654
      %v3931 = vadd.f32 %v2455, %v3657
      %v3932 = vadd.f32 %v2460, %v3662
      %v3933 = vadd.f32 %v2463, %v3665
      %v3934 = vadd.f32 %v2468, %v3670
      %v3935 = vadd.f32 %v2471, %v3673
      %v3936 = vadd.f32 %v2476, %v3678
      %v3937 = vadd.f32 %v2479, %v3681
      %v3938 = vadd.f32 %v2484, %v3686
      %v3939 = vadd.f32 %v2487, %v3689
      %v3940 = vadd.f32 %v2492, %v3694
      %v3941 = vadd.f32 %v2495, %v3697
      %v3942 = vadd.f32 %v2500, %v3702
      %v3943 = vadd.f32 %v2503, %v3705
      %v3944 = vadd.f32 %v2508, %v3710
      %v3945 = vadd.f32 %v2511, %v3713
      %v3946 = vadd.f32 %v2516, %v3718
      %v3947 = vadd.f32 %v2519, %v3721
      %v3948 = vadd.f32 %v2524, %v3726
      %v3949 = vadd.f32 %v2527, %v3729
      %v3950 = vadd.f32 %v2532, %v3734
      %v3951 = vadd.f32 %v2535, %v3737
      %v3952 = vadd.f32 %v2540, %v3742
      %v3953 = vadd.f32 %v2543, %v3745
      %v3954 = vadd.f32 %v2548, %v3750
      %v3955 = vadd.f32 %v2551, %v3753
      %v3956 = vadd.f32 %v2556, %v3758
      %v3957 = vadd.f32 %v2559, %v3761
      %v3958 = vadd.f32 %v2564, %v3766
      %v3959 = vadd.f32 %v2567, %v3769
      %v3960 = vadd.f32 %v2572, %v3774
      %v3961 = vadd.f32 %v2575, %v3777
      %v3962 = vadd.f32 %v2580, %v3782
      %v3963 = vadd.f32 %v2583, %v3785
      %v3964 = vadd.f32 %v2588, %v3790
      %v3965 = vadd.f32 %v2591, %v3793
      %v3966 = vadd.f32 %v2596, %v3798
      %v3967 = vadd.f32 %v2599, %v3801
      %v3968 = vadd.f32 %v2604, %v3806
      %v3969 = vadd.f32 %v2607, %v3809
      %v3970 = vadd.f32 %v2612, %v3814
      %v3971 = vadd.f32 %v2615, %v3817
      %v3972 = vadd.f32 %v2620, %v3822
      %v3973 = vadd.f32 %v2623, %v3825
      %v3974 = vadd.f32 %v2628, %v3830
      %v3975 = vadd.f32 %v2631, %v3833
      %v3976 = vadd.f32 %v2636, %v3838
      %v3977 = vadd.f32 %v2639, %v3841
      %v3978 = vadd.f32 %v2644, %v3846
      %v3979 = vadd.f32 %v2647, %v3849
      %v3980 = vld [vmem:[%s239 + $0x10] sm:$0xf]
      %v3981 = vld [vmem:[%s239 + $0x14] sm:$0xf]
      %v3982 = vld [vmem:[%s239 + $0x18] sm:$0xf]
      %v3983 = vld [vmem:[%s239 + $0x1c] sm:$0xf]
      %v3984 = vld [vmem:[%s239 + $0x20] sm:$0xf]
      %v3985 = vld [vmem:[%s239 + $0x24] sm:$0xf]
      %v3986 = vld [vmem:[%s239 + $0x28] sm:$0xf]
      %v3987 = vld [vmem:[%s239 + $0x2c] sm:$0xf]
      %v3988 = vld [vmem:[%s239 + $0x30] sm:$0xf]
      %v3989 = vld [vmem:[%s239 + $0x34] sm:$0xf]
      %v3990 = vld [vmem:[%s239 + $0x38] sm:$0xf]
      %v3991 = vld [vmem:[%s239 + $0x3c] sm:$0xf]
      %v3992 = vld [vmem:[%s239 + $0x40] sm:$0xf]
      %v3993 = vld [vmem:[%s239 + $0x44] sm:$0xf]
      %v3994 = vld [vmem:[%s239 + $0x48] sm:$0xf]
      %v3995 = vld [vmem:[%s239 + $0x4c] sm:$0xf]
      %v3996 = vld [vmem:[%s239 + $0x50] sm:$0xf]
      %v3997 = vld [vmem:[%s239 + $0x54] sm:$0xf]
      %v3998 = vld [vmem:[%s239 + $0x58] sm:$0xf]
      %v3999 = vld [vmem:[%s239 + $0x5c] sm:$0xf]
      %v4000 = vld [vmem:[%s239 + $0x60] sm:$0xf]
      %v4001 = vld [vmem:[%s239 + $0x64] sm:$0xf]
      %v4002 = vld [vmem:[%s239 + $0x68] sm:$0xf]
      %v4003 = vld [vmem:[%s239 + $0x6c] sm:$0xf]
      %v4004 = vld [vmem:[%s239 + $0x70] sm:$0xf]
      %v4005 = vld [vmem:[%s239 + $0x74] sm:$0xf]
      %v4006 = vld [vmem:[%s239 + $0x78] sm:$0xf]
      %v4007 = vld [vmem:[%s239 + $0x7c] sm:$0xf]
      %v4008 = vld [vmem:[%s239 + $0x80] sm:$0xf]
      %v4009 = vld [vmem:[%s239 + $0x84] sm:$0xf]
      %v4010 = vld [vmem:[%s239 + $0x88] sm:$0xf]
      %v4011 = vld [vmem:[%s239 + $0x8c] sm:$0xf]
      %v4012 = vld [vmem:[%s239 + $0x90] sm:$0xf]
      %v4013 = vld [vmem:[%s239 + $0x94] sm:$0xf]
      %v4014 = vld [vmem:[%s239 + $0x98] sm:$0xf]
      %v4015 = vld [vmem:[%s239 + $0x9c] sm:$0xf]
      %v4016 = vld [vmem:[%s239 + $0xa0] sm:$0xf]
      %v4017 = vld [vmem:[%s239 + $0xa4] sm:$0xf]
      %v4018 = vld [vmem:[%s239 + $0xa8] sm:$0xf]
      %v4019 = vld [vmem:[%s239 + $0xac] sm:$0xf]
      %v4020 = vld [vmem:[%s239 + $0xb0] sm:$0xf]
      %v4021 = vld [vmem:[%s239 + $0xb4] sm:$0xf]
      %v4022 = vld [vmem:[%s239 + $0xb8] sm:$0xf]
      %v4023 = vld [vmem:[%s239 + $0xbc] sm:$0xf]
      %v4024 = vld [vmem:[%s239 + $0xc0] sm:$0xf]
      %v4025 = vld [vmem:[%s239 + $0xc4] sm:$0xf]
      %v4026 = vld [vmem:[%s239 + $0xc8] sm:$0xf]
      %v4027 = vld [vmem:[%s239 + $0xcc] sm:$0xf]
      %v4028 = vld [vmem:[%s239 + $0xd0] sm:$0xf]
      %v4029 = vld [vmem:[%s239 + $0xd4] sm:$0xf]
      %v4030 = vld [vmem:[%s239 + $0xd8] sm:$0xf]
      %v4031 = vld [vmem:[%s239 + $0xdc] sm:$0xf]
      %v4032 = vld [vmem:[%s239 + $0xe0] sm:$0xf]
      %v4033 = vld [vmem:[%s239 + $0xe4] sm:$0xf]
      %v4034 = vld [vmem:[%s239 + $0xe8] sm:$0xf]
      %v4035 = vld [vmem:[%s239 + $0xec] sm:$0xf]
      %v4036 = vld [vmem:[%s239 + $0xf0] sm:$0xf]
      %v4037 = vld [vmem:[%s239 + $0xf4] sm:$0xf]
      %v4038 = vld [vmem:[%s239 + $0xf8] sm:$0xf]
      %v4039 = vld [vmem:[%s239 + $0xfc] sm:$0xf]
      %v4040 = vld [vmem:[%s239 + $0x100] sm:$0xf]
      %v4041 = vld [vmem:[%s239 + $0x104] sm:$0xf]
      %v4042 = vld [vmem:[%s239 + $0x108] sm:$0xf]
      %v4043 = vld [vmem:[%s239 + $0x10c] sm:$0xf]
      %v4044 = vld [vmem:[%s239 + $0x110] sm:$0xf]
      %v4045 = vld [vmem:[%s239 + $0x114] sm:$0xf]
      %v4046 = vld [vmem:[%s239 + $0x118] sm:$0xf]
      %v4047 = vld [vmem:[%s239 + $0x11c] sm:$0xf]
      %v4048 = vld [vmem:[%s239 + $0x120] sm:$0xf]
      %v4049 = vld [vmem:[%s239 + $0x124] sm:$0xf]
      %v4050 = vld [vmem:[%s239 + $0x128] sm:$0xf]
      %v4051 = vld [vmem:[%s239 + $0x12c] sm:$0xf]
      %v4052 = vld [vmem:[%s239 + $0x130] sm:$0xf]
      %v4053 = vld [vmem:[%s239 + $0x134] sm:$0xf]
      %v4054 = vld [vmem:[%s239 + $0x138] sm:$0xf]
      %v4055 = vld [vmem:[%s239 + $0x13c] sm:$0xf]
      %v4056 = vld [vmem:[%s239 + $0x140] sm:$0xf]
      %v4057 = vld [vmem:[%s239 + $0x144] sm:$0xf]
      %v4058 = vld [vmem:[%s239 + $0x148] sm:$0xf]
      %v4059 = vld [vmem:[%s239 + $0x14c] sm:$0xf]
      %v4060 = vld [vmem:[%s239 + $0x150] sm:$0xf]
      %v4061 = vld [vmem:[%s239 + $0x154] sm:$0xf]
      %v4062 = vld [vmem:[%s239 + $0x158] sm:$0xf]
      %v4063 = vld [vmem:[%s239 + $0x15c] sm:$0xf]
      %v4064 = vld [vmem:[%s239 + $0x160] sm:$0xf]
      %v4065 = vld [vmem:[%s239 + $0x164] sm:$0xf]
      %v4066 = vld [vmem:[%s239 + $0x168] sm:$0xf]
      %v4067 = vld [vmem:[%s239 + $0x16c] sm:$0xf]
      %v4068 = vld [vmem:[%s239 + $0x170] sm:$0xf]
      %v4069 = vld [vmem:[%s239 + $0x174] sm:$0xf]
      %v4070 = vld [vmem:[%s239 + $0x178] sm:$0xf]
      %v4071 = vld [vmem:[%s239 + $0x17c] sm:$0xf]
      %v4072 = vld [vmem:[%s239 + $0x180] sm:$0xf]
      %v4073 = vld [vmem:[%s239 + $0x184] sm:$0xf]
      %v4074 = vld [vmem:[%s239 + $0x188] sm:$0xf]
      %v4075 = vld [vmem:[%s239 + $0x18c] sm:$0xf]
      %v4076 = vld [vmem:[%s239 + $0x190] sm:$0xf]
      %v4077 = vld [vmem:[%s239 + $0x194] sm:$0xf]
      %v4078 = vld [vmem:[%s239 + $0x198] sm:$0xf]
      %v4079 = vld [vmem:[%s239 + $0x19c] sm:$0xf]
      %v4080 = vld [vmem:[%s239 + $0x1a0] sm:$0xf]
      %v4081 = vld [vmem:[%s239 + $0x1a4] sm:$0xf]
      %v4082 = vld [vmem:[%s239 + $0x1a8] sm:$0xf]
      %v4083 = vld [vmem:[%s239 + $0x1ac] sm:$0xf]
      %v4084 = vld [vmem:[%s239 + $0x1b0] sm:$0xf]
      %v4085 = vld [vmem:[%s239 + $0x1b4] sm:$0xf]
      %v4086 = vld [vmem:[%s239 + $0x1b8] sm:$0xf]
      %v4087 = vld [vmem:[%s239 + $0x1bc] sm:$0xf]
      %v4088 = vld [vmem:[%s239 + $0x1c0] sm:$0xf]
      %v4089 = vld [vmem:[%s239 + $0x1c4] sm:$0xf]
      %v4090 = vld [vmem:[%s239 + $0x1c8] sm:$0xf]
      %v4091 = vld [vmem:[%s239 + $0x1cc] sm:$0xf]
      %v4092 = vld [vmem:[%s239 + $0x1d0] sm:$0xf]
      %v4093 = vld [vmem:[%s239 + $0x1d4] sm:$0xf]
      %v4094 = vld [vmem:[%s239 + $0x1d8] sm:$0xf]
      %v4095 = vld [vmem:[%s239 + $0x1dc] sm:$0xf]
      %v4096 = vld [vmem:[%s239 + $0x1e0] sm:$0xf]
      %v4097 = vld [vmem:[%s239 + $0x1e4] sm:$0xf]
      %v4098 = vld [vmem:[%s239 + $0x1e8] sm:$0xf]
      %v4099 = vld [vmem:[%s239 + $0x1ec] sm:$0xf]
      %v4100 = vld [vmem:[%s239 + $0x1f0] sm:$0xf]
      %v4101 = vld [vmem:[%s239 + $0x1f4] sm:$0xf]
      %v4102 = vld [vmem:[%s239 + $0x1f8] sm:$0xf]
      %v4103 = vld [vmem:[%s239 + $0x1fc] sm:$0xf]
      %v4104 = vld [vmem:[%s239 + $0x200] sm:$0xf]
      %v4105 = vld [vmem:[%s239 + $0x204] sm:$0xf]
      %v4106 = vld [vmem:[%s239 + $0x208] sm:$0xf]
      %v4107 = vld [vmem:[%s239 + $0x20c] sm:$0xf]
      %s4108 = scalar_lea.vmem %s2, 48
      %v4109 = vld [vmem:[%s4108] sm:$0xf]
      %v4110 = vld [vmem:[%s4108 + $0x4] sm:$0xf]
      %v4111 = vld [vmem:[%s4108 + $0x8] sm:$0xf]
      %v4112 = vld [vmem:[%s4108 + $0xc] sm:$0xf]
      %v4241 = vunpack.c.l.b16 %v3980
      %v4242 = vunpack.c.l.b16 %v3981
      %v4243 = vunpack.c.l.b16 %v3982
      %v4244 = vunpack.c.l.b16 %v3983
      %v4245 = vunpack.c.l.b16 %v3984
      %v4246 = vunpack.c.l.b16 %v3985
      %v4247 = vunpack.c.l.b16 %v3986
      %v4248 = vunpack.c.l.b16 %v3987
      %v4249 = vunpack.c.l.b16 %v3988
      %v4250 = vunpack.c.l.b16 %v3989
      %v4251 = vunpack.c.l.b16 %v3990
      %v4252 = vunpack.c.l.b16 %v3991
      %v4253 = vunpack.c.l.b16 %v3992
      %v4254 = vunpack.c.l.b16 %v3993
      %v4255 = vunpack.c.l.b16 %v3994
      %v4256 = vunpack.c.l.b16 %v3995
      %v4257 = vunpack.c.l.b16 %v3996
      %v4258 = vunpack.c.l.b16 %v3997
      %v4259 = vunpack.c.l.b16 %v3998
      %v4260 = vunpack.c.l.b16 %v3999
      %v4261 = vunpack.c.l.b16 %v4000
      %v4262 = vunpack.c.l.b16 %v4001
      %v4263 = vunpack.c.l.b16 %v4002
      %v4264 = vunpack.c.l.b16 %v4003
      %v4265 = vunpack.c.l.b16 %v4004
      %v4266 = vunpack.c.l.b16 %v4005
      %v4267 = vunpack.c.l.b16 %v4006
      %v4268 = vunpack.c.l.b16 %v4007
      %v4269 = vunpack.c.l.b16 %v4008
      %v4270 = vunpack.c.l.b16 %v4009
      %v4271 = vunpack.c.l.b16 %v4010
      %v4272 = vunpack.c.l.b16 %v4011
      %v4273 = vunpack.c.l.b16 %v4012
      %v4274 = vunpack.c.l.b16 %v4013
      %v4275 = vunpack.c.l.b16 %v4014
      %v4276 = vunpack.c.l.b16 %v4015
      %v4277 = vunpack.c.l.b16 %v4016
      %v4278 = vunpack.c.l.b16 %v4017
      %v4279 = vunpack.c.l.b16 %v4018
      %v4280 = vunpack.c.l.b16 %v4019
      %v4281 = vunpack.c.l.b16 %v4020
      %v4282 = vunpack.c.l.b16 %v4021
      %v4283 = vunpack.c.l.b16 %v4022
      %v4284 = vunpack.c.l.b16 %v4023
      %v4285 = vunpack.c.l.b16 %v4024
      %v4286 = vunpack.c.l.b16 %v4025
      %v4287 = vunpack.c.l.b16 %v4026
      %v4288 = vunpack.c.l.b16 %v4027
      %v4289 = vunpack.c.l.b16 %v4028
      %v4290 = vunpack.c.l.b16 %v4029
      %v4291 = vunpack.c.l.b16 %v4030
      %v4292 = vunpack.c.l.b16 %v4031
      %v4293 = vunpack.c.l.b16 %v4032
      %v4294 = vunpack.c.l.b16 %v4033
      %v4295 = vunpack.c.l.b16 %v4034
      %v4296 = vunpack.c.l.b16 %v4035
      %v4297 = vunpack.c.l.b16 %v4036
      %v4298 = vunpack.c.l.b16 %v4037
      %v4299 = vunpack.c.l.b16 %v4038
      %v4300 = vunpack.c.l.b16 %v4039
      %v4301 = vunpack.c.l.b16 %v4040
      %v4302 = vunpack.c.l.b16 %v4041
      %v4303 = vunpack.c.l.b16 %v4042
      %v4304 = vunpack.c.l.b16 %v4043
      %v4305 = vunpack.c.l.b16 %v4044
      %v4306 = vunpack.c.l.b16 %v4045
      %v4307 = vunpack.c.l.b16 %v4046
      %v4308 = vunpack.c.l.b16 %v4047
      %v4309 = vunpack.c.l.b16 %v4048
      %v4310 = vunpack.c.l.b16 %v4049
      %v4311 = vunpack.c.l.b16 %v4050
      %v4312 = vunpack.c.l.b16 %v4051
      %v4313 = vunpack.c.l.b16 %v4052
      %v4314 = vunpack.c.l.b16 %v4053
      %v4315 = vunpack.c.l.b16 %v4054
      %v4316 = vunpack.c.l.b16 %v4055
      %v4317 = vunpack.c.l.b16 %v4056
      %v4318 = vunpack.c.l.b16 %v4057
      %v4319 = vunpack.c.l.b16 %v4058
      %v4320 = vunpack.c.l.b16 %v4059
      %v4321 = vunpack.c.l.b16 %v4060
      %v4322 = vunpack.c.l.b16 %v4061
      %v4323 = vunpack.c.l.b16 %v4062
      %v4324 = vunpack.c.l.b16 %v4063
      %v4325 = vunpack.c.l.b16 %v4064
      %v4326 = vunpack.c.l.b16 %v4065
      %v4327 = vunpack.c.l.b16 %v4066
      %v4328 = vunpack.c.l.b16 %v4067
      %v4329 = vunpack.c.l.b16 %v4068
      %v4330 = vunpack.c.l.b16 %v4069
      %v4331 = vunpack.c.l.b16 %v4070
      %v4332 = vunpack.c.l.b16 %v4071
      %v4333 = vunpack.c.l.b16 %v4072
      %v4334 = vunpack.c.l.b16 %v4073
      %v4335 = vunpack.c.l.b16 %v4074
      %v4336 = vunpack.c.l.b16 %v4075
      %v4337 = vunpack.c.l.b16 %v4076
      %v4338 = vunpack.c.l.b16 %v4077
      %v4339 = vunpack.c.l.b16 %v4078
      %v4340 = vunpack.c.l.b16 %v4079
      %v4341 = vunpack.c.l.b16 %v4080
      %v4342 = vunpack.c.l.b16 %v4081
      %v4343 = vunpack.c.l.b16 %v4082
      %v4344 = vunpack.c.l.b16 %v4083
      %v4345 = vunpack.c.l.b16 %v4084
      %v4346 = vunpack.c.l.b16 %v4085
      %v4347 = vunpack.c.l.b16 %v4086
      %v4348 = vunpack.c.l.b16 %v4087
      %v4349 = vunpack.c.l.b16 %v4088
      %v4350 = vunpack.c.l.b16 %v4089
      %v4351 = vunpack.c.l.b16 %v4090
      %v4352 = vunpack.c.l.b16 %v4091
      %v4353 = vunpack.c.l.b16 %v4092
      %v4354 = vunpack.c.l.b16 %v4093
      %v4355 = vunpack.c.l.b16 %v4094
      %v4356 = vunpack.c.l.b16 %v4095
      %v4357 = vunpack.c.l.b16 %v4096
      %v4358 = vunpack.c.l.b16 %v4097
      %v4359 = vunpack.c.l.b16 %v4098
      %v4360 = vunpack.c.l.b16 %v4099
      %v4361 = vunpack.c.l.b16 %v4100
      %v4362 = vunpack.c.l.b16 %v4101
      %v4363 = vunpack.c.l.b16 %v4102
      %v4364 = vunpack.c.l.b16 %v4103
      %v4365 = vunpack.c.l.b16 %v4104
      %v4366 = vunpack.c.l.b16 %v4105
      %v4367 = vunpack.c.l.b16 %v4106
      %v4368 = vunpack.c.l.b16 %v4107
      %v4369 = vpack.c.b16 %v4242, %v4241
      %v4370 = vpack.c.b16 %v4244, %v4243
      %v4371 = vpack.c.b16 %v4246, %v4245
      %v4372 = vpack.c.b16 %v4248, %v4247
      %v4373 = vpack.c.b16 %v4250, %v4249
      %v4374 = vpack.c.b16 %v4252, %v4251
      %v4375 = vpack.c.b16 %v4254, %v4253
      %v4376 = vpack.c.b16 %v4256, %v4255
      %v4377 = vpack.c.b16 %v4258, %v4257
      %v4378 = vpack.c.b16 %v4260, %v4259
      %v4379 = vpack.c.b16 %v4262, %v4261
      %v4380 = vpack.c.b16 %v4264, %v4263
      %v4381 = vpack.c.b16 %v4266, %v4265
      %v4382 = vpack.c.b16 %v4268, %v4267
      %v4383 = vpack.c.b16 %v4270, %v4269
      %v4384 = vpack.c.b16 %v4272, %v4271
      %v4385 = vpack.c.b16 %v4274, %v4273
      %v4386 = vpack.c.b16 %v4276, %v4275
      %v4387 = vpack.c.b16 %v4278, %v4277
      %v4388 = vpack.c.b16 %v4280, %v4279
      %v4389 = vpack.c.b16 %v4282, %v4281
      %v4390 = vpack.c.b16 %v4284, %v4283
      %v4391 = vpack.c.b16 %v4286, %v4285
      %v4392 = vpack.c.b16 %v4288, %v4287
      %v4393 = vpack.c.b16 %v4290, %v4289
      %v4394 = vpack.c.b16 %v4292, %v4291
      %v4395 = vpack.c.b16 %v4294, %v4293
      %v4396 = vpack.c.b16 %v4296, %v4295
      %v4397 = vpack.c.b16 %v4298, %v4297
      %v4398 = vpack.c.b16 %v4300, %v4299
      %v4399 = vpack.c.b16 %v4302, %v4301
      %v4400 = vpack.c.b16 %v4304, %v4303
      %v4401 = vpack.c.b16 %v4306, %v4305
      %v4402 = vpack.c.b16 %v4308, %v4307
      %v4403 = vpack.c.b16 %v4310, %v4309
      %v4404 = vpack.c.b16 %v4312, %v4311
      %v4405 = vpack.c.b16 %v4314, %v4313
      %v4406 = vpack.c.b16 %v4316, %v4315
      %v4407 = vpack.c.b16 %v4318, %v4317
      %v4408 = vpack.c.b16 %v4320, %v4319
      %v4409 = vpack.c.b16 %v4322, %v4321
      %v4410 = vpack.c.b16 %v4324, %v4323
      %v4411 = vpack.c.b16 %v4326, %v4325
      %v4412 = vpack.c.b16 %v4328, %v4327
      %v4413 = vpack.c.b16 %v4330, %v4329
      %v4414 = vpack.c.b16 %v4332, %v4331
      %v4415 = vpack.c.b16 %v4334, %v4333
      %v4416 = vpack.c.b16 %v4336, %v4335
      %v4417 = vpack.c.b16 %v4338, %v4337
      %v4418 = vpack.c.b16 %v4340, %v4339
      %v4419 = vpack.c.b16 %v4342, %v4341
      %v4420 = vpack.c.b16 %v4344, %v4343
      %v4421 = vpack.c.b16 %v4346, %v4345
      %v4422 = vpack.c.b16 %v4348, %v4347
      %v4423 = vpack.c.b16 %v4350, %v4349
      %v4424 = vpack.c.b16 %v4352, %v4351
      %v4425 = vpack.c.b16 %v4354, %v4353
      %v4426 = vpack.c.b16 %v4356, %v4355
      %v4427 = vpack.c.b16 %v4358, %v4357
      %v4428 = vpack.c.b16 %v4360, %v4359
      %v4429 = vpack.c.b16 %v4362, %v4361
      %v4430 = vpack.c.b16 %v4364, %v4363
      %v4431 = vpack.c.b16 %v4366, %v4365
      %v4432 = vpack.c.b16 %v4368, %v4367
      %v4437 = vunpack.c.l.b16 %v4109
      %v4438 = vunpack.c.l.b16 %v4110
      %v4439 = vunpack.c.l.b16 %v4111
      %v4440 = vunpack.c.l.b16 %v4112
      %v4441 = vpack.c.b16 %v4438, %v4437
      %v4442 = vpack.c.b16 %v4440, %v4439
      %v4446 = vsel %vm843, %v4369, 0
      %v4449 = vsel %vm843, %v4370, 0
      %v4452 = vsel %vm843, %v4371, 0
      %v4455 = vsel %vm843, %v4372, 0
      %v4458 = vsel %vm843, %v4373, 0
      %v4461 = vsel %vm843, %v4374, 0
      %v4464 = vsel %vm843, %v4375, 0
      %v4467 = vsel %vm843, %v4376, 0
      %v4470 = vsel %vm843, %v4377, 0
      %v4473 = vsel %vm843, %v4378, 0
      %v4476 = vsel %vm843, %v4379, 0
      %v4479 = vsel %vm843, %v4380, 0
      %v4482 = vsel %vm843, %v4381, 0
      %v4485 = vsel %vm843, %v4382, 0
      %v4488 = vsel %vm843, %v4383, 0
      %v4491 = vsel %vm843, %v4384, 0
      %v4494 = vsel %vm843, %v4385, 0
      %v4497 = vsel %vm843, %v4386, 0
      %v4500 = vsel %vm843, %v4387, 0
      %v4503 = vsel %vm843, %v4388, 0
      %v4506 = vsel %vm843, %v4389, 0
      %v4509 = vsel %vm843, %v4390, 0
      %v4512 = vsel %vm843, %v4391, 0
      %v4515 = vsel %vm843, %v4392, 0
      %v4518 = vsel %vm843, %v4393, 0
      %v4521 = vsel %vm843, %v4394, 0
      %v4524 = vsel %vm843, %v4395, 0
      %v4527 = vsel %vm843, %v4396, 0
      %v4530 = vsel %vm843, %v4397, 0
      %v4533 = vsel %vm843, %v4398, 0
      %v4536 = vsel %vm843, %v4399, 0
      %v4539 = vsel %vm843, %v4400, 0
      %v4542 = vsel %vm843, %v4401, 0
      %v4545 = vsel %vm843, %v4402, 0
      %v4548 = vsel %vm843, %v4403, 0
      %v4551 = vsel %vm843, %v4404, 0
      %v4554 = vsel %vm843, %v4405, 0
      %v4557 = vsel %vm843, %v4406, 0
      %v4560 = vsel %vm843, %v4407, 0
      %v4563 = vsel %vm843, %v4408, 0
      %v4566 = vsel %vm843, %v4409, 0
      %v4569 = vsel %vm843, %v4410, 0
      %v4572 = vsel %vm843, %v4411, 0
      %v4575 = vsel %vm843, %v4412, 0
      %v4578 = vsel %vm843, %v4413, 0
      %v4581 = vsel %vm843, %v4414, 0
      %v4584 = vsel %vm843, %v4415, 0
      %v4587 = vsel %vm843, %v4416, 0
      %v4590 = vsel %vm843, %v4417, 0
      %v4593 = vsel %vm843, %v4418, 0
      %v4596 = vsel %vm843, %v4419, 0
      %v4599 = vsel %vm843, %v4420, 0
      %v4602 = vsel %vm843, %v4421, 0
      %v4605 = vsel %vm843, %v4422, 0
      %v4608 = vsel %vm843, %v4423, 0
      %v4611 = vsel %vm843, %v4424, 0
      %v4614 = vsel %vm843, %v4425, 0
      %v4617 = vsel %vm843, %v4426, 0
      %v4620 = vsel %vm843, %v4427, 0
      %v4623 = vsel %vm843, %v4428, 0
      %v4626 = vsel %vm843, %v4429, 0
      %v4629 = vsel %vm843, %v4430, 0
      %v4632 = vsel %vm843, %v4431, 0
      %v4635 = vsel %vm843, %v4432, 0
      %4637 = vmatprep.subr.bf16.mxu0 0
      %4638 = vmatpush1.bf16.msra.mxu0 %v4441
      %4639 = vmatprep.subr.bf16.mxu0 0
      %4640 = vmatpush1.bf16.msra.mxu0 %v4442
      %4641 = vmatprep.subr.bf16.mxu0 0
      %4642 = vmatpush1.bf16.msra.mxu0 0
      %4643 = vmatprep.subr.bf16.mxu0 0
      %4644 = vmatpush1.bf16.msra.mxu0 0
      %4645 = vmatprep.subr.bf16.mxu0 0
      %4646 = vmatpush1.bf16.msra.mxu0 0
      %4647 = vmatprep.subr.bf16.mxu0 0
      %4648 = vmatpush1.bf16.msra.mxu0 0
      %4649 = vmatprep.subr.bf16.mxu0 0
      %4650 = vmatpush1.bf16.msra.mxu0 0
      %4651 = vmatprep.subr.bf16.mxu0 0
      %4652 = vmatpush1.bf16.msra.mxu0 0
      %4653 = vmatprep.subr.bf16.mxu0 0
      %4654 = vmatpush1.bf16.msra.mxu0 0
      %4655 = vmatprep.subr.bf16.mxu0 0
      %4656 = vmatpush1.bf16.msra.mxu0 0
      %4657 = vmatprep.subr.bf16.mxu0 0
      %4658 = vmatpush1.bf16.msra.mxu0 0
      %4659 = vmatprep.subr.bf16.mxu0 0
      %4660 = vmatpush1.bf16.msra.mxu0 0
      %4661 = vmatprep.subr.bf16.mxu0 0
      %4662 = vmatpush1.bf16.msra.mxu0 0
      %4663 = vmatprep.subr.bf16.mxu0 0
      %4664 = vmatpush1.bf16.msra.mxu0 0
      %4665 = vmatprep.subr.bf16.mxu0 0
      %4666 = vmatpush1.bf16.msra.mxu0 0
      %4667 = vmatprep.subr.bf16.mxu0 0
      %4668 = vmatpush1.bf16.msra.mxu0 0
      %4669 = vmatprep.mubr.bf16.mxu0 0
      %4670 = vmatmul.mubr.bf16.gmra.mrb[0].mxu0 %v4446
      %v4671 = vpop.f32.mrb[0].mxu0
      %v4672 = vadd.f32 0.0, %v4671
      %v4673 = vpop.f32.mrb[0].mxu0
      %v4674 = vpop.f32.mrb[0].mxu0
      %v4675 = vadd.f32 0.0, %v4674
      %v4676 = vpop.f32.mrb[0].mxu0
      %4677 = vmatprep.mubr.bf16.mxu0 0
      %4678 = vmatmul.mubr.bf16.gmra.mrb[0].mxu0 %v4449
      %v4679 = vpop.f32.mrb[0].mxu0
      %v4680 = vadd.f32 0.0, %v4679
      %v4681 = vpop.f32.mrb[0].mxu0
      %v4682 = vpop.f32.mrb[0].mxu0
      %v4683 = vadd.f32 0.0, %v4682
      %v4684 = vpop.f32.mrb[0].mxu0
      %4685 = vmatprep.mubr.bf16.mxu0 0
      %4686 = vmatmul.mubr.bf16.gmra.mrb[0].mxu0 %v4452
      %v4687 = vpop.f32.mrb[0].mxu0
      %v4688 = vadd.f32 0.0, %v4687
      %v4689 = vpop.f32.mrb[0].mxu0
      %v4690 = vpop.f32.mrb[0].mxu0
      %v4691 = vadd.f32 0.0, %v4690
      %v4692 = vpop.f32.mrb[0].mxu0
      %4693 = vmatprep.mubr.bf16.mxu0 0
      %4694 = vmatmul.mubr.bf16.gmra.mrb[0].mxu0 %v4455
      %v4695 = vpop.f32.mrb[0].mxu0
      %v4696 = vadd.f32 0.0, %v4695
      %v4697 = vpop.f32.mrb[0].mxu0
      %v4698 = vpop.f32.mrb[0].mxu0
      %v4699 = vadd.f32 0.0, %v4698
      %v4700 = vpop.f32.mrb[0].mxu0
      %4701 = vmatprep.mubr.bf16.mxu0 0
      %4702 = vmatmul.mubr.bf16.gmra.mrb[0].mxu0 %v4458
      %v4703 = vpop.f32.mrb[0].mxu0
      %v4704 = vadd.f32 0.0, %v4703
      %v4705 = vpop.f32.mrb[0].mxu0
      %v4706 = vpop.f32.mrb[0].mxu0
      %v4707 = vadd.f32 0.0, %v4706
      %v4708 = vpop.f32.mrb[0].mxu0
      %4709 = vmatprep.mubr.bf16.mxu0 0
      %4710 = vmatmul.mubr.bf16.gmra.mrb[0].mxu0 %v4461
      %v4711 = vpop.f32.mrb[0].mxu0
      %v4712 = vadd.f32 0.0, %v4711
      %v4713 = vpop.f32.mrb[0].mxu0
      %v4714 = vpop.f32.mrb[0].mxu0
      %v4715 = vadd.f32 0.0, %v4714
      %v4716 = vpop.f32.mrb[0].mxu0
      %4717 = vmatprep.mubr.bf16.mxu0 0
      %4718 = vmatmul.mubr.bf16.gmra.mrb[0].mxu0 %v4464
      %v4719 = vpop.f32.mrb[0].mxu0
      %v4720 = vadd.f32 0.0, %v4719
      %v4721 = vpop.f32.mrb[0].mxu0
      %v4722 = vpop.f32.mrb[0].mxu0
      %v4723 = vadd.f32 0.0, %v4722
      %v4724 = vpop.f32.mrb[0].mxu0
      %4725 = vmatprep.mubr.bf16.mxu0 0
      %4726 = vmatmul.mubr.bf16.gmra.mrb[0].mxu0 %v4467
      %v4727 = vpop.f32.mrb[0].mxu0
      %v4728 = vadd.f32 0.0, %v4727
      %v4729 = vpop.f32.mrb[0].mxu0
      %v4730 = vpop.f32.mrb[0].mxu0
      %v4731 = vadd.f32 0.0, %v4730
      %v4732 = vpop.f32.mrb[0].mxu0
      %4733 = vmatprep.mubr.bf16.mxu0 0
      %4734 = vmatmul.mubr.bf16.gmra.mrb[0].mxu0 %v4470
      %v4735 = vpop.f32.mrb[0].mxu0
      %v4736 = vadd.f32 0.0, %v4735
      %v4737 = vpop.f32.mrb[0].mxu0
      %v4738 = vpop.f32.mrb[0].mxu0
      %v4739 = vadd.f32 0.0, %v4738
      %v4740 = vpop.f32.mrb[0].mxu0
      %4741 = vmatprep.mubr.bf16.mxu0 0
      %4742 = vmatmul.mubr.bf16.gmra.mrb[0].mxu0 %v4473
      %v4743 = vpop.f32.mrb[0].mxu0
      %v4744 = vadd.f32 0.0, %v4743
      %v4745 = vpop.f32.mrb[0].mxu0
      %v4746 = vpop.f32.mrb[0].mxu0
      %v4747 = vadd.f32 0.0, %v4746
      %v4748 = vpop.f32.mrb[0].mxu0
      %4749 = vmatprep.mubr.bf16.mxu0 0
      %4750 = vmatmul.mubr.bf16.gmra.mrb[0].mxu0 %v4476
      %v4751 = vpop.f32.mrb[0].mxu0
      %v4752 = vadd.f32 0.0, %v4751
      %v4753 = vpop.f32.mrb[0].mxu0
      %v4754 = vpop.f32.mrb[0].mxu0
      %v4755 = vadd.f32 0.0, %v4754
      %v4756 = vpop.f32.mrb[0].mxu0
      %4757 = vmatprep.mubr.bf16.mxu0 0
      %4758 = vmatmul.mubr.bf16.gmra.mrb[0].mxu0 %v4479
      %v4759 = vpop.f32.mrb[0].mxu0
      %v4760 = vadd.f32 0.0, %v4759
      %v4761 = vpop.f32.mrb[0].mxu0
      %v4762 = vpop.f32.mrb[0].mxu0
      %v4763 = vadd.f32 0.0, %v4762
      %v4764 = vpop.f32.mrb[0].mxu0
      %4765 = vmatprep.mubr.bf16.mxu0 0
      %4766 = vmatmul.mubr.bf16.gmra.mrb[0].mxu0 %v4482
      %v4767 = vpop.f32.mrb[0].mxu0
      %v4768 = vadd.f32 0.0, %v4767
      %v4769 = vpop.f32.mrb[0].mxu0
      %v4770 = vpop.f32.mrb[0].mxu0
      %v4771 = vadd.f32 0.0, %v4770
      %v4772 = vpop.f32.mrb[0].mxu0
      %4773 = vmatprep.mubr.bf16.mxu0 0
      %4774 = vmatmul.mubr.bf16.gmra.mrb[0].mxu0 %v4485
      %v4775 = vpop.f32.mrb[0].mxu0
      %v4776 = vadd.f32 0.0, %v4775
      %v4777 = vpop.f32.mrb[0].mxu0
      %v4778 = vpop.f32.mrb[0].mxu0
      %v4779 = vadd.f32 0.0, %v4778
      %v4780 = vpop.f32.mrb[0].mxu0
      %4781 = vmatprep.mubr.bf16.mxu0 0
      %4782 = vmatmul.mubr.bf16.gmra.mrb[0].mxu0 %v4488
      %v4783 = vpop.f32.mrb[0].mxu0
      %v4784 = vadd.f32 0.0, %v4783
      %v4785 = vpop.f32.mrb[0].mxu0
      %v4786 = vpop.f32.mrb[0].mxu0
      %v4787 = vadd.f32 0.0, %v4786
      %v4788 = vpop.f32.mrb[0].mxu0
      %4789 = vmatprep.mubr.bf16.mxu0 0
      %4790 = vmatmul.mubr.bf16.gmra.mrb[0].mxu0 %v4491
      %v4791 = vpop.f32.mrb[0].mxu0
      %v4792 = vadd.f32 0.0, %v4791
      %v4793 = vpop.f32.mrb[0].mxu0
      %v4794 = vpop.f32.mrb[0].mxu0
      %v4795 = vadd.f32 0.0, %v4794
      %v4796 = vpop.f32.mrb[0].mxu0
      %4797 = vmatprep.mubr.bf16.mxu0 0
      %4798 = vmatmul.mubr.bf16.gmra.mrb[0].mxu0 %v4494
      %v4799 = vpop.f32.mrb[0].mxu0
      %v4800 = vadd.f32 0.0, %v4799
      %v4801 = vpop.f32.mrb[0].mxu0
      %v4802 = vpop.f32.mrb[0].mxu0
      %v4803 = vadd.f32 0.0, %v4802
      %v4804 = vpop.f32.mrb[0].mxu0
      %4805 = vmatprep.mubr.bf16.mxu0 0
      %4806 = vmatmul.mubr.bf16.gmra.mrb[0].mxu0 %v4497
      %v4807 = vpop.f32.mrb[0].mxu0
      %v4808 = vadd.f32 0.0, %v4807
      %v4809 = vpop.f32.mrb[0].mxu0
      %v4810 = vpop.f32.mrb[0].mxu0
      %v4811 = vadd.f32 0.0, %v4810
      %v4812 = vpop.f32.mrb[0].mxu0
      %4813 = vmatprep.mubr.bf16.mxu0 0
      %4814 = vmatmul.mubr.bf16.gmra.mrb[0].mxu0 %v4500
      %v4815 = vpop.f32.mrb[0].mxu0
      %v4816 = vadd.f32 0.0, %v4815
      %v4817 = vpop.f32.mrb[0].mxu0
      %v4818 = vpop.f32.mrb[0].mxu0
      %v4819 = vadd.f32 0.0, %v4818
      %v4820 = vpop.f32.mrb[0].mxu0
      %4821 = vmatprep.mubr.bf16.mxu0 0
      %4822 = vmatmul.mubr.bf16.gmra.mrb[0].mxu0 %v4503
      %v4823 = vpop.f32.mrb[0].mxu0
      %v4824 = vadd.f32 0.0, %v4823
      %v4825 = vpop.f32.mrb[0].mxu0
      %v4826 = vpop.f32.mrb[0].mxu0
      %v4827 = vadd.f32 0.0, %v4826
      %v4828 = vpop.f32.mrb[0].mxu0
      %4829 = vmatprep.mubr.bf16.mxu0 0
      %4830 = vmatmul.mubr.bf16.gmra.mrb[0].mxu0 %v4506
      %v4831 = vpop.f32.mrb[0].mxu0
      %v4832 = vadd.f32 0.0, %v4831
      %v4833 = vpop.f32.mrb[0].mxu0
      %v4834 = vpop.f32.mrb[0].mxu0
      %v4835 = vadd.f32 0.0, %v4834
      %v4836 = vpop.f32.mrb[0].mxu0
      %4837 = vmatprep.mubr.bf16.mxu0 0
      %4838 = vmatmul.mubr.bf16.gmra.mrb[0].mxu0 %v4509
      %v4839 = vpop.f32.mrb[0].mxu0
      %v4840 = vadd.f32 0.0, %v4839
      %v4841 = vpop.f32.mrb[0].mxu0
      %v4842 = vpop.f32.mrb[0].mxu0
      %v4843 = vadd.f32 0.0, %v4842
      %v4844 = vpop.f32.mrb[0].mxu0
      %4845 = vmatprep.mubr.bf16.mxu0 0
      %4846 = vmatmul.mubr.bf16.gmra.mrb[0].mxu0 %v4512
      %v4847 = vpop.f32.mrb[0].mxu0
      %v4848 = vadd.f32 0.0, %v4847
      %v4849 = vpop.f32.mrb[0].mxu0
      %v4850 = vpop.f32.mrb[0].mxu0
      %v4851 = vadd.f32 0.0, %v4850
      %v4852 = vpop.f32.mrb[0].mxu0
      %4853 = vmatprep.mubr.bf16.mxu0 0
      %4854 = vmatmul.mubr.bf16.gmra.mrb[0].mxu0 %v4515
      %v4855 = vpop.f32.mrb[0].mxu0
      %v4856 = vadd.f32 0.0, %v4855
      %v4857 = vpop.f32.mrb[0].mxu0
      %v4858 = vpop.f32.mrb[0].mxu0
      %v4859 = vadd.f32 0.0, %v4858
      %v4860 = vpop.f32.mrb[0].mxu0
      %4861 = vmatprep.mubr.bf16.mxu0 0
      %4862 = vmatmul.mubr.bf16.gmra.mrb[0].mxu0 %v4518
      %v4863 = vpop.f32.mrb[0].mxu0
      %v4864 = vadd.f32 0.0, %v4863
      %v4865 = vpop.f32.mrb[0].mxu0
      %v4866 = vpop.f32.mrb[0].mxu0
      %v4867 = vadd.f32 0.0, %v4866
      %v4868 = vpop.f32.mrb[0].mxu0
      %4869 = vmatprep.mubr.bf16.mxu0 0
      %4870 = vmatmul.mubr.bf16.gmra.mrb[0].mxu0 %v4521
      %v4871 = vpop.f32.mrb[0].mxu0
      %v4872 = vadd.f32 0.0, %v4871
      %v4873 = vpop.f32.mrb[0].mxu0
      %v4874 = vpop.f32.mrb[0].mxu0
      %v4875 = vadd.f32 0.0, %v4874
      %v4876 = vpop.f32.mrb[0].mxu0
      %4877 = vmatprep.mubr.bf16.mxu0 0
      %4878 = vmatmul.mubr.bf16.gmra.mrb[0].mxu0 %v4524
      %v4879 = vpop.f32.mrb[0].mxu0
      %v4880 = vadd.f32 0.0, %v4879
      %v4881 = vpop.f32.mrb[0].mxu0
      %v4882 = vpop.f32.mrb[0].mxu0
      %v4883 = vadd.f32 0.0, %v4882
      %v4884 = vpop.f32.mrb[0].mxu0
      %4885 = vmatprep.mubr.bf16.mxu0 0
      %4886 = vmatmul.mubr.bf16.gmra.mrb[0].mxu0 %v4527
      %v4887 = vpop.f32.mrb[0].mxu0
      %v4888 = vadd.f32 0.0, %v4887
      %v4889 = vpop.f32.mrb[0].mxu0
      %v4890 = vpop.f32.mrb[0].mxu0
      %v4891 = vadd.f32 0.0, %v4890
      %v4892 = vpop.f32.mrb[0].mxu0
      %4893 = vmatprep.mubr.bf16.mxu0 0
      %4894 = vmatmul.mubr.bf16.gmra.mrb[0].mxu0 %v4530
      %v4895 = vpop.f32.mrb[0].mxu0
      %v4896 = vadd.f32 0.0, %v4895
      %v4897 = vpop.f32.mrb[0].mxu0
      %v4898 = vpop.f32.mrb[0].mxu0
      %v4899 = vadd.f32 0.0, %v4898
      %v4900 = vpop.f32.mrb[0].mxu0
      %4901 = vmatprep.mubr.bf16.mxu0 0
      %4902 = vmatmul.mubr.bf16.gmra.mrb[0].mxu0 %v4533
      %v4903 = vpop.f32.mrb[0].mxu0
      %v4904 = vadd.f32 0.0, %v4903
      %v4905 = vpop.f32.mrb[0].mxu0
      %v4906 = vpop.f32.mrb[0].mxu0
      %v4907 = vadd.f32 0.0, %v4906
      %v4908 = vpop.f32.mrb[0].mxu0
      %4909 = vmatprep.mubr.bf16.mxu0 0
      %4910 = vmatmul.mubr.bf16.gmra.mrb[0].mxu0 %v4536
      %v4911 = vpop.f32.mrb[0].mxu0
      %v4912 = vadd.f32 0.0, %v4911
      %v4913 = vpop.f32.mrb[0].mxu0
      %v4914 = vpop.f32.mrb[0].mxu0
      %v4915 = vadd.f32 0.0, %v4914
      %v4916 = vpop.f32.mrb[0].mxu0
      %4917 = vmatprep.mubr.bf16.mxu0 0
      %4918 = vmatmul.mubr.bf16.gmra.mrb[0].mxu0 %v4539
      %v4919 = vpop.f32.mrb[0].mxu0
      %v4920 = vadd.f32 0.0, %v4919
      %v4921 = vpop.f32.mrb[0].mxu0
      %v4922 = vpop.f32.mrb[0].mxu0
      %v4923 = vadd.f32 0.0, %v4922
      %v4924 = vpop.f32.mrb[0].mxu0
      %4925 = vmatprep.mubr.bf16.mxu0 0
      %4926 = vmatmul.mubr.bf16.gmra.mrb[0].mxu0 %v4542
      %v4927 = vpop.f32.mrb[0].mxu0
      %v4928 = vadd.f32 0.0, %v4927
      %v4929 = vpop.f32.mrb[0].mxu0
      %v4930 = vpop.f32.mrb[0].mxu0
      %v4931 = vadd.f32 0.0, %v4930
      %v4932 = vpop.f32.mrb[0].mxu0
      %4933 = vmatprep.mubr.bf16.mxu0 0
      %4934 = vmatmul.mubr.bf16.gmra.mrb[0].mxu0 %v4545
      %v4935 = vpop.f32.mrb[0].mxu0
      %v4936 = vadd.f32 0.0, %v4935
      %v4937 = vpop.f32.mrb[0].mxu0
      %v4938 = vpop.f32.mrb[0].mxu0
      %v4939 = vadd.f32 0.0, %v4938
      %v4940 = vpop.f32.mrb[0].mxu0
      %4941 = vmatprep.mubr.bf16.mxu0 0
      %4942 = vmatmul.mubr.bf16.gmra.mrb[0].mxu0 %v4548
      %v4943 = vpop.f32.mrb[0].mxu0
      %v4944 = vadd.f32 0.0, %v4943
      %v4945 = vpop.f32.mrb[0].mxu0
      %v4946 = vpop.f32.mrb[0].mxu0
      %v4947 = vadd.f32 0.0, %v4946
      %v4948 = vpop.f32.mrb[0].mxu0
      %4949 = vmatprep.mubr.bf16.mxu0 0
      %4950 = vmatmul.mubr.bf16.gmra.mrb[0].mxu0 %v4551
      %v4951 = vpop.f32.mrb[0].mxu0
      %v4952 = vadd.f32 0.0, %v4951
      %v4953 = vpop.f32.mrb[0].mxu0
      %v4954 = vpop.f32.mrb[0].mxu0
      %v4955 = vadd.f32 0.0, %v4954
      %v4956 = vpop.f32.mrb[0].mxu0
      %4957 = vmatprep.mubr.bf16.mxu0 0
      %4958 = vmatmul.mubr.bf16.gmra.mrb[0].mxu0 %v4554
      %v4959 = vpop.f32.mrb[0].mxu0
      %v4960 = vadd.f32 0.0, %v4959
      %v4961 = vpop.f32.mrb[0].mxu0
      %v4962 = vpop.f32.mrb[0].mxu0
      %v4963 = vadd.f32 0.0, %v4962
      %v4964 = vpop.f32.mrb[0].mxu0
      %4965 = vmatprep.mubr.bf16.mxu0 0
      %4966 = vmatmul.mubr.bf16.gmra.mrb[0].mxu0 %v4557
      %v4967 = vpop.f32.mrb[0].mxu0
      %v4968 = vadd.f32 0.0, %v4967
      %v4969 = vpop.f32.mrb[0].mxu0
      %v4970 = vpop.f32.mrb[0].mxu0
      %v4971 = vadd.f32 0.0, %v4970
      %v4972 = vpop.f32.mrb[0].mxu0
      %4973 = vmatprep.mubr.bf16.mxu0 0
      %4974 = vmatmul.mubr.bf16.gmra.mrb[0].mxu0 %v4560
      %v4975 = vpop.f32.mrb[0].mxu0
      %v4976 = vadd.f32 0.0, %v4975
      %v4977 = vpop.f32.mrb[0].mxu0
      %v4978 = vpop.f32.mrb[0].mxu0
      %v4979 = vadd.f32 0.0, %v4978
      %v4980 = vpop.f32.mrb[0].mxu0
      %4981 = vmatprep.mubr.bf16.mxu0 0
      %4982 = vmatmul.mubr.bf16.gmra.mrb[0].mxu0 %v4563
      %v4983 = vpop.f32.mrb[0].mxu0
      %v4984 = vadd.f32 0.0, %v4983
      %v4985 = vpop.f32.mrb[0].mxu0
      %v4986 = vpop.f32.mrb[0].mxu0
      %v4987 = vadd.f32 0.0, %v4986
      %v4988 = vpop.f32.mrb[0].mxu0
      %4989 = vmatprep.mubr.bf16.mxu0 0
      %4990 = vmatmul.mubr.bf16.gmra.mrb[0].mxu0 %v4566
      %v4991 = vpop.f32.mrb[0].mxu0
      %v4992 = vadd.f32 0.0, %v4991
      %v4993 = vpop.f32.mrb[0].mxu0
      %v4994 = vpop.f32.mrb[0].mxu0
      %v4995 = vadd.f32 0.0, %v4994
      %v4996 = vpop.f32.mrb[0].mxu0
      %4997 = vmatprep.mubr.bf16.mxu0 0
      %4998 = vmatmul.mubr.bf16.gmra.mrb[0].mxu0 %v4569
      %v4999 = vpop.f32.mrb[0].mxu0
      %v5000 = vadd.f32 0.0, %v4999
      %v5001 = vpop.f32.mrb[0].mxu0
      %v5002 = vpop.f32.mrb[0].mxu0
      %v5003 = vadd.f32 0.0, %v5002
      %v5004 = vpop.f32.mrb[0].mxu0
      %5005 = vmatprep.mubr.bf16.mxu0 0
      %5006 = vmatmul.mubr.bf16.gmra.mrb[0].mxu0 %v4572
      %v5007 = vpop.f32.mrb[0].mxu0
      %v5008 = vadd.f32 0.0, %v5007
      %v5009 = vpop.f32.mrb[0].mxu0
      %v5010 = vpop.f32.mrb[0].mxu0
      %v5011 = vadd.f32 0.0, %v5010
      %v5012 = vpop.f32.mrb[0].mxu0
      %5013 = vmatprep.mubr.bf16.mxu0 0
      %5014 = vmatmul.mubr.bf16.gmra.mrb[0].mxu0 %v4575
      %v5015 = vpop.f32.mrb[0].mxu0
      %v5016 = vadd.f32 0.0, %v5015
      %v5017 = vpop.f32.mrb[0].mxu0
      %v5018 = vpop.f32.mrb[0].mxu0
      %v5019 = vadd.f32 0.0, %v5018
      %v5020 = vpop.f32.mrb[0].mxu0
      %5021 = vmatprep.mubr.bf16.mxu0 0
      %5022 = vmatmul.mubr.bf16.gmra.mrb[0].mxu0 %v4578
      %v5023 = vpop.f32.mrb[0].mxu0
      %v5024 = vadd.f32 0.0, %v5023
      %v5025 = vpop.f32.mrb[0].mxu0
      %v5026 = vpop.f32.mrb[0].mxu0
      %v5027 = vadd.f32 0.0, %v5026
      %v5028 = vpop.f32.mrb[0].mxu0
      %5029 = vmatprep.mubr.bf16.mxu0 0
      %5030 = vmatmul.mubr.bf16.gmra.mrb[0].mxu0 %v4581
      %v5031 = vpop.f32.mrb[0].mxu0
      %v5032 = vadd.f32 0.0, %v5031
      %v5033 = vpop.f32.mrb[0].mxu0
      %v5034 = vpop.f32.mrb[0].mxu0
      %v5035 = vadd.f32 0.0, %v5034
      %v5036 = vpop.f32.mrb[0].mxu0
      %5037 = vmatprep.mubr.bf16.mxu0 0
      %5038 = vmatmul.mubr.bf16.gmra.mrb[0].mxu0 %v4584
      %v5039 = vpop.f32.mrb[0].mxu0
      %v5040 = vadd.f32 0.0, %v5039
      %v5041 = vpop.f32.mrb[0].mxu0
      %v5042 = vpop.f32.mrb[0].mxu0
      %v5043 = vadd.f32 0.0, %v5042
      %v5044 = vpop.f32.mrb[0].mxu0
      %5045 = vmatprep.mubr.bf16.mxu0 0
      %5046 = vmatmul.mubr.bf16.gmra.mrb[0].mxu0 %v4587
      %v5047 = vpop.f32.mrb[0].mxu0
      %v5048 = vadd.f32 0.0, %v5047
      %v5049 = vpop.f32.mrb[0].mxu0
      %v5050 = vpop.f32.mrb[0].mxu0
      %v5051 = vadd.f32 0.0, %v5050
      %v5052 = vpop.f32.mrb[0].mxu0
      %5053 = vmatprep.mubr.bf16.mxu0 0
      %5054 = vmatmul.mubr.bf16.gmra.mrb[0].mxu0 %v4590
      %v5055 = vpop.f32.mrb[0].mxu0
      %v5056 = vadd.f32 0.0, %v5055
      %v5057 = vpop.f32.mrb[0].mxu0
      %v5058 = vpop.f32.mrb[0].mxu0
      %v5059 = vadd.f32 0.0, %v5058
      %v5060 = vpop.f32.mrb[0].mxu0
      %5061 = vmatprep.mubr.bf16.mxu0 0
      %5062 = vmatmul.mubr.bf16.gmra.mrb[0].mxu0 %v4593
      %v5063 = vpop.f32.mrb[0].mxu0
      %v5064 = vadd.f32 0.0, %v5063
      %v5065 = vpop.f32.mrb[0].mxu0
      %v5066 = vpop.f32.mrb[0].mxu0
      %v5067 = vadd.f32 0.0, %v5066
      %v5068 = vpop.f32.mrb[0].mxu0
      %5069 = vmatprep.mubr.bf16.mxu0 0
      %5070 = vmatmul.mubr.bf16.gmra.mrb[0].mxu0 %v4596
      %v5071 = vpop.f32.mrb[0].mxu0
      %v5072 = vadd.f32 0.0, %v5071
      %v5073 = vpop.f32.mrb[0].mxu0
      %v5074 = vpop.f32.mrb[0].mxu0
      %v5075 = vadd.f32 0.0, %v5074
      %v5076 = vpop.f32.mrb[0].mxu0
      %5077 = vmatprep.mubr.bf16.mxu0 0
      %5078 = vmatmul.mubr.bf16.gmra.mrb[0].mxu0 %v4599
      %v5079 = vpop.f32.mrb[0].mxu0
      %v5080 = vadd.f32 0.0, %v5079
      %v5081 = vpop.f32.mrb[0].mxu0
      %v5082 = vpop.f32.mrb[0].mxu0
      %v5083 = vadd.f32 0.0, %v5082
      %v5084 = vpop.f32.mrb[0].mxu0
      %5085 = vmatprep.mubr.bf16.mxu0 0
      %5086 = vmatmul.mubr.bf16.gmra.mrb[0].mxu0 %v4602
      %v5087 = vpop.f32.mrb[0].mxu0
      %v5088 = vadd.f32 0.0, %v5087
      %v5089 = vpop.f32.mrb[0].mxu0
      %v5090 = vpop.f32.mrb[0].mxu0
      %v5091 = vadd.f32 0.0, %v5090
      %v5092 = vpop.f32.mrb[0].mxu0
      %5093 = vmatprep.mubr.bf16.mxu0 0
      %5094 = vmatmul.mubr.bf16.gmra.mrb[0].mxu0 %v4605
      %v5095 = vpop.f32.mrb[0].mxu0
      %v5096 = vadd.f32 0.0, %v5095
      %v5097 = vpop.f32.mrb[0].mxu0
      %v5098 = vpop.f32.mrb[0].mxu0
      %v5099 = vadd.f32 0.0, %v5098
      %v5100 = vpop.f32.mrb[0].mxu0
      %5101 = vmatprep.mubr.bf16.mxu0 0
      %5102 = vmatmul.mubr.bf16.gmra.mrb[0].mxu0 %v4608
      %v5103 = vpop.f32.mrb[0].mxu0
      %v5104 = vadd.f32 0.0, %v5103
      %v5105 = vpop.f32.mrb[0].mxu0
      %v5106 = vpop.f32.mrb[0].mxu0
      %v5107 = vadd.f32 0.0, %v5106
      %v5108 = vpop.f32.mrb[0].mxu0
      %5109 = vmatprep.mubr.bf16.mxu0 0
      %5110 = vmatmul.mubr.bf16.gmra.mrb[0].mxu0 %v4611
      %v5111 = vpop.f32.mrb[0].mxu0
      %v5112 = vadd.f32 0.0, %v5111
      %v5113 = vpop.f32.mrb[0].mxu0
      %v5114 = vpop.f32.mrb[0].mxu0
      %v5115 = vadd.f32 0.0, %v5114
      %v5116 = vpop.f32.mrb[0].mxu0
      %5117 = vmatprep.mubr.bf16.mxu0 0
      %5118 = vmatmul.mubr.bf16.gmra.mrb[0].mxu0 %v4614
      %v5119 = vpop.f32.mrb[0].mxu0
      %v5120 = vadd.f32 0.0, %v5119
      %v5121 = vpop.f32.mrb[0].mxu0
      %v5122 = vpop.f32.mrb[0].mxu0
      %v5123 = vadd.f32 0.0, %v5122
      %v5124 = vpop.f32.mrb[0].mxu0
      %5125 = vmatprep.mubr.bf16.mxu0 0
      %5126 = vmatmul.mubr.bf16.gmra.mrb[0].mxu0 %v4617
      %v5127 = vpop.f32.mrb[0].mxu0
      %v5128 = vadd.f32 0.0, %v5127
      %v5129 = vpop.f32.mrb[0].mxu0
      %v5130 = vpop.f32.mrb[0].mxu0
      %v5131 = vadd.f32 0.0, %v5130
      %v5132 = vpop.f32.mrb[0].mxu0
      %5133 = vmatprep.mubr.bf16.mxu0 0
      %5134 = vmatmul.mubr.bf16.gmra.mrb[0].mxu0 %v4620
      %v5135 = vpop.f32.mrb[0].mxu0
      %v5136 = vadd.f32 0.0, %v5135
      %v5137 = vpop.f32.mrb[0].mxu0
      %v5138 = vpop.f32.mrb[0].mxu0
      %v5139 = vadd.f32 0.0, %v5138
      %v5140 = vpop.f32.mrb[0].mxu0
      %5141 = vmatprep.mubr.bf16.mxu0 0
      %5142 = vmatmul.mubr.bf16.gmra.mrb[0].mxu0 %v4623
      %v5143 = vpop.f32.mrb[0].mxu0
      %v5144 = vadd.f32 0.0, %v5143
      %v5145 = vpop.f32.mrb[0].mxu0
      %v5146 = vpop.f32.mrb[0].mxu0
      %v5147 = vadd.f32 0.0, %v5146
      %v5148 = vpop.f32.mrb[0].mxu0
      %5149 = vmatprep.mubr.bf16.mxu0 0
      %5150 = vmatmul.mubr.bf16.gmra.mrb[0].mxu0 %v4626
      %v5151 = vpop.f32.mrb[0].mxu0
      %v5152 = vadd.f32 0.0, %v5151
      %v5153 = vpop.f32.mrb[0].mxu0
      %v5154 = vpop.f32.mrb[0].mxu0
      %v5155 = vadd.f32 0.0, %v5154
      %v5156 = vpop.f32.mrb[0].mxu0
      %5157 = vmatprep.mubr.bf16.mxu0 0
      %5158 = vmatmul.mubr.bf16.gmra.mrb[0].mxu0 %v4629
      %v5159 = vpop.f32.mrb[0].mxu0
      %v5160 = vadd.f32 0.0, %v5159
      %v5161 = vpop.f32.mrb[0].mxu0
      %v5162 = vpop.f32.mrb[0].mxu0
      %v5163 = vadd.f32 0.0, %v5162
      %v5164 = vpop.f32.mrb[0].mxu0
      %5165 = vmatprep.mubr.bf16.mxu0 0
      %5166 = vmatmul.mubr.bf16.gmra.mrb[0].mxu0 %v4632
      %v5167 = vpop.f32.mrb[0].mxu0
      %v5168 = vadd.f32 0.0, %v5167
      %v5169 = vpop.f32.mrb[0].mxu0
      %v5170 = vpop.f32.mrb[0].mxu0
      %v5171 = vadd.f32 0.0, %v5170
      %v5172 = vpop.f32.mrb[0].mxu0
      %5173 = vmatprep.mubr.bf16.mxu0 0
      %5174 = vmatmul.mubr.bf16.gmra.mrb[0].mxu0 %v4635
      %v5175 = vpop.f32.mrb[0].mxu0
      %v5176 = vadd.f32 0.0, %v5175
      %v5177 = vpop.f32.mrb[0].mxu0
      %v5178 = vpop.f32.mrb[0].mxu0
      %v5179 = vadd.f32 0.0, %v5178
      %v5180 = vpop.f32.mrb[0].mxu0
      %5181 = vdwg.mxu0
      %v5182 = vadd.f32 %v3852, %v4672
      %v5183 = vadd.f32 %v3853, %v4675
      %v5184 = vadd.f32 %v3854, %v4680
      %v5185 = vadd.f32 %v3855, %v4683
      %v5186 = vadd.f32 %v3856, %v4688
      %v5187 = vadd.f32 %v3857, %v4691
      %v5188 = vadd.f32 %v3858, %v4696
      %v5189 = vadd.f32 %v3859, %v4699
      %v5190 = vadd.f32 %v3860, %v4704
      %v5191 = vadd.f32 %v3861, %v4707
      %v5192 = vadd.f32 %v3862, %v4712
      %v5193 = vadd.f32 %v3863, %v4715
      %v5194 = vadd.f32 %v3864, %v4720
      %v5195 = vadd.f32 %v3865, %v4723
      %v5196 = vadd.f32 %v3866, %v4728
      %v5197 = vadd.f32 %v3867, %v4731
      %v5198 = vadd.f32 %v3868, %v4736
      %v5199 = vadd.f32 %v3869, %v4739
      %v5200 = vadd.f32 %v3870, %v4744
      %v5201 = vadd.f32 %v3871, %v4747
      %v5202 = vadd.f32 %v3872, %v4752
      %v5203 = vadd.f32 %v3873, %v4755
      %v5204 = vadd.f32 %v3874, %v4760
      %v5205 = vadd.f32 %v3875, %v4763
      %v5206 = vadd.f32 %v3876, %v4768
      %v5207 = vadd.f32 %v3877, %v4771
      %v5208 = vadd.f32 %v3878, %v4776
      %v5209 = vadd.f32 %v3879, %v4779
      %v5210 = vadd.f32 %v3880, %v4784
      %v5211 = vadd.f32 %v3881, %v4787
      %v5212 = vadd.f32 %v3882, %v4792
      %v5213 = vadd.f32 %v3883, %v4795
      %v5214 = vadd.f32 %v3884, %v4800
      %v5215 = vadd.f32 %v3885, %v4803
      %v5216 = vadd.f32 %v3886, %v4808
      %v5217 = vadd.f32 %v3887, %v4811
      %v5218 = vadd.f32 %v3888, %v4816
      %v5219 = vadd.f32 %v3889, %v4819
      %v5220 = vadd.f32 %v3890, %v4824
      %v5221 = vadd.f32 %v3891, %v4827
      %v5222 = vadd.f32 %v3892, %v4832
      %v5223 = vadd.f32 %v3893, %v4835
      %v5224 = vadd.f32 %v3894, %v4840
      %v5225 = vadd.f32 %v3895, %v4843
      %v5226 = vadd.f32 %v3896, %v4848
      %v5227 = vadd.f32 %v3897, %v4851
      %v5228 = vadd.f32 %v3898, %v4856
      %v5229 = vadd.f32 %v3899, %v4859
      %v5230 = vadd.f32 %v3900, %v4864
      %v5231 = vadd.f32 %v3901, %v4867
      %v5232 = vadd.f32 %v3902, %v4872
      %v5233 = vadd.f32 %v3903, %v4875
      %v5234 = vadd.f32 %v3904, %v4880
      %v5235 = vadd.f32 %v3905, %v4883
      %v5236 = vadd.f32 %v3906, %v4888
      %v5237 = vadd.f32 %v3907, %v4891
      %v5238 = vadd.f32 %v3908, %v4896
      %v5239 = vadd.f32 %v3909, %v4899
      %v5240 = vadd.f32 %v3910, %v4904
      %v5241 = vadd.f32 %v3911, %v4907
      %v5242 = vadd.f32 %v3912, %v4912
      %v5243 = vadd.f32 %v3913, %v4915
      %v5244 = vadd.f32 %v3914, %v4920
      %v5245 = vadd.f32 %v3915, %v4923
      %v5246 = vadd.f32 %v3916, %v4928
      %v5247 = vadd.f32 %v3917, %v4931
      %v5248 = vadd.f32 %v3918, %v4936
      %v5249 = vadd.f32 %v3919, %v4939
      %v5250 = vadd.f32 %v3920, %v4944
      %v5251 = vadd.f32 %v3921, %v4947
      %v5252 = vadd.f32 %v3922, %v4952
      %v5253 = vadd.f32 %v3923, %v4955
      %v5254 = vadd.f32 %v3924, %v4960
      %v5255 = vadd.f32 %v3925, %v4963
      %v5256 = vadd.f32 %v3926, %v4968
      %v5257 = vadd.f32 %v3927, %v4971
      %v5258 = vadd.f32 %v3928, %v4976
      %v5259 = vadd.f32 %v3929, %v4979
      %v5260 = vadd.f32 %v3930, %v4984
      %v5261 = vadd.f32 %v3931, %v4987
      %v5262 = vadd.f32 %v3932, %v4992
      %v5263 = vadd.f32 %v3933, %v4995
      %v5264 = vadd.f32 %v3934, %v5000
      %v5265 = vadd.f32 %v3935, %v5003
      %v5266 = vadd.f32 %v3936, %v5008
      %v5267 = vadd.f32 %v3937, %v5011
      %v5268 = vadd.f32 %v3938, %v5016
      %v5269 = vadd.f32 %v3939, %v5019
      %v5270 = vadd.f32 %v3940, %v5024
      %v5271 = vadd.f32 %v3941, %v5027
      %v5272 = vadd.f32 %v3942, %v5032
      %v5273 = vadd.f32 %v3943, %v5035
      %v5274 = vadd.f32 %v3944, %v5040
      %v5275 = vadd.f32 %v3945, %v5043
      %v5276 = vadd.f32 %v3946, %v5048
      %v5277 = vadd.f32 %v3947, %v5051
      %v5278 = vadd.f32 %v3948, %v5056
      %v5279 = vadd.f32 %v3949, %v5059
      %v5280 = vadd.f32 %v3950, %v5064
      %v5281 = vadd.f32 %v3951, %v5067
      %v5282 = vadd.f32 %v3952, %v5072
      %v5283 = vadd.f32 %v3953, %v5075
      %v5284 = vadd.f32 %v3954, %v5080
      %v5285 = vadd.f32 %v3955, %v5083
      %v5286 = vadd.f32 %v3956, %v5088
      %v5287 = vadd.f32 %v3957, %v5091
      %v5288 = vadd.f32 %v3958, %v5096
      %v5289 = vadd.f32 %v3959, %v5099
      %v5290 = vadd.f32 %v3960, %v5104
      %v5291 = vadd.f32 %v3961, %v5107
      %v5292 = vadd.f32 %v3962, %v5112
      %v5293 = vadd.f32 %v3963, %v5115
      %v5294 = vadd.f32 %v3964, %v5120
      %v5295 = vadd.f32 %v3965, %v5123
      %v5296 = vadd.f32 %v3966, %v5128
      %v5297 = vadd.f32 %v3967, %v5131
      %v5298 = vadd.f32 %v3968, %v5136
      %v5299 = vadd.f32 %v3969, %v5139
      %v5300 = vadd.f32 %v3970, %v5144
      %v5301 = vadd.f32 %v3971, %v5147
      %v5302 = vadd.f32 %v3972, %v5152
      %v5303 = vadd.f32 %v3973, %v5155
      %v5304 = vadd.f32 %v3974, %v5160
      %v5305 = vadd.f32 %v3975, %v5163
      %v5306 = vadd.f32 %v3976, %v5168
      %v5307 = vadd.f32 %v3977, %v5171
      %v5308 = vadd.f32 %v3978, %v5176
      %v5309 = vadd.f32 %v3979, %v5179
      %v5310 = vld [vmem:[%s3] sm:$0x1]
      %v5312 = vlaneseq
      %v5313 = vshrl.u32 %v5312, 7
      %v5314 = vsub.s32 0, %v5313
      %v5315 = vrot.slane %v5310, %v5314
      %v5317 = vmul.f32 %v5182, %v5315
      %v5318 = vmul.f32 %v5183, %v5315
      %v5319 = vmul.f32 %v5184, %v5315
      %v5320 = vmul.f32 %v5185, %v5315
      %v5321 = vmul.f32 %v5186, %v5315
      %v5322 = vmul.f32 %v5187, %v5315
      %v5323 = vmul.f32 %v5188, %v5315
      %v5324 = vmul.f32 %v5189, %v5315
      %v5325 = vmul.f32 %v5190, %v5315
      %v5326 = vmul.f32 %v5191, %v5315
      %v5327 = vmul.f32 %v5192, %v5315
      %v5328 = vmul.f32 %v5193, %v5315
      %v5329 = vmul.f32 %v5194, %v5315
      %v5330 = vmul.f32 %v5195, %v5315
      %v5331 = vmul.f32 %v5196, %v5315
      %v5332 = vmul.f32 %v5197, %v5315
      %v5333 = vmul.f32 %v5198, %v5315
      %v5334 = vmul.f32 %v5199, %v5315
      %v5335 = vmul.f32 %v5200, %v5315
      %v5336 = vmul.f32 %v5201, %v5315
      %v5337 = vmul.f32 %v5202, %v5315
      %v5338 = vmul.f32 %v5203, %v5315
      %v5339 = vmul.f32 %v5204, %v5315
      %v5340 = vmul.f32 %v5205, %v5315
      %v5341 = vmul.f32 %v5206, %v5315
      %v5342 = vmul.f32 %v5207, %v5315
      %v5343 = vmul.f32 %v5208, %v5315
      %v5344 = vmul.f32 %v5209, %v5315
      %v5345 = vmul.f32 %v5210, %v5315
      %v5346 = vmul.f32 %v5211, %v5315
      %v5347 = vmul.f32 %v5212, %v5315
      %v5348 = vmul.f32 %v5213, %v5315
      %v5349 = vmul.f32 %v5214, %v5315
      %v5350 = vmul.f32 %v5215, %v5315
      %v5351 = vmul.f32 %v5216, %v5315
      %v5352 = vmul.f32 %v5217, %v5315
      %v5353 = vmul.f32 %v5218, %v5315
      %v5354 = vmul.f32 %v5219, %v5315
      %v5355 = vmul.f32 %v5220, %v5315
      %v5356 = vmul.f32 %v5221, %v5315
      %v5357 = vmul.f32 %v5222, %v5315
      %v5358 = vmul.f32 %v5223, %v5315
      %v5359 = vmul.f32 %v5224, %v5315
      %v5360 = vmul.f32 %v5225, %v5315
      %v5361 = vmul.f32 %v5226, %v5315
      %v5362 = vmul.f32 %v5227, %v5315
      %v5363 = vmul.f32 %v5228, %v5315
      %v5364 = vmul.f32 %v5229, %v5315
      %v5365 = vmul.f32 %v5230, %v5315
      %v5366 = vmul.f32 %v5231, %v5315
      %v5367 = vmul.f32 %v5232, %v5315
      %v5368 = vmul.f32 %v5233, %v5315
      %v5369 = vmul.f32 %v5234, %v5315
      %v5370 = vmul.f32 %v5235, %v5315
      %v5371 = vmul.f32 %v5236, %v5315
      %v5372 = vmul.f32 %v5237, %v5315
      %v5373 = vmul.f32 %v5238, %v5315
      %v5374 = vmul.f32 %v5239, %v5315
      %v5375 = vmul.f32 %v5240, %v5315
      %v5376 = vmul.f32 %v5241, %v5315
      %v5377 = vmul.f32 %v5242, %v5315
      %v5378 = vmul.f32 %v5243, %v5315
      %v5379 = vmul.f32 %v5244, %v5315
      %v5380 = vmul.f32 %v5245, %v5315
      %v5381 = vmul.f32 %v5246, %v5315
      %v5382 = vmul.f32 %v5247, %v5315
      %v5383 = vmul.f32 %v5248, %v5315
      %v5384 = vmul.f32 %v5249, %v5315
      %v5385 = vmul.f32 %v5250, %v5315
      %v5386 = vmul.f32 %v5251, %v5315
      %v5387 = vmul.f32 %v5252, %v5315
      %v5388 = vmul.f32 %v5253, %v5315
      %v5389 = vmul.f32 %v5254, %v5315
      %v5390 = vmul.f32 %v5255, %v5315
      %v5391 = vmul.f32 %v5256, %v5315
      %v5392 = vmul.f32 %v5257, %v5315
      %v5393 = vmul.f32 %v5258, %v5315
      %v5394 = vmul.f32 %v5259, %v5315
      %v5395 = vmul.f32 %v5260, %v5315
      %v5396 = vmul.f32 %v5261, %v5315
      %v5397 = vmul.f32 %v5262, %v5315
      %v5398 = vmul.f32 %v5263, %v5315
      %v5399 = vmul.f32 %v5264, %v5315
      %v5400 = vmul.f32 %v5265, %v5315
      %v5401 = vmul.f32 %v5266, %v5315
      %v5402 = vmul.f32 %v5267, %v5315
      %v5403 = vmul.f32 %v5268, %v5315
      %v5404 = vmul.f32 %v5269, %v5315
      %v5405 = vmul.f32 %v5270, %v5315
      %v5406 = vmul.f32 %v5271, %v5315
      %v5407 = vmul.f32 %v5272, %v5315
      %v5408 = vmul.f32 %v5273, %v5315
      %v5409 = vmul.f32 %v5274, %v5315
      %v5410 = vmul.f32 %v5275, %v5315
      %v5411 = vmul.f32 %v5276, %v5315
      %v5412 = vmul.f32 %v5277, %v5315
      %v5413 = vmul.f32 %v5278, %v5315
      %v5414 = vmul.f32 %v5279, %v5315
      %v5415 = vmul.f32 %v5280, %v5315
      %v5416 = vmul.f32 %v5281, %v5315
      %v5417 = vmul.f32 %v5282, %v5315
      %v5418 = vmul.f32 %v5283, %v5315
      %v5419 = vmul.f32 %v5284, %v5315
      %v5420 = vmul.f32 %v5285, %v5315
      %v5421 = vmul.f32 %v5286, %v5315
      %v5422 = vmul.f32 %v5287, %v5315
      %v5423 = vmul.f32 %v5288, %v5315
      %v5424 = vmul.f32 %v5289, %v5315
      %v5425 = vmul.f32 %v5290, %v5315
      %v5426 = vmul.f32 %v5291, %v5315
      %v5427 = vmul.f32 %v5292, %v5315
      %v5428 = vmul.f32 %v5293, %v5315
      %v5429 = vmul.f32 %v5294, %v5315
      %v5430 = vmul.f32 %v5295, %v5315
      %v5431 = vmul.f32 %v5296, %v5315
      %v5432 = vmul.f32 %v5297, %v5315
      %v5433 = vmul.f32 %v5298, %v5315
      %v5434 = vmul.f32 %v5299, %v5315
      %v5435 = vmul.f32 %v5300, %v5315
      %v5436 = vmul.f32 %v5301, %v5315
      %v5437 = vmul.f32 %v5302, %v5315
      %v5438 = vmul.f32 %v5303, %v5315
      %v5439 = vmul.f32 %v5304, %v5315
      %v5440 = vmul.f32 %v5305, %v5315
      %v5441 = vmul.f32 %v5306, %v5315
      %v5442 = vmul.f32 %v5307, %v5315
      %v5443 = vmul.f32 %v5308, %v5315
      %v5444 = vmul.f32 %v5309, %v5315
      %v5445 = vld [vmem:[%s4] sm:$0x1]
      %v5447 = vlaneseq
      %v5448 = vshrl.u32 %v5447, 7
      %v5449 = vsub.s32 0, %v5448
      %v5450 = vrot.slane %v5445, %v5449
      %v5452 = vadd.f32 %v5317, %v5450
      %v5453 = vadd.f32 %v5318, %v5450
      %v5454 = vadd.f32 %v5319, %v5450
      %v5455 = vadd.f32 %v5320, %v5450
      %v5456 = vadd.f32 %v5321, %v5450
      %v5457 = vadd.f32 %v5322, %v5450
      %v5458 = vadd.f32 %v5323, %v5450
      %v5459 = vadd.f32 %v5324, %v5450
      %v5460 = vadd.f32 %v5325, %v5450
      %v5461 = vadd.f32 %v5326, %v5450
      %v5462 = vadd.f32 %v5327, %v5450
      %v5463 = vadd.f32 %v5328, %v5450
      %v5464 = vadd.f32 %v5329, %v5450
      %v5465 = vadd.f32 %v5330, %v5450
      %v5466 = vadd.f32 %v5331, %v5450
      %v5467 = vadd.f32 %v5332, %v5450
      %v5468 = vadd.f32 %v5333, %v5450
      %v5469 = vadd.f32 %v5334, %v5450
      %v5470 = vadd.f32 %v5335, %v5450
      %v5471 = vadd.f32 %v5336, %v5450
      %v5472 = vadd.f32 %v5337, %v5450
      %v5473 = vadd.f32 %v5338, %v5450
      %v5474 = vadd.f32 %v5339, %v5450
      %v5475 = vadd.f32 %v5340, %v5450
      %v5476 = vadd.f32 %v5341, %v5450
      %v5477 = vadd.f32 %v5342, %v5450
      %v5478 = vadd.f32 %v5343, %v5450
      %v5479 = vadd.f32 %v5344, %v5450
      %v5480 = vadd.f32 %v5345, %v5450
      %v5481 = vadd.f32 %v5346, %v5450
      %v5482 = vadd.f32 %v5347, %v5450
      %v5483 = vadd.f32 %v5348, %v5450
      %v5484 = vadd.f32 %v5349, %v5450
      %v5485 = vadd.f32 %v5350, %v5450
      %v5486 = vadd.f32 %v5351, %v5450
      %v5487 = vadd.f32 %v5352, %v5450
      %v5488 = vadd.f32 %v5353, %v5450
      %v5489 = vadd.f32 %v5354, %v5450
      %v5490 = vadd.f32 %v5355, %v5450
      %v5491 = vadd.f32 %v5356, %v5450
      %v5492 = vadd.f32 %v5357, %v5450
      %v5493 = vadd.f32 %v5358, %v5450
      %v5494 = vadd.f32 %v5359, %v5450
      %v5495 = vadd.f32 %v5360, %v5450
      %v5496 = vadd.f32 %v5361, %v5450
      %v5497 = vadd.f32 %v5362, %v5450
      %v5498 = vadd.f32 %v5363, %v5450
      %v5499 = vadd.f32 %v5364, %v5450
      %v5500 = vadd.f32 %v5365, %v5450
      %v5501 = vadd.f32 %v5366, %v5450
      %v5502 = vadd.f32 %v5367, %v5450
      %v5503 = vadd.f32 %v5368, %v5450
      %v5504 = vadd.f32 %v5369, %v5450
      %v5505 = vadd.f32 %v5370, %v5450
      %v5506 = vadd.f32 %v5371, %v5450
      %v5507 = vadd.f32 %v5372, %v5450
      %v5508 = vadd.f32 %v5373, %v5450
      %v5509 = vadd.f32 %v5374, %v5450
      %v5510 = vadd.f32 %v5375, %v5450
      %v5511 = vadd.f32 %v5376, %v5450
      %v5512 = vadd.f32 %v5377, %v5450
      %v5513 = vadd.f32 %v5378, %v5450
      %v5514 = vadd.f32 %v5379, %v5450
      %v5515 = vadd.f32 %v5380, %v5450
      %v5516 = vadd.f32 %v5381, %v5450
      %v5517 = vadd.f32 %v5382, %v5450
      %v5518 = vadd.f32 %v5383, %v5450
      %v5519 = vadd.f32 %v5384, %v5450
      %v5520 = vadd.f32 %v5385, %v5450
      %v5521 = vadd.f32 %v5386, %v5450
      %v5522 = vadd.f32 %v5387, %v5450
      %v5523 = vadd.f32 %v5388, %v5450
      %v5524 = vadd.f32 %v5389, %v5450
      %v5525 = vadd.f32 %v5390, %v5450
      %v5526 = vadd.f32 %v5391, %v5450
      %v5527 = vadd.f32 %v5392, %v5450
      %v5528 = vadd.f32 %v5393, %v5450
      %v5529 = vadd.f32 %v5394, %v5450
      %v5530 = vadd.f32 %v5395, %v5450
      %v5531 = vadd.f32 %v5396, %v5450
      %v5532 = vadd.f32 %v5397, %v5450
      %v5533 = vadd.f32 %v5398, %v5450
      %v5534 = vadd.f32 %v5399, %v5450
      %v5535 = vadd.f32 %v5400, %v5450
      %v5536 = vadd.f32 %v5401, %v5450
      %v5537 = vadd.f32 %v5402, %v5450
      %v5538 = vadd.f32 %v5403, %v5450
      %v5539 = vadd.f32 %v5404, %v5450
      %v5540 = vadd.f32 %v5405, %v5450
      %v5541 = vadd.f32 %v5406, %v5450
      %v5542 = vadd.f32 %v5407, %v5450
      %v5543 = vadd.f32 %v5408, %v5450
      %v5544 = vadd.f32 %v5409, %v5450
      %v5545 = vadd.f32 %v5410, %v5450
      %v5546 = vadd.f32 %v5411, %v5450
      %v5547 = vadd.f32 %v5412, %v5450
      %v5548 = vadd.f32 %v5413, %v5450
      %v5549 = vadd.f32 %v5414, %v5450
      %v5550 = vadd.f32 %v5415, %v5450
      %v5551 = vadd.f32 %v5416, %v5450
      %v5552 = vadd.f32 %v5417, %v5450
      %v5553 = vadd.f32 %v5418, %v5450
      %v5554 = vadd.f32 %v5419, %v5450
      %v5555 = vadd.f32 %v5420, %v5450
      %v5556 = vadd.f32 %v5421, %v5450
      %v5557 = vadd.f32 %v5422, %v5450
      %v5558 = vadd.f32 %v5423, %v5450
      %v5559 = vadd.f32 %v5424, %v5450
      %v5560 = vadd.f32 %v5425, %v5450
      %v5561 = vadd.f32 %v5426, %v5450
      %v5562 = vadd.f32 %v5427, %v5450
      %v5563 = vadd.f32 %v5428, %v5450
      %v5564 = vadd.f32 %v5429, %v5450
      %v5565 = vadd.f32 %v5430, %v5450
      %v5566 = vadd.f32 %v5431, %v5450
      %v5567 = vadd.f32 %v5432, %v5450
      %v5568 = vadd.f32 %v5433, %v5450
      %v5569 = vadd.f32 %v5434, %v5450
      %v5570 = vadd.f32 %v5435, %v5450
      %v5571 = vadd.f32 %v5436, %v5450
      %v5572 = vadd.f32 %v5437, %v5450
      %v5573 = vadd.f32 %v5438, %v5450
      %v5574 = vadd.f32 %v5439, %v5450
      %v5575 = vadd.f32 %v5440, %v5450
      %v5576 = vadd.f32 %v5441, %v5450
      %v5577 = vadd.f32 %v5442, %v5450
      %v5578 = vadd.f32 %v5443, %v5450
      %v5579 = vadd.f32 %v5444, %v5450
      %vm5580 = vcmp.gt.f32.partialorder %v5452, 0.0
      %vm5581 = vcmp.gt.f32.partialorder %v5453, 0.0
      %vm5582 = vcmp.gt.f32.partialorder %v5454, 0.0
      %vm5583 = vcmp.gt.f32.partialorder %v5455, 0.0
      %vm5584 = vcmp.gt.f32.partialorder %v5456, 0.0
      %vm5585 = vcmp.gt.f32.partialorder %v5457, 0.0
      %vm5586 = vcmp.gt.f32.partialorder %v5458, 0.0
      %vm5587 = vcmp.gt.f32.partialorder %v5459, 0.0
      %vm5588 = vcmp.gt.f32.partialorder %v5460, 0.0
      %vm5589 = vcmp.gt.f32.partialorder %v5461, 0.0
      %vm5590 = vcmp.gt.f32.partialorder %v5462, 0.0
      %vm5591 = vcmp.gt.f32.partialorder %v5463, 0.0
      %vm5592 = vcmp.gt.f32.partialorder %v5464, 0.0
      %vm5593 = vcmp.gt.f32.partialorder %v5465, 0.0
      %vm5594 = vcmp.gt.f32.partialorder %v5466, 0.0
      %vm5595 = vcmp.gt.f32.partialorder %v5467, 0.0
      %vm5596 = vcmp.gt.f32.partialorder %v5468, 0.0
      %vm5597 = vcmp.gt.f32.partialorder %v5469, 0.0
      %vm5598 = vcmp.gt.f32.partialorder %v5470, 0.0
      %vm5599 = vcmp.gt.f32.partialorder %v5471, 0.0
      %vm5600 = vcmp.gt.f32.partialorder %v5472, 0.0
      %vm5601 = vcmp.gt.f32.partialorder %v5473, 0.0
      %vm5602 = vcmp.gt.f32.partialorder %v5474, 0.0
      %vm5603 = vcmp.gt.f32.partialorder %v5475, 0.0
      %vm5604 = vcmp.gt.f32.partialorder %v5476, 0.0
      %vm5605 = vcmp.gt.f32.partialorder %v5477, 0.0
      %vm5606 = vcmp.gt.f32.partialorder %v5478, 0.0
      %vm5607 = vcmp.gt.f32.partialorder %v5479, 0.0
      %vm5608 = vcmp.gt.f32.partialorder %v5480, 0.0
      %vm5609 = vcmp.gt.f32.partialorder %v5481, 0.0
      %vm5610 = vcmp.gt.f32.partialorder %v5482, 0.0
      %vm5611 = vcmp.gt.f32.partialorder %v5483, 0.0
      %vm5612 = vcmp.gt.f32.partialorder %v5484, 0.0
      %vm5613 = vcmp.gt.f32.partialorder %v5485, 0.0
      %vm5614 = vcmp.gt.f32.partialorder %v5486, 0.0
      %vm5615 = vcmp.gt.f32.partialorder %v5487, 0.0
      %vm5616 = vcmp.gt.f32.partialorder %v5488, 0.0
      %vm5617 = vcmp.gt.f32.partialorder %v5489, 0.0
      %vm5618 = vcmp.gt.f32.partialorder %v5490, 0.0
      %vm5619 = vcmp.gt.f32.partialorder %v5491, 0.0
      %vm5620 = vcmp.gt.f32.partialorder %v5492, 0.0
      %vm5621 = vcmp.gt.f32.partialorder %v5493, 0.0
      %vm5622 = vcmp.gt.f32.partialorder %v5494, 0.0
      %vm5623 = vcmp.gt.f32.partialorder %v5495, 0.0
      %vm5624 = vcmp.gt.f32.partialorder %v5496, 0.0
      %vm5625 = vcmp.gt.f32.partialorder %v5497, 0.0
      %vm5626 = vcmp.gt.f32.partialorder %v5498, 0.0
      %vm5627 = vcmp.gt.f32.partialorder %v5499, 0.0
      %vm5628 = vcmp.gt.f32.partialorder %v5500, 0.0
      %vm5629 = vcmp.gt.f32.partialorder %v5501, 0.0
      %vm5630 = vcmp.gt.f32.partialorder %v5502, 0.0
      %vm5631 = vcmp.gt.f32.partialorder %v5503, 0.0
      %vm5632 = vcmp.gt.f32.partialorder %v5504, 0.0
      %vm5633 = vcmp.gt.f32.partialorder %v5505, 0.0
      %vm5634 = vcmp.gt.f32.partialorder %v5506, 0.0
      %vm5635 = vcmp.gt.f32.partialorder %v5507, 0.0
      %vm5636 = vcmp.gt.f32.partialorder %v5508, 0.0
      %vm5637 = vcmp.gt.f32.partialorder %v5509, 0.0
      %vm5638 = vcmp.gt.f32.partialorder %v5510, 0.0
      %vm5639 = vcmp.gt.f32.partialorder %v5511, 0.0
      %vm5640 = vcmp.gt.f32.partialorder %v5512, 0.0
      %vm5641 = vcmp.gt.f32.partialorder %v5513, 0.0
      %vm5642 = vcmp.gt.f32.partialorder %v5514, 0.0
      %vm5643 = vcmp.gt.f32.partialorder %v5515, 0.0
      %vm5644 = vcmp.gt.f32.partialorder %v5516, 0.0
      %vm5645 = vcmp.gt.f32.partialorder %v5517, 0.0
      %vm5646 = vcmp.gt.f32.partialorder %v5518, 0.0
      %vm5647 = vcmp.gt.f32.partialorder %v5519, 0.0
      %vm5648 = vcmp.gt.f32.partialorder %v5520, 0.0
      %vm5649 = vcmp.gt.f32.partialorder %v5521, 0.0
      %vm5650 = vcmp.gt.f32.partialorder %v5522, 0.0
      %vm5651 = vcmp.gt.f32.partialorder %v5523, 0.0
      %vm5652 = vcmp.gt.f32.partialorder %v5524, 0.0
      %vm5653 = vcmp.gt.f32.partialorder %v5525, 0.0
      %vm5654 = vcmp.gt.f32.partialorder %v5526, 0.0
      %vm5655 = vcmp.gt.f32.partialorder %v5527, 0.0
      %vm5656 = vcmp.gt.f32.partialorder %v5528, 0.0
      %vm5657 = vcmp.gt.f32.partialorder %v5529, 0.0
      %vm5658 = vcmp.gt.f32.partialorder %v5530, 0.0
      %vm5659 = vcmp.gt.f32.partialorder %v5531, 0.0
      %vm5660 = vcmp.gt.f32.partialorder %v5532, 0.0
      %vm5661 = vcmp.gt.f32.partialorder %v5533, 0.0
      %vm5662 = vcmp.gt.f32.partialorder %v5534, 0.0
      %vm5663 = vcmp.gt.f32.partialorder %v5535, 0.0
      %vm5664 = vcmp.gt.f32.partialorder %v5536, 0.0
      %vm5665 = vcmp.gt.f32.partialorder %v5537, 0.0
      %vm5666 = vcmp.gt.f32.partialorder %v5538, 0.0
      %vm5667 = vcmp.gt.f32.partialorder %v5539, 0.0
      %vm5668 = vcmp.gt.f32.partialorder %v5540, 0.0
      %vm5669 = vcmp.gt.f32.partialorder %v5541, 0.0
      %vm5670 = vcmp.gt.f32.partialorder %v5542, 0.0
      %vm5671 = vcmp.gt.f32.partialorder %v5543, 0.0
      %vm5672 = vcmp.gt.f32.partialorder %v5544, 0.0
      %vm5673 = vcmp.gt.f32.partialorder %v5545, 0.0
      %vm5674 = vcmp.gt.f32.partialorder %v5546, 0.0
      %vm5675 = vcmp.gt.f32.partialorder %v5547, 0.0
      %vm5676 = vcmp.gt.f32.partialorder %v5548, 0.0
      %vm5677 = vcmp.gt.f32.partialorder %v5549, 0.0
      %vm5678 = vcmp.gt.f32.partialorder %v5550, 0.0
      %vm5679 = vcmp.gt.f32.partialorder %v5551, 0.0
      %vm5680 = vcmp.gt.f32.partialorder %v5552, 0.0
      %vm5681 = vcmp.gt.f32.partialorder %v5553, 0.0
      %vm5682 = vcmp.gt.f32.partialorder %v5554, 0.0
      %vm5683 = vcmp.gt.f32.partialorder %v5555, 0.0
      %vm5684 = vcmp.gt.f32.partialorder %v5556, 0.0
      %vm5685 = vcmp.gt.f32.partialorder %v5557, 0.0
      %vm5686 = vcmp.gt.f32.partialorder %v5558, 0.0
      %vm5687 = vcmp.gt.f32.partialorder %v5559, 0.0
      %vm5688 = vcmp.gt.f32.partialorder %v5560, 0.0
      %vm5689 = vcmp.gt.f32.partialorder %v5561, 0.0
      %vm5690 = vcmp.gt.f32.partialorder %v5562, 0.0
      %vm5691 = vcmp.gt.f32.partialorder %v5563, 0.0
      %vm5692 = vcmp.gt.f32.partialorder %v5564, 0.0
      %vm5693 = vcmp.gt.f32.partialorder %v5565, 0.0
      %vm5694 = vcmp.gt.f32.partialorder %v5566, 0.0
      %vm5695 = vcmp.gt.f32.partialorder %v5567, 0.0
      %vm5696 = vcmp.gt.f32.partialorder %v5568, 0.0
      %vm5697 = vcmp.gt.f32.partialorder %v5569, 0.0
      %vm5698 = vcmp.gt.f32.partialorder %v5570, 0.0
      %vm5699 = vcmp.gt.f32.partialorder %v5571, 0.0
      %vm5700 = vcmp.gt.f32.partialorder %v5572, 0.0
      %vm5701 = vcmp.gt.f32.partialorder %v5573, 0.0
      %vm5702 = vcmp.gt.f32.partialorder %v5574, 0.0
      %vm5703 = vcmp.gt.f32.partialorder %v5575, 0.0
      %vm5704 = vcmp.gt.f32.partialorder %v5576, 0.0
      %vm5705 = vcmp.gt.f32.partialorder %v5577, 0.0
      %vm5706 = vcmp.gt.f32.partialorder %v5578, 0.0
      %vm5707 = vcmp.gt.f32.partialorder %v5579, 0.0
      %v5708 = vmul.f32 %v5452, 0.2
      %v5709 = vmul.f32 %v5453, 0.2
      %v5710 = vmul.f32 %v5454, 0.2
      %v5711 = vmul.f32 %v5455, 0.2
      %v5712 = vmul.f32 %v5456, 0.2
      %v5713 = vmul.f32 %v5457, 0.2
      %v5714 = vmul.f32 %v5458, 0.2
      %v5715 = vmul.f32 %v5459, 0.2
      %v5716 = vmul.f32 %v5460, 0.2
      %v5717 = vmul.f32 %v5461, 0.2
      %v5718 = vmul.f32 %v5462, 0.2
      %v5719 = vmul.f32 %v5463, 0.2
      %v5720 = vmul.f32 %v5464, 0.2
      %v5721 = vmul.f32 %v5465, 0.2
      %v5722 = vmul.f32 %v5466, 0.2
      %v5723 = vmul.f32 %v5467, 0.2
      %v5724 = vmul.f32 %v5468, 0.2
      %v5725 = vmul.f32 %v5469, 0.2
      %v5726 = vmul.f32 %v5470, 0.2
      %v5727 = vmul.f32 %v5471, 0.2
      %v5728 = vmul.f32 %v5472, 0.2
      %v5729 = vmul.f32 %v5473, 0.2
      %v5730 = vmul.f32 %v5474, 0.2
      %v5731 = vmul.f32 %v5475, 0.2
      %v5732 = vmul.f32 %v5476, 0.2
      %v5733 = vmul.f32 %v5477, 0.2
      %v5734 = vmul.f32 %v5478, 0.2
      %v5735 = vmul.f32 %v5479, 0.2
      %v5736 = vmul.f32 %v5480, 0.2
      %v5737 = vmul.f32 %v5481, 0.2
      %v5738 = vmul.f32 %v5482, 0.2
      %v5739 = vmul.f32 %v5483, 0.2
      %v5740 = vmul.f32 %v5484, 0.2
      %v5741 = vmul.f32 %v5485, 0.2
      %v5742 = vmul.f32 %v5486, 0.2
      %v5743 = vmul.f32 %v5487, 0.2
      %v5744 = vmul.f32 %v5488, 0.2
      %v5745 = vmul.f32 %v5489, 0.2
      %v5746 = vmul.f32 %v5490, 0.2
      %v5747 = vmul.f32 %v5491, 0.2
      %v5748 = vmul.f32 %v5492, 0.2
      %v5749 = vmul.f32 %v5493, 0.2
      %v5750 = vmul.f32 %v5494, 0.2
      %v5751 = vmul.f32 %v5495, 0.2
      %v5752 = vmul.f32 %v5496, 0.2
      %v5753 = vmul.f32 %v5497, 0.2
      %v5754 = vmul.f32 %v5498, 0.2
      %v5755 = vmul.f32 %v5499, 0.2
      %v5756 = vmul.f32 %v5500, 0.2
      %v5757 = vmul.f32 %v5501, 0.2
      %v5758 = vmul.f32 %v5502, 0.2
      %v5759 = vmul.f32 %v5503, 0.2
      %v5760 = vmul.f32 %v5504, 0.2
      %v5761 = vmul.f32 %v5505, 0.2
      %v5762 = vmul.f32 %v5506, 0.2
      %v5763 = vmul.f32 %v5507, 0.2
      %v5764 = vmul.f32 %v5508, 0.2
      %v5765 = vmul.f32 %v5509, 0.2
      %v5766 = vmul.f32 %v5510, 0.2
      %v5767 = vmul.f32 %v5511, 0.2
      %v5768 = vmul.f32 %v5512, 0.2
      %v5769 = vmul.f32 %v5513, 0.2
      %v5770 = vmul.f32 %v5514, 0.2
      %v5771 = vmul.f32 %v5515, 0.2
      %v5772 = vmul.f32 %v5516, 0.2
      %v5773 = vmul.f32 %v5517, 0.2
      %v5774 = vmul.f32 %v5518, 0.2
      %v5775 = vmul.f32 %v5519, 0.2
      %v5776 = vmul.f32 %v5520, 0.2
      %v5777 = vmul.f32 %v5521, 0.2
      %v5778 = vmul.f32 %v5522, 0.2
      %v5779 = vmul.f32 %v5523, 0.2
      %v5780 = vmul.f32 %v5524, 0.2
      %v5781 = vmul.f32 %v5525, 0.2
      %v5782 = vmul.f32 %v5526, 0.2
      %v5783 = vmul.f32 %v5527, 0.2
      %v5784 = vmul.f32 %v5528, 0.2
      %v5785 = vmul.f32 %v5529, 0.2
      %v5786 = vmul.f32 %v5530, 0.2
      %v5787 = vmul.f32 %v5531, 0.2
      %v5788 = vmul.f32 %v5532, 0.2
      %v5789 = vmul.f32 %v5533, 0.2
      %v5790 = vmul.f32 %v5534, 0.2
      %v5791 = vmul.f32 %v5535, 0.2
      %v5792 = vmul.f32 %v5536, 0.2
      %v5793 = vmul.f32 %v5537, 0.2
      %v5794 = vmul.f32 %v5538, 0.2
      %v5795 = vmul.f32 %v5539, 0.2
      %v5796 = vmul.f32 %v5540, 0.2
      %v5797 = vmul.f32 %v5541, 0.2
      %v5798 = vmul.f32 %v5542, 0.2
      %v5799 = vmul.f32 %v5543, 0.2
      %v5800 = vmul.f32 %v5544, 0.2
      %v5801 = vmul.f32 %v5545, 0.2
      %v5802 = vmul.f32 %v5546, 0.2
      %v5803 = vmul.f32 %v5547, 0.2
      %v5804 = vmul.f32 %v5548, 0.2
      %v5805 = vmul.f32 %v5549, 0.2
      %v5806 = vmul.f32 %v5550, 0.2
      %v5807 = vmul.f32 %v5551, 0.2
      %v5808 = vmul.f32 %v5552, 0.2
      %v5809 = vmul.f32 %v5553, 0.2
      %v5810 = vmul.f32 %v5554, 0.2
      %v5811 = vmul.f32 %v5555, 0.2
      %v5812 = vmul.f32 %v5556, 0.2
      %v5813 = vmul.f32 %v5557, 0.2
      %v5814 = vmul.f32 %v5558, 0.2
      %v5815 = vmul.f32 %v5559, 0.2
      %v5816 = vmul.f32 %v5560, 0.2
      %v5817 = vmul.f32 %v5561, 0.2
      %v5818 = vmul.f32 %v5562, 0.2
      %v5819 = vmul.f32 %v5563, 0.2
      %v5820 = vmul.f32 %v5564, 0.2
      %v5821 = vmul.f32 %v5565, 0.2
      %v5822 = vmul.f32 %v5566, 0.2
      %v5823 = vmul.f32 %v5567, 0.2
      %v5824 = vmul.f32 %v5568, 0.2
      %v5825 = vmul.f32 %v5569, 0.2
      %v5826 = vmul.f32 %v5570, 0.2
      %v5827 = vmul.f32 %v5571, 0.2
      %v5828 = vmul.f32 %v5572, 0.2
      %v5829 = vmul.f32 %v5573, 0.2
      %v5830 = vmul.f32 %v5574, 0.2
      %v5831 = vmul.f32 %v5575, 0.2
      %v5832 = vmul.f32 %v5576, 0.2
      %v5833 = vmul.f32 %v5577, 0.2
      %v5834 = vmul.f32 %v5578, 0.2
      %v5835 = vmul.f32 %v5579, 0.2
      %v5836 = vsel %vm5580, %v5452, %v5708
      %v5837 = vsel %vm5581, %v5453, %v5709
      %v5838 = vsel %vm5582, %v5454, %v5710
      %v5839 = vsel %vm5583, %v5455, %v5711
      %v5840 = vsel %vm5584, %v5456, %v5712
      %v5841 = vsel %vm5585, %v5457, %v5713
      %v5842 = vsel %vm5586, %v5458, %v5714
      %v5843 = vsel %vm5587, %v5459, %v5715
      %v5844 = vsel %vm5588, %v5460, %v5716
      %v5845 = vsel %vm5589, %v5461, %v5717
      %v5846 = vsel %vm5590, %v5462, %v5718
      %v5847 = vsel %vm5591, %v5463, %v5719
      %v5848 = vsel %vm5592, %v5464, %v5720
      %v5849 = vsel %vm5593, %v5465, %v5721
      %v5850 = vsel %vm5594, %v5466, %v5722
      %v5851 = vsel %vm5595, %v5467, %v5723
      %v5852 = vsel %vm5596, %v5468, %v5724
      %v5853 = vsel %vm5597, %v5469, %v5725
      %v5854 = vsel %vm5598, %v5470, %v5726
      %v5855 = vsel %vm5599, %v5471, %v5727
      %v5856 = vsel %vm5600, %v5472, %v5728
      %v5857 = vsel %vm5601, %v5473, %v5729
      %v5858 = vsel %vm5602, %v5474, %v5730
      %v5859 = vsel %vm5603, %v5475, %v5731
      %v5860 = vsel %vm5604, %v5476, %v5732
      %v5861 = vsel %vm5605, %v5477, %v5733
      %v5862 = vsel %vm5606, %v5478, %v5734
      %v5863 = vsel %vm5607, %v5479, %v5735
      %v5864 = vsel %vm5608, %v5480, %v5736
      %v5865 = vsel %vm5609, %v5481, %v5737
      %v5866 = vsel %vm5610, %v5482, %v5738
      %v5867 = vsel %vm5611, %v5483, %v5739
      %v5868 = vsel %vm5612, %v5484, %v5740
      %v5869 = vsel %vm5613, %v5485, %v5741
      %v5870 = vsel %vm5614, %v5486, %v5742
      %v5871 = vsel %vm5615, %v5487, %v5743
      %v5872 = vsel %vm5616, %v5488, %v5744
      %v5873 = vsel %vm5617, %v5489, %v5745
      %v5874 = vsel %vm5618, %v5490, %v5746
      %v5875 = vsel %vm5619, %v5491, %v5747
      %v5876 = vsel %vm5620, %v5492, %v5748
      %v5877 = vsel %vm5621, %v5493, %v5749
      %v5878 = vsel %vm5622, %v5494, %v5750
      %v5879 = vsel %vm5623, %v5495, %v5751
      %v5880 = vsel %vm5624, %v5496, %v5752
      %v5881 = vsel %vm5625, %v5497, %v5753
      %v5882 = vsel %vm5626, %v5498, %v5754
      %v5883 = vsel %vm5627, %v5499, %v5755
      %v5884 = vsel %vm5628, %v5500, %v5756
      %v5885 = vsel %vm5629, %v5501, %v5757
      %v5886 = vsel %vm5630, %v5502, %v5758
      %v5887 = vsel %vm5631, %v5503, %v5759
      %v5888 = vsel %vm5632, %v5504, %v5760
      %v5889 = vsel %vm5633, %v5505, %v5761
      %v5890 = vsel %vm5634, %v5506, %v5762
      %v5891 = vsel %vm5635, %v5507, %v5763
      %v5892 = vsel %vm5636, %v5508, %v5764
      %v5893 = vsel %vm5637, %v5509, %v5765
      %v5894 = vsel %vm5638, %v5510, %v5766
      %v5895 = vsel %vm5639, %v5511, %v5767
      %v5896 = vsel %vm5640, %v5512, %v5768
      %v5897 = vsel %vm5641, %v5513, %v5769
      %v5898 = vsel %vm5642, %v5514, %v5770
      %v5899 = vsel %vm5643, %v5515, %v5771
      %v5900 = vsel %vm5644, %v5516, %v5772
      %v5901 = vsel %vm5645, %v5517, %v5773
      %v5902 = vsel %vm5646, %v5518, %v5774
      %v5903 = vsel %vm5647, %v5519, %v5775
      %v5904 = vsel %vm5648, %v5520, %v5776
      %v5905 = vsel %vm5649, %v5521, %v5777
      %v5906 = vsel %vm5650, %v5522, %v5778
      %v5907 = vsel %vm5651, %v5523, %v5779
      %v5908 = vsel %vm5652, %v5524, %v5780
      %v5909 = vsel %vm5653, %v5525, %v5781
      %v5910 = vsel %vm5654, %v5526, %v5782
      %v5911 = vsel %vm5655, %v5527, %v5783
      %v5912 = vsel %vm5656, %v5528, %v5784
      %v5913 = vsel %vm5657, %v5529, %v5785
      %v5914 = vsel %vm5658, %v5530, %v5786
      %v5915 = vsel %vm5659, %v5531, %v5787
      %v5916 = vsel %vm5660, %v5532, %v5788
      %v5917 = vsel %vm5661, %v5533, %v5789
      %v5918 = vsel %vm5662, %v5534, %v5790
      %v5919 = vsel %vm5663, %v5535, %v5791
      %v5920 = vsel %vm5664, %v5536, %v5792
      %v5921 = vsel %vm5665, %v5537, %v5793
      %v5922 = vsel %vm5666, %v5538, %v5794
      %v5923 = vsel %vm5667, %v5539, %v5795
      %v5924 = vsel %vm5668, %v5540, %v5796
      %v5925 = vsel %vm5669, %v5541, %v5797
      %v5926 = vsel %vm5670, %v5542, %v5798
      %v5927 = vsel %vm5671, %v5543, %v5799
      %v5928 = vsel %vm5672, %v5544, %v5800
      %v5929 = vsel %vm5673, %v5545, %v5801
      %v5930 = vsel %vm5674, %v5546, %v5802
      %v5931 = vsel %vm5675, %v5547, %v5803
      %v5932 = vsel %vm5676, %v5548, %v5804
      %v5933 = vsel %vm5677, %v5549, %v5805
      %v5934 = vsel %vm5678, %v5550, %v5806
      %v5935 = vsel %vm5679, %v5551, %v5807
      %v5936 = vsel %vm5680, %v5552, %v5808
      %v5937 = vsel %vm5681, %v5553, %v5809
      %v5938 = vsel %vm5682, %v5554, %v5810
      %v5939 = vsel %vm5683, %v5555, %v5811
      %v5940 = vsel %vm5684, %v5556, %v5812
      %v5941 = vsel %vm5685, %v5557, %v5813
      %v5942 = vsel %vm5686, %v5558, %v5814
      %v5943 = vsel %vm5687, %v5559, %v5815
      %v5944 = vsel %vm5688, %v5560, %v5816
      %v5945 = vsel %vm5689, %v5561, %v5817
      %v5946 = vsel %vm5690, %v5562, %v5818
      %v5947 = vsel %vm5691, %v5563, %v5819
      %v5948 = vsel %vm5692, %v5564, %v5820
      %v5949 = vsel %vm5693, %v5565, %v5821
      %v5950 = vsel %vm5694, %v5566, %v5822
      %v5951 = vsel %vm5695, %v5567, %v5823
      %v5952 = vsel %vm5696, %v5568, %v5824
      %v5953 = vsel %vm5697, %v5569, %v5825
      %v5954 = vsel %vm5698, %v5570, %v5826
      %v5955 = vsel %vm5699, %v5571, %v5827
      %v5956 = vsel %vm5700, %v5572, %v5828
      %v5957 = vsel %vm5701, %v5573, %v5829
      %v5958 = vsel %vm5702, %v5574, %v5830
      %v5959 = vsel %vm5703, %v5575, %v5831
      %v5960 = vsel %vm5704, %v5576, %v5832
      %v5961 = vsel %vm5705, %v5577, %v5833
      %v5962 = vsel %vm5706, %v5578, %v5834
      %v5963 = vsel %vm5707, %v5579, %v5835
      %v5964 = vpack.c.bf16 %v5837, %v5836
      %v5965 = vpack.c.bf16 %v5839, %v5838
      %v5966 = vpack.c.bf16 %v5841, %v5840
      %v5967 = vpack.c.bf16 %v5843, %v5842
      %v5968 = vpack.c.bf16 %v5845, %v5844
      %v5969 = vpack.c.bf16 %v5847, %v5846
      %v5970 = vpack.c.bf16 %v5849, %v5848
      %v5971 = vpack.c.bf16 %v5851, %v5850
      %v5972 = vpack.c.bf16 %v5853, %v5852
      %v5973 = vpack.c.bf16 %v5855, %v5854
      %v5974 = vpack.c.bf16 %v5857, %v5856
      %v5975 = vpack.c.bf16 %v5859, %v5858
      %v5976 = vpack.c.bf16 %v5861, %v5860
      %v5977 = vpack.c.bf16 %v5863, %v5862
      %v5978 = vpack.c.bf16 %v5865, %v5864
      %v5979 = vpack.c.bf16 %v5867, %v5866
      %v5980 = vpack.c.bf16 %v5869, %v5868
      %v5981 = vpack.c.bf16 %v5871, %v5870
      %v5982 = vpack.c.bf16 %v5873, %v5872
      %v5983 = vpack.c.bf16 %v5875, %v5874
      %v5984 = vpack.c.bf16 %v5877, %v5876
      %v5985 = vpack.c.bf16 %v5879, %v5878
      %v5986 = vpack.c.bf16 %v5881, %v5880
      %v5987 = vpack.c.bf16 %v5883, %v5882
      %v5988 = vpack.c.bf16 %v5885, %v5884
      %v5989 = vpack.c.bf16 %v5887, %v5886
      %v5990 = vpack.c.bf16 %v5889, %v5888
      %v5991 = vpack.c.bf16 %v5891, %v5890
      %v5992 = vpack.c.bf16 %v5893, %v5892
      %v5993 = vpack.c.bf16 %v5895, %v5894
      %v5994 = vpack.c.bf16 %v5897, %v5896
      %v5995 = vpack.c.bf16 %v5899, %v5898
      %v5996 = vpack.c.bf16 %v5901, %v5900
      %v5997 = vpack.c.bf16 %v5903, %v5902
      %v5998 = vpack.c.bf16 %v5905, %v5904
      %v5999 = vpack.c.bf16 %v5907, %v5906
      %v6000 = vpack.c.bf16 %v5909, %v5908
      %v6001 = vpack.c.bf16 %v5911, %v5910
      %v6002 = vpack.c.bf16 %v5913, %v5912
      %v6003 = vpack.c.bf16 %v5915, %v5914
      %v6004 = vpack.c.bf16 %v5917, %v5916
      %v6005 = vpack.c.bf16 %v5919, %v5918
      %v6006 = vpack.c.bf16 %v5921, %v5920
      %v6007 = vpack.c.bf16 %v5923, %v5922
      %v6008 = vpack.c.bf16 %v5925, %v5924
      %v6009 = vpack.c.bf16 %v5927, %v5926
      %v6010 = vpack.c.bf16 %v5929, %v5928
      %v6011 = vpack.c.bf16 %v5931, %v5930
      %v6012 = vpack.c.bf16 %v5933, %v5932
      %v6013 = vpack.c.bf16 %v5935, %v5934
      %v6014 = vpack.c.bf16 %v5937, %v5936
      %v6015 = vpack.c.bf16 %v5939, %v5938
      %v6016 = vpack.c.bf16 %v5941, %v5940
      %v6017 = vpack.c.bf16 %v5943, %v5942
      %v6018 = vpack.c.bf16 %v5945, %v5944
      %v6019 = vpack.c.bf16 %v5947, %v5946
      %v6020 = vpack.c.bf16 %v5949, %v5948
      %v6021 = vpack.c.bf16 %v5951, %v5950
      %v6022 = vpack.c.bf16 %v5953, %v5952
      %v6023 = vpack.c.bf16 %v5955, %v5954
      %v6024 = vpack.c.bf16 %v5957, %v5956
      %v6025 = vpack.c.bf16 %v5959, %v5958
      %v6026 = vpack.c.bf16 %v5961, %v5960
      %v6027 = vpack.c.bf16 %v5963, %v5962
      %v6092 = vunpack.c.l.b16 %v5964
      %v6093 = vunpack.c.h.b16 %v5964
      %v6094 = vunpack.c.l.b16 %v5965
      %v6095 = vunpack.c.h.b16 %v5965
      %v6096 = vunpack.c.l.b16 %v5966
      %v6097 = vunpack.c.h.b16 %v5966
      %v6098 = vunpack.c.l.b16 %v5967
      %v6099 = vunpack.c.h.b16 %v5967
      %v6100 = vunpack.c.l.b16 %v5968
      %v6101 = vunpack.c.h.b16 %v5968
      %v6102 = vunpack.c.l.b16 %v5969
      %v6103 = vunpack.c.h.b16 %v5969
      %v6104 = vunpack.c.l.b16 %v5970
      %v6105 = vunpack.c.h.b16 %v5970
      %v6106 = vunpack.c.l.b16 %v5971
      %v6107 = vunpack.c.h.b16 %v5971
      %v6108 = vunpack.c.l.b16 %v5972
      %v6109 = vunpack.c.h.b16 %v5972
      %v6110 = vunpack.c.l.b16 %v5973
      %v6111 = vunpack.c.h.b16 %v5973
      %v6112 = vunpack.c.l.b16 %v5974
      %v6113 = vunpack.c.h.b16 %v5974
      %v6114 = vunpack.c.l.b16 %v5975
      %v6115 = vunpack.c.h.b16 %v5975
      %v6116 = vunpack.c.l.b16 %v5976
      %v6117 = vunpack.c.h.b16 %v5976
      %v6118 = vunpack.c.l.b16 %v5977
      %v6119 = vunpack.c.h.b16 %v5977
      %v6120 = vunpack.c.l.b16 %v5978
      %v6121 = vunpack.c.h.b16 %v5978
      %v6122 = vunpack.c.l.b16 %v5979
      %v6123 = vunpack.c.h.b16 %v5979
      %v6124 = vunpack.c.l.b16 %v5980
      %v6125 = vunpack.c.h.b16 %v5980
      %v6126 = vunpack.c.l.b16 %v5981
      %v6127 = vunpack.c.h.b16 %v5981
      %v6128 = vunpack.c.l.b16 %v5982
      %v6129 = vunpack.c.h.b16 %v5982
      %v6130 = vunpack.c.l.b16 %v5983
      %v6131 = vunpack.c.h.b16 %v5983
      %v6132 = vunpack.c.l.b16 %v5984
      %v6133 = vunpack.c.h.b16 %v5984
      %v6134 = vunpack.c.l.b16 %v5985
      %v6135 = vunpack.c.h.b16 %v5985
      %v6136 = vunpack.c.l.b16 %v5986
      %v6137 = vunpack.c.h.b16 %v5986
      %v6138 = vunpack.c.l.b16 %v5987
      %v6139 = vunpack.c.h.b16 %v5987
      %v6140 = vunpack.c.l.b16 %v5988
      %v6141 = vunpack.c.h.b16 %v5988
      %v6142 = vunpack.c.l.b16 %v5989
      %v6143 = vunpack.c.h.b16 %v5989
      %v6144 = vunpack.c.l.b16 %v5990
      %v6145 = vunpack.c.h.b16 %v5990
      %v6146 = vunpack.c.l.b16 %v5991
      %v6147 = vunpack.c.h.b16 %v5991
      %v6148 = vunpack.c.l.b16 %v5992
      %v6149 = vunpack.c.h.b16 %v5992
      %v6150 = vunpack.c.l.b16 %v5993
      %v6151 = vunpack.c.h.b16 %v5993
      %v6152 = vunpack.c.l.b16 %v5994
      %v6153 = vunpack.c.h.b16 %v5994
      %v6154 = vunpack.c.l.b16 %v5995
      %v6155 = vunpack.c.h.b16 %v5995
      %v6156 = vunpack.c.l.b16 %v5996
      %v6157 = vunpack.c.h.b16 %v5996
      %v6158 = vunpack.c.l.b16 %v5997
      %v6159 = vunpack.c.h.b16 %v5997
      %v6160 = vunpack.c.l.b16 %v5998
      %v6161 = vunpack.c.h.b16 %v5998
      %v6162 = vunpack.c.l.b16 %v5999
      %v6163 = vunpack.c.h.b16 %v5999
      %v6164 = vunpack.c.l.b16 %v6000
      %v6165 = vunpack.c.h.b16 %v6000
      %v6166 = vunpack.c.l.b16 %v6001
      %v6167 = vunpack.c.h.b16 %v6001
      %v6168 = vunpack.c.l.b16 %v6002
      %v6169 = vunpack.c.h.b16 %v6002
      %v6170 = vunpack.c.l.b16 %v6003
      %v6171 = vunpack.c.h.b16 %v6003
      %v6172 = vunpack.c.l.b16 %v6004
      %v6173 = vunpack.c.h.b16 %v6004
      %v6174 = vunpack.c.l.b16 %v6005
      %v6175 = vunpack.c.h.b16 %v6005
      %v6176 = vunpack.c.l.b16 %v6006
      %v6177 = vunpack.c.h.b16 %v6006
      %v6178 = vunpack.c.l.b16 %v6007
      %v6179 = vunpack.c.h.b16 %v6007
      %v6180 = vunpack.c.l.b16 %v6008
      %v6181 = vunpack.c.h.b16 %v6008
      %v6182 = vunpack.c.l.b16 %v6009
      %v6183 = vunpack.c.h.b16 %v6009
      %v6184 = vunpack.c.l.b16 %v6010
      %v6185 = vunpack.c.h.b16 %v6010
      %v6186 = vunpack.c.l.b16 %v6011
      %v6187 = vunpack.c.h.b16 %v6011
      %v6188 = vunpack.c.l.b16 %v6012
      %v6189 = vunpack.c.h.b16 %v6012
      %v6190 = vunpack.c.l.b16 %v6013
      %v6191 = vunpack.c.h.b16 %v6013
      %v6192 = vunpack.c.l.b16 %v6014
      %v6193 = vunpack.c.h.b16 %v6014
      %v6194 = vunpack.c.l.b16 %v6015
      %v6195 = vunpack.c.h.b16 %v6015
      %v6196 = vunpack.c.l.b16 %v6016
      %v6197 = vunpack.c.h.b16 %v6016
      %v6198 = vunpack.c.l.b16 %v6017
      %v6199 = vunpack.c.h.b16 %v6017
      %v6200 = vunpack.c.l.b16 %v6018
      %v6201 = vunpack.c.h.b16 %v6018
      %v6202 = vunpack.c.l.b16 %v6019
      %v6203 = vunpack.c.h.b16 %v6019
      %v6204 = vunpack.c.l.b16 %v6020
      %v6205 = vunpack.c.h.b16 %v6020
      %v6206 = vunpack.c.l.b16 %v6021
      %v6207 = vunpack.c.h.b16 %v6021
      %v6208 = vunpack.c.l.b16 %v6022
      %v6209 = vunpack.c.h.b16 %v6022
      %v6210 = vunpack.c.l.b16 %v6023
      %v6211 = vunpack.c.h.b16 %v6023
      %v6212 = vunpack.c.l.b16 %v6024
      %v6213 = vunpack.c.h.b16 %v6024
      %v6214 = vunpack.c.l.b16 %v6025
      %v6215 = vunpack.c.h.b16 %v6025
      %v6216 = vunpack.c.l.b16 %v6026
      %v6217 = vunpack.c.h.b16 %v6026
      %v6218 = vunpack.c.l.b16 %v6027
      %v6219 = vunpack.c.h.b16 %v6027
      %v6220 = vpack.c.b16 %v6092, %v6092
      %v6221 = vpack.c.b16 %v6093, %v6093
      %v6222 = vpack.c.b16 %v6094, %v6094
      %v6223 = vpack.c.b16 %v6095, %v6095
      %v6224 = vpack.c.b16 %v6096, %v6096
      %v6225 = vpack.c.b16 %v6097, %v6097
      %v6226 = vpack.c.b16 %v6098, %v6098
      %v6227 = vpack.c.b16 %v6099, %v6099
      %v6228 = vpack.c.b16 %v6100, %v6100
      %v6229 = vpack.c.b16 %v6101, %v6101
      %v6230 = vpack.c.b16 %v6102, %v6102
      %v6231 = vpack.c.b16 %v6103, %v6103
      %v6232 = vpack.c.b16 %v6104, %v6104
      %v6233 = vpack.c.b16 %v6105, %v6105
      %v6234 = vpack.c.b16 %v6106, %v6106
      %v6235 = vpack.c.b16 %v6107, %v6107
      %v6236 = vpack.c.b16 %v6108, %v6108
      %v6237 = vpack.c.b16 %v6109, %v6109
      %v6238 = vpack.c.b16 %v6110, %v6110
      %v6239 = vpack.c.b16 %v6111, %v6111
      %v6240 = vpack.c.b16 %v6112, %v6112
      %v6241 = vpack.c.b16 %v6113, %v6113
      %v6242 = vpack.c.b16 %v6114, %v6114
      %v6243 = vpack.c.b16 %v6115, %v6115
      %v6244 = vpack.c.b16 %v6116, %v6116
      %v6245 = vpack.c.b16 %v6117, %v6117
      %v6246 = vpack.c.b16 %v6118, %v6118
      %v6247 = vpack.c.b16 %v6119, %v6119
      %v6248 = vpack.c.b16 %v6120, %v6120
      %v6249 = vpack.c.b16 %v6121, %v6121
      %v6250 = vpack.c.b16 %v6122, %v6122
      %v6251 = vpack.c.b16 %v6123, %v6123
      %v6252 = vpack.c.b16 %v6124, %v6124
      %v6253 = vpack.c.b16 %v6125, %v6125
      %v6254 = vpack.c.b16 %v6126, %v6126
      %v6255 = vpack.c.b16 %v6127, %v6127
      %v6256 = vpack.c.b16 %v6128, %v6128
      %v6257 = vpack.c.b16 %v6129, %v6129
      %v6258 = vpack.c.b16 %v6130, %v6130
      %v6259 = vpack.c.b16 %v6131, %v6131
      %v6260 = vpack.c.b16 %v6132, %v6132
      %v6261 = vpack.c.b16 %v6133, %v6133
      %v6262 = vpack.c.b16 %v6134, %v6134
      %v6263 = vpack.c.b16 %v6135, %v6135
      %v6264 = vpack.c.b16 %v6136, %v6136
      %v6265 = vpack.c.b16 %v6137, %v6137
      %v6266 = vpack.c.b16 %v6138, %v6138
      %v6267 = vpack.c.b16 %v6139, %v6139
      %v6268 = vpack.c.b16 %v6140, %v6140
      %v6269 = vpack.c.b16 %v6141, %v6141
      %v6270 = vpack.c.b16 %v6142, %v6142
      %v6271 = vpack.c.b16 %v6143, %v6143
      %v6272 = vpack.c.b16 %v6144, %v6144
      %v6273 = vpack.c.b16 %v6145, %v6145
      %v6274 = vpack.c.b16 %v6146, %v6146
      %v6275 = vpack.c.b16 %v6147, %v6147
      %v6276 = vpack.c.b16 %v6148, %v6148
      %v6277 = vpack.c.b16 %v6149, %v6149
      %v6278 = vpack.c.b16 %v6150, %v6150
      %v6279 = vpack.c.b16 %v6151, %v6151
      %v6280 = vpack.c.b16 %v6152, %v6152
      %v6281 = vpack.c.b16 %v6153, %v6153
      %v6282 = vpack.c.b16 %v6154, %v6154
      %v6283 = vpack.c.b16 %v6155, %v6155
      %v6284 = vpack.c.b16 %v6156, %v6156
      %v6285 = vpack.c.b16 %v6157, %v6157
      %v6286 = vpack.c.b16 %v6158, %v6158
      %v6287 = vpack.c.b16 %v6159, %v6159
      %v6288 = vpack.c.b16 %v6160, %v6160
      %v6289 = vpack.c.b16 %v6161, %v6161
      %v6290 = vpack.c.b16 %v6162, %v6162
      %v6291 = vpack.c.b16 %v6163, %v6163
      %v6292 = vpack.c.b16 %v6164, %v6164
      %v6293 = vpack.c.b16 %v6165, %v6165
      %v6294 = vpack.c.b16 %v6166, %v6166
      %v6295 = vpack.c.b16 %v6167, %v6167
      %v6296 = vpack.c.b16 %v6168, %v6168
      %v6297 = vpack.c.b16 %v6169, %v6169
      %v6298 = vpack.c.b16 %v6170, %v6170
      %v6299 = vpack.c.b16 %v6171, %v6171
      %v6300 = vpack.c.b16 %v6172, %v6172
      %v6301 = vpack.c.b16 %v6173, %v6173
      %v6302 = vpack.c.b16 %v6174, %v6174
      %v6303 = vpack.c.b16 %v6175, %v6175
      %v6304 = vpack.c.b16 %v6176, %v6176
      %v6305 = vpack.c.b16 %v6177, %v6177
      %v6306 = vpack.c.b16 %v6178, %v6178
      %v6307 = vpack.c.b16 %v6179, %v6179
      %v6308 = vpack.c.b16 %v6180, %v6180
      %v6309 = vpack.c.b16 %v6181, %v6181
      %v6310 = vpack.c.b16 %v6182, %v6182
      %v6311 = vpack.c.b16 %v6183, %v6183
      %v6312 = vpack.c.b16 %v6184, %v6184
      %v6313 = vpack.c.b16 %v6185, %v6185
      %v6314 = vpack.c.b16 %v6186, %v6186
      %v6315 = vpack.c.b16 %v6187, %v6187
      %v6316 = vpack.c.b16 %v6188, %v6188
      %v6317 = vpack.c.b16 %v6189, %v6189
      %v6318 = vpack.c.b16 %v6190, %v6190
      %v6319 = vpack.c.b16 %v6191, %v6191
      %v6320 = vpack.c.b16 %v6192, %v6192
      %v6321 = vpack.c.b16 %v6193, %v6193
      %v6322 = vpack.c.b16 %v6194, %v6194
      %v6323 = vpack.c.b16 %v6195, %v6195
      %v6324 = vpack.c.b16 %v6196, %v6196
      %v6325 = vpack.c.b16 %v6197, %v6197
      %v6326 = vpack.c.b16 %v6198, %v6198
      %v6327 = vpack.c.b16 %v6199, %v6199
      %v6328 = vpack.c.b16 %v6200, %v6200
      %v6329 = vpack.c.b16 %v6201, %v6201
      %v6330 = vpack.c.b16 %v6202, %v6202
      %v6331 = vpack.c.b16 %v6203, %v6203
      %v6332 = vpack.c.b16 %v6204, %v6204
      %v6333 = vpack.c.b16 %v6205, %v6205
      %v6334 = vpack.c.b16 %v6206, %v6206
      %v6335 = vpack.c.b16 %v6207, %v6207
      %v6336 = vpack.c.b16 %v6208, %v6208
      %v6337 = vpack.c.b16 %v6209, %v6209
      %v6338 = vpack.c.b16 %v6210, %v6210
      %v6339 = vpack.c.b16 %v6211, %v6211
      %v6340 = vpack.c.b16 %v6212, %v6212
      %v6341 = vpack.c.b16 %v6213, %v6213
      %v6342 = vpack.c.b16 %v6214, %v6214
      %v6343 = vpack.c.b16 %v6215, %v6215
      %v6344 = vpack.c.b16 %v6216, %v6216
      %v6345 = vpack.c.b16 %v6217, %v6217
      %v6346 = vpack.c.b16 %v6218, %v6218
      %v6347 = vpack.c.b16 %v6219, %v6219
      %6476 = vst [vmem:[%s244] sm:$0xf] %v6220
      %6477 = vst [vmem:[%s244 + $0x4] sm:$0xf] %v6221
      %6478 = vst [vmem:[%s244 + $0x8] sm:$0xf] %v6222
      %6479 = vst [vmem:[%s244 + $0xc] sm:$0xf] %v6223
      %6480 = vst [vmem:[%s244 + $0x10] sm:$0xf] %v6224
      %6481 = vst [vmem:[%s244 + $0x14] sm:$0xf] %v6225
      %6482 = vst [vmem:[%s244 + $0x18] sm:$0xf] %v6226
      %6483 = vst [vmem:[%s244 + $0x1c] sm:$0xf] %v6227
      %6484 = vst [vmem:[%s244 + $0x20] sm:$0xf] %v6228
      %6485 = vst [vmem:[%s244 + $0x24] sm:$0xf] %v6229
      %6486 = vst [vmem:[%s244 + $0x28] sm:$0xf] %v6230
      %6487 = vst [vmem:[%s244 + $0x2c] sm:$0xf] %v6231
      %6488 = vst [vmem:[%s244 + $0x30] sm:$0xf] %v6232
      %6489 = vst [vmem:[%s244 + $0x34] sm:$0xf] %v6233
      %6490 = vst [vmem:[%s244 + $0x38] sm:$0xf] %v6234
      %6491 = vst [vmem:[%s244 + $0x3c] sm:$0xf] %v6235
      %6492 = vst [vmem:[%s244 + $0x40] sm:$0xf] %v6236
      %6493 = vst [vmem:[%s244 + $0x44] sm:$0xf] %v6237
      %6494 = vst [vmem:[%s244 + $0x48] sm:$0xf] %v6238
      %6495 = vst [vmem:[%s244 + $0x4c] sm:$0xf] %v6239
      %6496 = vst [vmem:[%s244 + $0x50] sm:$0xf] %v6240
      %6497 = vst [vmem:[%s244 + $0x54] sm:$0xf] %v6241
      %6498 = vst [vmem:[%s244 + $0x58] sm:$0xf] %v6242
      %6499 = vst [vmem:[%s244 + $0x5c] sm:$0xf] %v6243
      %6500 = vst [vmem:[%s244 + $0x60] sm:$0xf] %v6244
      %6501 = vst [vmem:[%s244 + $0x64] sm:$0xf] %v6245
      %6502 = vst [vmem:[%s244 + $0x68] sm:$0xf] %v6246
      %6503 = vst [vmem:[%s244 + $0x6c] sm:$0xf] %v6247
      %6504 = vst [vmem:[%s244 + $0x70] sm:$0xf] %v6248
      %6505 = vst [vmem:[%s244 + $0x74] sm:$0xf] %v6249
      %6506 = vst [vmem:[%s244 + $0x78] sm:$0xf] %v6250
      %6507 = vst [vmem:[%s244 + $0x7c] sm:$0xf] %v6251
      %6508 = vst [vmem:[%s244 + $0x80] sm:$0xf] %v6252
      %6509 = vst [vmem:[%s244 + $0x84] sm:$0xf] %v6253
      %6510 = vst [vmem:[%s244 + $0x88] sm:$0xf] %v6254
      %6511 = vst [vmem:[%s244 + $0x8c] sm:$0xf] %v6255
      %6512 = vst [vmem:[%s244 + $0x90] sm:$0xf] %v6256
      %6513 = vst [vmem:[%s244 + $0x94] sm:$0xf] %v6257
      %6514 = vst [vmem:[%s244 + $0x98] sm:$0xf] %v6258
      %6515 = vst [vmem:[%s244 + $0x9c] sm:$0xf] %v6259
      %6516 = vst [vmem:[%s244 + $0xa0] sm:$0xf] %v6260
      %6517 = vst [vmem:[%s244 + $0xa4] sm:$0xf] %v6261
      %6518 = vst [vmem:[%s244 + $0xa8] sm:$0xf] %v6262
      %6519 = vst [vmem:[%s244 + $0xac] sm:$0xf] %v6263
      %6520 = vst [vmem:[%s244 + $0xb0] sm:$0xf] %v6264
      %6521 = vst [vmem:[%s244 + $0xb4] sm:$0xf] %v6265
      %6522 = vst [vmem:[%s244 + $0xb8] sm:$0xf] %v6266
      %6523 = vst [vmem:[%s244 + $0xbc] sm:$0xf] %v6267
      %6524 = vst [vmem:[%s244 + $0xc0] sm:$0xf] %v6268
      %6525 = vst [vmem:[%s244 + $0xc4] sm:$0xf] %v6269
      %6526 = vst [vmem:[%s244 + $0xc8] sm:$0xf] %v6270
      %6527 = vst [vmem:[%s244 + $0xcc] sm:$0xf] %v6271
      %6528 = vst [vmem:[%s244 + $0xd0] sm:$0xf] %v6272
      %6529 = vst [vmem:[%s244 + $0xd4] sm:$0xf] %v6273
      %6530 = vst [vmem:[%s244 + $0xd8] sm:$0xf] %v6274
      %6531 = vst [vmem:[%s244 + $0xdc] sm:$0xf] %v6275
      %6532 = vst [vmem:[%s244 + $0xe0] sm:$0xf] %v6276
      %6533 = vst [vmem:[%s244 + $0xe4] sm:$0xf] %v6277
      %6534 = vst [vmem:[%s244 + $0xe8] sm:$0xf] %v6278
      %6535 = vst [vmem:[%s244 + $0xec] sm:$0xf] %v6279
      %6536 = vst [vmem:[%s244 + $0xf0] sm:$0xf] %v6280
      %6537 = vst [vmem:[%s244 + $0xf4] sm:$0xf] %v6281
      %6538 = vst [vmem:[%s244 + $0xf8] sm:$0xf] %v6282
      %6539 = vst [vmem:[%s244 + $0xfc] sm:$0xf] %v6283
      %6540 = vst [vmem:[%s244 + $0x100] sm:$0xf] %v6284
      %6541 = vst [vmem:[%s244 + $0x104] sm:$0xf] %v6285
      %6542 = vst [vmem:[%s244 + $0x108] sm:$0xf] %v6286
      %6543 = vst [vmem:[%s244 + $0x10c] sm:$0xf] %v6287
      %6544 = vst [vmem:[%s244 + $0x110] sm:$0xf] %v6288
      %6545 = vst [vmem:[%s244 + $0x114] sm:$0xf] %v6289
      %6546 = vst [vmem:[%s244 + $0x118] sm:$0xf] %v6290
      %6547 = vst [vmem:[%s244 + $0x11c] sm:$0xf] %v6291
      %6548 = vst [vmem:[%s244 + $0x120] sm:$0xf] %v6292
      %6549 = vst [vmem:[%s244 + $0x124] sm:$0xf] %v6293
      %6550 = vst [vmem:[%s244 + $0x128] sm:$0xf] %v6294
      %6551 = vst [vmem:[%s244 + $0x12c] sm:$0xf] %v6295
      %6552 = vst [vmem:[%s244 + $0x130] sm:$0xf] %v6296
      %6553 = vst [vmem:[%s244 + $0x134] sm:$0xf] %v6297
      %6554 = vst [vmem:[%s244 + $0x138] sm:$0xf] %v6298
      %6555 = vst [vmem:[%s244 + $0x13c] sm:$0xf] %v6299
      %6556 = vst [vmem:[%s244 + $0x140] sm:$0xf] %v6300
      %6557 = vst [vmem:[%s244 + $0x144] sm:$0xf] %v6301
      %6558 = vst [vmem:[%s244 + $0x148] sm:$0xf] %v6302
      %6559 = vst [vmem:[%s244 + $0x14c] sm:$0xf] %v6303
      %6560 = vst [vmem:[%s244 + $0x150] sm:$0xf] %v6304
      %6561 = vst [vmem:[%s244 + $0x154] sm:$0xf] %v6305
      %6562 = vst [vmem:[%s244 + $0x158] sm:$0xf] %v6306
      %6563 = vst [vmem:[%s244 + $0x15c] sm:$0xf] %v6307
      %6564 = vst [vmem:[%s244 + $0x160] sm:$0xf] %v6308
      %6565 = vst [vmem:[%s244 + $0x164] sm:$0xf] %v6309
      %6566 = vst [vmem:[%s244 + $0x168] sm:$0xf] %v6310
      %6567 = vst [vmem:[%s244 + $0x16c] sm:$0xf] %v6311
      %6568 = vst [vmem:[%s244 + $0x170] sm:$0xf] %v6312
      %6569 = vst [vmem:[%s244 + $0x174] sm:$0xf] %v6313
      %6570 = vst [vmem:[%s244 + $0x178] sm:$0xf] %v6314
      %6571 = vst [vmem:[%s244 + $0x17c] sm:$0xf] %v6315
      %6572 = vst [vmem:[%s244 + $0x180] sm:$0xf] %v6316
      %6573 = vst [vmem:[%s244 + $0x184] sm:$0xf] %v6317
      %6574 = vst [vmem:[%s244 + $0x188] sm:$0xf] %v6318
      %6575 = vst [vmem:[%s244 + $0x18c] sm:$0xf] %v6319
      %6576 = vst [vmem:[%s244 + $0x190] sm:$0xf] %v6320
      %6577 = vst [vmem:[%s244 + $0x194] sm:$0xf] %v6321
      %6578 = vst [vmem:[%s244 + $0x198] sm:$0xf] %v6322
      %6579 = vst [vmem:[%s244 + $0x19c] sm:$0xf] %v6323
      %6580 = vst [vmem:[%s244 + $0x1a0] sm:$0xf] %v6324
      %6581 = vst [vmem:[%s244 + $0x1a4] sm:$0xf] %v6325
      %6582 = vst [vmem:[%s244 + $0x1a8] sm:$0xf] %v6326
      %6583 = vst [vmem:[%s244 + $0x1ac] sm:$0xf] %v6327
      %6584 = vst [vmem:[%s244 + $0x1b0] sm:$0xf] %v6328
      %6585 = vst [vmem:[%s244 + $0x1b4] sm:$0xf] %v6329
      %6586 = vst [vmem:[%s244 + $0x1b8] sm:$0xf] %v6330
      %6587 = vst [vmem:[%s244 + $0x1bc] sm:$0xf] %v6331
      %6588 = vst [vmem:[%s244 + $0x1c0] sm:$0xf] %v6332
      %6589 = vst [vmem:[%s244 + $0x1c4] sm:$0xf] %v6333
      %6590 = vst [vmem:[%s244 + $0x1c8] sm:$0xf] %v6334
      %6591 = vst [vmem:[%s244 + $0x1cc] sm:$0xf] %v6335
      %6592 = vst [vmem:[%s244 + $0x1d0] sm:$0xf] %v6336
      %6593 = vst [vmem:[%s244 + $0x1d4] sm:$0xf] %v6337
      %6594 = vst [vmem:[%s244 + $0x1d8] sm:$0xf] %v6338
      %6595 = vst [vmem:[%s244 + $0x1dc] sm:$0xf] %v6339
      %6596 = vst [vmem:[%s244 + $0x1e0] sm:$0xf] %v6340
      %6597 = vst [vmem:[%s244 + $0x1e4] sm:$0xf] %v6341
      %6598 = vst [vmem:[%s244 + $0x1e8] sm:$0xf] %v6342
      %6599 = vst [vmem:[%s244 + $0x1ec] sm:$0xf] %v6343
      %6600 = vst [vmem:[%s244 + $0x1f0] sm:$0xf] %v6344
      %6601 = vst [vmem:[%s244 + $0x1f4] sm:$0xf] %v6345
      %6602 = vst [vmem:[%s244 + $0x1f8] sm:$0xf] %v6346
      %6603 = vst [vmem:[%s244 + $0x1fc] sm:$0xf] %v6347
      %p6604 = scmp.lt.s32.totalorder %s16, 1
      %s6605 = scalar_select %p6604, %s16, 1
      %s6606 = smul.addr %s6605, 128
      %s6607 = smul.addr %s6606, 4
      %s6608 = scalar_lea.vmem %s5, %s6607
      // Predicated region
      $region41: #{netD_forward.5} parent=39 // pred_check
        %p6609 = pneg %p149
      $region42: #{netD_forward.5} parent=39 // pred_check_branch
        %6611 = sbr.rel (%p6609) target = $region44
      $region43: #{netD_forward.5} parent=39 // pred_region
        _
      $region44: #{netD_forward.5} parent=39 // pred_fallthru
        _
    $region40: #{netD_forward.5} parent=5 // pred_fallthru
      _
    %p6612 = scmp.le.s32.totalorder 2, %s11
    // Predicated region
    $region45: #{netD_forward.5} parent=5 // pred_check
      %p6613 = pneg %p6612
    $region46: #{netD_forward.5} parent=5 // pred_check_branch
      %6615 = sbr.rel (%p6613) target = $region48
    $region47: #{netD_forward.5} parent=5 // pred_region
      %s6616 = ssub.s32 %s11, 2
      // Predicated region
      $region49: #{netD_forward.5} parent=47 // pred_check
        %p6617 = pneg %p155
      $region50: #{netD_forward.5} parent=47 // pred_check_branch
        %6619 = sbr.rel (%p6617) target = $region52
      $region51: #{netD_forward.5} parent=47 // pred_region
        %p6620 = scmp.lt.s32.totalorder %s17, 1
        %s6621 = scalar_select %p6620, %s17, 1
        %s6622 = smul.addr %s6621, 128
        %s6623 = smul.addr %s6622, 4
        %s6624 = scalar_lea.vmem %s5, %s6623
      $region52: #{netD_forward.5} parent=47 // pred_fallthru
        _
    $region48: #{netD_forward.5} parent=5 // pred_fallthru
      _
  $region6: #{netD_forward.5} parent=0 // loop_footer
    %s15 = sadd.s32 1, %s11
  $region7: #{netD_forward.5} parent=0 // loop_footer_branch
    %10 = sbr.rel target = $region3
  $region8: #{netD_forward.5} parent=0 // loop_exit
    _

// kernel: netD_forward.6
$region0: #{netD_forward.6}
  #allocation0 [shape = 'u32[]', space=smem, size = 0x4, offset = 0x4, fixed_abs, tag = 'smem constant byte address 0x4 - core index']
  #allocation1 [shape = 'u32[144,128]{1,0:T(1,128)}', space=vmem, size = 0x12000, scoped, tag = 'internal scratch']
  %s0 = inlined_call_operand.vmem [shape: bf16[2,272,32], index: 0, kind: input, shape index: {}]
  %s1 = inlined_call_operand.vmem [shape: bf16[2,272,32], index: 1, kind: input, shape index: {}]
  %s2 = inlined_call_operand.vmem [shape: bf16[4,32,128], index: 2, kind: input, shape index: {}]
  %s3 = inlined_call_operand.vmem [shape: f32[1,128], index: 3, kind: input, shape index: {}]
  %s4 = inlined_call_operand.vmem [shape: f32[1,128], index: 4, kind: input, shape index: {}]
  %s5 = inlined_call_operand.vmem [shape: bf16[2,256,128], index: 5, kind: output, shape index: {}]
  %s6 = sld [smem:[#allocation0]]
  $region53: #{netD_forward.6} parent=0
    _
  %s8 = ssub.s32 1, %s6
  %s9 = scalar_select 0, %s8, %s6
  loop: start=0, step=1, limit=4
  $region2: #{netD_forward.6} parent=0 // loop_pre_header
    _
  $region3: #{netD_forward.6} parent=0 // loop_header
    %s11 = sphi 0, %s15
    %p12 = scmp.ge.s32.totalorder %s11, 4
    %s21 = sphi 0, %s23
    %s24 = sphi 0, %s21
    %s25 = sphi 0, %s24
    %s41 = sphi 0, %s25
    %s47 = sphi 0, %s49
    %s50 = sphi 0, %s47
    %s51 = sphi 0, %s50
    %s67 = sphi 0, %s51
    %s71 = sphi 0, %s71
    %s73 = sphi 0, %s71
    %s74 = sphi 0, %s73
    %s88 = sphi 0, %s74
    %s92 = sphi 0, %s92
    %s94 = sphi 0, %s92
    %s95 = sphi 0, %s94
    %s109 = sphi 0, %s95
    %s113 = sphi 0, %s113
    %s115 = sphi 0, %s113
    %s116 = sphi 0, %s115
    %s130 = sphi 0, %s116
    %s136 = sphi 0, %s138
    %s139 = sphi 0, %s136
    %s140 = sphi 0, %s139
    %s156 = sphi 0, %s140
  $region4: #{netD_forward.6} parent=0 // loop_header_branch
    %14 = sbr.rel (%p12) target = $region8
  $region5: #{netD_forward.6} parent=0 // loop_body
    %s16 = ssub.s32 %s11, 1
    %s17 = ssub.s32 %s11, 2
    %s18 = sadd.s32 %s11, 1
    %s19 = ssub.s32 %s11, %s18
    %p20 = scmp.eq.s32.totalorder %s19, 0
    %s22 = sadd.s32 %s21, 1
    %s23 = scalar_select %p20, %s21, %s22
    %p26 = pneg %p20
    %p27 = scmp.eq.s32.totalorder %s11, 1
    %p28 = por %p26, %p27
    %p29 = scmp.ne.s32.totalorder %s21, %s24
    %p30 = scmp.eq.s32.totalorder %s11, 0
    %p31 = por %p29, %p30
    %p32 = scmp.ne.s32.totalorder %s21, %s24
    %p33 = scmp.eq.s32.totalorder %s16, 1
    %p34 = por %p32, %p33
    %p35 = scmp.ne.s32.totalorder %s24, %s25
    %p36 = scmp.eq.s32.totalorder %s16, 0
    %p37 = por %p35, %p36
    %p38 = scmp.ne.s32.totalorder %s24, %s25
    %p39 = scmp.eq.s32.totalorder %s17, 1
    %p40 = por %p38, %p39
    %p42 = scmp.ne.s32.totalorder %s25, %s41
    %p43 = scmp.eq.s32.totalorder %s17, 0
    %p44 = por %p42, %p43
    %s45 = ssub.s32 %s11, %s18
    %p46 = scmp.eq.s32.totalorder %s45, 0
    %s48 = sadd.s32 %s47, 1
    %s49 = scalar_select %p46, %s47, %s48
    %p52 = pneg %p46
    %p53 = scmp.eq.s32.totalorder %s11, 1
    %p54 = por %p52, %p53
    %p55 = scmp.ne.s32.totalorder %s47, %s50
    %p56 = scmp.eq.s32.totalorder %s11, 0
    %p57 = por %p55, %p56
    %p58 = scmp.ne.s32.totalorder %s47, %s50
    %p59 = scmp.eq.s32.totalorder %s16, 1
    %p60 = por %p58, %p59
    %p61 = scmp.ne.s32.totalorder %s50, %s51
    %p62 = scmp.eq.s32.totalorder %s16, 0
    %p63 = por %p61, %p62
    %p64 = scmp.ne.s32.totalorder %s50, %s51
    %p65 = scmp.eq.s32.totalorder %s17, 1
    %p66 = por %p64, %p65
    %p68 = scmp.ne.s32.totalorder %s51, %s67
    %p69 = scmp.eq.s32.totalorder %s17, 0
    %p70 = por %p68, %p69
    %s72 = sadd.s32 %s71, 1
    %p75 = scmp.eq.s32.totalorder %s11, 1
    %p76 = scmp.ne.s32.totalorder %s71, %s73
    %p77 = scmp.eq.s32.totalorder %s11, 0
    %p78 = por %p76, %p77
    %p79 = scmp.ne.s32.totalorder %s71, %s73
    %p80 = scmp.eq.s32.totalorder %s16, 1
    %p81 = por %p79, %p80
    %p82 = scmp.ne.s32.totalorder %s73, %s74
    %p83 = scmp.eq.s32.totalorder %s16, 0
    %p84 = por %p82, %p83
    %p85 = scmp.ne.s32.totalorder %s73, %s74
    %p86 = scmp.eq.s32.totalorder %s17, 1
    %p87 = por %p85, %p86
    %p89 = scmp.ne.s32.totalorder %s74, %s88
    %p90 = scmp.eq.s32.totalorder %s17, 0
    %p91 = por %p89, %p90
    %s93 = sadd.s32 %s92, 1
    %p96 = scmp.eq.s32.totalorder %s11, 1
    %p97 = scmp.ne.s32.totalorder %s92, %s94
    %p98 = scmp.eq.s32.totalorder %s11, 0
    %p99 = por %p97, %p98
    %p100 = scmp.ne.s32.totalorder %s92, %s94
    %p101 = scmp.eq.s32.totalorder %s16, 1
    %p102 = por %p100, %p101
    %p103 = scmp.ne.s32.totalorder %s94, %s95
    %p104 = scmp.eq.s32.totalorder %s16, 0
    %p105 = por %p103, %p104
    %p106 = scmp.ne.s32.totalorder %s94, %s95
    %p107 = scmp.eq.s32.totalorder %s17, 1
    %p108 = por %p106, %p107
    %p110 = scmp.ne.s32.totalorder %s95, %s109
    %p111 = scmp.eq.s32.totalorder %s17, 0
    %p112 = por %p110, %p111
    %s114 = sadd.s32 %s113, 1
    %p117 = scmp.eq.s32.totalorder %s11, 1
    %p118 = scmp.ne.s32.totalorder %s113, %s115
    %p119 = scmp.eq.s32.totalorder %s11, 0
    %p120 = por %p118, %p119
    %p121 = scmp.ne.s32.totalorder %s113, %s115
    %p122 = scmp.eq.s32.totalorder %s16, 1
    %p123 = por %p121, %p122
    %p124 = scmp.ne.s32.totalorder %s115, %s116
    %p125 = scmp.eq.s32.totalorder %s16, 0
    %p126 = por %p124, %p125
    %p127 = scmp.ne.s32.totalorder %s115, %s116
    %p128 = scmp.eq.s32.totalorder %s17, 1
    %p129 = por %p127, %p128
    %p131 = scmp.ne.s32.totalorder %s116, %s130
    %p132 = scmp.eq.s32.totalorder %s17, 0
    %p133 = por %p131, %p132
    %s134 = ssub.s32 %s11, %s18
    %p135 = scmp.eq.s32.totalorder %s134, 0
    %s137 = sadd.s32 %s136, 1
    %s138 = scalar_select %p135, %s136, %s137
    %p141 = pneg %p135
    %p142 = scmp.eq.s32.totalorder %s11, 1
    %p143 = por %p141, %p142
    %p144 = scmp.ne.s32.totalorder %s136, %s139
    %p145 = scmp.eq.s32.totalorder %s11, 0
    %p146 = por %p144, %p145
    %p147 = scmp.ne.s32.totalorder %s136, %s139
    %p148 = scmp.eq.s32.totalorder %s16, 1
    %p149 = por %p147, %p148
    %p150 = scmp.ne.s32.totalorder %s139, %s140
    %p151 = scmp.eq.s32.totalorder %s16, 0
    %p152 = por %p150, %p151
    %p153 = scmp.ne.s32.totalorder %s139, %s140
    %p154 = scmp.eq.s32.totalorder %s17, 1
    %p155 = por %p153, %p154
    %p157 = scmp.ne.s32.totalorder %s140, %s156
    %p158 = scmp.eq.s32.totalorder %s17, 0
    %p159 = por %p157, %p158
    %p160 = scmp.le.s32.totalorder 1, %s11
    %p161 = scmp.lt.s32.totalorder %s11, 3
    %p162 = pnand %p160, %p161
    %p163 = pneg %p162
    // Predicated region
    $region9: #{netD_forward.6} parent=5 // pred_check
      _
    $region10: #{netD_forward.6} parent=5 // pred_check_branch
      %165 = sbr.rel (%p162) target = $region12
    $region11: #{netD_forward.6} parent=5 // pred_region
      %s166 = ssub.s32 %s11, 1
      // Predicated region
      $region13: #{netD_forward.6} parent=11 // pred_check
        %p167 = pneg %p84
      $region14: #{netD_forward.6} parent=11 // pred_check_branch
        %169 = sbr.rel (%p167) target = $region16
      $region15: #{netD_forward.6} parent=11 // pred_region
        _
      $region16: #{netD_forward.6} parent=11 // pred_fallthru
        _
      // Predicated region
      $region17: #{netD_forward.6} parent=11 // pred_check
        %p170 = pneg %p105
      $region18: #{netD_forward.6} parent=11 // pred_check_branch
        %172 = sbr.rel (%p170) target = $region20
      $region19: #{netD_forward.6} parent=11 // pred_region
        _
      $region20: #{netD_forward.6} parent=11 // pred_fallthru
        _
      // Predicated region
      $region21: #{netD_forward.6} parent=11 // pred_check
        %p173 = pneg %p126
      $region22: #{netD_forward.6} parent=11 // pred_check_branch
        %175 = sbr.rel (%p173) target = $region24
      $region23: #{netD_forward.6} parent=11 // pred_region
        _
      $region24: #{netD_forward.6} parent=11 // pred_fallthru
        _
    $region12: #{netD_forward.6} parent=5 // pred_fallthru
      _
    %p176 = scmp.lt.s32.totalorder %s11, 2
    // Predicated region
    $region25: #{netD_forward.6} parent=5 // pred_check
      %p177 = pneg %p176
    $region26: #{netD_forward.6} parent=5 // pred_check_branch
      %179 = sbr.rel (%p177) target = $region28
    $region27: #{netD_forward.6} parent=5 // pred_region
      // Predicated region
      $region29: #{netD_forward.6} parent=27 // pred_check
        %p180 = pneg %p31
      $region30: #{netD_forward.6} parent=27 // pred_check_branch
        %182 = sbr.rel (%p180) target = $region32
      $region31: #{netD_forward.6} parent=27 // pred_region
        %p183 = scmp.lt.s32.totalorder %s11, 1
        %s184 = scalar_select %p183, %s11, 1
        %s185 = smul.addr %s184, 34
        %s186 = smul.addr %s185, 4
        %s187 = scalar_lea.vmem %s0, %s186
      $region32: #{netD_forward.6} parent=27 // pred_fallthru
        _
      // Predicated region
      $region33: #{netD_forward.6} parent=27 // pred_check
        %p188 = pneg %p57
      $region34: #{netD_forward.6} parent=27 // pred_check_branch
        %190 = sbr.rel (%p188) target = $region36
      $region35: #{netD_forward.6} parent=27 // pred_region
        %p191 = scmp.lt.s32.totalorder %s11, 1
        %s192 = scalar_select %p191, %s11, 1
        %s193 = smul.addr %s192, 34
        %s194 = smul.addr %s193, 4
        %s195 = scalar_lea.vmem %s1, %s194
      $region36: #{netD_forward.6} parent=27 // pred_fallthru
        _
    $region28: #{netD_forward.6} parent=5 // pred_fallthru
      _
    %p196 = scmp.le.s32.totalorder 1, %s11
    %p197 = scmp.lt.s32.totalorder %s11, 3
    %p198 = pnand %p196, %p197
    %p199 = pneg %p198
    // Predicated region
    $region37: #{netD_forward.6} parent=5 // pred_check
      _
    $region38: #{netD_forward.6} parent=5 // pred_check_branch
      %201 = sbr.rel (%p198) target = $region40
    $region39: #{netD_forward.6} parent=5 // pred_region
      %s202 = ssub.s32 %s11, 1
      %p203 = scmp.lt.s32.totalorder %s16, 1
      %s204 = scalar_select %p203, %s16, 1
      %s205 = smul.addr %s204, 34
      %s206 = smul.addr %s205, 4
      %s207 = scalar_lea.vmem %s0, %s206
      %p208 = pneg %p37
      %p209 = pneg %p34
      %p210 = scmp.lt.s32.totalorder %s16, 1
      %s211 = scalar_select %p210, %s16, 1
      %s212 = smul.addr %s211, 34
      %s213 = smul.addr %s212, 4
      %s214 = scalar_lea.vmem %s1, %s213
      %p215 = pneg %p63
      %p216 = pneg %p60
      %p217 = pneg %p84
      %p218 = pneg %p81
      %p219 = pneg %p105
      %p220 = pneg %p102
      %p221 = pneg %p126
      %p222 = pneg %p123
      %p223 = pneg %p152
      %p224 = pneg %p149
      %p225 = scmp.lt.s32.totalorder %s16, 1
      %s226 = scalar_select %p225, %s16, 1
      %s227 = smul.addr %s226, 32
      %s228 = smul.addr %s227, 4
      %s229 = scalar_lea.vmem %s5, %s228
      %p230 = scmp.lt.s32.totalorder %s16, 1
      %s231 = scalar_select %p230, %s16, 1
      %s232 = smul.addr %s231, 34
      %s233 = smul.addr %s232, 4
      %s234 = scalar_lea.vmem %s0, %s233
      %p235 = scmp.lt.s32.totalorder %s16, 1
      %s236 = scalar_select %p235, %s16, 1
      %s237 = smul.addr %s236, 34
      %s238 = smul.addr %s237, 4
      %s239 = scalar_lea.vmem %s1, %s238
      %p240 = scmp.lt.s32.totalorder %s16, 1
      %s241 = scalar_select %p240, %s16, 1
      %s242 = smul.addr %s241, 32
      %s243 = smul.addr %s242, 4
      %s244 = scalar_lea.vmem %s5, %s243
      %v246 = vld [vmem:[%s234] sm:$0xf]
      %v247 = vld [vmem:[%s234 + $0x4] sm:$0xf]
      %v248 = vld [vmem:[%s234 + $0x8] sm:$0xf]
      %v249 = vld [vmem:[%s234 + $0xc] sm:$0xf]
      %v250 = vld [vmem:[%s234 + $0x10] sm:$0xf]
      %v251 = vld [vmem:[%s234 + $0x14] sm:$0xf]
      %v252 = vld [vmem:[%s234 + $0x18] sm:$0xf]
      %v253 = vld [vmem:[%s234 + $0x1c] sm:$0xf]
      %v254 = vld [vmem:[%s234 + $0x20] sm:$0xf]
      %v255 = vld [vmem:[%s234 + $0x24] sm:$0xf]
      %v256 = vld [vmem:[%s234 + $0x28] sm:$0xf]
      %v257 = vld [vmem:[%s234 + $0x2c] sm:$0xf]
      %v258 = vld [vmem:[%s234 + $0x30] sm:$0xf]
      %v259 = vld [vmem:[%s234 + $0x34] sm:$0xf]
      %v260 = vld [vmem:[%s234 + $0x38] sm:$0xf]
      %v261 = vld [vmem:[%s234 + $0x3c] sm:$0xf]
      %v262 = vld [vmem:[%s234 + $0x40] sm:$0xf]
      %v263 = vld [vmem:[%s234 + $0x44] sm:$0xf]
      %v264 = vld [vmem:[%s234 + $0x48] sm:$0xf]
      %v265 = vld [vmem:[%s234 + $0x4c] sm:$0xf]
      %v266 = vld [vmem:[%s234 + $0x50] sm:$0xf]
      %v267 = vld [vmem:[%s234 + $0x54] sm:$0xf]
      %v268 = vld [vmem:[%s234 + $0x58] sm:$0xf]
      %v269 = vld [vmem:[%s234 + $0x5c] sm:$0xf]
      %v270 = vld [vmem:[%s234 + $0x60] sm:$0xf]
      %v271 = vld [vmem:[%s234 + $0x64] sm:$0xf]
      %v272 = vld [vmem:[%s234 + $0x68] sm:$0xf]
      %v273 = vld [vmem:[%s234 + $0x6c] sm:$0xf]
      %v274 = vld [vmem:[%s234 + $0x70] sm:$0xf]
      %v275 = vld [vmem:[%s234 + $0x74] sm:$0xf]
      %v276 = vld [vmem:[%s234 + $0x78] sm:$0xf]
      %v277 = vld [vmem:[%s234 + $0x7c] sm:$0xf]
      %v278 = vld [vmem:[%s2] sm:$0xf]
      %v279 = vld [vmem:[%s2 + $0x4] sm:$0xf]
      %v280 = vld [vmem:[%s2 + $0x8] sm:$0xf]
      %v281 = vld [vmem:[%s2 + $0xc] sm:$0xf]
      %v282 = vld [vmem:[%s239] sm:$0xf]
      %v283 = vld [vmem:[%s239 + $0x4] sm:$0xf]
      %v284 = vld [vmem:[%s239 + $0x8] sm:$0xf]
      %v285 = vld [vmem:[%s239 + $0xc] sm:$0xf]
      %v286 = vld [vmem:[%s239 + $0x10] sm:$0xf]
      %v287 = vld [vmem:[%s239 + $0x14] sm:$0xf]
      %v288 = vld [vmem:[%s239 + $0x18] sm:$0xf]
      %v289 = vld [vmem:[%s239 + $0x1c] sm:$0xf]
      %v290 = vld [vmem:[%s239 + $0x20] sm:$0xf]
      %v291 = vld [vmem:[%s239 + $0x24] sm:$0xf]
      %v292 = vld [vmem:[%s239 + $0x28] sm:$0xf]
      %v293 = vld [vmem:[%s239 + $0x2c] sm:$0xf]
      %v294 = vld [vmem:[%s239 + $0x30] sm:$0xf]
      %v295 = vld [vmem:[%s239 + $0x34] sm:$0xf]
      %v296 = vld [vmem:[%s239 + $0x38] sm:$0xf]
      %v297 = vld [vmem:[%s239 + $0x3c] sm:$0xf]
      %v298 = vld [vmem:[%s239 + $0x40] sm:$0xf]
      %v299 = vld [vmem:[%s239 + $0x44] sm:$0xf]
      %v300 = vld [vmem:[%s239 + $0x48] sm:$0xf]
      %v301 = vld [vmem:[%s239 + $0x4c] sm:$0xf]
      %v302 = vld [vmem:[%s239 + $0x50] sm:$0xf]
      %v303 = vld [vmem:[%s239 + $0x54] sm:$0xf]
      %v304 = vld [vmem:[%s239 + $0x58] sm:$0xf]
      %v305 = vld [vmem:[%s239 + $0x5c] sm:$0xf]
      %v306 = vld [vmem:[%s239 + $0x60] sm:$0xf]
      %v307 = vld [vmem:[%s239 + $0x64] sm:$0xf]
      %v308 = vld [vmem:[%s239 + $0x68] sm:$0xf]
      %v309 = vld [vmem:[%s239 + $0x6c] sm:$0xf]
      %v310 = vld [vmem:[%s239 + $0x70] sm:$0xf]
      %v311 = vld [vmem:[%s239 + $0x74] sm:$0xf]
      %v312 = vld [vmem:[%s239 + $0x78] sm:$0xf]
      %v313 = vld [vmem:[%s239 + $0x7c] sm:$0xf]
      %s314 = scalar_lea.vmem %s2, 16
      %v315 = vld [vmem:[%s314] sm:$0xf]
      %v316 = vld [vmem:[%s314 + $0x4] sm:$0xf]
      %v317 = vld [vmem:[%s314 + $0x8] sm:$0xf]
      %v318 = vld [vmem:[%s314 + $0xc] sm:$0xf]
      %v351 = vunpack.c.l.b16 %v282
      %v352 = vunpack.c.l.b16 %v283
      %v353 = vunpack.c.l.b16 %v284
      %v354 = vunpack.c.l.b16 %v285
      %v355 = vunpack.c.l.b16 %v286
      %v356 = vunpack.c.l.b16 %v287
      %v357 = vunpack.c.l.b16 %v288
      %v358 = vunpack.c.l.b16 %v289
      %v359 = vunpack.c.l.b16 %v290
      %v360 = vunpack.c.l.b16 %v291
      %v361 = vunpack.c.l.b16 %v292
      %v362 = vunpack.c.l.b16 %v293
      %v363 = vunpack.c.l.b16 %v294
      %v364 = vunpack.c.l.b16 %v295
      %v365 = vunpack.c.l.b16 %v296
      %v366 = vunpack.c.l.b16 %v297
      %v367 = vunpack.c.l.b16 %v298
      %v368 = vunpack.c.l.b16 %v299
      %v369 = vunpack.c.l.b16 %v300
      %v370 = vunpack.c.l.b16 %v301
      %v371 = vunpack.c.l.b16 %v302
      %v372 = vunpack.c.l.b16 %v303
      %v373 = vunpack.c.l.b16 %v304
      %v374 = vunpack.c.l.b16 %v305
      %v375 = vunpack.c.l.b16 %v306
      %v376 = vunpack.c.l.b16 %v307
      %v377 = vunpack.c.l.b16 %v308
      %v378 = vunpack.c.l.b16 %v309
      %v379 = vunpack.c.l.b16 %v310
      %v380 = vunpack.c.l.b16 %v311
      %v381 = vunpack.c.l.b16 %v312
      %v382 = vunpack.c.l.b16 %v313
      %v383 = vpack.c.b16 %v352, %v351
      %v384 = vpack.c.b16 %v354, %v353
      %v385 = vpack.c.b16 %v356, %v355
      %v386 = vpack.c.b16 %v358, %v357
      %v387 = vpack.c.b16 %v360, %v359
      %v388 = vpack.c.b16 %v362, %v361
      %v389 = vpack.c.b16 %v364, %v363
      %v390 = vpack.c.b16 %v366, %v365
      %v391 = vpack.c.b16 %v368, %v367
      %v392 = vpack.c.b16 %v370, %v369
      %v393 = vpack.c.b16 %v372, %v371
      %v394 = vpack.c.b16 %v374, %v373
      %v395 = vpack.c.b16 %v376, %v375
      %v396 = vpack.c.b16 %v378, %v377
      %v397 = vpack.c.b16 %v380, %v379
      %v398 = vpack.c.b16 %v382, %v381
      %v403 = vunpack.c.l.b16 %v315
      %v404 = vunpack.c.l.b16 %v316
      %v405 = vunpack.c.l.b16 %v317
      %v406 = vunpack.c.l.b16 %v318
      %v407 = vpack.c.b16 %v404, %v403
      %v408 = vpack.c.b16 %v406, %v405
      %vm411 = vcmask 261120
      %v413 = vsel %vm411, %v383, 0
      %v416 = vsel %vm411, %v384, 0
      %v419 = vsel %vm411, %v385, 0
      %v422 = vsel %vm411, %v386, 0
      %v425 = vsel %vm411, %v387, 0
      %v428 = vsel %vm411, %v388, 0
      %v431 = vsel %vm411, %v389, 0
      %v434 = vsel %vm411, %v390, 0
      %v437 = vsel %vm411, %v391, 0
      %v440 = vsel %vm411, %v392, 0
      %v443 = vsel %vm411, %v393, 0
      %v446 = vsel %vm411, %v394, 0
      %v449 = vsel %vm411, %v395, 0
      %v452 = vsel %vm411, %v396, 0
      %v455 = vsel %vm411, %v397, 0
      %v458 = vsel %vm411, %v398, 0
      %460 = vmatprep.subr.bf16.mxu0 0
      %461 = vmatpush1.bf16.msra.mxu0 %v407
      %462 = vmatprep.subr.bf16.mxu0 0
      %463 = vmatpush1.bf16.msra.mxu0 %v408
      %464 = vmatprep.subr.bf16.mxu0 0
      %465 = vmatpush1.bf16.msra.mxu0 0
      %466 = vmatprep.subr.bf16.mxu0 0
      %467 = vmatpush1.bf16.msra.mxu0 0
      %468 = vmatprep.subr.bf16.mxu0 0
      %469 = vmatpush1.bf16.msra.mxu0 0
      %470 = vmatprep.subr.bf16.mxu0 0
      %471 = vmatpush1.bf16.msra.mxu0 0
      %472 = vmatprep.subr.bf16.mxu0 0
      %473 = vmatpush1.bf16.msra.mxu0 0
      %474 = vmatprep.subr.bf16.mxu0 0
      %475 = vmatpush1.bf16.msra.mxu0 0
      %476 = vmatprep.subr.bf16.mxu0 0
      %477 = vmatpush1.bf16.msra.mxu0 0
      %478 = vmatprep.subr.bf16.mxu0 0
      %479 = vmatpush1.bf16.msra.mxu0 0
      %480 = vmatprep.subr.bf16.mxu0 0
      %481 = vmatpush1.bf16.msra.mxu0 0
      %482 = vmatprep.subr.bf16.mxu0 0
      %483 = vmatpush1.bf16.msra.mxu0 0
      %484 = vmatprep.subr.bf16.mxu0 0
      %485 = vmatpush1.bf16.msra.mxu0 0
      %486 = vmatprep.subr.bf16.mxu0 0
      %487 = vmatpush1.bf16.msra.mxu0 0
      %488 = vmatprep.subr.bf16.mxu0 0
      %489 = vmatpush1.bf16.msra.mxu0 0
      %490 = vmatprep.subr.bf16.mxu0 0
      %491 = vmatpush1.bf16.msra.mxu0 0
      %492 = vmatprep.mubr.bf16.mxu0 0
      %493 = vmatmul.mubr.bf16.gmra.mrb[0].mxu0 %v413
      %v494 = vpop.f32.mrb[0].mxu0
      %v495 = vadd.f32 0.0, %v494
      %v496 = vpop.f32.mrb[0].mxu0
      %v497 = vpop.f32.mrb[0].mxu0
      %v498 = vadd.f32 0.0, %v497
      %v499 = vpop.f32.mrb[0].mxu0
      %500 = vmatprep.mubr.bf16.mxu0 0
      %501 = vmatmul.mubr.bf16.gmra.mrb[0].mxu0 %v416
      %v502 = vpop.f32.mrb[0].mxu0
      %v503 = vadd.f32 0.0, %v502
      %v504 = vpop.f32.mrb[0].mxu0
      %v505 = vpop.f32.mrb[0].mxu0
      %v506 = vadd.f32 0.0, %v505
      %v507 = vpop.f32.mrb[0].mxu0
      %508 = vmatprep.mubr.bf16.mxu0 0
      %509 = vmatmul.mubr.bf16.gmra.mrb[0].mxu0 %v419
      %v510 = vpop.f32.mrb[0].mxu0
      %v511 = vadd.f32 0.0, %v510
      %v512 = vpop.f32.mrb[0].mxu0
      %v513 = vpop.f32.mrb[0].mxu0
      %v514 = vadd.f32 0.0, %v513
      %v515 = vpop.f32.mrb[0].mxu0
      %516 = vmatprep.mubr.bf16.mxu0 0
      %517 = vmatmul.mubr.bf16.gmra.mrb[0].mxu0 %v422
      %v518 = vpop.f32.mrb[0].mxu0
      %v519 = vadd.f32 0.0, %v518
      %v520 = vpop.f32.mrb[0].mxu0
      %v521 = vpop.f32.mrb[0].mxu0
      %v522 = vadd.f32 0.0, %v521
      %v523 = vpop.f32.mrb[0].mxu0
      %524 = vmatprep.mubr.bf16.mxu0 0
      %525 = vmatmul.mubr.bf16.gmra.mrb[0].mxu0 %v425
      %v526 = vpop.f32.mrb[0].mxu0
      %v527 = vadd.f32 0.0, %v526
      %v528 = vpop.f32.mrb[0].mxu0
      %v529 = vpop.f32.mrb[0].mxu0
      %v530 = vadd.f32 0.0, %v529
      %v531 = vpop.f32.mrb[0].mxu0
      %532 = vmatprep.mubr.bf16.mxu0 0
      %533 = vmatmul.mubr.bf16.gmra.mrb[0].mxu0 %v428
      %v534 = vpop.f32.mrb[0].mxu0
      %v535 = vadd.f32 0.0, %v534
      %v536 = vpop.f32.mrb[0].mxu0
      %v537 = vpop.f32.mrb[0].mxu0
      %v538 = vadd.f32 0.0, %v537
      %v539 = vpop.f32.mrb[0].mxu0
      %540 = vmatprep.mubr.bf16.mxu0 0
      %541 = vmatmul.mubr.bf16.gmra.mrb[0].mxu0 %v431
      %v542 = vpop.f32.mrb[0].mxu0
      %v543 = vadd.f32 0.0, %v542
      %v544 = vpop.f32.mrb[0].mxu0
      %v545 = vpop.f32.mrb[0].mxu0
      %v546 = vadd.f32 0.0, %v545
      %v547 = vpop.f32.mrb[0].mxu0
      %548 = vmatprep.mubr.bf16.mxu0 0
      %549 = vmatmul.mubr.bf16.gmra.mrb[0].mxu0 %v434
      %v550 = vpop.f32.mrb[0].mxu0
      %v551 = vadd.f32 0.0, %v550
      %v552 = vpop.f32.mrb[0].mxu0
      %v553 = vpop.f32.mrb[0].mxu0
      %v554 = vadd.f32 0.0, %v553
      %v555 = vpop.f32.mrb[0].mxu0
      %556 = vmatprep.mubr.bf16.mxu0 0
      %557 = vmatmul.mubr.bf16.gmra.mrb[0].mxu0 %v437
      %v558 = vpop.f32.mrb[0].mxu0
      %v559 = vadd.f32 0.0, %v558
      %v560 = vpop.f32.mrb[0].mxu0
      %v561 = vpop.f32.mrb[0].mxu0
      %v562 = vadd.f32 0.0, %v561
      %v563 = vpop.f32.mrb[0].mxu0
      %564 = vmatprep.mubr.bf16.mxu0 0
      %565 = vmatmul.mubr.bf16.gmra.mrb[0].mxu0 %v440
      %v566 = vpop.f32.mrb[0].mxu0
      %v567 = vadd.f32 0.0, %v566
      %v568 = vpop.f32.mrb[0].mxu0
      %v569 = vpop.f32.mrb[0].mxu0
      %v570 = vadd.f32 0.0, %v569
      %v571 = vpop.f32.mrb[0].mxu0
      %572 = vmatprep.mubr.bf16.mxu0 0
      %573 = vmatmul.mubr.bf16.gmra.mrb[0].mxu0 %v443
      %v574 = vpop.f32.mrb[0].mxu0
      %v575 = vadd.f32 0.0, %v574
      %v576 = vpop.f32.mrb[0].mxu0
      %v577 = vpop.f32.mrb[0].mxu0
      %v578 = vadd.f32 0.0, %v577
      %v579 = vpop.f32.mrb[0].mxu0
      %580 = vmatprep.mubr.bf16.mxu0 0
      %581 = vmatmul.mubr.bf16.gmra.mrb[0].mxu0 %v446
      %v582 = vpop.f32.mrb[0].mxu0
      %v583 = vadd.f32 0.0, %v582
      %v584 = vpop.f32.mrb[0].mxu0
      %v585 = vpop.f32.mrb[0].mxu0
      %v586 = vadd.f32 0.0, %v585
      %v587 = vpop.f32.mrb[0].mxu0
      %588 = vmatprep.mubr.bf16.mxu0 0
      %589 = vmatmul.mubr.bf16.gmra.mrb[0].mxu0 %v449
      %v590 = vpop.f32.mrb[0].mxu0
      %v591 = vadd.f32 0.0, %v590
      %v592 = vpop.f32.mrb[0].mxu0
      %v593 = vpop.f32.mrb[0].mxu0
      %v594 = vadd.f32 0.0, %v593
      %v595 = vpop.f32.mrb[0].mxu0
      %596 = vmatprep.mubr.bf16.mxu0 0
      %597 = vmatmul.mubr.bf16.gmra.mrb[0].mxu0 %v452
      %v598 = vpop.f32.mrb[0].mxu0
      %v599 = vadd.f32 0.0, %v598
      %v600 = vpop.f32.mrb[0].mxu0
      %v601 = vpop.f32.mrb[0].mxu0
      %v602 = vadd.f32 0.0, %v601
      %v603 = vpop.f32.mrb[0].mxu0
      %604 = vmatprep.mubr.bf16.mxu0 0
      %605 = vmatmul.mubr.bf16.gmra.mrb[0].mxu0 %v455
      %v606 = vpop.f32.mrb[0].mxu0
      %v607 = vadd.f32 0.0, %v606
      %v608 = vpop.f32.mrb[0].mxu0
      %v609 = vpop.f32.mrb[0].mxu0
      %v610 = vadd.f32 0.0, %v609
      %v611 = vpop.f32.mrb[0].mxu0
      %612 = vmatprep.mubr.bf16.mxu0 0
      %613 = vmatmul.mubr.bf16.gmra.mrb[0].mxu0 %v458
      %v614 = vpop.f32.mrb[0].mxu0
      %v615 = vadd.f32 0.0, %v614
      %v616 = vpop.f32.mrb[0].mxu0
      %v617 = vpop.f32.mrb[0].mxu0
      %v618 = vadd.f32 0.0, %v617
      %v619 = vpop.f32.mrb[0].mxu0
      %620 = vdwg.mxu0
      %v653 = vunpack.c.l.b16 %v246
      %v654 = vunpack.c.l.b16 %v247
      %v655 = vunpack.c.l.b16 %v248
      %v656 = vunpack.c.l.b16 %v249
      %v657 = vunpack.c.l.b16 %v250
      %v658 = vunpack.c.l.b16 %v251
      %v659 = vunpack.c.l.b16 %v252
      %v660 = vunpack.c.l.b16 %v253
      %v661 = vunpack.c.l.b16 %v254
      %v662 = vunpack.c.l.b16 %v255
      %v663 = vunpack.c.l.b16 %v256
      %v664 = vunpack.c.l.b16 %v257
      %v665 = vunpack.c.l.b16 %v258
      %v666 = vunpack.c.l.b16 %v259
      %v667 = vunpack.c.l.b16 %v260
      %v668 = vunpack.c.l.b16 %v261
      %v669 = vunpack.c.l.b16 %v262
      %v670 = vunpack.c.l.b16 %v263
      %v671 = vunpack.c.l.b16 %v264
      %v672 = vunpack.c.l.b16 %v265
      %v673 = vunpack.c.l.b16 %v266
      %v674 = vunpack.c.l.b16 %v267
      %v675 = vunpack.c.l.b16 %v268
      %v676 = vunpack.c.l.b16 %v269
      %v677 = vunpack.c.l.b16 %v270
      %v678 = vunpack.c.l.b16 %v271
      %v679 = vunpack.c.l.b16 %v272
      %v680 = vunpack.c.l.b16 %v273
      %v681 = vunpack.c.l.b16 %v274
      %v682 = vunpack.c.l.b16 %v275
      %v683 = vunpack.c.l.b16 %v276
      %v684 = vunpack.c.l.b16 %v277
      %v685 = vpack.c.b16 %v654, %v653
      %v686 = vpack.c.b16 %v656, %v655
      %v687 = vpack.c.b16 %v658, %v657
      %v688 = vpack.c.b16 %v660, %v659
      %v689 = vpack.c.b16 %v662, %v661
      %v690 = vpack.c.b16 %v664, %v663
      %v691 = vpack.c.b16 %v666, %v665
      %v692 = vpack.c.b16 %v668, %v667
      %v693 = vpack.c.b16 %v670, %v669
      %v694 = vpack.c.b16 %v672, %v671
      %v695 = vpack.c.b16 %v674, %v673
      %v696 = vpack.c.b16 %v676, %v675
      %v697 = vpack.c.b16 %v678, %v677
      %v698 = vpack.c.b16 %v680, %v679
      %v699 = vpack.c.b16 %v682, %v681
      %v700 = vpack.c.b16 %v684, %v683
      %v705 = vunpack.c.l.b16 %v278
      %v706 = vunpack.c.l.b16 %v279
      %v707 = vunpack.c.l.b16 %v280
      %v708 = vunpack.c.l.b16 %v281
      %v709 = vpack.c.b16 %v706, %v705
      %v710 = vpack.c.b16 %v708, %v707
      %v714 = vsel %vm411, %v685, 0
      %v717 = vsel %vm411, %v686, 0
      %v720 = vsel %vm411, %v687, 0
      %v723 = vsel %vm411, %v688, 0
      %v726 = vsel %vm411, %v689, 0
      %v729 = vsel %vm411, %v690, 0
      %v732 = vsel %vm411, %v691, 0
      %v735 = vsel %vm411, %v692, 0
      %v738 = vsel %vm411, %v693, 0
      %v741 = vsel %vm411, %v694, 0
      %v744 = vsel %vm411, %v695, 0
      %v747 = vsel %vm411, %v696, 0
      %v750 = vsel %vm411, %v697, 0
      %v753 = vsel %vm411, %v698, 0
      %v756 = vsel %vm411, %v699, 0
      %v759 = vsel %vm411, %v700, 0
      %761 = vmatprep.subr.bf16.mxu0 0
      %762 = vmatpush1.bf16.msra.mxu0 %v709
      %763 = vmatprep.subr.bf16.mxu0 0
      %764 = vmatpush1.bf16.msra.mxu0 %v710
      %765 = vmatprep.subr.bf16.mxu0 0
      %766 = vmatpush1.bf16.msra.mxu0 0
      %767 = vmatprep.subr.bf16.mxu0 0
      %768 = vmatpush1.bf16.msra.mxu0 0
      %769 = vmatprep.subr.bf16.mxu0 0
      %770 = vmatpush1.bf16.msra.mxu0 0
      %771 = vmatprep.subr.bf16.mxu0 0
      %772 = vmatpush1.bf16.msra.mxu0 0
      %773 = vmatprep.subr.bf16.mxu0 0
      %774 = vmatpush1.bf16.msra.mxu0 0
      %775 = vmatprep.subr.bf16.mxu0 0
      %776 = vmatpush1.bf16.msra.mxu0 0
      %777 = vmatprep.subr.bf16.mxu0 0
      %778 = vmatpush1.bf16.msra.mxu0 0
      %779 = vmatprep.subr.bf16.mxu0 0
      %780 = vmatpush1.bf16.msra.mxu0 0
      %781 = vmatprep.subr.bf16.mxu0 0
      %782 = vmatpush1.bf16.msra.mxu0 0
      %783 = vmatprep.subr.bf16.mxu0 0
      %784 = vmatpush1.bf16.msra.mxu0 0
      %785 = vmatprep.subr.bf16.mxu0 0
      %786 = vmatpush1.bf16.msra.mxu0 0
      %787 = vmatprep.subr.bf16.mxu0 0
      %788 = vmatpush1.bf16.msra.mxu0 0
      %789 = vmatprep.subr.bf16.mxu0 0
      %790 = vmatpush1.bf16.msra.mxu0 0
      %791 = vmatprep.subr.bf16.mxu0 0
      %792 = vmatpush1.bf16.msra.mxu0 0
      %793 = vmatprep.mubr.bf16.mxu0 0
      %794 = vmatmul.mubr.bf16.gmra.mrb[0].mxu0 %v714
      %v795 = vpop.f32.mrb[0].mxu0
      %v796 = vadd.f32 %v495, %v795
      %v797 = vpop.f32.mrb[0].mxu0
      %v798 = vpop.f32.mrb[0].mxu0
      %v799 = vadd.f32 %v498, %v798
      %v800 = vpop.f32.mrb[0].mxu0
      %801 = vmatprep.mubr.bf16.mxu0 0
      %802 = vmatmul.mubr.bf16.gmra.mrb[0].mxu0 %v717
      %v803 = vpop.f32.mrb[0].mxu0
      %v804 = vadd.f32 %v503, %v803
      %v805 = vpop.f32.mrb[0].mxu0
      %v806 = vpop.f32.mrb[0].mxu0
      %v807 = vadd.f32 %v506, %v806
      %v808 = vpop.f32.mrb[0].mxu0
      %809 = vmatprep.mubr.bf16.mxu0 0
      %810 = vmatmul.mubr.bf16.gmra.mrb[0].mxu0 %v720
      %v811 = vpop.f32.mrb[0].mxu0
      %v812 = vadd.f32 %v511, %v811
      %v813 = vpop.f32.mrb[0].mxu0
      %v814 = vpop.f32.mrb[0].mxu0
      %v815 = vadd.f32 %v514, %v814
      %v816 = vpop.f32.mrb[0].mxu0
      %817 = vmatprep.mubr.bf16.mxu0 0
      %818 = vmatmul.mubr.bf16.gmra.mrb[0].mxu0 %v723
      %v819 = vpop.f32.mrb[0].mxu0
      %v820 = vadd.f32 %v519, %v819
      %v821 = vpop.f32.mrb[0].mxu0
      %v822 = vpop.f32.mrb[0].mxu0
      %v823 = vadd.f32 %v522, %v822
      %v824 = vpop.f32.mrb[0].mxu0
      %825 = vmatprep.mubr.bf16.mxu0 0
      %826 = vmatmul.mubr.bf16.gmra.mrb[0].mxu0 %v726
      %v827 = vpop.f32.mrb[0].mxu0
      %v828 = vadd.f32 %v527, %v827
      %v829 = vpop.f32.mrb[0].mxu0
      %v830 = vpop.f32.mrb[0].mxu0
      %v831 = vadd.f32 %v530, %v830
      %v832 = vpop.f32.mrb[0].mxu0
      %833 = vmatprep.mubr.bf16.mxu0 0
      %834 = vmatmul.mubr.bf16.gmra.mrb[0].mxu0 %v729
      %v835 = vpop.f32.mrb[0].mxu0
      %v836 = vadd.f32 %v535, %v835
      %v837 = vpop.f32.mrb[0].mxu0
      %v838 = vpop.f32.mrb[0].mxu0
      %v839 = vadd.f32 %v538, %v838
      %v840 = vpop.f32.mrb[0].mxu0
      %841 = vmatprep.mubr.bf16.mxu0 0
      %842 = vmatmul.mubr.bf16.gmra.mrb[0].mxu0 %v732
      %v843 = vpop.f32.mrb[0].mxu0
      %v844 = vadd.f32 %v543, %v843
      %v845 = vpop.f32.mrb[0].mxu0
      %v846 = vpop.f32.mrb[0].mxu0
      %v847 = vadd.f32 %v546, %v846
      %v848 = vpop.f32.mrb[0].mxu0
      %849 = vmatprep.mubr.bf16.mxu0 0
      %850 = vmatmul.mubr.bf16.gmra.mrb[0].mxu0 %v735
      %v851 = vpop.f32.mrb[0].mxu0
      %v852 = vadd.f32 %v551, %v851
      %v853 = vpop.f32.mrb[0].mxu0
      %v854 = vpop.f32.mrb[0].mxu0
      %v855 = vadd.f32 %v554, %v854
      %v856 = vpop.f32.mrb[0].mxu0
      %857 = vmatprep.mubr.bf16.mxu0 0
      %858 = vmatmul.mubr.bf16.gmra.mrb[0].mxu0 %v738
      %v859 = vpop.f32.mrb[0].mxu0
      %v860 = vadd.f32 %v559, %v859
      %v861 = vpop.f32.mrb[0].mxu0
      %v862 = vpop.f32.mrb[0].mxu0
      %v863 = vadd.f32 %v562, %v862
      %v864 = vpop.f32.mrb[0].mxu0
      %865 = vmatprep.mubr.bf16.mxu0 0
      %866 = vmatmul.mubr.bf16.gmra.mrb[0].mxu0 %v741
      %v867 = vpop.f32.mrb[0].mxu0
      %v868 = vadd.f32 %v567, %v867
      %v869 = vpop.f32.mrb[0].mxu0
      %v870 = vpop.f32.mrb[0].mxu0
      %v871 = vadd.f32 %v570, %v870
      %v872 = vpop.f32.mrb[0].mxu0
      %873 = vmatprep.mubr.bf16.mxu0 0
      %874 = vmatmul.mubr.bf16.gmra.mrb[0].mxu0 %v744
      %v875 = vpop.f32.mrb[0].mxu0
      %v876 = vadd.f32 %v575, %v875
      %v877 = vpop.f32.mrb[0].mxu0
      %v878 = vpop.f32.mrb[0].mxu0
      %v879 = vadd.f32 %v578, %v878
      %v880 = vpop.f32.mrb[0].mxu0
      %881 = vmatprep.mubr.bf16.mxu0 0
      %882 = vmatmul.mubr.bf16.gmra.mrb[0].mxu0 %v747
      %v883 = vpop.f32.mrb[0].mxu0
      %v884 = vadd.f32 %v583, %v883
      %v885 = vpop.f32.mrb[0].mxu0
      %v886 = vpop.f32.mrb[0].mxu0
      %v887 = vadd.f32 %v586, %v886
      %v888 = vpop.f32.mrb[0].mxu0
      %889 = vmatprep.mubr.bf16.mxu0 0
      %890 = vmatmul.mubr.bf16.gmra.mrb[0].mxu0 %v750
      %v891 = vpop.f32.mrb[0].mxu0
      %v892 = vadd.f32 %v591, %v891
      %v893 = vpop.f32.mrb[0].mxu0
      %v894 = vpop.f32.mrb[0].mxu0
      %v895 = vadd.f32 %v594, %v894
      %v896 = vpop.f32.mrb[0].mxu0
      %897 = vmatprep.mubr.bf16.mxu0 0
      %898 = vmatmul.mubr.bf16.gmra.mrb[0].mxu0 %v753
      %v899 = vpop.f32.mrb[0].mxu0
      %v900 = vadd.f32 %v599, %v899
      %v901 = vpop.f32.mrb[0].mxu0
      %v902 = vpop.f32.mrb[0].mxu0
      %v903 = vadd.f32 %v602, %v902
      %v904 = vpop.f32.mrb[0].mxu0
      %905 = vmatprep.mubr.bf16.mxu0 0
      %906 = vmatmul.mubr.bf16.gmra.mrb[0].mxu0 %v756
      %v907 = vpop.f32.mrb[0].mxu0
      %v908 = vadd.f32 %v607, %v907
      %v909 = vpop.f32.mrb[0].mxu0
      %v910 = vpop.f32.mrb[0].mxu0
      %v911 = vadd.f32 %v610, %v910
      %v912 = vpop.f32.mrb[0].mxu0
      %913 = vmatprep.mubr.bf16.mxu0 0
      %914 = vmatmul.mubr.bf16.gmra.mrb[0].mxu0 %v759
      %v915 = vpop.f32.mrb[0].mxu0
      %v916 = vadd.f32 %v615, %v915
      %v917 = vpop.f32.mrb[0].mxu0
      %v918 = vpop.f32.mrb[0].mxu0
      %v919 = vadd.f32 %v618, %v918
      %v920 = vpop.f32.mrb[0].mxu0
      %921 = vdwg.mxu0
      %v922 = vld [vmem:[%s234 + $0x8] sm:$0xf]
      %v923 = vld [vmem:[%s234 + $0xc] sm:$0xf]
      %v924 = vld [vmem:[%s234 + $0x10] sm:$0xf]
      %v925 = vld [vmem:[%s234 + $0x14] sm:$0xf]
      %v926 = vld [vmem:[%s234 + $0x18] sm:$0xf]
      %v927 = vld [vmem:[%s234 + $0x1c] sm:$0xf]
      %v928 = vld [vmem:[%s234 + $0x20] sm:$0xf]
      %v929 = vld [vmem:[%s234 + $0x24] sm:$0xf]
      %v930 = vld [vmem:[%s234 + $0x28] sm:$0xf]
      %v931 = vld [vmem:[%s234 + $0x2c] sm:$0xf]
      %v932 = vld [vmem:[%s234 + $0x30] sm:$0xf]
      %v933 = vld [vmem:[%s234 + $0x34] sm:$0xf]
      %v934 = vld [vmem:[%s234 + $0x38] sm:$0xf]
      %v935 = vld [vmem:[%s234 + $0x3c] sm:$0xf]
      %v936 = vld [vmem:[%s234 + $0x40] sm:$0xf]
      %v937 = vld [vmem:[%s234 + $0x44] sm:$0xf]
      %v938 = vld [vmem:[%s234 + $0x48] sm:$0xf]
      %v939 = vld [vmem:[%s234 + $0x4c] sm:$0xf]
      %v940 = vld [vmem:[%s234 + $0x50] sm:$0xf]
      %v941 = vld [vmem:[%s234 + $0x54] sm:$0xf]
      %v942 = vld [vmem:[%s234 + $0x58] sm:$0xf]
      %v943 = vld [vmem:[%s234 + $0x5c] sm:$0xf]
      %v944 = vld [vmem:[%s234 + $0x60] sm:$0xf]
      %v945 = vld [vmem:[%s234 + $0x64] sm:$0xf]
      %v946 = vld [vmem:[%s234 + $0x68] sm:$0xf]
      %v947 = vld [vmem:[%s234 + $0x6c] sm:$0xf]
      %v948 = vld [vmem:[%s234 + $0x70] sm:$0xf]
      %v949 = vld [vmem:[%s234 + $0x74] sm:$0xf]
      %v950 = vld [vmem:[%s234 + $0x78] sm:$0xf]
      %v951 = vld [vmem:[%s234 + $0x7c] sm:$0xf]
      %v952 = vld [vmem:[%s234 + $0x80] sm:$0xf]
      %v953 = vld [vmem:[%s234 + $0x84] sm:$0xf]
      %s954 = scalar_lea.vmem %s2, 32
      %v955 = vld [vmem:[%s954] sm:$0xf]
      %v956 = vld [vmem:[%s954 + $0x4] sm:$0xf]
      %v957 = vld [vmem:[%s954 + $0x8] sm:$0xf]
      %v958 = vld [vmem:[%s954 + $0xc] sm:$0xf]
      %v991 = vunpack.c.l.b16 %v922
      %v992 = vunpack.c.l.b16 %v923
      %v993 = vunpack.c.l.b16 %v924
      %v994 = vunpack.c.l.b16 %v925
      %v995 = vunpack.c.l.b16 %v926
      %v996 = vunpack.c.l.b16 %v927
      %v997 = vunpack.c.l.b16 %v928
      %v998 = vunpack.c.l.b16 %v929
      %v999 = vunpack.c.l.b16 %v930
      %v1000 = vunpack.c.l.b16 %v931
      %v1001 = vunpack.c.l.b16 %v932
      %v1002 = vunpack.c.l.b16 %v933
      %v1003 = vunpack.c.l.b16 %v934
      %v1004 = vunpack.c.l.b16 %v935
      %v1005 = vunpack.c.l.b16 %v936
      %v1006 = vunpack.c.l.b16 %v937
      %v1007 = vunpack.c.l.b16 %v938
      %v1008 = vunpack.c.l.b16 %v939
      %v1009 = vunpack.c.l.b16 %v940
      %v1010 = vunpack.c.l.b16 %v941
      %v1011 = vunpack.c.l.b16 %v942
      %v1012 = vunpack.c.l.b16 %v943
      %v1013 = vunpack.c.l.b16 %v944
      %v1014 = vunpack.c.l.b16 %v945
      %v1015 = vunpack.c.l.b16 %v946
      %v1016 = vunpack.c.l.b16 %v947
      %v1017 = vunpack.c.l.b16 %v948
      %v1018 = vunpack.c.l.b16 %v949
      %v1019 = vunpack.c.l.b16 %v950
      %v1020 = vunpack.c.l.b16 %v951
      %v1021 = vunpack.c.l.b16 %v952
      %v1022 = vunpack.c.l.b16 %v953
      %v1023 = vpack.c.b16 %v992, %v991
      %v1024 = vpack.c.b16 %v994, %v993
      %v1025 = vpack.c.b16 %v996, %v995
      %v1026 = vpack.c.b16 %v998, %v997
      %v1027 = vpack.c.b16 %v1000, %v999
      %v1028 = vpack.c.b16 %v1002, %v1001
      %v1029 = vpack.c.b16 %v1004, %v1003
      %v1030 = vpack.c.b16 %v1006, %v1005
      %v1031 = vpack.c.b16 %v1008, %v1007
      %v1032 = vpack.c.b16 %v1010, %v1009
      %v1033 = vpack.c.b16 %v1012, %v1011
      %v1034 = vpack.c.b16 %v1014, %v1013
      %v1035 = vpack.c.b16 %v1016, %v1015
      %v1036 = vpack.c.b16 %v1018, %v1017
      %v1037 = vpack.c.b16 %v1020, %v1019
      %v1038 = vpack.c.b16 %v1022, %v1021
      %v1043 = vunpack.c.l.b16 %v955
      %v1044 = vunpack.c.l.b16 %v956
      %v1045 = vunpack.c.l.b16 %v957
      %v1046 = vunpack.c.l.b16 %v958
      %v1047 = vpack.c.b16 %v1044, %v1043
      %v1048 = vpack.c.b16 %v1046, %v1045
      %v1052 = vsel %vm411, %v1023, 0
      %v1055 = vsel %vm411, %v1024, 0
      %v1058 = vsel %vm411, %v1025, 0
      %v1061 = vsel %vm411, %v1026, 0
      %v1064 = vsel %vm411, %v1027, 0
      %v1067 = vsel %vm411, %v1028, 0
      %v1070 = vsel %vm411, %v1029, 0
      %v1073 = vsel %vm411, %v1030, 0
      %v1076 = vsel %vm411, %v1031, 0
      %v1079 = vsel %vm411, %v1032, 0
      %v1082 = vsel %vm411, %v1033, 0
      %v1085 = vsel %vm411, %v1034, 0
      %v1088 = vsel %vm411, %v1035, 0
      %v1091 = vsel %vm411, %v1036, 0
      %v1094 = vsel %vm411, %v1037, 0
      %v1097 = vsel %vm411, %v1038, 0
      %1099 = vmatprep.subr.bf16.mxu0 0
      %1100 = vmatpush1.bf16.msra.mxu0 %v1047
      %1101 = vmatprep.subr.bf16.mxu0 0
      %1102 = vmatpush1.bf16.msra.mxu0 %v1048
      %1103 = vmatprep.subr.bf16.mxu0 0
      %1104 = vmatpush1.bf16.msra.mxu0 0
      %1105 = vmatprep.subr.bf16.mxu0 0
      %1106 = vmatpush1.bf16.msra.mxu0 0
      %1107 = vmatprep.subr.bf16.mxu0 0
      %1108 = vmatpush1.bf16.msra.mxu0 0
      %1109 = vmatprep.subr.bf16.mxu0 0
      %1110 = vmatpush1.bf16.msra.mxu0 0
      %1111 = vmatprep.subr.bf16.mxu0 0
      %1112 = vmatpush1.bf16.msra.mxu0 0
      %1113 = vmatprep.subr.bf16.mxu0 0
      %1114 = vmatpush1.bf16.msra.mxu0 0
      %1115 = vmatprep.subr.bf16.mxu0 0
      %1116 = vmatpush1.bf16.msra.mxu0 0
      %1117 = vmatprep.subr.bf16.mxu0 0
      %1118 = vmatpush1.bf16.msra.mxu0 0
      %1119 = vmatprep.subr.bf16.mxu0 0
      %1120 = vmatpush1.bf16.msra.mxu0 0
      %1121 = vmatprep.subr.bf16.mxu0 0
      %1122 = vmatpush1.bf16.msra.mxu0 0
      %1123 = vmatprep.subr.bf16.mxu0 0
      %1124 = vmatpush1.bf16.msra.mxu0 0
      %1125 = vmatprep.subr.bf16.mxu0 0
      %1126 = vmatpush1.bf16.msra.mxu0 0
      %1127 = vmatprep.subr.bf16.mxu0 0
      %1128 = vmatpush1.bf16.msra.mxu0 0
      %1129 = vmatprep.subr.bf16.mxu0 0
      %1130 = vmatpush1.bf16.msra.mxu0 0
      %1131 = vmatprep.mubr.bf16.mxu0 0
      %1132 = vmatmul.mubr.bf16.gmra.mrb[0].mxu0 %v1052
      %v1133 = vpop.f32.mrb[0].mxu0
      %v1134 = vadd.f32 0.0, %v1133
      %v1135 = vpop.f32.mrb[0].mxu0
      %v1136 = vpop.f32.mrb[0].mxu0
      %v1137 = vadd.f32 0.0, %v1136
      %v1138 = vpop.f32.mrb[0].mxu0
      %1139 = vmatprep.mubr.bf16.mxu0 0
      %1140 = vmatmul.mubr.bf16.gmra.mrb[0].mxu0 %v1055
      %v1141 = vpop.f32.mrb[0].mxu0
      %v1142 = vadd.f32 0.0, %v1141
      %v1143 = vpop.f32.mrb[0].mxu0
      %v1144 = vpop.f32.mrb[0].mxu0
      %v1145 = vadd.f32 0.0, %v1144
      %v1146 = vpop.f32.mrb[0].mxu0
      %1147 = vmatprep.mubr.bf16.mxu0 0
      %1148 = vmatmul.mubr.bf16.gmra.mrb[0].mxu0 %v1058
      %v1149 = vpop.f32.mrb[0].mxu0
      %v1150 = vadd.f32 0.0, %v1149
      %v1151 = vpop.f32.mrb[0].mxu0
      %v1152 = vpop.f32.mrb[0].mxu0
      %v1153 = vadd.f32 0.0, %v1152
      %v1154 = vpop.f32.mrb[0].mxu0
      %1155 = vmatprep.mubr.bf16.mxu0 0
      %1156 = vmatmul.mubr.bf16.gmra.mrb[0].mxu0 %v1061
      %v1157 = vpop.f32.mrb[0].mxu0
      %v1158 = vadd.f32 0.0, %v1157
      %v1159 = vpop.f32.mrb[0].mxu0
      %v1160 = vpop.f32.mrb[0].mxu0
      %v1161 = vadd.f32 0.0, %v1160
      %v1162 = vpop.f32.mrb[0].mxu0
      %1163 = vmatprep.mubr.bf16.mxu0 0
      %1164 = vmatmul.mubr.bf16.gmra.mrb[0].mxu0 %v1064
      %v1165 = vpop.f32.mrb[0].mxu0
      %v1166 = vadd.f32 0.0, %v1165
      %v1167 = vpop.f32.mrb[0].mxu0
      %v1168 = vpop.f32.mrb[0].mxu0
      %v1169 = vadd.f32 0.0, %v1168
      %v1170 = vpop.f32.mrb[0].mxu0
      %1171 = vmatprep.mubr.bf16.mxu0 0
      %1172 = vmatmul.mubr.bf16.gmra.mrb[0].mxu0 %v1067
      %v1173 = vpop.f32.mrb[0].mxu0
      %v1174 = vadd.f32 0.0, %v1173
      %v1175 = vpop.f32.mrb[0].mxu0
      %v1176 = vpop.f32.mrb[0].mxu0
      %v1177 = vadd.f32 0.0, %v1176
      %v1178 = vpop.f32.mrb[0].mxu0
      %1179 = vmatprep.mubr.bf16.mxu0 0
      %1180 = vmatmul.mubr.bf16.gmra.mrb[0].mxu0 %v1070
      %v1181 = vpop.f32.mrb[0].mxu0
      %v1182 = vadd.f32 0.0, %v1181
      %v1183 = vpop.f32.mrb[0].mxu0
      %v1184 = vpop.f32.mrb[0].mxu0
      %v1185 = vadd.f32 0.0, %v1184
      %v1186 = vpop.f32.mrb[0].mxu0
      %1187 = vmatprep.mubr.bf16.mxu0 0
      %1188 = vmatmul.mubr.bf16.gmra.mrb[0].mxu0 %v1073
      %v1189 = vpop.f32.mrb[0].mxu0
      %v1190 = vadd.f32 0.0, %v1189
      %v1191 = vpop.f32.mrb[0].mxu0
      %v1192 = vpop.f32.mrb[0].mxu0
      %v1193 = vadd.f32 0.0, %v1192
      %v1194 = vpop.f32.mrb[0].mxu0
      %1195 = vmatprep.mubr.bf16.mxu0 0
      %1196 = vmatmul.mubr.bf16.gmra.mrb[0].mxu0 %v1076
      %v1197 = vpop.f32.mrb[0].mxu0
      %v1198 = vadd.f32 0.0, %v1197
      %v1199 = vpop.f32.mrb[0].mxu0
      %v1200 = vpop.f32.mrb[0].mxu0
      %v1201 = vadd.f32 0.0, %v1200
      %v1202 = vpop.f32.mrb[0].mxu0
      %1203 = vmatprep.mubr.bf16.mxu0 0
      %1204 = vmatmul.mubr.bf16.gmra.mrb[0].mxu0 %v1079
      %v1205 = vpop.f32.mrb[0].mxu0
      %v1206 = vadd.f32 0.0, %v1205
      %v1207 = vpop.f32.mrb[0].mxu0
      %v1208 = vpop.f32.mrb[0].mxu0
      %v1209 = vadd.f32 0.0, %v1208
      %v1210 = vpop.f32.mrb[0].mxu0
      %1211 = vmatprep.mubr.bf16.mxu0 0
      %1212 = vmatmul.mubr.bf16.gmra.mrb[0].mxu0 %v1082
      %v1213 = vpop.f32.mrb[0].mxu0
      %v1214 = vadd.f32 0.0, %v1213
      %v1215 = vpop.f32.mrb[0].mxu0
      %v1216 = vpop.f32.mrb[0].mxu0
      %v1217 = vadd.f32 0.0, %v1216
      %v1218 = vpop.f32.mrb[0].mxu0
      %1219 = vmatprep.mubr.bf16.mxu0 0
      %1220 = vmatmul.mubr.bf16.gmra.mrb[0].mxu0 %v1085
      %v1221 = vpop.f32.mrb[0].mxu0
      %v1222 = vadd.f32 0.0, %v1221
      %v1223 = vpop.f32.mrb[0].mxu0
      %v1224 = vpop.f32.mrb[0].mxu0
      %v1225 = vadd.f32 0.0, %v1224
      %v1226 = vpop.f32.mrb[0].mxu0
      %1227 = vmatprep.mubr.bf16.mxu0 0
      %1228 = vmatmul.mubr.bf16.gmra.mrb[0].mxu0 %v1088
      %v1229 = vpop.f32.mrb[0].mxu0
      %v1230 = vadd.f32 0.0, %v1229
      %v1231 = vpop.f32.mrb[0].mxu0
      %v1232 = vpop.f32.mrb[0].mxu0
      %v1233 = vadd.f32 0.0, %v1232
      %v1234 = vpop.f32.mrb[0].mxu0
      %1235 = vmatprep.mubr.bf16.mxu0 0
      %1236 = vmatmul.mubr.bf16.gmra.mrb[0].mxu0 %v1091
      %v1237 = vpop.f32.mrb[0].mxu0
      %v1238 = vadd.f32 0.0, %v1237
      %v1239 = vpop.f32.mrb[0].mxu0
      %v1240 = vpop.f32.mrb[0].mxu0
      %v1241 = vadd.f32 0.0, %v1240
      %v1242 = vpop.f32.mrb[0].mxu0
      %1243 = vmatprep.mubr.bf16.mxu0 0
      %1244 = vmatmul.mubr.bf16.gmra.mrb[0].mxu0 %v1094
      %v1245 = vpop.f32.mrb[0].mxu0
      %v1246 = vadd.f32 0.0, %v1245
      %v1247 = vpop.f32.mrb[0].mxu0
      %v1248 = vpop.f32.mrb[0].mxu0
      %v1249 = vadd.f32 0.0, %v1248
      %v1250 = vpop.f32.mrb[0].mxu0
      %1251 = vmatprep.mubr.bf16.mxu0 0
      %1252 = vmatmul.mubr.bf16.gmra.mrb[0].mxu0 %v1097
      %v1253 = vpop.f32.mrb[0].mxu0
      %v1254 = vadd.f32 0.0, %v1253
      %v1255 = vpop.f32.mrb[0].mxu0
      %v1256 = vpop.f32.mrb[0].mxu0
      %v1257 = vadd.f32 0.0, %v1256
      %v1258 = vpop.f32.mrb[0].mxu0
      %1259 = vdwg.mxu0
      %v1260 = vadd.f32 %v796, %v1134
      %v1261 = vadd.f32 %v799, %v1137
      %v1262 = vadd.f32 %v804, %v1142
      %v1263 = vadd.f32 %v807, %v1145
      %v1264 = vadd.f32 %v812, %v1150
      %v1265 = vadd.f32 %v815, %v1153
      %v1266 = vadd.f32 %v820, %v1158
      %v1267 = vadd.f32 %v823, %v1161
      %v1268 = vadd.f32 %v828, %v1166
      %v1269 = vadd.f32 %v831, %v1169
      %v1270 = vadd.f32 %v836, %v1174
      %v1271 = vadd.f32 %v839, %v1177
      %v1272 = vadd.f32 %v844, %v1182
      %v1273 = vadd.f32 %v847, %v1185
      %v1274 = vadd.f32 %v852, %v1190
      %v1275 = vadd.f32 %v855, %v1193
      %v1276 = vadd.f32 %v860, %v1198
      %v1277 = vadd.f32 %v863, %v1201
      %v1278 = vadd.f32 %v868, %v1206
      %v1279 = vadd.f32 %v871, %v1209
      %v1280 = vadd.f32 %v876, %v1214
      %v1281 = vadd.f32 %v879, %v1217
      %v1282 = vadd.f32 %v884, %v1222
      %v1283 = vadd.f32 %v887, %v1225
      %v1284 = vadd.f32 %v892, %v1230
      %v1285 = vadd.f32 %v895, %v1233
      %v1286 = vadd.f32 %v900, %v1238
      %v1287 = vadd.f32 %v903, %v1241
      %v1288 = vadd.f32 %v908, %v1246
      %v1289 = vadd.f32 %v911, %v1249
      %v1290 = vadd.f32 %v916, %v1254
      %v1291 = vadd.f32 %v919, %v1257
      %v1292 = vld [vmem:[%s239 + $0x8] sm:$0xf]
      %v1293 = vld [vmem:[%s239 + $0xc] sm:$0xf]
      %v1294 = vld [vmem:[%s239 + $0x10] sm:$0xf]
      %v1295 = vld [vmem:[%s239 + $0x14] sm:$0xf]
      %v1296 = vld [vmem:[%s239 + $0x18] sm:$0xf]
      %v1297 = vld [vmem:[%s239 + $0x1c] sm:$0xf]
      %v1298 = vld [vmem:[%s239 + $0x20] sm:$0xf]
      %v1299 = vld [vmem:[%s239 + $0x24] sm:$0xf]
      %v1300 = vld [vmem:[%s239 + $0x28] sm:$0xf]
      %v1301 = vld [vmem:[%s239 + $0x2c] sm:$0xf]
      %v1302 = vld [vmem:[%s239 + $0x30] sm:$0xf]
      %v1303 = vld [vmem:[%s239 + $0x34] sm:$0xf]
      %v1304 = vld [vmem:[%s239 + $0x38] sm:$0xf]
      %v1305 = vld [vmem:[%s239 + $0x3c] sm:$0xf]
      %v1306 = vld [vmem:[%s239 + $0x40] sm:$0xf]
      %v1307 = vld [vmem:[%s239 + $0x44] sm:$0xf]
      %v1308 = vld [vmem:[%s239 + $0x48] sm:$0xf]
      %v1309 = vld [vmem:[%s239 + $0x4c] sm:$0xf]
      %v1310 = vld [vmem:[%s239 + $0x50] sm:$0xf]
      %v1311 = vld [vmem:[%s239 + $0x54] sm:$0xf]
      %v1312 = vld [vmem:[%s239 + $0x58] sm:$0xf]
      %v1313 = vld [vmem:[%s239 + $0x5c] sm:$0xf]
      %v1314 = vld [vmem:[%s239 + $0x60] sm:$0xf]
      %v1315 = vld [vmem:[%s239 + $0x64] sm:$0xf]
      %v1316 = vld [vmem:[%s239 + $0x68] sm:$0xf]
      %v1317 = vld [vmem:[%s239 + $0x6c] sm:$0xf]
      %v1318 = vld [vmem:[%s239 + $0x70] sm:$0xf]
      %v1319 = vld [vmem:[%s239 + $0x74] sm:$0xf]
      %v1320 = vld [vmem:[%s239 + $0x78] sm:$0xf]
      %v1321 = vld [vmem:[%s239 + $0x7c] sm:$0xf]
      %v1322 = vld [vmem:[%s239 + $0x80] sm:$0xf]
      %v1323 = vld [vmem:[%s239 + $0x84] sm:$0xf]
      %s1324 = scalar_lea.vmem %s2, 48
      %v1325 = vld [vmem:[%s1324] sm:$0xf]
      %v1326 = vld [vmem:[%s1324 + $0x4] sm:$0xf]
      %v1327 = vld [vmem:[%s1324 + $0x8] sm:$0xf]
      %v1328 = vld [vmem:[%s1324 + $0xc] sm:$0xf]
      %v1361 = vunpack.c.l.b16 %v1292
      %v1362 = vunpack.c.l.b16 %v1293
      %v1363 = vunpack.c.l.b16 %v1294
      %v1364 = vunpack.c.l.b16 %v1295
      %v1365 = vunpack.c.l.b16 %v1296
      %v1366 = vunpack.c.l.b16 %v1297
      %v1367 = vunpack.c.l.b16 %v1298
      %v1368 = vunpack.c.l.b16 %v1299
      %v1369 = vunpack.c.l.b16 %v1300
      %v1370 = vunpack.c.l.b16 %v1301
      %v1371 = vunpack.c.l.b16 %v1302
      %v1372 = vunpack.c.l.b16 %v1303
      %v1373 = vunpack.c.l.b16 %v1304
      %v1374 = vunpack.c.l.b16 %v1305
      %v1375 = vunpack.c.l.b16 %v1306
      %v1376 = vunpack.c.l.b16 %v1307
      %v1377 = vunpack.c.l.b16 %v1308
      %v1378 = vunpack.c.l.b16 %v1309
      %v1379 = vunpack.c.l.b16 %v1310
      %v1380 = vunpack.c.l.b16 %v1311
      %v1381 = vunpack.c.l.b16 %v1312
      %v1382 = vunpack.c.l.b16 %v1313
      %v1383 = vunpack.c.l.b16 %v1314
      %v1384 = vunpack.c.l.b16 %v1315
      %v1385 = vunpack.c.l.b16 %v1316
      %v1386 = vunpack.c.l.b16 %v1317
      %v1387 = vunpack.c.l.b16 %v1318
      %v1388 = vunpack.c.l.b16 %v1319
      %v1389 = vunpack.c.l.b16 %v1320
      %v1390 = vunpack.c.l.b16 %v1321
      %v1391 = vunpack.c.l.b16 %v1322
      %v1392 = vunpack.c.l.b16 %v1323
      %v1393 = vpack.c.b16 %v1362, %v1361
      %v1394 = vpack.c.b16 %v1364, %v1363
      %v1395 = vpack.c.b16 %v1366, %v1365
      %v1396 = vpack.c.b16 %v1368, %v1367
      %v1397 = vpack.c.b16 %v1370, %v1369
      %v1398 = vpack.c.b16 %v1372, %v1371
      %v1399 = vpack.c.b16 %v1374, %v1373
      %v1400 = vpack.c.b16 %v1376, %v1375
      %v1401 = vpack.c.b16 %v1378, %v1377
      %v1402 = vpack.c.b16 %v1380, %v1379
      %v1403 = vpack.c.b16 %v1382, %v1381
      %v1404 = vpack.c.b16 %v1384, %v1383
      %v1405 = vpack.c.b16 %v1386, %v1385
      %v1406 = vpack.c.b16 %v1388, %v1387
      %v1407 = vpack.c.b16 %v1390, %v1389
      %v1408 = vpack.c.b16 %v1392, %v1391
      %v1413 = vunpack.c.l.b16 %v1325
      %v1414 = vunpack.c.l.b16 %v1326
      %v1415 = vunpack.c.l.b16 %v1327
      %v1416 = vunpack.c.l.b16 %v1328
      %v1417 = vpack.c.b16 %v1414, %v1413
      %v1418 = vpack.c.b16 %v1416, %v1415
      %v1422 = vsel %vm411, %v1393, 0
      %v1425 = vsel %vm411, %v1394, 0
      %v1428 = vsel %vm411, %v1395, 0
      %v1431 = vsel %vm411, %v1396, 0
      %v1434 = vsel %vm411, %v1397, 0
      %v1437 = vsel %vm411, %v1398, 0
      %v1440 = vsel %vm411, %v1399, 0
      %v1443 = vsel %vm411, %v1400, 0
      %v1446 = vsel %vm411, %v1401, 0
      %v1449 = vsel %vm411, %v1402, 0
      %v1452 = vsel %vm411, %v1403, 0
      %v1455 = vsel %vm411, %v1404, 0
      %v1458 = vsel %vm411, %v1405, 0
      %v1461 = vsel %vm411, %v1406, 0
      %v1464 = vsel %vm411, %v1407, 0
      %v1467 = vsel %vm411, %v1408, 0
      %1469 = vmatprep.subr.bf16.mxu0 0
      %1470 = vmatpush1.bf16.msra.mxu0 %v1417
      %1471 = vmatprep.subr.bf16.mxu0 0
      %1472 = vmatpush1.bf16.msra.mxu0 %v1418
      %1473 = vmatprep.subr.bf16.mxu0 0
      %1474 = vmatpush1.bf16.msra.mxu0 0
      %1475 = vmatprep.subr.bf16.mxu0 0
      %1476 = vmatpush1.bf16.msra.mxu0 0
      %1477 = vmatprep.subr.bf16.mxu0 0
      %1478 = vmatpush1.bf16.msra.mxu0 0
      %1479 = vmatprep.subr.bf16.mxu0 0
      %1480 = vmatpush1.bf16.msra.mxu0 0
      %1481 = vmatprep.subr.bf16.mxu0 0
      %1482 = vmatpush1.bf16.msra.mxu0 0
      %1483 = vmatprep.subr.bf16.mxu0 0
      %1484 = vmatpush1.bf16.msra.mxu0 0
      %1485 = vmatprep.subr.bf16.mxu0 0
      %1486 = vmatpush1.bf16.msra.mxu0 0
      %1487 = vmatprep.subr.bf16.mxu0 0
      %1488 = vmatpush1.bf16.msra.mxu0 0
      %1489 = vmatprep.subr.bf16.mxu0 0
      %1490 = vmatpush1.bf16.msra.mxu0 0
      %1491 = vmatprep.subr.bf16.mxu0 0
      %1492 = vmatpush1.bf16.msra.mxu0 0
      %1493 = vmatprep.subr.bf16.mxu0 0
      %1494 = vmatpush1.bf16.msra.mxu0 0
      %1495 = vmatprep.subr.bf16.mxu0 0
      %1496 = vmatpush1.bf16.msra.mxu0 0
      %1497 = vmatprep.subr.bf16.mxu0 0
      %1498 = vmatpush1.bf16.msra.mxu0 0
      %1499 = vmatprep.subr.bf16.mxu0 0
      %1500 = vmatpush1.bf16.msra.mxu0 0
      %1501 = vmatprep.mubr.bf16.mxu0 0
      %1502 = vmatmul.mubr.bf16.gmra.mrb[0].mxu0 %v1422
      %v1503 = vpop.f32.mrb[0].mxu0
      %v1504 = vadd.f32 0.0, %v1503
      %v1505 = vpop.f32.mrb[0].mxu0
      %v1506 = vpop.f32.mrb[0].mxu0
      %v1507 = vadd.f32 0.0, %v1506
      %v1508 = vpop.f32.mrb[0].mxu0
      %1509 = vmatprep.mubr.bf16.mxu0 0
      %1510 = vmatmul.mubr.bf16.gmra.mrb[0].mxu0 %v1425
      %v1511 = vpop.f32.mrb[0].mxu0
      %v1512 = vadd.f32 0.0, %v1511
      %v1513 = vpop.f32.mrb[0].mxu0
      %v1514 = vpop.f32.mrb[0].mxu0
      %v1515 = vadd.f32 0.0, %v1514
      %v1516 = vpop.f32.mrb[0].mxu0
      %1517 = vmatprep.mubr.bf16.mxu0 0
      %1518 = vmatmul.mubr.bf16.gmra.mrb[0].mxu0 %v1428
      %v1519 = vpop.f32.mrb[0].mxu0
      %v1520 = vadd.f32 0.0, %v1519
      %v1521 = vpop.f32.mrb[0].mxu0
      %v1522 = vpop.f32.mrb[0].mxu0
      %v1523 = vadd.f32 0.0, %v1522
      %v1524 = vpop.f32.mrb[0].mxu0
      %1525 = vmatprep.mubr.bf16.mxu0 0
      %1526 = vmatmul.mubr.bf16.gmra.mrb[0].mxu0 %v1431
      %v1527 = vpop.f32.mrb[0].mxu0
      %v1528 = vadd.f32 0.0, %v1527
      %v1529 = vpop.f32.mrb[0].mxu0
      %v1530 = vpop.f32.mrb[0].mxu0
      %v1531 = vadd.f32 0.0, %v1530
      %v1532 = vpop.f32.mrb[0].mxu0
      %1533 = vmatprep.mubr.bf16.mxu0 0
      %1534 = vmatmul.mubr.bf16.gmra.mrb[0].mxu0 %v1434
      %v1535 = vpop.f32.mrb[0].mxu0
      %v1536 = vadd.f32 0.0, %v1535
      %v1537 = vpop.f32.mrb[0].mxu0
      %v1538 = vpop.f32.mrb[0].mxu0
      %v1539 = vadd.f32 0.0, %v1538
      %v1540 = vpop.f32.mrb[0].mxu0
      %1541 = vmatprep.mubr.bf16.mxu0 0
      %1542 = vmatmul.mubr.bf16.gmra.mrb[0].mxu0 %v1437
      %v1543 = vpop.f32.mrb[0].mxu0
      %v1544 = vadd.f32 0.0, %v1543
      %v1545 = vpop.f32.mrb[0].mxu0
      %v1546 = vpop.f32.mrb[0].mxu0
      %v1547 = vadd.f32 0.0, %v1546
      %v1548 = vpop.f32.mrb[0].mxu0
      %1549 = vmatprep.mubr.bf16.mxu0 0
      %1550 = vmatmul.mubr.bf16.gmra.mrb[0].mxu0 %v1440
      %v1551 = vpop.f32.mrb[0].mxu0
      %v1552 = vadd.f32 0.0, %v1551
      %v1553 = vpop.f32.mrb[0].mxu0
      %v1554 = vpop.f32.mrb[0].mxu0
      %v1555 = vadd.f32 0.0, %v1554
      %v1556 = vpop.f32.mrb[0].mxu0
      %1557 = vmatprep.mubr.bf16.mxu0 0
      %1558 = vmatmul.mubr.bf16.gmra.mrb[0].mxu0 %v1443
      %v1559 = vpop.f32.mrb[0].mxu0
      %v1560 = vadd.f32 0.0, %v1559
      %v1561 = vpop.f32.mrb[0].mxu0
      %v1562 = vpop.f32.mrb[0].mxu0
      %v1563 = vadd.f32 0.0, %v1562
      %v1564 = vpop.f32.mrb[0].mxu0
      %1565 = vmatprep.mubr.bf16.mxu0 0
      %1566 = vmatmul.mubr.bf16.gmra.mrb[0].mxu0 %v1446
      %v1567 = vpop.f32.mrb[0].mxu0
      %v1568 = vadd.f32 0.0, %v1567
      %v1569 = vpop.f32.mrb[0].mxu0
      %v1570 = vpop.f32.mrb[0].mxu0
      %v1571 = vadd.f32 0.0, %v1570
      %v1572 = vpop.f32.mrb[0].mxu0
      %1573 = vmatprep.mubr.bf16.mxu0 0
      %1574 = vmatmul.mubr.bf16.gmra.mrb[0].mxu0 %v1449
      %v1575 = vpop.f32.mrb[0].mxu0
      %v1576 = vadd.f32 0.0, %v1575
      %v1577 = vpop.f32.mrb[0].mxu0
      %v1578 = vpop.f32.mrb[0].mxu0
      %v1579 = vadd.f32 0.0, %v1578
      %v1580 = vpop.f32.mrb[0].mxu0
      %1581 = vmatprep.mubr.bf16.mxu0 0
      %1582 = vmatmul.mubr.bf16.gmra.mrb[0].mxu0 %v1452
      %v1583 = vpop.f32.mrb[0].mxu0
      %v1584 = vadd.f32 0.0, %v1583
      %v1585 = vpop.f32.mrb[0].mxu0
      %v1586 = vpop.f32.mrb[0].mxu0
      %v1587 = vadd.f32 0.0, %v1586
      %v1588 = vpop.f32.mrb[0].mxu0
      %1589 = vmatprep.mubr.bf16.mxu0 0
      %1590 = vmatmul.mubr.bf16.gmra.mrb[0].mxu0 %v1455
      %v1591 = vpop.f32.mrb[0].mxu0
      %v1592 = vadd.f32 0.0, %v1591
      %v1593 = vpop.f32.mrb[0].mxu0
      %v1594 = vpop.f32.mrb[0].mxu0
      %v1595 = vadd.f32 0.0, %v1594
      %v1596 = vpop.f32.mrb[0].mxu0
      %1597 = vmatprep.mubr.bf16.mxu0 0
      %1598 = vmatmul.mubr.bf16.gmra.mrb[0].mxu0 %v1458
      %v1599 = vpop.f32.mrb[0].mxu0
      %v1600 = vadd.f32 0.0, %v1599
      %v1601 = vpop.f32.mrb[0].mxu0
      %v1602 = vpop.f32.mrb[0].mxu0
      %v1603 = vadd.f32 0.0, %v1602
      %v1604 = vpop.f32.mrb[0].mxu0
      %1605 = vmatprep.mubr.bf16.mxu0 0
      %1606 = vmatmul.mubr.bf16.gmra.mrb[0].mxu0 %v1461
      %v1607 = vpop.f32.mrb[0].mxu0
      %v1608 = vadd.f32 0.0, %v1607
      %v1609 = vpop.f32.mrb[0].mxu0
      %v1610 = vpop.f32.mrb[0].mxu0
      %v1611 = vadd.f32 0.0, %v1610
      %v1612 = vpop.f32.mrb[0].mxu0
      %1613 = vmatprep.mubr.bf16.mxu0 0
      %1614 = vmatmul.mubr.bf16.gmra.mrb[0].mxu0 %v1464
      %v1615 = vpop.f32.mrb[0].mxu0
      %v1616 = vadd.f32 0.0, %v1615
      %v1617 = vpop.f32.mrb[0].mxu0
      %v1618 = vpop.f32.mrb[0].mxu0
      %v1619 = vadd.f32 0.0, %v1618
      %v1620 = vpop.f32.mrb[0].mxu0
      %1621 = vmatprep.mubr.bf16.mxu0 0
      %1622 = vmatmul.mubr.bf16.gmra.mrb[0].mxu0 %v1467
      %v1623 = vpop.f32.mrb[0].mxu0
      %v1624 = vadd.f32 0.0, %v1623
      %v1625 = vpop.f32.mrb[0].mxu0
      %v1626 = vpop.f32.mrb[0].mxu0
      %v1627 = vadd.f32 0.0, %v1626
      %v1628 = vpop.f32.mrb[0].mxu0
      %1629 = vdwg.mxu0
      %v1630 = vadd.f32 %v1260, %v1504
      %v1631 = vadd.f32 %v1261, %v1507
      %v1632 = vadd.f32 %v1262, %v1512
      %v1633 = vadd.f32 %v1263, %v1515
      %v1634 = vadd.f32 %v1264, %v1520
      %v1635 = vadd.f32 %v1265, %v1523
      %v1636 = vadd.f32 %v1266, %v1528
      %v1637 = vadd.f32 %v1267, %v1531
      %v1638 = vadd.f32 %v1268, %v1536
      %v1639 = vadd.f32 %v1269, %v1539
      %v1640 = vadd.f32 %v1270, %v1544
      %v1641 = vadd.f32 %v1271, %v1547
      %v1642 = vadd.f32 %v1272, %v1552
      %v1643 = vadd.f32 %v1273, %v1555
      %v1644 = vadd.f32 %v1274, %v1560
      %v1645 = vadd.f32 %v1275, %v1563
      %v1646 = vadd.f32 %v1276, %v1568
      %v1647 = vadd.f32 %v1277, %v1571
      %v1648 = vadd.f32 %v1278, %v1576
      %v1649 = vadd.f32 %v1279, %v1579
      %v1650 = vadd.f32 %v1280, %v1584
      %v1651 = vadd.f32 %v1281, %v1587
      %v1652 = vadd.f32 %v1282, %v1592
      %v1653 = vadd.f32 %v1283, %v1595
      %v1654 = vadd.f32 %v1284, %v1600
      %v1655 = vadd.f32 %v1285, %v1603
      %v1656 = vadd.f32 %v1286, %v1608
      %v1657 = vadd.f32 %v1287, %v1611
      %v1658 = vadd.f32 %v1288, %v1616
      %v1659 = vadd.f32 %v1289, %v1619
      %v1660 = vadd.f32 %v1290, %v1624
      %v1661 = vadd.f32 %v1291, %v1627
      %v1662 = vld [vmem:[%s3] sm:$0x1]
      %v1664 = vlaneseq
      %v1665 = vshrl.u32 %v1664, 7
      %v1666 = vsub.s32 0, %v1665
      %v1667 = vrot.slane %v1662, %v1666
      %v1669 = vmul.f32 %v1630, %v1667
      %v1670 = vmul.f32 %v1631, %v1667
      %v1671 = vmul.f32 %v1632, %v1667
      %v1672 = vmul.f32 %v1633, %v1667
      %v1673 = vmul.f32 %v1634, %v1667
      %v1674 = vmul.f32 %v1635, %v1667
      %v1675 = vmul.f32 %v1636, %v1667
      %v1676 = vmul.f32 %v1637, %v1667
      %v1677 = vmul.f32 %v1638, %v1667
      %v1678 = vmul.f32 %v1639, %v1667
      %v1679 = vmul.f32 %v1640, %v1667
      %v1680 = vmul.f32 %v1641, %v1667
      %v1681 = vmul.f32 %v1642, %v1667
      %v1682 = vmul.f32 %v1643, %v1667
      %v1683 = vmul.f32 %v1644, %v1667
      %v1684 = vmul.f32 %v1645, %v1667
      %v1685 = vmul.f32 %v1646, %v1667
      %v1686 = vmul.f32 %v1647, %v1667
      %v1687 = vmul.f32 %v1648, %v1667
      %v1688 = vmul.f32 %v1649, %v1667
      %v1689 = vmul.f32 %v1650, %v1667
      %v1690 = vmul.f32 %v1651, %v1667
      %v1691 = vmul.f32 %v1652, %v1667
      %v1692 = vmul.f32 %v1653, %v1667
      %v1693 = vmul.f32 %v1654, %v1667
      %v1694 = vmul.f32 %v1655, %v1667
      %v1695 = vmul.f32 %v1656, %v1667
      %v1696 = vmul.f32 %v1657, %v1667
      %v1697 = vmul.f32 %v1658, %v1667
      %v1698 = vmul.f32 %v1659, %v1667
      %v1699 = vmul.f32 %v1660, %v1667
      %v1700 = vmul.f32 %v1661, %v1667
      %v1701 = vld [vmem:[%s4] sm:$0x1]
      %v1703 = vlaneseq
      %v1704 = vshrl.u32 %v1703, 7
      %v1705 = vsub.s32 0, %v1704
      %v1706 = vrot.slane %v1701, %v1705
      %v1708 = vadd.f32 %v1669, %v1706
      %v1709 = vadd.f32 %v1670, %v1706
      %v1710 = vadd.f32 %v1671, %v1706
      %v1711 = vadd.f32 %v1672, %v1706
      %v1712 = vadd.f32 %v1673, %v1706
      %v1713 = vadd.f32 %v1674, %v1706
      %v1714 = vadd.f32 %v1675, %v1706
      %v1715 = vadd.f32 %v1676, %v1706
      %v1716 = vadd.f32 %v1677, %v1706
      %v1717 = vadd.f32 %v1678, %v1706
      %v1718 = vadd.f32 %v1679, %v1706
      %v1719 = vadd.f32 %v1680, %v1706
      %v1720 = vadd.f32 %v1681, %v1706
      %v1721 = vadd.f32 %v1682, %v1706
      %v1722 = vadd.f32 %v1683, %v1706
      %v1723 = vadd.f32 %v1684, %v1706
      %v1724 = vadd.f32 %v1685, %v1706
      %v1725 = vadd.f32 %v1686, %v1706
      %v1726 = vadd.f32 %v1687, %v1706
      %v1727 = vadd.f32 %v1688, %v1706
      %v1728 = vadd.f32 %v1689, %v1706
      %v1729 = vadd.f32 %v1690, %v1706
      %v1730 = vadd.f32 %v1691, %v1706
      %v1731 = vadd.f32 %v1692, %v1706
      %v1732 = vadd.f32 %v1693, %v1706
      %v1733 = vadd.f32 %v1694, %v1706
      %v1734 = vadd.f32 %v1695, %v1706
      %v1735 = vadd.f32 %v1696, %v1706
      %v1736 = vadd.f32 %v1697, %v1706
      %v1737 = vadd.f32 %v1698, %v1706
      %v1738 = vadd.f32 %v1699, %v1706
      %v1739 = vadd.f32 %v1700, %v1706
      %vm1740 = vcmp.gt.f32.partialorder %v1708, 0.0
      %vm1741 = vcmp.gt.f32.partialorder %v1709, 0.0
      %vm1742 = vcmp.gt.f32.partialorder %v1710, 0.0
      %vm1743 = vcmp.gt.f32.partialorder %v1711, 0.0
      %vm1744 = vcmp.gt.f32.partialorder %v1712, 0.0
      %vm1745 = vcmp.gt.f32.partialorder %v1713, 0.0
      %vm1746 = vcmp.gt.f32.partialorder %v1714, 0.0
      %vm1747 = vcmp.gt.f32.partialorder %v1715, 0.0
      %vm1748 = vcmp.gt.f32.partialorder %v1716, 0.0
      %vm1749 = vcmp.gt.f32.partialorder %v1717, 0.0
      %vm1750 = vcmp.gt.f32.partialorder %v1718, 0.0
      %vm1751 = vcmp.gt.f32.partialorder %v1719, 0.0
      %vm1752 = vcmp.gt.f32.partialorder %v1720, 0.0
      %vm1753 = vcmp.gt.f32.partialorder %v1721, 0.0
      %vm1754 = vcmp.gt.f32.partialorder %v1722, 0.0
      %vm1755 = vcmp.gt.f32.partialorder %v1723, 0.0
      %vm1756 = vcmp.gt.f32.partialorder %v1724, 0.0
      %vm1757 = vcmp.gt.f32.partialorder %v1725, 0.0
      %vm1758 = vcmp.gt.f32.partialorder %v1726, 0.0
      %vm1759 = vcmp.gt.f32.partialorder %v1727, 0.0
      %vm1760 = vcmp.gt.f32.partialorder %v1728, 0.0
      %vm1761 = vcmp.gt.f32.partialorder %v1729, 0.0
      %vm1762 = vcmp.gt.f32.partialorder %v1730, 0.0
      %vm1763 = vcmp.gt.f32.partialorder %v1731, 0.0
      %vm1764 = vcmp.gt.f32.partialorder %v1732, 0.0
      %vm1765 = vcmp.gt.f32.partialorder %v1733, 0.0
      %vm1766 = vcmp.gt.f32.partialorder %v1734, 0.0
      %vm1767 = vcmp.gt.f32.partialorder %v1735, 0.0
      %vm1768 = vcmp.gt.f32.partialorder %v1736, 0.0
      %vm1769 = vcmp.gt.f32.partialorder %v1737, 0.0
      %vm1770 = vcmp.gt.f32.partialorder %v1738, 0.0
      %vm1771 = vcmp.gt.f32.partialorder %v1739, 0.0
      %v1772 = vmul.f32 %v1708, 0.2
      %v1773 = vmul.f32 %v1709, 0.2
      %v1774 = vmul.f32 %v1710, 0.2
      %v1775 = vmul.f32 %v1711, 0.2
      %v1776 = vmul.f32 %v1712, 0.2
      %v1777 = vmul.f32 %v1713, 0.2
      %v1778 = vmul.f32 %v1714, 0.2
      %v1779 = vmul.f32 %v1715, 0.2
      %v1780 = vmul.f32 %v1716, 0.2
      %v1781 = vmul.f32 %v1717, 0.2
      %v1782 = vmul.f32 %v1718, 0.2
      %v1783 = vmul.f32 %v1719, 0.2
      %v1784 = vmul.f32 %v1720, 0.2
      %v1785 = vmul.f32 %v1721, 0.2
      %v1786 = vmul.f32 %v1722, 0.2
      %v1787 = vmul.f32 %v1723, 0.2
      %v1788 = vmul.f32 %v1724, 0.2
      %v1789 = vmul.f32 %v1725, 0.2
      %v1790 = vmul.f32 %v1726, 0.2
      %v1791 = vmul.f32 %v1727, 0.2
      %v1792 = vmul.f32 %v1728, 0.2
      %v1793 = vmul.f32 %v1729, 0.2
      %v1794 = vmul.f32 %v1730, 0.2
      %v1795 = vmul.f32 %v1731, 0.2
      %v1796 = vmul.f32 %v1732, 0.2
      %v1797 = vmul.f32 %v1733, 0.2
      %v1798 = vmul.f32 %v1734, 0.2
      %v1799 = vmul.f32 %v1735, 0.2
      %v1800 = vmul.f32 %v1736, 0.2
      %v1801 = vmul.f32 %v1737, 0.2
      %v1802 = vmul.f32 %v1738, 0.2
      %v1803 = vmul.f32 %v1739, 0.2
      %v1804 = vsel %vm1740, %v1708, %v1772
      %v1805 = vsel %vm1741, %v1709, %v1773
      %v1806 = vsel %vm1742, %v1710, %v1774
      %v1807 = vsel %vm1743, %v1711, %v1775
      %v1808 = vsel %vm1744, %v1712, %v1776
      %v1809 = vsel %vm1745, %v1713, %v1777
      %v1810 = vsel %vm1746, %v1714, %v1778
      %v1811 = vsel %vm1747, %v1715, %v1779
      %v1812 = vsel %vm1748, %v1716, %v1780
      %v1813 = vsel %vm1749, %v1717, %v1781
      %v1814 = vsel %vm1750, %v1718, %v1782
      %v1815 = vsel %vm1751, %v1719, %v1783
      %v1816 = vsel %vm1752, %v1720, %v1784
      %v1817 = vsel %vm1753, %v1721, %v1785
      %v1818 = vsel %vm1754, %v1722, %v1786
      %v1819 = vsel %vm1755, %v1723, %v1787
      %v1820 = vsel %vm1756, %v1724, %v1788
      %v1821 = vsel %vm1757, %v1725, %v1789
      %v1822 = vsel %vm1758, %v1726, %v1790
      %v1823 = vsel %vm1759, %v1727, %v1791
      %v1824 = vsel %vm1760, %v1728, %v1792
      %v1825 = vsel %vm1761, %v1729, %v1793
      %v1826 = vsel %vm1762, %v1730, %v1794
      %v1827 = vsel %vm1763, %v1731, %v1795
      %v1828 = vsel %vm1764, %v1732, %v1796
      %v1829 = vsel %vm1765, %v1733, %v1797
      %v1830 = vsel %vm1766, %v1734, %v1798
      %v1831 = vsel %vm1767, %v1735, %v1799
      %v1832 = vsel %vm1768, %v1736, %v1800
      %v1833 = vsel %vm1769, %v1737, %v1801
      %v1834 = vsel %vm1770, %v1738, %v1802
      %v1835 = vsel %vm1771, %v1739, %v1803
      %v1836 = vpack.c.bf16 %v1805, %v1804
      %v1837 = vpack.c.bf16 %v1807, %v1806
      %v1838 = vpack.c.bf16 %v1809, %v1808
      %v1839 = vpack.c.bf16 %v1811, %v1810
      %v1840 = vpack.c.bf16 %v1813, %v1812
      %v1841 = vpack.c.bf16 %v1815, %v1814
      %v1842 = vpack.c.bf16 %v1817, %v1816
      %v1843 = vpack.c.bf16 %v1819, %v1818
      %v1844 = vpack.c.bf16 %v1821, %v1820
      %v1845 = vpack.c.bf16 %v1823, %v1822
      %v1846 = vpack.c.bf16 %v1825, %v1824
      %v1847 = vpack.c.bf16 %v1827, %v1826
      %v1848 = vpack.c.bf16 %v1829, %v1828
      %v1849 = vpack.c.bf16 %v1831, %v1830
      %v1850 = vpack.c.bf16 %v1833, %v1832
      %v1851 = vpack.c.bf16 %v1835, %v1834
      %v1868 = vunpack.c.l.b16 %v1836
      %v1869 = vunpack.c.h.b16 %v1836
      %v1870 = vunpack.c.l.b16 %v1837
      %v1871 = vunpack.c.h.b16 %v1837
      %v1872 = vunpack.c.l.b16 %v1838
      %v1873 = vunpack.c.h.b16 %v1838
      %v1874 = vunpack.c.l.b16 %v1839
      %v1875 = vunpack.c.h.b16 %v1839
      %v1876 = vunpack.c.l.b16 %v1840
      %v1877 = vunpack.c.h.b16 %v1840
      %v1878 = vunpack.c.l.b16 %v1841
      %v1879 = vunpack.c.h.b16 %v1841
      %v1880 = vunpack.c.l.b16 %v1842
      %v1881 = vunpack.c.h.b16 %v1842
      %v1882 = vunpack.c.l.b16 %v1843
      %v1883 = vunpack.c.h.b16 %v1843
      %v1884 = vunpack.c.l.b16 %v1844
      %v1885 = vunpack.c.h.b16 %v1844
      %v1886 = vunpack.c.l.b16 %v1845
      %v1887 = vunpack.c.h.b16 %v1845
      %v1888 = vunpack.c.l.b16 %v1846
      %v1889 = vunpack.c.h.b16 %v1846
      %v1890 = vunpack.c.l.b16 %v1847
      %v1891 = vunpack.c.h.b16 %v1847
      %v1892 = vunpack.c.l.b16 %v1848
      %v1893 = vunpack.c.h.b16 %v1848
      %v1894 = vunpack.c.l.b16 %v1849
      %v1895 = vunpack.c.h.b16 %v1849
      %v1896 = vunpack.c.l.b16 %v1850
      %v1897 = vunpack.c.h.b16 %v1850
      %v1898 = vunpack.c.l.b16 %v1851
      %v1899 = vunpack.c.h.b16 %v1851
      %v1900 = vpack.c.b16 %v1868, %v1868
      %v1901 = vpack.c.b16 %v1869, %v1869
      %v1902 = vpack.c.b16 %v1870, %v1870
      %v1903 = vpack.c.b16 %v1871, %v1871
      %v1904 = vpack.c.b16 %v1872, %v1872
      %v1905 = vpack.c.b16 %v1873, %v1873
      %v1906 = vpack.c.b16 %v1874, %v1874
      %v1907 = vpack.c.b16 %v1875, %v1875
      %v1908 = vpack.c.b16 %v1876, %v1876
      %v1909 = vpack.c.b16 %v1877, %v1877
      %v1910 = vpack.c.b16 %v1878, %v1878
      %v1911 = vpack.c.b16 %v1879, %v1879
      %v1912 = vpack.c.b16 %v1880, %v1880
      %v1913 = vpack.c.b16 %v1881, %v1881
      %v1914 = vpack.c.b16 %v1882, %v1882
      %v1915 = vpack.c.b16 %v1883, %v1883
      %v1916 = vpack.c.b16 %v1884, %v1884
      %v1917 = vpack.c.b16 %v1885, %v1885
      %v1918 = vpack.c.b16 %v1886, %v1886
      %v1919 = vpack.c.b16 %v1887, %v1887
      %v1920 = vpack.c.b16 %v1888, %v1888
      %v1921 = vpack.c.b16 %v1889, %v1889
      %v1922 = vpack.c.b16 %v1890, %v1890
      %v1923 = vpack.c.b16 %v1891, %v1891
      %v1924 = vpack.c.b16 %v1892, %v1892
      %v1925 = vpack.c.b16 %v1893, %v1893
      %v1926 = vpack.c.b16 %v1894, %v1894
      %v1927 = vpack.c.b16 %v1895, %v1895
      %v1928 = vpack.c.b16 %v1896, %v1896
      %v1929 = vpack.c.b16 %v1897, %v1897
      %v1930 = vpack.c.b16 %v1898, %v1898
      %v1931 = vpack.c.b16 %v1899, %v1899
      %1964 = vst [vmem:[%s244] sm:$0xf] %v1900
      %1965 = vst [vmem:[%s244 + $0x4] sm:$0xf] %v1901
      %1966 = vst [vmem:[%s244 + $0x8] sm:$0xf] %v1902
      %1967 = vst [vmem:[%s244 + $0xc] sm:$0xf] %v1903
      %1968 = vst [vmem:[%s244 + $0x10] sm:$0xf] %v1904
      %1969 = vst [vmem:[%s244 + $0x14] sm:$0xf] %v1905
      %1970 = vst [vmem:[%s244 + $0x18] sm:$0xf] %v1906
      %1971 = vst [vmem:[%s244 + $0x1c] sm:$0xf] %v1907
      %1972 = vst [vmem:[%s244 + $0x20] sm:$0xf] %v1908
      %1973 = vst [vmem:[%s244 + $0x24] sm:$0xf] %v1909
      %1974 = vst [vmem:[%s244 + $0x28] sm:$0xf] %v1910
      %1975 = vst [vmem:[%s244 + $0x2c] sm:$0xf] %v1911
      %1976 = vst [vmem:[%s244 + $0x30] sm:$0xf] %v1912
      %1977 = vst [vmem:[%s244 + $0x34] sm:$0xf] %v1913
      %1978 = vst [vmem:[%s244 + $0x38] sm:$0xf] %v1914
      %1979 = vst [vmem:[%s244 + $0x3c] sm:$0xf] %v1915
      %1980 = vst [vmem:[%s244 + $0x40] sm:$0xf] %v1916
      %1981 = vst [vmem:[%s244 + $0x44] sm:$0xf] %v1917
      %1982 = vst [vmem:[%s244 + $0x48] sm:$0xf] %v1918
      %1983 = vst [vmem:[%s244 + $0x4c] sm:$0xf] %v1919
      %1984 = vst [vmem:[%s244 + $0x50] sm:$0xf] %v1920
      %1985 = vst [vmem:[%s244 + $0x54] sm:$0xf] %v1921
      %1986 = vst [vmem:[%s244 + $0x58] sm:$0xf] %v1922
      %1987 = vst [vmem:[%s244 + $0x5c] sm:$0xf] %v1923
      %1988 = vst [vmem:[%s244 + $0x60] sm:$0xf] %v1924
      %1989 = vst [vmem:[%s244 + $0x64] sm:$0xf] %v1925
      %1990 = vst [vmem:[%s244 + $0x68] sm:$0xf] %v1926
      %1991 = vst [vmem:[%s244 + $0x6c] sm:$0xf] %v1927
      %1992 = vst [vmem:[%s244 + $0x70] sm:$0xf] %v1928
      %1993 = vst [vmem:[%s244 + $0x74] sm:$0xf] %v1929
      %1994 = vst [vmem:[%s244 + $0x78] sm:$0xf] %v1930
      %1995 = vst [vmem:[%s244 + $0x7c] sm:$0xf] %v1931
      %p1996 = scmp.lt.s32.totalorder %s16, 1
      %s1997 = scalar_select %p1996, %s16, 1
      %s1998 = smul.addr %s1997, 32
      %s1999 = smul.addr %s1998, 4
      %s2000 = scalar_lea.vmem %s5, %s1999
      // Predicated region
      $region41: #{netD_forward.6} parent=39 // pred_check
        %p2001 = pneg %p149
      $region42: #{netD_forward.6} parent=39 // pred_check_branch
        %2003 = sbr.rel (%p2001) target = $region44
      $region43: #{netD_forward.6} parent=39 // pred_region
        _
      $region44: #{netD_forward.6} parent=39 // pred_fallthru
        _
    $region40: #{netD_forward.6} parent=5 // pred_fallthru
      _
    %p2004 = scmp.le.s32.totalorder 2, %s11
    // Predicated region
    $region45: #{netD_forward.6} parent=5 // pred_check
      %p2005 = pneg %p2004
    $region46: #{netD_forward.6} parent=5 // pred_check_branch
      %2007 = sbr.rel (%p2005) target = $region48
    $region47: #{netD_forward.6} parent=5 // pred_region
      %s2008 = ssub.s32 %s11, 2
      // Predicated region
      $region49: #{netD_forward.6} parent=47 // pred_check
        %p2009 = pneg %p155
      $region50: #{netD_forward.6} parent=47 // pred_check_branch
        %2011 = sbr.rel (%p2009) target = $region52
      $region51: #{netD_forward.6} parent=47 // pred_region
        %p2012 = scmp.lt.s32.totalorder %s17, 1
        %s2013 = scalar_select %p2012, %s17, 1
        %s2014 = smul.addr %s2013, 32
        %s2015 = smul.addr %s2014, 4
        %s2016 = scalar_lea.vmem %s5, %s2015
      $region52: #{netD_forward.6} parent=47 // pred_fallthru
        _
    $region48: #{netD_forward.6} parent=5 // pred_fallthru
      _
  $region6: #{netD_forward.6} parent=0 // loop_footer
    %s15 = sadd.s32 1, %s11
  $region7: #{netD_forward.6} parent=0 // loop_footer_branch
    %10 = sbr.rel target = $region3
  $region8: #{netD_forward.6} parent=0 // loop_exit
    _

// kernel: netD_forward.7
$region0: #{netD_forward.7}
  #allocation0 [shape = 'u32[]', space=smem, size = 0x4, offset = 0x4, fixed_abs, tag = 'smem constant byte address 0x4 - core index']
  #allocation1 [shape = 'u32[144,128]{1,0:T(1,128)}', space=vmem, size = 0x12000, scoped, tag = 'internal scratch']
  %s0 = inlined_call_operand.vmem [shape: bf16[128,256], index: 0, kind: input, shape index: {}]
  %s1 = inlined_call_operand.vmem [shape: bf16[256,128], index: 1, kind: input, shape index: {}]
  %s2 = inlined_call_operand.vmem [shape: f32[1,128], index: 2, kind: input, shape index: {}]
  %s3 = inlined_call_operand.vmem [shape: f32[1,128], index: 3, kind: input, shape index: {}]
  %s4 = inlined_call_operand.vmem [shape: bf16[128,128], index: 4, kind: output, shape index: {}]
  %s5 = sld [smem:[#allocation0]]
  $region26: #{netD_forward.7} parent=0
    _
  %s7 = ssub.s32 1, %s5
  %s8 = scalar_select 0, %s7, %s5
  // Predicated region
  $region2: #{netD_forward.7} parent=0 // pred_check
    _
  $region3: #{netD_forward.7} parent=0 // pred_check_branch
    %10 = sbr.rel (0) target = $region5
  $region4: #{netD_forward.7} parent=0 // pred_region
    _
  $region5: #{netD_forward.7} parent=0 // pred_fallthru
    _
  // Predicated region
  $region6: #{netD_forward.7} parent=0 // pred_check
    _
  $region7: #{netD_forward.7} parent=0 // pred_check_branch
    %12 = sbr.rel (0) target = $region9
  $region8: #{netD_forward.7} parent=0 // pred_region
    _
  $region9: #{netD_forward.7} parent=0 // pred_fallthru
    _
  // Predicated region
  $region10: #{netD_forward.7} parent=0 // pred_check
    _
  $region11: #{netD_forward.7} parent=0 // pred_check_branch
    %14 = sbr.rel (0) target = $region13
  $region12: #{netD_forward.7} parent=0 // pred_region
    _
  $region13: #{netD_forward.7} parent=0 // pred_fallthru
    _
  // Predicated region
  $region14: #{netD_forward.7} parent=0 // pred_check
    _
  $region15: #{netD_forward.7} parent=0 // pred_check_branch
    %16 = sbr.rel (0) target = $region17
  $region16: #{netD_forward.7} parent=0 // pred_region
    _
  $region17: #{netD_forward.7} parent=0 // pred_fallthru
    _
  %v18 = vld [vmem:[%s0] sm:$0xff]
  %v19 = vld [vmem:[%s0 + $0x8] sm:$0xff]
  %v20 = vld [vmem:[%s0 + $0x10] sm:$0xff]
  %v21 = vld [vmem:[%s0 + $0x18] sm:$0xff]
  %v22 = vld [vmem:[%s0 + $0x20] sm:$0xff]
  %v23 = vld [vmem:[%s0 + $0x28] sm:$0xff]
  %v24 = vld [vmem:[%s0 + $0x30] sm:$0xff]
  %v25 = vld [vmem:[%s0 + $0x38] sm:$0xff]
  %v26 = vld [vmem:[%s0 + $0x40] sm:$0xff]
  %v27 = vld [vmem:[%s0 + $0x48] sm:$0xff]
  %v28 = vld [vmem:[%s0 + $0x50] sm:$0xff]
  %v29 = vld [vmem:[%s0 + $0x58] sm:$0xff]
  %v30 = vld [vmem:[%s0 + $0x60] sm:$0xff]
  %v31 = vld [vmem:[%s0 + $0x68] sm:$0xff]
  %v32 = vld [vmem:[%s0 + $0x70] sm:$0xff]
  %v33 = vld [vmem:[%s0 + $0x78] sm:$0xff]
  %v34 = vld [vmem:[%s1] sm:$0xf]
  %v35 = vld [vmem:[%s1 + $0x4] sm:$0xf]
  %v36 = vld [vmem:[%s1 + $0x8] sm:$0xf]
  %v37 = vld [vmem:[%s1 + $0xc] sm:$0xf]
  %v38 = vld [vmem:[%s1 + $0x10] sm:$0xf]
  %v39 = vld [vmem:[%s1 + $0x14] sm:$0xf]
  %v40 = vld [vmem:[%s1 + $0x18] sm:$0xf]
  %v41 = vld [vmem:[%s1 + $0x1c] sm:$0xf]
  %v42 = vld [vmem:[%s1 + $0x20] sm:$0xf]
  %v43 = vld [vmem:[%s1 + $0x24] sm:$0xf]
  %v44 = vld [vmem:[%s1 + $0x28] sm:$0xf]
  %v45 = vld [vmem:[%s1 + $0x2c] sm:$0xf]
  %v46 = vld [vmem:[%s1 + $0x30] sm:$0xf]
  %v47 = vld [vmem:[%s1 + $0x34] sm:$0xf]
  %v48 = vld [vmem:[%s1 + $0x38] sm:$0xf]
  %v49 = vld [vmem:[%s1 + $0x3c] sm:$0xf]
  %v50 = vld [vmem:[%s1 + $0x40] sm:$0xf]
  %v51 = vld [vmem:[%s1 + $0x44] sm:$0xf]
  %v52 = vld [vmem:[%s1 + $0x48] sm:$0xf]
  %v53 = vld [vmem:[%s1 + $0x4c] sm:$0xf]
  %v54 = vld [vmem:[%s1 + $0x50] sm:$0xf]
  %v55 = vld [vmem:[%s1 + $0x54] sm:$0xf]
  %v56 = vld [vmem:[%s1 + $0x58] sm:$0xf]
  %v57 = vld [vmem:[%s1 + $0x5c] sm:$0xf]
  %v58 = vld [vmem:[%s1 + $0x60] sm:$0xf]
  %v59 = vld [vmem:[%s1 + $0x64] sm:$0xf]
  %v60 = vld [vmem:[%s1 + $0x68] sm:$0xf]
  %v61 = vld [vmem:[%s1 + $0x6c] sm:$0xf]
  %v62 = vld [vmem:[%s1 + $0x70] sm:$0xf]
  %v63 = vld [vmem:[%s1 + $0x74] sm:$0xf]
  %v64 = vld [vmem:[%s1 + $0x78] sm:$0xf]
  %v65 = vld [vmem:[%s1 + $0x7c] sm:$0xf]
  %v82 = vunpack.c.l.b16 %v18
  %v83 = vunpack.c.h.b16 %v18
  %v84 = vunpack.c.l.b16 %v19
  %v85 = vunpack.c.h.b16 %v19
  %v86 = vunpack.c.l.b16 %v20
  %v87 = vunpack.c.h.b16 %v20
  %v88 = vunpack.c.l.b16 %v21
  %v89 = vunpack.c.h.b16 %v21
  %v90 = vunpack.c.l.b16 %v22
  %v91 = vunpack.c.h.b16 %v22
  %v92 = vunpack.c.l.b16 %v23
  %v93 = vunpack.c.h.b16 %v23
  %v94 = vunpack.c.l.b16 %v24
  %v95 = vunpack.c.h.b16 %v24
  %v96 = vunpack.c.l.b16 %v25
  %v97 = vunpack.c.h.b16 %v25
  %v98 = vunpack.c.l.b16 %v26
  %v99 = vunpack.c.h.b16 %v26
  %v100 = vunpack.c.l.b16 %v27
  %v101 = vunpack.c.h.b16 %v27
  %v102 = vunpack.c.l.b16 %v28
  %v103 = vunpack.c.h.b16 %v28
  %v104 = vunpack.c.l.b16 %v29
  %v105 = vunpack.c.h.b16 %v29
  %v106 = vunpack.c.l.b16 %v30
  %v107 = vunpack.c.h.b16 %v30
  %v108 = vunpack.c.l.b16 %v31
  %v109 = vunpack.c.h.b16 %v31
  %v110 = vunpack.c.l.b16 %v32
  %v111 = vunpack.c.h.b16 %v32
  %v112 = vunpack.c.l.b16 %v33
  %v113 = vunpack.c.h.b16 %v33
  %v114 = vpack.c.b16 %v84, %v82
  %v115 = vpack.c.b16 %v85, %v83
  %v116 = vpack.c.b16 %v88, %v86
  %v117 = vpack.c.b16 %v89, %v87
  %v118 = vpack.c.b16 %v92, %v90
  %v119 = vpack.c.b16 %v93, %v91
  %v120 = vpack.c.b16 %v96, %v94
  %v121 = vpack.c.b16 %v97, %v95
  %v122 = vpack.c.b16 %v100, %v98
  %v123 = vpack.c.b16 %v101, %v99
  %v124 = vpack.c.b16 %v104, %v102
  %v125 = vpack.c.b16 %v105, %v103
  %v126 = vpack.c.b16 %v108, %v106
  %v127 = vpack.c.b16 %v109, %v107
  %v128 = vpack.c.b16 %v112, %v110
  %v129 = vpack.c.b16 %v113, %v111
  %v178 = vunpack.c.l.b16 %v34
  %v179 = vunpack.c.l.b16 %v35
  %v180 = vunpack.c.l.b16 %v36
  %v181 = vunpack.c.l.b16 %v37
  %v182 = vunpack.c.l.b16 %v38
  %v183 = vunpack.c.l.b16 %v39
  %v184 = vunpack.c.l.b16 %v40
  %v185 = vunpack.c.l.b16 %v41
  %v186 = vunpack.c.l.b16 %v42
  %v187 = vunpack.c.l.b16 %v43
  %v188 = vunpack.c.l.b16 %v44
  %v189 = vunpack.c.l.b16 %v45
  %v190 = vunpack.c.l.b16 %v46
  %v191 = vunpack.c.l.b16 %v47
  %v192 = vunpack.c.l.b16 %v48
  %v193 = vunpack.c.l.b16 %v49
  %v194 = vunpack.c.l.b16 %v50
  %v195 = vunpack.c.l.b16 %v51
  %v196 = vunpack.c.l.b16 %v52
  %v197 = vunpack.c.l.b16 %v53
  %v198 = vunpack.c.l.b16 %v54
  %v199 = vunpack.c.l.b16 %v55
  %v200 = vunpack.c.l.b16 %v56
  %v201 = vunpack.c.l.b16 %v57
  %v202 = vunpack.c.l.b16 %v58
  %v203 = vunpack.c.l.b16 %v59
  %v204 = vunpack.c.l.b16 %v60
  %v205 = vunpack.c.l.b16 %v61
  %v206 = vunpack.c.l.b16 %v62
  %v207 = vunpack.c.l.b16 %v63
  %v208 = vunpack.c.l.b16 %v64
  %v209 = vunpack.c.l.b16 %v65
  %v210 = vpack.c.b16 %v179, %v178
  %v211 = vpack.c.b16 %v181, %v180
  %v212 = vpack.c.b16 %v183, %v182
  %v213 = vpack.c.b16 %v185, %v184
  %v214 = vpack.c.b16 %v187, %v186
  %v215 = vpack.c.b16 %v189, %v188
  %v216 = vpack.c.b16 %v191, %v190
  %v217 = vpack.c.b16 %v193, %v192
  %v218 = vpack.c.b16 %v195, %v194
  %v219 = vpack.c.b16 %v197, %v196
  %v220 = vpack.c.b16 %v199, %v198
  %v221 = vpack.c.b16 %v201, %v200
  %v222 = vpack.c.b16 %v203, %v202
  %v223 = vpack.c.b16 %v205, %v204
  %v224 = vpack.c.b16 %v207, %v206
  %v225 = vpack.c.b16 %v209, %v208
  %242 = vmatprep.subr.bf16.mxu0 0
  %243 = vmatpush1.bf16.msra.mxu0 %v210
  %244 = vmatprep.subr.bf16.mxu0 0
  %245 = vmatpush1.bf16.msra.mxu0 %v211
  %246 = vmatprep.subr.bf16.mxu0 0
  %247 = vmatpush1.bf16.msra.mxu0 %v212
  %248 = vmatprep.subr.bf16.mxu0 0
  %249 = vmatpush1.bf16.msra.mxu0 %v213
  %250 = vmatprep.subr.bf16.mxu0 0
  %251 = vmatpush1.bf16.msra.mxu0 %v214
  %252 = vmatprep.subr.bf16.mxu0 0
  %253 = vmatpush1.bf16.msra.mxu0 %v215
  %254 = vmatprep.subr.bf16.mxu0 0
  %255 = vmatpush1.bf16.msra.mxu0 %v216
  %256 = vmatprep.subr.bf16.mxu0 0
  %257 = vmatpush1.bf16.msra.mxu0 %v217
  %258 = vmatprep.subr.bf16.mxu0 0
  %259 = vmatpush1.bf16.msra.mxu0 %v218
  %260 = vmatprep.subr.bf16.mxu0 0
  %261 = vmatpush1.bf16.msra.mxu0 %v219
  %262 = vmatprep.subr.bf16.mxu0 0
  %263 = vmatpush1.bf16.msra.mxu0 %v220
  %264 = vmatprep.subr.bf16.mxu0 0
  %265 = vmatpush1.bf16.msra.mxu0 %v221
  %266 = vmatprep.subr.bf16.mxu0 0
  %267 = vmatpush1.bf16.msra.mxu0 %v222
  %268 = vmatprep.subr.bf16.mxu0 0
  %269 = vmatpush1.bf16.msra.mxu0 %v223
  %270 = vmatprep.subr.bf16.mxu0 0
  %271 = vmatpush1.bf16.msra.mxu0 %v224
  %272 = vmatprep.subr.bf16.mxu0 0
  %273 = vmatpush1.bf16.msra.mxu0 %v225
  %274 = vmatprep.mubr.bf16.mxu0 %v115
  %275 = vmatmul.mubr.bf16.gmra.mrb[0].mxu0 %v114
  %v276 = vpop.f32.mrb[0].mxu0
  %v277 = vadd.f32 0.0, %v276
  %v278 = vpop.f32.mrb[0].mxu0
  %v279 = vpop.f32.mrb[0].mxu0
  %v280 = vadd.f32 0.0, %v279
  %v281 = vpop.f32.mrb[0].mxu0
  %282 = vmatprep.mubr.bf16.mxu0 %v117
  %283 = vmatmul.mubr.bf16.gmra.mrb[0].mxu0 %v116
  %v284 = vpop.f32.mrb[0].mxu0
  %v285 = vadd.f32 0.0, %v284
  %v286 = vpop.f32.mrb[0].mxu0
  %v287 = vpop.f32.mrb[0].mxu0
  %v288 = vadd.f32 0.0, %v287
  %v289 = vpop.f32.mrb[0].mxu0
  %290 = vmatprep.mubr.bf16.mxu0 %v119
  %291 = vmatmul.mubr.bf16.gmra.mrb[0].mxu0 %v118
  %v292 = vpop.f32.mrb[0].mxu0
  %v293 = vadd.f32 0.0, %v292
  %v294 = vpop.f32.mrb[0].mxu0
  %v295 = vpop.f32.mrb[0].mxu0
  %v296 = vadd.f32 0.0, %v295
  %v297 = vpop.f32.mrb[0].mxu0
  %298 = vmatprep.mubr.bf16.mxu0 %v121
  %299 = vmatmul.mubr.bf16.gmra.mrb[0].mxu0 %v120
  %v300 = vpop.f32.mrb[0].mxu0
  %v301 = vadd.f32 0.0, %v300
  %v302 = vpop.f32.mrb[0].mxu0
  %v303 = vpop.f32.mrb[0].mxu0
  %v304 = vadd.f32 0.0, %v303
  %v305 = vpop.f32.mrb[0].mxu0
  %306 = vmatprep.mubr.bf16.mxu0 %v123
  %307 = vmatmul.mubr.bf16.gmra.mrb[0].mxu0 %v122
  %v308 = vpop.f32.mrb[0].mxu0
  %v309 = vadd.f32 0.0, %v308
  %v310 = vpop.f32.mrb[0].mxu0
  %v311 = vpop.f32.mrb[0].mxu0
  %v312 = vadd.f32 0.0, %v311
  %v313 = vpop.f32.mrb[0].mxu0
  %314 = vmatprep.mubr.bf16.mxu0 %v125
  %315 = vmatmul.mubr.bf16.gmra.mrb[0].mxu0 %v124
  %v316 = vpop.f32.mrb[0].mxu0
  %v317 = vadd.f32 0.0, %v316
  %v318 = vpop.f32.mrb[0].mxu0
  %v319 = vpop.f32.mrb[0].mxu0
  %v320 = vadd.f32 0.0, %v319
  %v321 = vpop.f32.mrb[0].mxu0
  %322 = vmatprep.mubr.bf16.mxu0 %v127
  %323 = vmatmul.mubr.bf16.gmra.mrb[0].mxu0 %v126
  %v324 = vpop.f32.mrb[0].mxu0
  %v325 = vadd.f32 0.0, %v324
  %v326 = vpop.f32.mrb[0].mxu0
  %v327 = vpop.f32.mrb[0].mxu0
  %v328 = vadd.f32 0.0, %v327
  %v329 = vpop.f32.mrb[0].mxu0
  %330 = vmatprep.mubr.bf16.mxu0 %v129
  %331 = vmatmul.mubr.bf16.gmra.mrb[0].mxu0 %v128
  %v332 = vpop.f32.mrb[0].mxu0
  %v333 = vadd.f32 0.0, %v332
  %v334 = vpop.f32.mrb[0].mxu0
  %v335 = vpop.f32.mrb[0].mxu0
  %v336 = vadd.f32 0.0, %v335
  %v337 = vpop.f32.mrb[0].mxu0
  %338 = vdwg.mxu0
  %v339 = vld [vmem:[%s2] sm:$0x1]
  %v341 = vlaneseq
  %v342 = vshrl.u32 %v341, 7
  %v343 = vsub.s32 0, %v342
  %v344 = vrot.slane %v339, %v343
  %v346 = vmul.f32 %v277, %v344
  %v347 = vmul.f32 %v280, %v344
  %v348 = vmul.f32 %v285, %v344
  %v349 = vmul.f32 %v288, %v344
  %v350 = vmul.f32 %v293, %v344
  %v351 = vmul.f32 %v296, %v344
  %v352 = vmul.f32 %v301, %v344
  %v353 = vmul.f32 %v304, %v344
  %v354 = vmul.f32 %v309, %v344
  %v355 = vmul.f32 %v312, %v344
  %v356 = vmul.f32 %v317, %v344
  %v357 = vmul.f32 %v320, %v344
  %v358 = vmul.f32 %v325, %v344
  %v359 = vmul.f32 %v328, %v344
  %v360 = vmul.f32 %v333, %v344
  %v361 = vmul.f32 %v336, %v344
  %v362 = vld [vmem:[%s3] sm:$0x1]
  %v364 = vlaneseq
  %v365 = vshrl.u32 %v364, 7
  %v366 = vsub.s32 0, %v365
  %v367 = vrot.slane %v362, %v366
  %v369 = vadd.f32 %v346, %v367
  %v370 = vadd.f32 %v347, %v367
  %v371 = vadd.f32 %v348, %v367
  %v372 = vadd.f32 %v349, %v367
  %v373 = vadd.f32 %v350, %v367
  %v374 = vadd.f32 %v351, %v367
  %v375 = vadd.f32 %v352, %v367
  %v376 = vadd.f32 %v353, %v367
  %v377 = vadd.f32 %v354, %v367
  %v378 = vadd.f32 %v355, %v367
  %v379 = vadd.f32 %v356, %v367
  %v380 = vadd.f32 %v357, %v367
  %v381 = vadd.f32 %v358, %v367
  %v382 = vadd.f32 %v359, %v367
  %v383 = vadd.f32 %v360, %v367
  %v384 = vadd.f32 %v361, %v367
  %vm385 = vcmp.gt.f32.partialorder %v369, 0.0
  %vm386 = vcmp.gt.f32.partialorder %v370, 0.0
  %vm387 = vcmp.gt.f32.partialorder %v371, 0.0
  %vm388 = vcmp.gt.f32.partialorder %v372, 0.0
  %vm389 = vcmp.gt.f32.partialorder %v373, 0.0
  %vm390 = vcmp.gt.f32.partialorder %v374, 0.0
  %vm391 = vcmp.gt.f32.partialorder %v375, 0.0
  %vm392 = vcmp.gt.f32.partialorder %v376, 0.0
  %vm393 = vcmp.gt.f32.partialorder %v377, 0.0
  %vm394 = vcmp.gt.f32.partialorder %v378, 0.0
  %vm395 = vcmp.gt.f32.partialorder %v379, 0.0
  %vm396 = vcmp.gt.f32.partialorder %v380, 0.0
  %vm397 = vcmp.gt.f32.partialorder %v381, 0.0
  %vm398 = vcmp.gt.f32.partialorder %v382, 0.0
  %vm399 = vcmp.gt.f32.partialorder %v383, 0.0
  %vm400 = vcmp.gt.f32.partialorder %v384, 0.0
  %v401 = vmul.f32 %v369, 0.2
  %v402 = vmul.f32 %v370, 0.2
  %v403 = vmul.f32 %v371, 0.2
  %v404 = vmul.f32 %v372, 0.2
  %v405 = vmul.f32 %v373, 0.2
  %v406 = vmul.f32 %v374, 0.2
  %v407 = vmul.f32 %v375, 0.2
  %v408 = vmul.f32 %v376, 0.2
  %v409 = vmul.f32 %v377, 0.2
  %v410 = vmul.f32 %v378, 0.2
  %v411 = vmul.f32 %v379, 0.2
  %v412 = vmul.f32 %v380, 0.2
  %v413 = vmul.f32 %v381, 0.2
  %v414 = vmul.f32 %v382, 0.2
  %v415 = vmul.f32 %v383, 0.2
  %v416 = vmul.f32 %v384, 0.2
  %v417 = vsel %vm385, %v369, %v401
  %v418 = vsel %vm386, %v370, %v402
  %v419 = vsel %vm387, %v371, %v403
  %v420 = vsel %vm388, %v372, %v404
  %v421 = vsel %vm389, %v373, %v405
  %v422 = vsel %vm390, %v374, %v406
  %v423 = vsel %vm391, %v375, %v407
  %v424 = vsel %vm392, %v376, %v408
  %v425 = vsel %vm393, %v377, %v409
  %v426 = vsel %vm394, %v378, %v410
  %v427 = vsel %vm395, %v379, %v411
  %v428 = vsel %vm396, %v380, %v412
  %v429 = vsel %vm397, %v381, %v413
  %v430 = vsel %vm398, %v382, %v414
  %v431 = vsel %vm399, %v383, %v415
  %v432 = vsel %vm400, %v384, %v416
  %v433 = vpack.c.bf16 %v418, %v417
  %v434 = vpack.c.bf16 %v420, %v419
  %v435 = vpack.c.bf16 %v422, %v421
  %v436 = vpack.c.bf16 %v424, %v423
  %v437 = vpack.c.bf16 %v426, %v425
  %v438 = vpack.c.bf16 %v428, %v427
  %v439 = vpack.c.bf16 %v430, %v429
  %v440 = vpack.c.bf16 %v432, %v431
  %v449 = vunpack.c.l.b16 %v433
  %v450 = vunpack.c.h.b16 %v433
  %v451 = vunpack.c.l.b16 %v434
  %v452 = vunpack.c.h.b16 %v434
  %v453 = vunpack.c.l.b16 %v435
  %v454 = vunpack.c.h.b16 %v435
  %v455 = vunpack.c.l.b16 %v436
  %v456 = vunpack.c.h.b16 %v436
  %v457 = vunpack.c.l.b16 %v437
  %v458 = vunpack.c.h.b16 %v437
  %v459 = vunpack.c.l.b16 %v438
  %v460 = vunpack.c.h.b16 %v438
  %v461 = vunpack.c.l.b16 %v439
  %v462 = vunpack.c.h.b16 %v439
  %v463 = vunpack.c.l.b16 %v440
  %v464 = vunpack.c.h.b16 %v440
  %v465 = vpack.c.b16 %v449, %v449
  %v466 = vpack.c.b16 %v450, %v450
  %v467 = vpack.c.b16 %v451, %v451
  %v468 = vpack.c.b16 %v452, %v452
  %v469 = vpack.c.b16 %v453, %v453
  %v470 = vpack.c.b16 %v454, %v454
  %v471 = vpack.c.b16 %v455, %v455
  %v472 = vpack.c.b16 %v456, %v456
  %v473 = vpack.c.b16 %v457, %v457
  %v474 = vpack.c.b16 %v458, %v458
  %v475 = vpack.c.b16 %v459, %v459
  %v476 = vpack.c.b16 %v460, %v460
  %v477 = vpack.c.b16 %v461, %v461
  %v478 = vpack.c.b16 %v462, %v462
  %v479 = vpack.c.b16 %v463, %v463
  %v480 = vpack.c.b16 %v464, %v464
  %497 = vst [vmem:[%s4] sm:$0xf] %v465
  %498 = vst [vmem:[%s4 + $0x4] sm:$0xf] %v466
  %499 = vst [vmem:[%s4 + $0x8] sm:$0xf] %v467
  %500 = vst [vmem:[%s4 + $0xc] sm:$0xf] %v468
  %501 = vst [vmem:[%s4 + $0x10] sm:$0xf] %v469
  %502 = vst [vmem:[%s4 + $0x14] sm:$0xf] %v470
  %503 = vst [vmem:[%s4 + $0x18] sm:$0xf] %v471
  %504 = vst [vmem:[%s4 + $0x1c] sm:$0xf] %v472
  %505 = vst [vmem:[%s4 + $0x20] sm:$0xf] %v473
  %506 = vst [vmem:[%s4 + $0x24] sm:$0xf] %v474
  %507 = vst [vmem:[%s4 + $0x28] sm:$0xf] %v475
  %508 = vst [vmem:[%s4 + $0x2c] sm:$0xf] %v476
  %509 = vst [vmem:[%s4 + $0x30] sm:$0xf] %v477
  %510 = vst [vmem:[%s4 + $0x34] sm:$0xf] %v478
  %511 = vst [vmem:[%s4 + $0x38] sm:$0xf] %v479
  %512 = vst [vmem:[%s4 + $0x3c] sm:$0xf] %v480
  // Predicated region
  $region18: #{netD_forward.7} parent=0 // pred_check
    _
  $region19: #{netD_forward.7} parent=0 // pred_check_branch
    %514 = sbr.rel (0) target = $region21
  $region20: #{netD_forward.7} parent=0 // pred_region
    _
  $region21: #{netD_forward.7} parent=0 // pred_fallthru
    _
  // Predicated region
  $region22: #{netD_forward.7} parent=0 // pred_check
    _
  $region23: #{netD_forward.7} parent=0 // pred_check_branch
    %516 = sbr.rel (0) target = $region25
  $region24: #{netD_forward.7} parent=0 // pred_region
    _
  $region25: #{netD_forward.7} parent=0 // pred_fallthru
    _

// kernel: netD_forward.8
$region0: #{netD_forward.8}
  #allocation0 [shape = 'u32[]', space=smem, size = 0x4, offset = 0x4, fixed_abs, tag = 'smem constant byte address 0x4 - core index']
  #allocation1 [shape = 'u32[144,128]{1,0:T(1,128)}', space=vmem, size = 0x12000, scoped, tag = 'internal scratch']
  %s0 = inlined_call_operand.vmem [shape: bf16[32,512], index: 0, kind: input, shape index: {}]
  %s1 = inlined_call_operand.vmem [shape: bf16[512,128], index: 1, kind: input, shape index: {}]
  %s2 = inlined_call_operand.vmem [shape: f32[1,128], index: 2, kind: input, shape index: {}]
  %s3 = inlined_call_operand.vmem [shape: f32[1,128], index: 3, kind: input, shape index: {}]
  %s4 = inlined_call_operand.vmem [shape: bf16[32,128], index: 4, kind: output, shape index: {}]
  %s5 = sld [smem:[#allocation0]]
  $region26: #{netD_forward.8} parent=0
    _
  %s7 = ssub.s32 1, %s5
  %s8 = scalar_select 0, %s7, %s5
  // Predicated region
  $region2: #{netD_forward.8} parent=0 // pred_check
    _
  $region3: #{netD_forward.8} parent=0 // pred_check_branch
    %10 = sbr.rel (0) target = $region5
  $region4: #{netD_forward.8} parent=0 // pred_region
    _
  $region5: #{netD_forward.8} parent=0 // pred_fallthru
    _
  // Predicated region
  $region6: #{netD_forward.8} parent=0 // pred_check
    _
  $region7: #{netD_forward.8} parent=0 // pred_check_branch
    %12 = sbr.rel (0) target = $region9
  $region8: #{netD_forward.8} parent=0 // pred_region
    _
  $region9: #{netD_forward.8} parent=0 // pred_fallthru
    _
  // Predicated region
  $region10: #{netD_forward.8} parent=0 // pred_check
    _
  $region11: #{netD_forward.8} parent=0 // pred_check_branch
    %14 = sbr.rel (0) target = $region13
  $region12: #{netD_forward.8} parent=0 // pred_region
    _
  $region13: #{netD_forward.8} parent=0 // pred_fallthru
    _
  // Predicated region
  $region14: #{netD_forward.8} parent=0 // pred_check
    _
  $region15: #{netD_forward.8} parent=0 // pred_check_branch
    %16 = sbr.rel (0) target = $region17
  $region16: #{netD_forward.8} parent=0 // pred_region
    _
  $region17: #{netD_forward.8} parent=0 // pred_fallthru
    _
  %v18 = vld [vmem:[%s0] sm:$0xff]
  %v19 = vld [vmem:[%s0 + $0x8] sm:$0xff]
  %v20 = vld [vmem:[%s0 + $0x10] sm:$0xff]
  %v21 = vld [vmem:[%s0 + $0x18] sm:$0xff]
  %v22 = vld [vmem:[%s0 + $0x20] sm:$0xff]
  %v23 = vld [vmem:[%s0 + $0x28] sm:$0xff]
  %v24 = vld [vmem:[%s0 + $0x30] sm:$0xff]
  %v25 = vld [vmem:[%s0 + $0x38] sm:$0xff]
  %v26 = vld [vmem:[%s1] sm:$0xf]
  %v27 = vld [vmem:[%s1 + $0x4] sm:$0xf]
  %v28 = vld [vmem:[%s1 + $0x8] sm:$0xf]
  %v29 = vld [vmem:[%s1 + $0xc] sm:$0xf]
  %v30 = vld [vmem:[%s1 + $0x10] sm:$0xf]
  %v31 = vld [vmem:[%s1 + $0x14] sm:$0xf]
  %v32 = vld [vmem:[%s1 + $0x18] sm:$0xf]
  %v33 = vld [vmem:[%s1 + $0x1c] sm:$0xf]
  %v34 = vld [vmem:[%s1 + $0x20] sm:$0xf]
  %v35 = vld [vmem:[%s1 + $0x24] sm:$0xf]
  %v36 = vld [vmem:[%s1 + $0x28] sm:$0xf]
  %v37 = vld [vmem:[%s1 + $0x2c] sm:$0xf]
  %v38 = vld [vmem:[%s1 + $0x30] sm:$0xf]
  %v39 = vld [vmem:[%s1 + $0x34] sm:$0xf]
  %v40 = vld [vmem:[%s1 + $0x38] sm:$0xf]
  %v41 = vld [vmem:[%s1 + $0x3c] sm:$0xf]
  %v42 = vld [vmem:[%s1 + $0x40] sm:$0xf]
  %v43 = vld [vmem:[%s1 + $0x44] sm:$0xf]
  %v44 = vld [vmem:[%s1 + $0x48] sm:$0xf]
  %v45 = vld [vmem:[%s1 + $0x4c] sm:$0xf]
  %v46 = vld [vmem:[%s1 + $0x50] sm:$0xf]
  %v47 = vld [vmem:[%s1 + $0x54] sm:$0xf]
  %v48 = vld [vmem:[%s1 + $0x58] sm:$0xf]
  %v49 = vld [vmem:[%s1 + $0x5c] sm:$0xf]
  %v50 = vld [vmem:[%s1 + $0x60] sm:$0xf]
  %v51 = vld [vmem:[%s1 + $0x64] sm:$0xf]
  %v52 = vld [vmem:[%s1 + $0x68] sm:$0xf]
  %v53 = vld [vmem:[%s1 + $0x6c] sm:$0xf]
  %v54 = vld [vmem:[%s1 + $0x70] sm:$0xf]
  %v55 = vld [vmem:[%s1 + $0x74] sm:$0xf]
  %v56 = vld [vmem:[%s1 + $0x78] sm:$0xf]
  %v57 = vld [vmem:[%s1 + $0x7c] sm:$0xf]
  %v58 = vld [vmem:[%s1 + $0x80] sm:$0xf]
  %v59 = vld [vmem:[%s1 + $0x84] sm:$0xf]
  %v60 = vld [vmem:[%s1 + $0x88] sm:$0xf]
  %v61 = vld [vmem:[%s1 + $0x8c] sm:$0xf]
  %v62 = vld [vmem:[%s1 + $0x90] sm:$0xf]
  %v63 = vld [vmem:[%s1 + $0x94] sm:$0xf]
  %v64 = vld [vmem:[%s1 + $0x98] sm:$0xf]
  %v65 = vld [vmem:[%s1 + $0x9c] sm:$0xf]
  %v66 = vld [vmem:[%s1 + $0xa0] sm:$0xf]
  %v67 = vld [vmem:[%s1 + $0xa4] sm:$0xf]
  %v68 = vld [vmem:[%s1 + $0xa8] sm:$0xf]
  %v69 = vld [vmem:[%s1 + $0xac] sm:$0xf]
  %v70 = vld [vmem:[%s1 + $0xb0] sm:$0xf]
  %v71 = vld [vmem:[%s1 + $0xb4] sm:$0xf]
  %v72 = vld [vmem:[%s1 + $0xb8] sm:$0xf]
  %v73 = vld [vmem:[%s1 + $0xbc] sm:$0xf]
  %v74 = vld [vmem:[%s1 + $0xc0] sm:$0xf]
  %v75 = vld [vmem:[%s1 + $0xc4] sm:$0xf]
  %v76 = vld [vmem:[%s1 + $0xc8] sm:$0xf]
  %v77 = vld [vmem:[%s1 + $0xcc] sm:$0xf]
  %v78 = vld [vmem:[%s1 + $0xd0] sm:$0xf]
  %v79 = vld [vmem:[%s1 + $0xd4] sm:$0xf]
  %v80 = vld [vmem:[%s1 + $0xd8] sm:$0xf]
  %v81 = vld [vmem:[%s1 + $0xdc] sm:$0xf]
  %v82 = vld [vmem:[%s1 + $0xe0] sm:$0xf]
  %v83 = vld [vmem:[%s1 + $0xe4] sm:$0xf]
  %v84 = vld [vmem:[%s1 + $0xe8] sm:$0xf]
  %v85 = vld [vmem:[%s1 + $0xec] sm:$0xf]
  %v86 = vld [vmem:[%s1 + $0xf0] sm:$0xf]
  %v87 = vld [vmem:[%s1 + $0xf4] sm:$0xf]
  %v88 = vld [vmem:[%s1 + $0xf8] sm:$0xf]
  %v89 = vld [vmem:[%s1 + $0xfc] sm:$0xf]
  %v98 = vunpack.c.l.b16 %v18
  %v99 = vunpack.c.h.b16 %v18
  %v100 = vunpack.c.l.b16 %v19
  %v101 = vunpack.c.h.b16 %v19
  %v102 = vunpack.c.l.b16 %v20
  %v103 = vunpack.c.h.b16 %v20
  %v104 = vunpack.c.l.b16 %v21
  %v105 = vunpack.c.h.b16 %v21
  %v106 = vunpack.c.l.b16 %v22
  %v107 = vunpack.c.h.b16 %v22
  %v108 = vunpack.c.l.b16 %v23
  %v109 = vunpack.c.h.b16 %v23
  %v110 = vunpack.c.l.b16 %v24
  %v111 = vunpack.c.h.b16 %v24
  %v112 = vunpack.c.l.b16 %v25
  %v113 = vunpack.c.h.b16 %v25
  %v114 = vpack.c.b16 %v102, %v98
  %v115 = vpack.c.b16 %v103, %v99
  %v116 = vpack.c.b16 %v104, %v100
  %v117 = vpack.c.b16 %v105, %v101
  %v118 = vpack.c.b16 %v110, %v106
  %v119 = vpack.c.b16 %v111, %v107
  %v120 = vpack.c.b16 %v112, %v108
  %v121 = vpack.c.b16 %v113, %v109
  %v194 = vunpack.c.l.b16 %v26
  %v195 = vunpack.c.l.b16 %v27
  %v196 = vunpack.c.l.b16 %v28
  %v197 = vunpack.c.l.b16 %v29
  %v198 = vunpack.c.l.b16 %v30
  %v199 = vunpack.c.l.b16 %v31
  %v200 = vunpack.c.l.b16 %v32
  %v201 = vunpack.c.l.b16 %v33
  %v202 = vunpack.c.l.b16 %v34
  %v203 = vunpack.c.l.b16 %v35
  %v204 = vunpack.c.l.b16 %v36
  %v205 = vunpack.c.l.b16 %v37
  %v206 = vunpack.c.l.b16 %v38
  %v207 = vunpack.c.l.b16 %v39
  %v208 = vunpack.c.l.b16 %v40
  %v209 = vunpack.c.l.b16 %v41
  %v210 = vunpack.c.l.b16 %v42
  %v211 = vunpack.c.l.b16 %v43
  %v212 = vunpack.c.l.b16 %v44
  %v213 = vunpack.c.l.b16 %v45
  %v214 = vunpack.c.l.b16 %v46
  %v215 = vunpack.c.l.b16 %v47
  %v216 = vunpack.c.l.b16 %v48
  %v217 = vunpack.c.l.b16 %v49
  %v218 = vunpack.c.l.b16 %v50
  %v219 = vunpack.c.l.b16 %v51
  %v220 = vunpack.c.l.b16 %v52
  %v221 = vunpack.c.l.b16 %v53
  %v222 = vunpack.c.l.b16 %v54
  %v223 = vunpack.c.l.b16 %v55
  %v224 = vunpack.c.l.b16 %v56
  %v225 = vunpack.c.l.b16 %v57
  %v226 = vunpack.c.l.b16 %v58
  %v227 = vunpack.c.l.b16 %v59
  %v228 = vunpack.c.l.b16 %v60
  %v229 = vunpack.c.l.b16 %v61
  %v230 = vunpack.c.l.b16 %v62
  %v231 = vunpack.c.l.b16 %v63
  %v232 = vunpack.c.l.b16 %v64
  %v233 = vunpack.c.l.b16 %v65
  %v234 = vunpack.c.l.b16 %v66
  %v235 = vunpack.c.l.b16 %v67
  %v236 = vunpack.c.l.b16 %v68
  %v237 = vunpack.c.l.b16 %v69
  %v238 = vunpack.c.l.b16 %v70
  %v239 = vunpack.c.l.b16 %v71
  %v240 = vunpack.c.l.b16 %v72
  %v241 = vunpack.c.l.b16 %v73
  %v242 = vunpack.c.l.b16 %v74
  %v243 = vunpack.c.l.b16 %v75
  %v244 = vunpack.c.l.b16 %v76
  %v245 = vunpack.c.l.b16 %v77
  %v246 = vunpack.c.l.b16 %v78
  %v247 = vunpack.c.l.b16 %v79
  %v248 = vunpack.c.l.b16 %v80
  %v249 = vunpack.c.l.b16 %v81
  %v250 = vunpack.c.l.b16 %v82
  %v251 = vunpack.c.l.b16 %v83
  %v252 = vunpack.c.l.b16 %v84
  %v253 = vunpack.c.l.b16 %v85
  %v254 = vunpack.c.l.b16 %v86
  %v255 = vunpack.c.l.b16 %v87
  %v256 = vunpack.c.l.b16 %v88
  %v257 = vunpack.c.l.b16 %v89
  %v258 = vpack.c.b16 %v195, %v194
  %v259 = vpack.c.b16 %v197, %v196
  %v260 = vpack.c.b16 %v199, %v198
  %v261 = vpack.c.b16 %v201, %v200
  %v262 = vpack.c.b16 %v203, %v202
  %v263 = vpack.c.b16 %v205, %v204
  %v264 = vpack.c.b16 %v207, %v206
  %v265 = vpack.c.b16 %v209, %v208
  %v266 = vpack.c.b16 %v211, %v210
  %v267 = vpack.c.b16 %v213, %v212
  %v268 = vpack.c.b16 %v215, %v214
  %v269 = vpack.c.b16 %v217, %v216
  %v270 = vpack.c.b16 %v219, %v218
  %v271 = vpack.c.b16 %v221, %v220
  %v272 = vpack.c.b16 %v223, %v222
  %v273 = vpack.c.b16 %v225, %v224
  %v274 = vpack.c.b16 %v227, %v226
  %v275 = vpack.c.b16 %v229, %v228
  %v276 = vpack.c.b16 %v231, %v230
  %v277 = vpack.c.b16 %v233, %v232
  %v278 = vpack.c.b16 %v235, %v234
  %v279 = vpack.c.b16 %v237, %v236
  %v280 = vpack.c.b16 %v239, %v238
  %v281 = vpack.c.b16 %v241, %v240
  %v282 = vpack.c.b16 %v243, %v242
  %v283 = vpack.c.b16 %v245, %v244
  %v284 = vpack.c.b16 %v247, %v246
  %v285 = vpack.c.b16 %v249, %v248
  %v286 = vpack.c.b16 %v251, %v250
  %v287 = vpack.c.b16 %v253, %v252
  %v288 = vpack.c.b16 %v255, %v254
  %v289 = vpack.c.b16 %v257, %v256
  %322 = vmatprep.subr.bf16.mxu0 0
  %323 = vmatpush1.bf16.msra.mxu0 %v258
  %324 = vmatprep.subr.bf16.mxu0 0
  %325 = vmatpush1.bf16.msra.mxu0 %v259
  %326 = vmatprep.subr.bf16.mxu0 0
  %327 = vmatpush1.bf16.msra.mxu0 %v260
  %328 = vmatprep.subr.bf16.mxu0 0
  %329 = vmatpush1.bf16.msra.mxu0 %v261
  %330 = vmatprep.subr.bf16.mxu0 0
  %331 = vmatpush1.bf16.msra.mxu0 %v262
  %332 = vmatprep.subr.bf16.mxu0 0
  %333 = vmatpush1.bf16.msra.mxu0 %v263
  %334 = vmatprep.subr.bf16.mxu0 0
  %335 = vmatpush1.bf16.msra.mxu0 %v264
  %336 = vmatprep.subr.bf16.mxu0 0
  %337 = vmatpush1.bf16.msra.mxu0 %v265
  %338 = vmatprep.subr.bf16.mxu0 0
  %339 = vmatpush1.bf16.msra.mxu0 %v266
  %340 = vmatprep.subr.bf16.mxu0 0
  %341 = vmatpush1.bf16.msra.mxu0 %v267
  %342 = vmatprep.subr.bf16.mxu0 0
  %343 = vmatpush1.bf16.msra.mxu0 %v268
  %344 = vmatprep.subr.bf16.mxu0 0
  %345 = vmatpush1.bf16.msra.mxu0 %v269
  %346 = vmatprep.subr.bf16.mxu0 0
  %347 = vmatpush1.bf16.msra.mxu0 %v270
  %348 = vmatprep.subr.bf16.mxu0 0
  %349 = vmatpush1.bf16.msra.mxu0 %v271
  %350 = vmatprep.subr.bf16.mxu0 0
  %351 = vmatpush1.bf16.msra.mxu0 %v272
  %352 = vmatprep.subr.bf16.mxu0 0
  %353 = vmatpush1.bf16.msra.mxu0 %v273
  %354 = vmatprep.mubr.bf16.mxu0 %v115
  %355 = vmatmul.mubr.bf16.gmra.mrb[0].mxu0 %v114
  %v356 = vpop.f32.mrb[0].mxu0
  %v357 = vadd.f32 0.0, %v356
  %v358 = vpop.f32.mrb[0].mxu0
  %v359 = vpop.f32.mrb[0].mxu0
  %v360 = vadd.f32 0.0, %v359
  %v361 = vpop.f32.mrb[0].mxu0
  %362 = vmatprep.mubr.bf16.mxu0 %v119
  %363 = vmatmul.mubr.bf16.gmra.mrb[0].mxu0 %v118
  %v364 = vpop.f32.mrb[0].mxu0
  %v365 = vadd.f32 0.0, %v364
  %v366 = vpop.f32.mrb[0].mxu0
  %v367 = vpop.f32.mrb[0].mxu0
  %v368 = vadd.f32 0.0, %v367
  %v369 = vpop.f32.mrb[0].mxu0
  %370 = vdwg.mxu0
  %371 = vmatprep.subr.bf16.mxu0 0
  %372 = vmatpush1.bf16.msra.mxu0 %v274
  %373 = vmatprep.subr.bf16.mxu0 0
  %374 = vmatpush1.bf16.msra.mxu0 %v275
  %375 = vmatprep.subr.bf16.mxu0 0
  %376 = vmatpush1.bf16.msra.mxu0 %v276
  %377 = vmatprep.subr.bf16.mxu0 0
  %378 = vmatpush1.bf16.msra.mxu0 %v277
  %379 = vmatprep.subr.bf16.mxu0 0
  %380 = vmatpush1.bf16.msra.mxu0 %v278
  %381 = vmatprep.subr.bf16.mxu0 0
  %382 = vmatpush1.bf16.msra.mxu0 %v279
  %383 = vmatprep.subr.bf16.mxu0 0
  %384 = vmatpush1.bf16.msra.mxu0 %v280
  %385 = vmatprep.subr.bf16.mxu0 0
  %386 = vmatpush1.bf16.msra.mxu0 %v281
  %387 = vmatprep.subr.bf16.mxu0 0
  %388 = vmatpush1.bf16.msra.mxu0 %v282
  %389 = vmatprep.subr.bf16.mxu0 0
  %390 = vmatpush1.bf16.msra.mxu0 %v283
  %391 = vmatprep.subr.bf16.mxu0 0
  %392 = vmatpush1.bf16.msra.mxu0 %v284
  %393 = vmatprep.subr.bf16.mxu0 0
  %394 = vmatpush1.bf16.msra.mxu0 %v285
  %395 = vmatprep.subr.bf16.mxu0 0
  %396 = vmatpush1.bf16.msra.mxu0 %v286
  %397 = vmatprep.subr.bf16.mxu0 0
  %398 = vmatpush1.bf16.msra.mxu0 %v287
  %399 = vmatprep.subr.bf16.mxu0 0
  %400 = vmatpush1.bf16.msra.mxu0 %v288
  %401 = vmatprep.subr.bf16.mxu0 0
  %402 = vmatpush1.bf16.msra.mxu0 %v289
  %403 = vmatprep.mubr.bf16.mxu0 %v117
  %404 = vmatmul.mubr.bf16.gmra.mrb[0].mxu0 %v116
  %v405 = vpop.f32.mrb[0].mxu0
  %v406 = vadd.f32 %v357, %v405
  %v407 = vpop.f32.mrb[0].mxu0
  %v408 = vpop.f32.mrb[0].mxu0
  %v409 = vadd.f32 %v360, %v408
  %v410 = vpop.f32.mrb[0].mxu0
  %411 = vmatprep.mubr.bf16.mxu0 %v121
  %412 = vmatmul.mubr.bf16.gmra.mrb[0].mxu0 %v120
  %v413 = vpop.f32.mrb[0].mxu0
  %v414 = vadd.f32 %v365, %v413
  %v415 = vpop.f32.mrb[0].mxu0
  %v416 = vpop.f32.mrb[0].mxu0
  %v417 = vadd.f32 %v368, %v416
  %v418 = vpop.f32.mrb[0].mxu0
  %419 = vdwg.mxu0
  %v420 = vld [vmem:[%s2] sm:$0x1]
  %v422 = vlaneseq
  %v423 = vshrl.u32 %v422, 7
  %v424 = vsub.s32 0, %v423
  %v425 = vrot.slane %v420, %v424
  %v427 = vmul.f32 %v406, %v425
  %v428 = vmul.f32 %v409, %v425
  %v429 = vmul.f32 %v414, %v425
  %v430 = vmul.f32 %v417, %v425
  %v431 = vld [vmem:[%s3] sm:$0x1]
  %v433 = vlaneseq
  %v434 = vshrl.u32 %v433, 7
  %v435 = vsub.s32 0, %v434
  %v436 = vrot.slane %v431, %v435
  %v438 = vadd.f32 %v427, %v436
  %v439 = vadd.f32 %v428, %v436
  %v440 = vadd.f32 %v429, %v436
  %v441 = vadd.f32 %v430, %v436
  %vm442 = vcmp.gt.f32.partialorder %v438, 0.0
  %vm443 = vcmp.gt.f32.partialorder %v439, 0.0
  %vm444 = vcmp.gt.f32.partialorder %v440, 0.0
  %vm445 = vcmp.gt.f32.partialorder %v441, 0.0
  %v446 = vmul.f32 %v438, 0.2
  %v447 = vmul.f32 %v439, 0.2
  %v448 = vmul.f32 %v440, 0.2
  %v449 = vmul.f32 %v441, 0.2
  %v450 = vsel %vm442, %v438, %v446
  %v451 = vsel %vm443, %v439, %v447
  %v452 = vsel %vm444, %v440, %v448
  %v453 = vsel %vm445, %v441, %v449
  %v454 = vpack.c.bf16 %v451, %v450
  %v455 = vpack.c.bf16 %v453, %v452
  %v458 = vunpack.c.l.b16 %v454
  %v459 = vunpack.c.h.b16 %v454
  %v460 = vunpack.c.l.b16 %v455
  %v461 = vunpack.c.h.b16 %v455
  %v462 = vpack.c.b16 %v458, %v458
  %v463 = vpack.c.b16 %v459, %v459
  %v464 = vpack.c.b16 %v460, %v460
  %v465 = vpack.c.b16 %v461, %v461
  %470 = vst [vmem:[%s4] sm:$0xf] %v462
  %471 = vst [vmem:[%s4 + $0x4] sm:$0xf] %v463
  %472 = vst [vmem:[%s4 + $0x8] sm:$0xf] %v464
  %473 = vst [vmem:[%s4 + $0xc] sm:$0xf] %v465
  // Predicated region
  $region18: #{netD_forward.8} parent=0 // pred_check
    _
  $region19: #{netD_forward.8} parent=0 // pred_check_branch
    %475 = sbr.rel (0) target = $region21
  $region20: #{netD_forward.8} parent=0 // pred_region
    _
  $region21: #{netD_forward.8} parent=0 // pred_fallthru
    _
  // Predicated region
  $region22: #{netD_forward.8} parent=0 // pred_check
    _
  $region23: #{netD_forward.8} parent=0 // pred_check_branch
    %477 = sbr.rel (0) target = $region25
  $region24: #{netD_forward.8} parent=0 // pred_region
    _
  $region25: #{netD_forward.8} parent=0 // pred_fallthru
    _

// kernel: netD_forward.9
$region0: #{netD_forward.9}
  #allocation0 [shape = 'u32[]', space=smem, size = 0x4, offset = 0x4, fixed_abs, tag = 'smem constant byte address 0x4 - core index']
  #allocation1 [shape = 'u32[144,128]{1,0:T(1,128)}', space=vmem, size = 0x12000, scoped, tag = 'internal scratch']
  %s0 = inlined_call_operand.vmem [shape: bf16[8,1024], index: 0, kind: input, shape index: {}]
  %s1 = inlined_call_operand.vmem [shape: bf16[1024,128], index: 1, kind: input, shape index: {}]
  %s2 = inlined_call_operand.vmem [shape: f32[1,128], index: 2, kind: input, shape index: {}]
  %s3 = inlined_call_operand.vmem [shape: f32[1,128], index: 3, kind: input, shape index: {}]
  %s4 = inlined_call_operand.vmem [shape: f32[8,128], index: 4, kind: output, shape index: {}]
  %s5 = sld [smem:[#allocation0]]
  $region26: #{netD_forward.9} parent=0
    _
  %s7 = ssub.s32 1, %s5
  %s8 = scalar_select 0, %s7, %s5
  // Predicated region
  $region2: #{netD_forward.9} parent=0 // pred_check
    _
  $region3: #{netD_forward.9} parent=0 // pred_check_branch
    %10 = sbr.rel (0) target = $region5
  $region4: #{netD_forward.9} parent=0 // pred_region
    _
  $region5: #{netD_forward.9} parent=0 // pred_fallthru
    _
  // Predicated region
  $region6: #{netD_forward.9} parent=0 // pred_check
    _
  $region7: #{netD_forward.9} parent=0 // pred_check_branch
    %12 = sbr.rel (0) target = $region9
  $region8: #{netD_forward.9} parent=0 // pred_region
    _
  $region9: #{netD_forward.9} parent=0 // pred_fallthru
    _
  // Predicated region
  $region10: #{netD_forward.9} parent=0 // pred_check
    _
  $region11: #{netD_forward.9} parent=0 // pred_check_branch
    %14 = sbr.rel (0) target = $region13
  $region12: #{netD_forward.9} parent=0 // pred_region
    _
  $region13: #{netD_forward.9} parent=0 // pred_fallthru
    _
  // Predicated region
  $region14: #{netD_forward.9} parent=0 // pred_check
    _
  $region15: #{netD_forward.9} parent=0 // pred_check_branch
    %16 = sbr.rel (0) target = $region17
  $region16: #{netD_forward.9} parent=0 // pred_region
    _
  $region17: #{netD_forward.9} parent=0 // pred_fallthru
    _
  %v18 = vld [vmem:[%s0] sm:$0xff]
  %v19 = vld [vmem:[%s0 + $0x8] sm:$0xff]
  %v20 = vld [vmem:[%s0 + $0x10] sm:$0xff]
  %v21 = vld [vmem:[%s0 + $0x18] sm:$0xff]
  %v22 = vld [vmem:[%s1] sm:$0xf]
  %v23 = vld [vmem:[%s1 + $0x4] sm:$0xf]
  %v24 = vld [vmem:[%s1 + $0x8] sm:$0xf]
  %v25 = vld [vmem:[%s1 + $0xc] sm:$0xf]
  %v26 = vld [vmem:[%s1 + $0x10] sm:$0xf]
  %v27 = vld [vmem:[%s1 + $0x14] sm:$0xf]
  %v28 = vld [vmem:[%s1 + $0x18] sm:$0xf]
  %v29 = vld [vmem:[%s1 + $0x1c] sm:$0xf]
  %v30 = vld [vmem:[%s1 + $0x20] sm:$0xf]
  %v31 = vld [vmem:[%s1 + $0x24] sm:$0xf]
  %v32 = vld [vmem:[%s1 + $0x28] sm:$0xf]
  %v33 = vld [vmem:[%s1 + $0x2c] sm:$0xf]
  %v34 = vld [vmem:[%s1 + $0x30] sm:$0xf]
  %v35 = vld [vmem:[%s1 + $0x34] sm:$0xf]
  %v36 = vld [vmem:[%s1 + $0x38] sm:$0xf]
  %v37 = vld [vmem:[%s1 + $0x3c] sm:$0xf]
  %v38 = vld [vmem:[%s1 + $0x40] sm:$0xf]
  %v39 = vld [vmem:[%s1 + $0x44] sm:$0xf]
  %v40 = vld [vmem:[%s1 + $0x48] sm:$0xf]
  %v41 = vld [vmem:[%s1 + $0x4c] sm:$0xf]
  %v42 = vld [vmem:[%s1 + $0x50] sm:$0xf]
  %v43 = vld [vmem:[%s1 + $0x54] sm:$0xf]
  %v44 = vld [vmem:[%s1 + $0x58] sm:$0xf]
  %v45 = vld [vmem:[%s1 + $0x5c] sm:$0xf]
  %v46 = vld [vmem:[%s1 + $0x60] sm:$0xf]
  %v47 = vld [vmem:[%s1 + $0x64] sm:$0xf]
  %v48 = vld [vmem:[%s1 + $0x68] sm:$0xf]
  %v49 = vld [vmem:[%s1 + $0x6c] sm:$0xf]
  %v50 = vld [vmem:[%s1 + $0x70] sm:$0xf]
  %v51 = vld [vmem:[%s1 + $0x74] sm:$0xf]
  %v52 = vld [vmem:[%s1 + $0x78] sm:$0xf]
  %v53 = vld [vmem:[%s1 + $0x7c] sm:$0xf]
  %v54 = vld [vmem:[%s1 + $0x80] sm:$0xf]
  %v55 = vld [vmem:[%s1 + $0x84] sm:$0xf]
  %v56 = vld [vmem:[%s1 + $0x88] sm:$0xf]
  %v57 = vld [vmem:[%s1 + $0x8c] sm:$0xf]
  %v58 = vld [vmem:[%s1 + $0x90] sm:$0xf]
  %v59 = vld [vmem:[%s1 + $0x94] sm:$0xf]
  %v60 = vld [vmem:[%s1 + $0x98] sm:$0xf]
  %v61 = vld [vmem:[%s1 + $0x9c] sm:$0xf]
  %v62 = vld [vmem:[%s1 + $0xa0] sm:$0xf]
  %v63 = vld [vmem:[%s1 + $0xa4] sm:$0xf]
  %v64 = vld [vmem:[%s1 + $0xa8] sm:$0xf]
  %v65 = vld [vmem:[%s1 + $0xac] sm:$0xf]
  %v66 = vld [vmem:[%s1 + $0xb0] sm:$0xf]
  %v67 = vld [vmem:[%s1 + $0xb4] sm:$0xf]
  %v68 = vld [vmem:[%s1 + $0xb8] sm:$0xf]
  %v69 = vld [vmem:[%s1 + $0xbc] sm:$0xf]
  %v70 = vld [vmem:[%s1 + $0xc0] sm:$0xf]
  %v71 = vld [vmem:[%s1 + $0xc4] sm:$0xf]
  %v72 = vld [vmem:[%s1 + $0xc8] sm:$0xf]
  %v73 = vld [vmem:[%s1 + $0xcc] sm:$0xf]
  %v74 = vld [vmem:[%s1 + $0xd0] sm:$0xf]
  %v75 = vld [vmem:[%s1 + $0xd4] sm:$0xf]
  %v76 = vld [vmem:[%s1 + $0xd8] sm:$0xf]
  %v77 = vld [vmem:[%s1 + $0xdc] sm:$0xf]
  %v78 = vld [vmem:[%s1 + $0xe0] sm:$0xf]
  %v79 = vld [vmem:[%s1 + $0xe4] sm:$0xf]
  %v80 = vld [vmem:[%s1 + $0xe8] sm:$0xf]
  %v81 = vld [vmem:[%s1 + $0xec] sm:$0xf]
  %v82 = vld [vmem:[%s1 + $0xf0] sm:$0xf]
  %v83 = vld [vmem:[%s1 + $0xf4] sm:$0xf]
  %v84 = vld [vmem:[%s1 + $0xf8] sm:$0xf]
  %v85 = vld [vmem:[%s1 + $0xfc] sm:$0xf]
  %v86 = vld [vmem:[%s1 + $0x100] sm:$0xf]
  %v87 = vld [vmem:[%s1 + $0x104] sm:$0xf]
  %v88 = vld [vmem:[%s1 + $0x108] sm:$0xf]
  %v89 = vld [vmem:[%s1 + $0x10c] sm:$0xf]
  %v90 = vld [vmem:[%s1 + $0x110] sm:$0xf]
  %v91 = vld [vmem:[%s1 + $0x114] sm:$0xf]
  %v92 = vld [vmem:[%s1 + $0x118] sm:$0xf]
  %v93 = vld [vmem:[%s1 + $0x11c] sm:$0xf]
  %v94 = vld [vmem:[%s1 + $0x120] sm:$0xf]
  %v95 = vld [vmem:[%s1 + $0x124] sm:$0xf]
  %v96 = vld [vmem:[%s1 + $0x128] sm:$0xf]
  %v97 = vld [vmem:[%s1 + $0x12c] sm:$0xf]
  %v98 = vld [vmem:[%s1 + $0x130] sm:$0xf]
  %v99 = vld [vmem:[%s1 + $0x134] sm:$0xf]
  %v100 = vld [vmem:[%s1 + $0x138] sm:$0xf]
  %v101 = vld [vmem:[%s1 + $0x13c] sm:$0xf]
  %v102 = vld [vmem:[%s1 + $0x140] sm:$0xf]
  %v103 = vld [vmem:[%s1 + $0x144] sm:$0xf]
  %v104 = vld [vmem:[%s1 + $0x148] sm:$0xf]
  %v105 = vld [vmem:[%s1 + $0x14c] sm:$0xf]
  %v106 = vld [vmem:[%s1 + $0x150] sm:$0xf]
  %v107 = vld [vmem:[%s1 + $0x154] sm:$0xf]
  %v108 = vld [vmem:[%s1 + $0x158] sm:$0xf]
  %v109 = vld [vmem:[%s1 + $0x15c] sm:$0xf]
  %v110 = vld [vmem:[%s1 + $0x160] sm:$0xf]
  %v111 = vld [vmem:[%s1 + $0x164] sm:$0xf]
  %v112 = vld [vmem:[%s1 + $0x168] sm:$0xf]
  %v113 = vld [vmem:[%s1 + $0x16c] sm:$0xf]
  %v114 = vld [vmem:[%s1 + $0x170] sm:$0xf]
  %v115 = vld [vmem:[%s1 + $0x174] sm:$0xf]
  %v116 = vld [vmem:[%s1 + $0x178] sm:$0xf]
  %v117 = vld [vmem:[%s1 + $0x17c] sm:$0xf]
  %v118 = vld [vmem:[%s1 + $0x180] sm:$0xf]
  %v119 = vld [vmem:[%s1 + $0x184] sm:$0xf]
  %v120 = vld [vmem:[%s1 + $0x188] sm:$0xf]
  %v121 = vld [vmem:[%s1 + $0x18c] sm:$0xf]
  %v122 = vld [vmem:[%s1 + $0x190] sm:$0xf]
  %v123 = vld [vmem:[%s1 + $0x194] sm:$0xf]
  %v124 = vld [vmem:[%s1 + $0x198] sm:$0xf]
  %v125 = vld [vmem:[%s1 + $0x19c] sm:$0xf]
  %v126 = vld [vmem:[%s1 + $0x1a0] sm:$0xf]
  %v127 = vld [vmem:[%s1 + $0x1a4] sm:$0xf]
  %v128 = vld [vmem:[%s1 + $0x1a8] sm:$0xf]
  %v129 = vld [vmem:[%s1 + $0x1ac] sm:$0xf]
  %v130 = vld [vmem:[%s1 + $0x1b0] sm:$0xf]
  %v131 = vld [vmem:[%s1 + $0x1b4] sm:$0xf]
  %v132 = vld [vmem:[%s1 + $0x1b8] sm:$0xf]
  %v133 = vld [vmem:[%s1 + $0x1bc] sm:$0xf]
  %v134 = vld [vmem:[%s1 + $0x1c0] sm:$0xf]
  %v135 = vld [vmem:[%s1 + $0x1c4] sm:$0xf]
  %v136 = vld [vmem:[%s1 + $0x1c8] sm:$0xf]
  %v137 = vld [vmem:[%s1 + $0x1cc] sm:$0xf]
  %v138 = vld [vmem:[%s1 + $0x1d0] sm:$0xf]
  %v139 = vld [vmem:[%s1 + $0x1d4] sm:$0xf]
  %v140 = vld [vmem:[%s1 + $0x1d8] sm:$0xf]
  %v141 = vld [vmem:[%s1 + $0x1dc] sm:$0xf]
  %v142 = vld [vmem:[%s1 + $0x1e0] sm:$0xf]
  %v143 = vld [vmem:[%s1 + $0x1e4] sm:$0xf]
  %v144 = vld [vmem:[%s1 + $0x1e8] sm:$0xf]
  %v145 = vld [vmem:[%s1 + $0x1ec] sm:$0xf]
  %v146 = vld [vmem:[%s1 + $0x1f0] sm:$0xf]
  %v147 = vld [vmem:[%s1 + $0x1f4] sm:$0xf]
  %v148 = vld [vmem:[%s1 + $0x1f8] sm:$0xf]
  %v149 = vld [vmem:[%s1 + $0x1fc] sm:$0xf]
  %v154 = vunpack.c.l.b16 %v18
  %v155 = vunpack.c.h.b16 %v18
  %v156 = vunpack.c.l.b16 %v19
  %v157 = vunpack.c.h.b16 %v19
  %v158 = vunpack.c.l.b16 %v20
  %v159 = vunpack.c.h.b16 %v20
  %v160 = vunpack.c.l.b16 %v21
  %v161 = vunpack.c.h.b16 %v21
  %v162 = vpack.c.b16 %v154, %v154
  %v163 = vpack.c.b16 %v155, %v155
  %v164 = vpack.c.b16 %v156, %v156
  %v165 = vpack.c.b16 %v157, %v157
  %v166 = vpack.c.b16 %v158, %v158
  %v167 = vpack.c.b16 %v159, %v159
  %v168 = vpack.c.b16 %v160, %v160
  %v169 = vpack.c.b16 %v161, %v161
  %v306 = vunpack.c.l.b16 %v22
  %v307 = vunpack.c.l.b16 %v23
  %v308 = vunpack.c.l.b16 %v24
  %v309 = vunpack.c.l.b16 %v25
  %v310 = vunpack.c.l.b16 %v26
  %v311 = vunpack.c.l.b16 %v27
  %v312 = vunpack.c.l.b16 %v28
  %v313 = vunpack.c.l.b16 %v29
  %v314 = vunpack.c.l.b16 %v30
  %v315 = vunpack.c.l.b16 %v31
  %v316 = vunpack.c.l.b16 %v32
  %v317 = vunpack.c.l.b16 %v33
  %v318 = vunpack.c.l.b16 %v34
  %v319 = vunpack.c.l.b16 %v35
  %v320 = vunpack.c.l.b16 %v36
  %v321 = vunpack.c.l.b16 %v37
  %v322 = vunpack.c.l.b16 %v38
  %v323 = vunpack.c.l.b16 %v39
  %v324 = vunpack.c.l.b16 %v40
  %v325 = vunpack.c.l.b16 %v41
  %v326 = vunpack.c.l.b16 %v42
  %v327 = vunpack.c.l.b16 %v43
  %v328 = vunpack.c.l.b16 %v44
  %v329 = vunpack.c.l.b16 %v45
  %v330 = vunpack.c.l.b16 %v46
  %v331 = vunpack.c.l.b16 %v47
  %v332 = vunpack.c.l.b16 %v48
  %v333 = vunpack.c.l.b16 %v49
  %v334 = vunpack.c.l.b16 %v50
  %v335 = vunpack.c.l.b16 %v51
  %v336 = vunpack.c.l.b16 %v52
  %v337 = vunpack.c.l.b16 %v53
  %v338 = vunpack.c.l.b16 %v54
  %v339 = vunpack.c.l.b16 %v55
  %v340 = vunpack.c.l.b16 %v56
  %v341 = vunpack.c.l.b16 %v57
  %v342 = vunpack.c.l.b16 %v58
  %v343 = vunpack.c.l.b16 %v59
  %v344 = vunpack.c.l.b16 %v60
  %v345 = vunpack.c.l.b16 %v61
  %v346 = vunpack.c.l.b16 %v62
  %v347 = vunpack.c.l.b16 %v63
  %v348 = vunpack.c.l.b16 %v64
  %v349 = vunpack.c.l.b16 %v65
  %v350 = vunpack.c.l.b16 %v66
  %v351 = vunpack.c.l.b16 %v67
  %v352 = vunpack.c.l.b16 %v68
  %v353 = vunpack.c.l.b16 %v69
  %v354 = vunpack.c.l.b16 %v70
  %v355 = vunpack.c.l.b16 %v71
  %v356 = vunpack.c.l.b16 %v72
  %v357 = vunpack.c.l.b16 %v73
  %v358 = vunpack.c.l.b16 %v74
  %v359 = vunpack.c.l.b16 %v75
  %v360 = vunpack.c.l.b16 %v76
  %v361 = vunpack.c.l.b16 %v77
  %v362 = vunpack.c.l.b16 %v78
  %v363 = vunpack.c.l.b16 %v79
  %v364 = vunpack.c.l.b16 %v80
  %v365 = vunpack.c.l.b16 %v81
  %v366 = vunpack.c.l.b16 %v82
  %v367 = vunpack.c.l.b16 %v83
  %v368 = vunpack.c.l.b16 %v84
  %v369 = vunpack.c.l.b16 %v85
  %v370 = vunpack.c.l.b16 %v86
  %v371 = vunpack.c.l.b16 %v87
  %v372 = vunpack.c.l.b16 %v88
  %v373 = vunpack.c.l.b16 %v89
  %v374 = vunpack.c.l.b16 %v90
  %v375 = vunpack.c.l.b16 %v91
  %v376 = vunpack.c.l.b16 %v92
  %v377 = vunpack.c.l.b16 %v93
  %v378 = vunpack.c.l.b16 %v94
  %v379 = vunpack.c.l.b16 %v95
  %v380 = vunpack.c.l.b16 %v96
  %v381 = vunpack.c.l.b16 %v97
  %v382 = vunpack.c.l.b16 %v98
  %v383 = vunpack.c.l.b16 %v99
  %v384 = vunpack.c.l.b16 %v100
  %v385 = vunpack.c.l.b16 %v101
  %v386 = vunpack.c.l.b16 %v102
  %v387 = vunpack.c.l.b16 %v103
  %v388 = vunpack.c.l.b16 %v104
  %v389 = vunpack.c.l.b16 %v105
  %v390 = vunpack.c.l.b16 %v106
  %v391 = vunpack.c.l.b16 %v107
  %v392 = vunpack.c.l.b16 %v108
  %v393 = vunpack.c.l.b16 %v109
  %v394 = vunpack.c.l.b16 %v110
  %v395 = vunpack.c.l.b16 %v111
  %v396 = vunpack.c.l.b16 %v112
  %v397 = vunpack.c.l.b16 %v113
  %v398 = vunpack.c.l.b16 %v114
  %v399 = vunpack.c.l.b16 %v115
  %v400 = vunpack.c.l.b16 %v116
  %v401 = vunpack.c.l.b16 %v117
  %v402 = vunpack.c.l.b16 %v118
  %v403 = vunpack.c.l.b16 %v119
  %v404 = vunpack.c.l.b16 %v120
  %v405 = vunpack.c.l.b16 %v121
  %v406 = vunpack.c.l.b16 %v122
  %v407 = vunpack.c.l.b16 %v123
  %v408 = vunpack.c.l.b16 %v124
  %v409 = vunpack.c.l.b16 %v125
  %v410 = vunpack.c.l.b16 %v126
  %v411 = vunpack.c.l.b16 %v127
  %v412 = vunpack.c.l.b16 %v128
  %v413 = vunpack.c.l.b16 %v129
  %v414 = vunpack.c.l.b16 %v130
  %v415 = vunpack.c.l.b16 %v131
  %v416 = vunpack.c.l.b16 %v132
  %v417 = vunpack.c.l.b16 %v133
  %v418 = vunpack.c.l.b16 %v134
  %v419 = vunpack.c.l.b16 %v135
  %v420 = vunpack.c.l.b16 %v136
  %v421 = vunpack.c.l.b16 %v137
  %v422 = vunpack.c.l.b16 %v138
  %v423 = vunpack.c.l.b16 %v139
  %v424 = vunpack.c.l.b16 %v140
  %v425 = vunpack.c.l.b16 %v141
  %v426 = vunpack.c.l.b16 %v142
  %v427 = vunpack.c.l.b16 %v143
  %v428 = vunpack.c.l.b16 %v144
  %v429 = vunpack.c.l.b16 %v145
  %v430 = vunpack.c.l.b16 %v146
  %v431 = vunpack.c.l.b16 %v147
  %v432 = vunpack.c.l.b16 %v148
  %v433 = vunpack.c.l.b16 %v149
  %v434 = vpack.c.b16 %v307, %v306
  %v435 = vpack.c.b16 %v309, %v308
  %v436 = vpack.c.b16 %v311, %v310
  %v437 = vpack.c.b16 %v313, %v312
  %v438 = vpack.c.b16 %v315, %v314
  %v439 = vpack.c.b16 %v317, %v316
  %v440 = vpack.c.b16 %v319, %v318
  %v441 = vpack.c.b16 %v321, %v320
  %v442 = vpack.c.b16 %v323, %v322
  %v443 = vpack.c.b16 %v325, %v324
  %v444 = vpack.c.b16 %v327, %v326
  %v445 = vpack.c.b16 %v329, %v328
  %v446 = vpack.c.b16 %v331, %v330
  %v447 = vpack.c.b16 %v333, %v332
  %v448 = vpack.c.b16 %v335, %v334
  %v449 = vpack.c.b16 %v337, %v336
  %v450 = vpack.c.b16 %v339, %v338
  %v451 = vpack.c.b16 %v341, %v340
  %v452 = vpack.c.b16 %v343, %v342
  %v453 = vpack.c.b16 %v345, %v344
  %v454 = vpack.c.b16 %v347, %v346
  %v455 = vpack.c.b16 %v349, %v348
  %v456 = vpack.c.b16 %v351, %v350
  %v457 = vpack.c.b16 %v353, %v352
  %v458 = vpack.c.b16 %v355, %v354
  %v459 = vpack.c.b16 %v357, %v356
  %v460 = vpack.c.b16 %v359, %v358
  %v461 = vpack.c.b16 %v361, %v360
  %v462 = vpack.c.b16 %v363, %v362
  %v463 = vpack.c.b16 %v365, %v364
  %v464 = vpack.c.b16 %v367, %v366
  %v465 = vpack.c.b16 %v369, %v368
  %v466 = vpack.c.b16 %v371, %v370
  %v467 = vpack.c.b16 %v373, %v372
  %v468 = vpack.c.b16 %v375, %v374
  %v469 = vpack.c.b16 %v377, %v376
  %v470 = vpack.c.b16 %v379, %v378
  %v471 = vpack.c.b16 %v381, %v380
  %v472 = vpack.c.b16 %v383, %v382
  %v473 = vpack.c.b16 %v385, %v384
  %v474 = vpack.c.b16 %v387, %v386
  %v475 = vpack.c.b16 %v389, %v388
  %v476 = vpack.c.b16 %v391, %v390
  %v477 = vpack.c.b16 %v393, %v392
  %v478 = vpack.c.b16 %v395, %v394
  %v479 = vpack.c.b16 %v397, %v396
  %v480 = vpack.c.b16 %v399, %v398
  %v481 = vpack.c.b16 %v401, %v400
  %v482 = vpack.c.b16 %v403, %v402
  %v483 = vpack.c.b16 %v405, %v404
  %v484 = vpack.c.b16 %v407, %v406
  %v485 = vpack.c.b16 %v409, %v408
  %v486 = vpack.c.b16 %v411, %v410
  %v487 = vpack.c.b16 %v413, %v412
  %v488 = vpack.c.b16 %v415, %v414
  %v489 = vpack.c.b16 %v417, %v416
  %v490 = vpack.c.b16 %v419, %v418
  %v491 = vpack.c.b16 %v421, %v420
  %v492 = vpack.c.b16 %v423, %v422
  %v493 = vpack.c.b16 %v425, %v424
  %v494 = vpack.c.b16 %v427, %v426
  %v495 = vpack.c.b16 %v429, %v428
  %v496 = vpack.c.b16 %v431, %v430
  %v497 = vpack.c.b16 %v433, %v432
  %562 = vmatprep.subr.bf16.mxu0 0
  %563 = vmatpush1.bf16.msra.mxu0 %v434
  %564 = vmatprep.subr.bf16.mxu0 0
  %565 = vmatpush1.bf16.msra.mxu0 %v435
  %566 = vmatprep.subr.bf16.mxu0 0
  %567 = vmatpush1.bf16.msra.mxu0 %v436
  %568 = vmatprep.subr.bf16.mxu0 0
  %569 = vmatpush1.bf16.msra.mxu0 %v437
  %570 = vmatprep.subr.bf16.mxu0 0
  %571 = vmatpush1.bf16.msra.mxu0 %v438
  %572 = vmatprep.subr.bf16.mxu0 0
  %573 = vmatpush1.bf16.msra.mxu0 %v439
  %574 = vmatprep.subr.bf16.mxu0 0
  %575 = vmatpush1.bf16.msra.mxu0 %v440
  %576 = vmatprep.subr.bf16.mxu0 0
  %577 = vmatpush1.bf16.msra.mxu0 %v441
  %578 = vmatprep.subr.bf16.mxu0 0
  %579 = vmatpush1.bf16.msra.mxu0 %v442
  %580 = vmatprep.subr.bf16.mxu0 0
  %581 = vmatpush1.bf16.msra.mxu0 %v443
  %582 = vmatprep.subr.bf16.mxu0 0
  %583 = vmatpush1.bf16.msra.mxu0 %v444
  %584 = vmatprep.subr.bf16.mxu0 0
  %585 = vmatpush1.bf16.msra.mxu0 %v445
  %586 = vmatprep.subr.bf16.mxu0 0
  %587 = vmatpush1.bf16.msra.mxu0 %v446
  %588 = vmatprep.subr.bf16.mxu0 0
  %589 = vmatpush1.bf16.msra.mxu0 %v447
  %590 = vmatprep.subr.bf16.mxu0 0
  %591 = vmatpush1.bf16.msra.mxu0 %v448
  %592 = vmatprep.subr.bf16.mxu0 0
  %593 = vmatpush1.bf16.msra.mxu0 %v449
  %594 = vmatprep.mubr.bf16.mxu0 %v163
  %595 = vmatmul.mubr.bf16.gmra.mrb[0].mxu0 %v162
  %v596 = vpop.f32.mrb[0].mxu0
  %v597 = vadd.f32 0.0, %v596
  %v598 = vpop.f32.mrb[0].mxu0
  %v599 = vpop.f32.mrb[0].mxu0
  %v600 = vpop.f32.mrb[0].mxu0
  %601 = vdwg.mxu0
  %602 = vmatprep.subr.bf16.mxu0 0
  %603 = vmatpush1.bf16.msra.mxu0 %v450
  %604 = vmatprep.subr.bf16.mxu0 0
  %605 = vmatpush1.bf16.msra.mxu0 %v451
  %606 = vmatprep.subr.bf16.mxu0 0
  %607 = vmatpush1.bf16.msra.mxu0 %v452
  %608 = vmatprep.subr.bf16.mxu0 0
  %609 = vmatpush1.bf16.msra.mxu0 %v453
  %610 = vmatprep.subr.bf16.mxu0 0
  %611 = vmatpush1.bf16.msra.mxu0 %v454
  %612 = vmatprep.subr.bf16.mxu0 0
  %613 = vmatpush1.bf16.msra.mxu0 %v455
  %614 = vmatprep.subr.bf16.mxu0 0
  %615 = vmatpush1.bf16.msra.mxu0 %v456
  %616 = vmatprep.subr.bf16.mxu0 0
  %617 = vmatpush1.bf16.msra.mxu0 %v457
  %618 = vmatprep.subr.bf16.mxu0 0
  %619 = vmatpush1.bf16.msra.mxu0 %v458
  %620 = vmatprep.subr.bf16.mxu0 0
  %621 = vmatpush1.bf16.msra.mxu0 %v459
  %622 = vmatprep.subr.bf16.mxu0 0
  %623 = vmatpush1.bf16.msra.mxu0 %v460
  %624 = vmatprep.subr.bf16.mxu0 0
  %625 = vmatpush1.bf16.msra.mxu0 %v461
  %626 = vmatprep.subr.bf16.mxu0 0
  %627 = vmatpush1.bf16.msra.mxu0 %v462
  %628 = vmatprep.subr.bf16.mxu0 0
  %629 = vmatpush1.bf16.msra.mxu0 %v463
  %630 = vmatprep.subr.bf16.mxu0 0
  %631 = vmatpush1.bf16.msra.mxu0 %v464
  %632 = vmatprep.subr.bf16.mxu0 0
  %633 = vmatpush1.bf16.msra.mxu0 %v465
  %634 = vmatprep.mubr.bf16.mxu0 %v165
  %635 = vmatmul.mubr.bf16.gmra.mrb[0].mxu0 %v164
  %v636 = vpop.f32.mrb[0].mxu0
  %v637 = vadd.f32 %v597, %v636
  %v638 = vpop.f32.mrb[0].mxu0
  %v639 = vpop.f32.mrb[0].mxu0
  %v640 = vpop.f32.mrb[0].mxu0
  %641 = vdwg.mxu0
  %642 = vmatprep.subr.bf16.mxu0 0
  %643 = vmatpush1.bf16.msra.mxu0 %v466
  %644 = vmatprep.subr.bf16.mxu0 0
  %645 = vmatpush1.bf16.msra.mxu0 %v467
  %646 = vmatprep.subr.bf16.mxu0 0
  %647 = vmatpush1.bf16.msra.mxu0 %v468
  %648 = vmatprep.subr.bf16.mxu0 0
  %649 = vmatpush1.bf16.msra.mxu0 %v469
  %650 = vmatprep.subr.bf16.mxu0 0
  %651 = vmatpush1.bf16.msra.mxu0 %v470
  %652 = vmatprep.subr.bf16.mxu0 0
  %653 = vmatpush1.bf16.msra.mxu0 %v471
  %654 = vmatprep.subr.bf16.mxu0 0
  %655 = vmatpush1.bf16.msra.mxu0 %v472
  %656 = vmatprep.subr.bf16.mxu0 0
  %657 = vmatpush1.bf16.msra.mxu0 %v473
  %658 = vmatprep.subr.bf16.mxu0 0
  %659 = vmatpush1.bf16.msra.mxu0 %v474
  %660 = vmatprep.subr.bf16.mxu0 0
  %661 = vmatpush1.bf16.msra.mxu0 %v475
  %662 = vmatprep.subr.bf16.mxu0 0
  %663 = vmatpush1.bf16.msra.mxu0 %v476
  %664 = vmatprep.subr.bf16.mxu0 0
  %665 = vmatpush1.bf16.msra.mxu0 %v477
  %666 = vmatprep.subr.bf16.mxu0 0
  %667 = vmatpush1.bf16.msra.mxu0 %v478
  %668 = vmatprep.subr.bf16.mxu0 0
  %669 = vmatpush1.bf16.msra.mxu0 %v479
  %670 = vmatprep.subr.bf16.mxu0 0
  %671 = vmatpush1.bf16.msra.mxu0 %v480
  %672 = vmatprep.subr.bf16.mxu0 0
  %673 = vmatpush1.bf16.msra.mxu0 %v481
  %674 = vmatprep.mubr.bf16.mxu0 %v167
  %675 = vmatmul.mubr.bf16.gmra.mrb[0].mxu0 %v166
  %v676 = vpop.f32.mrb[0].mxu0
  %v677 = vadd.f32 %v637, %v676
  %v678 = vpop.f32.mrb[0].mxu0
  %v679 = vpop.f32.mrb[0].mxu0
  %v680 = vpop.f32.mrb[0].mxu0
  %681 = vdwg.mxu0
  %682 = vmatprep.subr.bf16.mxu0 0
  %683 = vmatpush1.bf16.msra.mxu0 %v482
  %684 = vmatprep.subr.bf16.mxu0 0
  %685 = vmatpush1.bf16.msra.mxu0 %v483
  %686 = vmatprep.subr.bf16.mxu0 0
  %687 = vmatpush1.bf16.msra.mxu0 %v484
  %688 = vmatprep.subr.bf16.mxu0 0
  %689 = vmatpush1.bf16.msra.mxu0 %v485
  %690 = vmatprep.subr.bf16.mxu0 0
  %691 = vmatpush1.bf16.msra.mxu0 %v486
  %692 = vmatprep.subr.bf16.mxu0 0
  %693 = vmatpush1.bf16.msra.mxu0 %v487
  %694 = vmatprep.subr.bf16.mxu0 0
  %695 = vmatpush1.bf16.msra.mxu0 %v488
  %696 = vmatprep.subr.bf16.mxu0 0
  %697 = vmatpush1.bf16.msra.mxu0 %v489
  %698 = vmatprep.subr.bf16.mxu0 0
  %699 = vmatpush1.bf16.msra.mxu0 %v490
  %700 = vmatprep.subr.bf16.mxu0 0
  %701 = vmatpush1.bf16.msra.mxu0 %v491
  %702 = vmatprep.subr.bf16.mxu0 0
  %703 = vmatpush1.bf16.msra.mxu0 %v492
  %704 = vmatprep.subr.bf16.mxu0 0
  %705 = vmatpush1.bf16.msra.mxu0 %v493
  %706 = vmatprep.subr.bf16.mxu0 0
  %707 = vmatpush1.bf16.msra.mxu0 %v494
  %708 = vmatprep.subr.bf16.mxu0 0
  %709 = vmatpush1.bf16.msra.mxu0 %v495
  %710 = vmatprep.subr.bf16.mxu0 0
  %711 = vmatpush1.bf16.msra.mxu0 %v496
  %712 = vmatprep.subr.bf16.mxu0 0
  %713 = vmatpush1.bf16.msra.mxu0 %v497
  %714 = vmatprep.mubr.bf16.mxu0 %v169
  %715 = vmatmul.mubr.bf16.gmra.mrb[0].mxu0 %v168
  %v716 = vpop.f32.mrb[0].mxu0
  %v717 = vadd.f32 %v677, %v716
  %v718 = vpop.f32.mrb[0].mxu0
  %v719 = vpop.f32.mrb[0].mxu0
  %v720 = vpop.f32.mrb[0].mxu0
  %721 = vdwg.mxu0
  %v722 = vld [vmem:[%s2] sm:$0x1]
  %v724 = vlaneseq
  %v725 = vshrl.u32 %v724, 7
  %v726 = vsub.s32 0, %v725
  %v727 = vrot.slane %v722, %v726
  %v729 = vmul.f32 %v717, %v727
  %v730 = vld [vmem:[%s3] sm:$0x1]
  %v732 = vlaneseq
  %v733 = vshrl.u32 %v732, 7
  %v734 = vsub.s32 0, %v733
  %v735 = vrot.slane %v730, %v734
  %v737 = vadd.f32 %v729, %v735
  %v738 = vsub.f32 0.0, %v737
  %v739 = vmul.f32 %v738, 1.442695
  %v740 = vpow.pop %v739
  %v741 = vadd.f32 %v740, 1.0
  %v742 = vrcp.pop %v741
  %v743 = vmul.f32 1.0, %v742
  %744 = vst [vmem:[%s4] sm:$0xff] %v743
  // Predicated region
  $region18: #{netD_forward.9} parent=0 // pred_check
    _
  $region19: #{netD_forward.9} parent=0 // pred_check_branch
    %746 = sbr.rel (0) target = $region21
  $region20: #{netD_forward.9} parent=0 // pred_region
    _
  $region21: #{netD_forward.9} parent=0 // pred_fallthru
    _
  // Predicated region
  $region22: #{netD_forward.9} parent=0 // pred_check
    _
  $region23: #{netD_forward.9} parent=0 // pred_check_branch
    %748 = sbr.rel (0) target = $region25
  $region24: #{netD_forward.9} parent=0 // pred_region
    _
  $region25: #{netD_forward.9} parent=0 // pred_fallthru
    _

</llo_original>
